<compile_context>
chip_gen: v5e
topology: v5e:2x2
jax: 0.10.0
libtpu: 0.0.40
codegen_flags: <defaults>
</compile_context>

<pallas_src>
import functools

import jax
import jax.numpy as jnp
from jax.experimental import pallas as pl
from jax.experimental.pallas import tpu as pltpu


# ----------------------------- tiling constants -----------------------------

LANE = 128            # TPU lane width; Cout padded to this for lane-dense vst
TM_MAX = 128          # max M tile
TN_MAX = 256          # max Cout tile
TK_SINGLE_MAX = 512   # keep K as a single block if K_pad <= this
TK_SPLIT = 256        # K tile when the contraction is split


def _round_up(x, m):
    return (x + m - 1) // m * m


def _m_geom(M):
    """M padding / tile so we get >=2 parallel grid steps when M allows it."""
    if M >= 256:
        M_pad = _round_up(M, TM_MAX)
        return M_pad, TM_MAX
    if M >= 32:
        M_pad = _round_up(M, 32)
        return M_pad, M_pad // 2          # 2 parallel M steps (multiple of 16)
    M_pad = _round_up(M, 16)              # bf16 min sublane tile
    return M_pad, M_pad


def _k_geom(K):
    K_pad = _round_up(K, LANE)
    if K_pad <= TK_SINGLE_MAX:
        return K_pad, K_pad
    K_pad = _round_up(K, TK_SPLIT)
    return K_pad, TK_SPLIT


def _n_geom(Cout):
    C_pad = _round_up(Cout, LANE)
    tn = min(C_pad, TN_MAX)
    if C_pad % tn != 0:
        C_pad = _round_up(Cout, tn)
    return C_pad, tn


# ----------------------------- Pallas kernels ------------------------------

def _mm_bias_kernel(x_ref, w_ref, b_ref, o_ref, acc_ref, *, relu):
    # grid = (i: M tiles, j: Cout tiles, k: K tiles); k is the reduction axis
    @pl.when(pl.program_id(2) == 0)
    def _init():
        acc_ref[...] = jnp.zeros_like(acc_ref)

    acc_ref[...] += jnp.dot(x_ref[...], w_ref[...],
                            preferred_element_type=jnp.float32)

    @pl.when(pl.program_id(2) == pl.num_programs(2) - 1)
    def _finalize():
        y = acc_ref[...] + b_ref[...]         # BN scale already folded into w
        if relu:
            y = jnp.maximum(y, 0.0)
        o_ref[...] = y.astype(o_ref.dtype)    # bf16 lane-dense store


def _mm_bias_res_relu_kernel(x_ref, w_ref, b_ref, r_ref, o_ref, acc_ref):
    # Last conv of a BasicBlock: out = relu(x @ w + bias + residual)
    @pl.when(pl.program_id(2) == 0)
    def _init():
        acc_ref[...] = jnp.zeros_like(acc_ref)

    acc_ref[...] += jnp.dot(x_ref[...], w_ref[...],
                            preferred_element_type=jnp.float32)

    @pl.when(pl.program_id(2) == pl.num_programs(2) - 1)
    def _finalize():
        y = acc_ref[...] + b_ref[...] + r_ref[...].astype(jnp.float32)
        o_ref[...] = jnp.maximum(y, 0.0).astype(o_ref.dtype)


# ----------------------------- JAX glue (im2col) ---------------------------

def _im2col(x, kh, kw, stride, dilation, pad):
    """x: (N,H,W,C) -> patches (N,Ho,Wo,kh*kw*C), (i,j,c) ordering, dtype kept."""
    N, H, W, C = x.shape
    xp = jnp.pad(x, ((0, 0), (pad, pad), (pad, pad), (0, 0)))
    Ho = (H + 2 * pad - dilation * (kh - 1) - 1) // stride + 1
    Wo = (W + 2 * pad - dilation * (kw - 1) - 1) // stride + 1
    cols = []
    for i in range(kh):
        for j in range(kw):
            hi, wj = i * dilation, j * dilation
            patch = jax.lax.slice(
                xp,
                (0, hi, wj, 0),
                (N, hi + (Ho - 1) * stride + 1, wj + (Wo - 1) * stride + 1, C),
                (1, stride, stride, 1))
            cols.append(patch)                                   # (N, Ho, Wo, C)
    return jnp.stack(cols, axis=3).reshape(N, Ho, Wo, kh * kw * C)


# ----------------------------- fused conv + BN (+ReLU/+residual) -----------

def conv_bn(x, wm, b2, *, cin, kh, kw, stride, pad, relu, residual=None):
    """One conv+BN(+ReLU)(+residual) as a tiled MXU matmul.

    x        : NHWC bf16, channels possibly 128-padded; sliced to `cin` here.
    wm       : pre-packed (K_pad, C_pad) bf16 weights (BN scale folded in).
    b2       : pre-packed (1, C_pad) f32 bias (BN shift folded in).
    residual : NHWC bf16 with the output's spatial dims (channels <= C_pad).

    Returns NHWC bf16 with Cout padded to a multiple of 128; padded channels
    are exact zeros (zero weights / zero bias / zero residual padding).
    """
    x = x[..., :cin]                               # drop dead padded channels
    K = kh * kw * cin
    K_pad, tk = _k_geom(K)
    C_pad = wm.shape[1]
    _, tn = _n_geom(C_pad)
    assert wm.shape == (K_pad, C_pad), (wm.shape, K_pad, C_pad)

    patches = _im2col(x, kh, kw, stride, 1, pad)   # bf16
    N, Ho, Wo, _ = patches.shape
    M = N * Ho * Wo
    M_pad, tm = _m_geom(M)

    grid = (M_pad // tm, C_pad // tn, K_pad // tk)

    xm = patches.reshape(M, K)
    xm = jnp.pad(xm, ((0, M_pad - M), (0, K_pad - K)))   # stays bf16

    in_specs = [
        pl.BlockSpec((tm, tk), lambda i, j, k: (i, k)),
        pl.BlockSpec((tk, tn), lambda i, j, k: (k, j)),
        pl.BlockSpec((1, tn), lambda i, j, k: (0, j)),   # constant over k
    ]
    args = [xm, wm, b2]

    if residual is None:
        kernel = functools.partial(_mm_bias_kernel, relu=relu)
    else:
        assert relu, "residual path is always followed by ReLU in BasicBlock"
        Cr = residual.shape[-1]
        rm = residual.reshape(M, Cr).astype(jnp.bfloat16)
        rm = jnp.pad(rm, ((0, M_pad - M), (0, C_pad - Cr)))
        in_specs.append(pl.BlockSpec((tm, tn), lambda i, j, k: (i, j)))
        args.append(rm)
        kernel = _mm_bias_res_relu_kernel

    out = pl.pallas_call(
        kernel,
        out_shape=jax.ShapeDtypeStruct((M_pad, C_pad), jnp.bfloat16),
        grid_spec=pltpu.PrefetchScalarGridSpec(
            num_scalar_prefetch=0,
            grid=grid,
            in_specs=in_specs,
            out_specs=pl.BlockSpec((tm, tn), lambda i, j, k: (i, j)),
            scratch_shapes=[pltpu.VMEM((tm, tn), jnp.float32)],
        ),
        compiler_params=pltpu.CompilerParams(
            dimension_semantics=("parallel", "parallel", "arbitrary"),
            vmem_limit_bytes=32 * 1024 * 1024,   # safe on v7x's 64 MiB VMEM
        ),
    )(*args)

    return out[:M].reshape(N, Ho, Wo, C_pad)


# ----------------------------- max pool (plain JAX, real channels, bf16) ----

def maxpool_3x3_s2_p1(x):
    """nn.MaxPool2d(kernel_size=3, stride=2, padding=1) on NHWC (not hot)."""
    N, H, W, C = x.shape
    xp = jnp.pad(x, ((0, 0), (1, 1), (1, 1), (0, 0)),
                 constant_values=-jnp.inf)
    Ho = (H + 2 - 3) // 2 + 1
    Wo = (W + 2 - 3) // 2 + 1
    out = None
    for i in range(3):
        for j in range(3):
            tap = jax.lax.slice(
                xp,
                (0, i, j, 0),
                (N, i + (Ho - 1) * 2 + 1, j + (Wo - 1) * 2 + 1, C),
                (1, 2, 2, 1))
            out = tap if out is None else jnp.maximum(out, tap)
    return out


# ----------------------------- parameter init / packing --------------------

_BN_EPS = 1e-5

STAGE_BLOCKS = (2, 2, 2, 2)      # depth=18 -> BasicBlock, expansion=1
STRIDES = (1, 2, 2, 2)
IN_CHANNELS = 3
STEM_CHANNELS = 8
ORIGINAL_INPLANES = 8


def _init_conv(key, cout, cin, kh, kw):
    fan_in = cin * kh * kw
    return jax.random.normal(key, (cout, cin, kh, kw), jnp.float32) * (2.0 / fan_in) ** 0.5


def _init_bn(key, c):
    k1, k2, k3, k4 = jax.random.split(key, 4)
    gamma = jax.random.uniform(k1, (c,), minval=0.5, maxval=1.5)
    beta = jax.random.normal(k2, (c,)) * 0.1
    mean = jax.random.normal(k3, (c,)) * 0.1
    var = jax.random.uniform(k4, (c,), minval=0.5, maxval=1.5)
    scale = gamma / jnp.sqrt(var + _BN_EPS)          # eval-mode BN folded
    bias = beta - mean * scale
    return scale.astype(jnp.float32), bias.astype(jnp.float32)


def init_params(key, in_channels=IN_CHANNELS, stem_channels=STEM_CHANNELS,
                original_inplanes=ORIGINAL_INPLANES):
    params = {}
    keys = iter(jax.random.split(key, 256))
    params['conv1_w'] = _init_conv(next(keys), stem_channels, in_channels, 7, 7)
    params['bn1_scale'], params['bn1_bias'] = _init_bn(next(keys), stem_channels)
    inplanes = stem_channels
    for li, (nblocks, stride) in enumerate(zip(STAGE_BLOCKS, STRIDES)):
        planes = original_inplanes * 2 ** li
        for bi in range(nblocks):
            s = stride if bi == 0 else 1
            p = {}
            if bi == 0 and (s != 1 or inplanes != planes):
                p['down_w'] = _init_conv(next(keys), planes, inplanes, 1, 1)
                p['down_scale'], p['down_bias'] = _init_bn(next(keys), planes)
            p['conv1_w'] = _init_conv(next(keys), planes, inplanes, 3, 3)
            p['bn1_scale'], p['bn1_bias'] = _init_bn(next(keys), planes)
            p['conv2_w'] = _init_conv(next(keys), planes, planes, 3, 3)
            p['bn2_scale'], p['bn2_bias'] = _init_bn(next(keys), planes)
            params[f'layer{li + 1}_block{bi}'] = p
            inplanes = planes
    return params


def _pack_conv(w, scale, bias):
    """PyTorch-layout conv weight + eval BN -> (K_pad,C_pad) bf16 + (1,C_pad) f32."""
    cout, cin, kh, kw = w.shape
    K = kh * kw * cin
    K_pad, _ = _k_geom(K)
    C_pad, _ = _n_geom(cout)
    wf = w.astype(jnp.float32) * scale.astype(jnp.float32)[:, None, None, None]
    wm = jnp.transpose(wf, (2, 3, 1, 0)).reshape(K, cout)
    wm = jnp.pad(wm, ((0, K_pad - K), (0, C_pad - cout))).astype(jnp.bfloat16)
    b2 = jnp.pad(bias.astype(jnp.float32), (0, C_pad - cout)).reshape(1, C_pad)
    return wm, b2


def prepare_params(params):
    """One-time weight prep, OUTSIDE the jitted forward."""
    packed = {}
    packed['stem_w'], packed['stem_b'] = _pack_conv(
        params['conv1_w'], params['bn1_scale'], params['bn1_bias'])
    for li, (nblocks, _) in enumerate(zip(STAGE_BLOCKS, STRIDES)):
        for bi in range(nblocks):
            p = params[f'layer{li + 1}_block{bi}']
            q = {}
            if 'down_w' in p:
                q['down_w'], q['down_b'] = _pack_conv(
                    p['down_w'], p['down_scale'], p['down_bias'])
            q['conv1_w'], q['conv1_b'] = _pack_conv(
                p['conv1_w'], p['bn1_scale'], p['bn1_bias'])
            q['conv2_w'], q['conv2_b'] = _pack_conv(
                p['conv2_w'], p['bn2_scale'], p['bn2_bias'])
            packed[f'layer{li + 1}_block{bi}'] = q
    return packed


# ----------------------------- forward pass --------------------------------

def _resnet_forward_impl(packed, x_nchw):
    """Matches easycv ResNet(depth=18, out_indices=(0,1,2,3,4)).forward, eval."""
    x = jnp.transpose(x_nchw, (0, 2, 3, 1)).astype(jnp.bfloat16)  # NCHW -> NHWC

    # stem: conv7x7 s2 p3 -> BN -> ReLU   (output channel-padded to 128, bf16)
    x = conv_bn(x, packed['stem_w'], packed['stem_b'],
                cin=IN_CHANNELS, kh=7, kw=7, stride=2, pad=3, relu=True)
    outs = [(x, STEM_CHANNELS)]          # out_indices includes 0 (pre-maxpool)

    # max-pool on the real stem channels only (bf16)
    x = maxpool_3x3_s2_p1(x[..., :STEM_CHANNELS])

    inplanes = STEM_CHANNELS
    for li, (nblocks, stride) in enumerate(zip(STAGE_BLOCKS, STRIDES)):
        planes = ORIGINAL_INPLANES * 2 ** li
        for bi in range(nblocks):
            p = packed[f'layer{li + 1}_block{bi}']
            s = stride if bi == 0 else 1
            identity = x
            if 'down_w' in p:  # downsample branch: 1x1 conv -> BN (no ReLU)
                identity = conv_bn(x, p['down_w'], p['down_b'], cin=inplanes,
                                   kh=1, kw=1, stride=s, pad=0, relu=False)
            out = conv_bn(x, p['conv1_w'], p['conv1_b'], cin=inplanes,
                          kh=3, kw=3, stride=s, pad=1, relu=True)
            x = conv_bn(out, p['conv2_w'], p['conv2_b'], cin=planes,
                        kh=3, kw=3, stride=1, pad=1, relu=True,
                        residual=identity)
            inplanes = planes
        outs.append((x, planes))

    # strip channel padding on the returned feature maps, back to NCHW f32
    return [jnp.transpose(o[..., :c], (0, 3, 1, 2)).astype(jnp.float32)
            for o, c in outs]


resnet_forward = jax.jit(_resnet_forward_impl)


# ----------------------------- main -----------------------------------------

if __name__ == "__main__":
    key = jax.random.PRNGKey(0)
    kp, kx = jax.random.split(key)

    params = init_params(kp)
    packed = prepare_params(params)       # one-time weight pack, outside jit
    packed = jax.block_until_ready(packed)

    x = jax.random.normal(kx, (2, IN_CHANNELS, 32, 32), jnp.float32)  # NCHW

    outs = resnet_forward(packed, x)
    outs = jax.block_until_ready(outs)

    expected = [(2, 8, 16, 16), (2, 8, 8, 8), (2, 16, 4, 4), (2, 32, 2, 2), (2, 64, 1, 1)]
    assert len(outs) == len(expected)
    for o, e in zip(outs, expected):
        assert tuple(o.shape) == e, (o.shape, e)
        assert bool(jnp.all(jnp.isfinite(o)))

    print("KERNEL_OK")
</pallas_src>

<mosaic_0001>
module attributes {stable_mosaic.version = 11 : i64} {
  func.func @_mm_bias_kernel(%arg0: i32, %arg1: i32, %arg2: i32, %arg3: memref<128x256xbf16, #tpu.memory_space<vmem>>, %arg4: memref<256x128xbf16, #tpu.memory_space<vmem>>, %arg5: memref<1x128xf32, #tpu.memory_space<vmem>>, %arg6: memref<128x128xbf16, #tpu.memory_space<vmem>>, %arg7: memref<128x128xf32, #tpu.memory_space<vmem>>) attributes {dimension_semantics = [#tpu.dimension_semantics<parallel>, #tpu.dimension_semantics<parallel>, #tpu.dimension_semantics<arbitrary>], iteration_bounds = array<i64: 4, 1, 1>, scalar_prefetch = 0 : i64, scratch_operands = 1 : i64, tpu.core_type = #tpu.core_type<tc>, window_params = [{transform_indices = @transform_0, window_bounds = array<i64: 128, 256>}, {transform_indices = @transform_1, window_bounds = array<i64: 256, 128>}, {transform_indices = @transform_2, window_bounds = array<i64: 1, 128>}, {transform_indices = @transform_3, window_bounds = array<i64: 128, 128>}]} {
    %c0_i32 = arith.constant 0 : i32
    %0 = arith.cmpi eq, %arg2, %c0_i32 : i32
    %1 = arith.extui %0 : i1 to i32
    %c0_i32_0 = arith.constant 0 : i32
    %2 = arith.cmpi ne, %1, %c0_i32_0 : i32
    scf.if %2 {
      %cst_10 = arith.constant 0.000000e+00 : f32
      %12 = vector.broadcast %cst_10 : f32 to vector<128x128xf32>
      %c0_11 = arith.constant 0 : index
      %c0_12 = arith.constant 0 : index
      %13 = vector.load %arg7[%c0_11, %c0_12] : memref<128x128xf32, #tpu.memory_space<vmem>>, vector<128x128xf32>
      tpu.vector_store %arg7[%c0_11, %c0_12], %12 {strides = array<i32>} : memref<128x128xf32, #tpu.memory_space<vmem>>, vector<128x128xf32>,
    } else {
    }
    %c0 = arith.constant 0 : index
    %c0_1 = arith.constant 0 : index
    %3 = vector.load %arg7[%c0, %c0_1] : memref<128x128xf32, #tpu.memory_space<vmem>>, vector<128x128xf32>
    %c0_2 = arith.constant 0 : index
    %c0_3 = arith.constant 0 : index
    %4 = vector.load %arg3[%c0_2, %c0_3] : memref<128x256xbf16, #tpu.memory_space<vmem>>, vector<128x256xbf16>
    %c0_4 = arith.constant 0 : index
    %c0_5 = arith.constant 0 : index
    %5 = vector.load %arg4[%c0_4, %c0_5] : memref<256x128xbf16, #tpu.memory_space<vmem>>, vector<256x128xbf16>
    %cst = arith.constant dense<0.000000e+00> : vector<128x128xf32>
    %6 = tpu.matmul %4, %5, %cst {dimension_numbers = #tpu.dot_dimension_numbers<[1], [0], [0], [1], [0, 0, 1, 1], [], []>} : vector<128x256xbf16>, vector<256x128xbf16>, vector<128x128xf32> -> vector<128x128xf32>
    %7 = arith.addf %3, %6 : vector<128x128xf32>
    %c0_6 = arith.constant 0 : index
    %c0_7 = arith.constant 0 : index
    %8 = vector.load %arg7[%c0_6, %c0_7] : memref<128x128xf32, #tpu.memory_space<vmem>>, vector<128x128xf32>
    tpu.vector_store %arg7[%c0_6, %c0_7], %7 {strides = array<i32>} : memref<128x128xf32, #tpu.memory_space<vmem>>, vector<128x128xf32>,
    %c0_i32_8 = arith.constant 0 : i32
    %9 = arith.cmpi eq, %arg2, %c0_i32_8 : i32
    %10 = arith.extui %9 : i1 to i32
    %c0_i32_9 = arith.constant 0 : i32
    %11 = arith.cmpi ne, %10, %c0_i32_9 : i32
    scf.if %11 {
      %c0_10 = arith.constant 0 : index
      %c0_11 = arith.constant 0 : index
      %12 = vector.load %arg7[%c0_10, %c0_11] : memref<128x128xf32, #tpu.memory_space<vmem>>, vector<128x128xf32>
      %c0_12 = arith.constant 0 : index
      %c0_13 = arith.constant 0 : index
      %13 = vector.load %arg5[%c0_12, %c0_13] : memref<1x128xf32, #tpu.memory_space<vmem>>, vector<1x128xf32>
      %14 = vector.broadcast %13 : vector<1x128xf32> to vector<128x128xf32>
      %15 = arith.addf %12, %14 : vector<128x128xf32>
      %cst_14 = arith.constant 0.000000e+00 : f32
      %16 = vector.broadcast %cst_14 : f32 to vector<128x128xf32>
      %17 = arith.maximumf %15, %16 : vector<128x128xf32>
      %18 = arith.truncf %17 : vector<128x128xf32> to vector<128x128xbf16>
      %c0_15 = arith.constant 0 : index
      %c0_16 = arith.constant 0 : index
      %19 = vector.load %arg6[%c0_15, %c0_16] : memref<128x128xbf16, #tpu.memory_space<vmem>>, vector<128x128xbf16>
      tpu.vector_store %arg6[%c0_15, %c0_16], %18 {strides = array<i32>} : memref<128x128xbf16, #tpu.memory_space<vmem>>, vector<128x128xbf16>,
    } else {
    }
    return
  }
  func.func @transform_0(%arg0: i32, %arg1: i32, %arg2: i32) -> (i32, i32) {
    %c0_i32 = arith.constant 0 : i32
    return %arg0, %arg2 : i32, i32
  }
  func.func @transform_1(%arg0: i32, %arg1: i32, %arg2: i32) -> (i32, i32) {
    %c0_i32 = arith.constant 0 : i32
    return %arg2, %arg1 : i32, i32
  }
  func.func @transform_2(%arg0: i32, %arg1: i32, %arg2: i32) -> (i32, i32) {
    %c0_i32 = arith.constant 0 : i32
    %c0_i32_0 = arith.constant 0 : i32
    return %c0_i32, %arg1 : i32, i32
  }
  func.func @transform_3(%arg0: i32, %arg1: i32, %arg2: i32) -> (i32, i32) {
    %c0_i32 = arith.constant 0 : i32
    return %arg0, %arg1 : i32, i32
  }
}

module attributes {stable_mosaic.version = 11 : i64} {
  func.func @_mm_bias_kernel(%arg0: i32, %arg1: i32, %arg2: i32, %arg3: memref<64x128xbf16, #tpu.memory_space<vmem>>, %arg4: memref<128x128xbf16, #tpu.memory_space<vmem>>, %arg5: memref<1x128xf32, #tpu.memory_space<vmem>>, %arg6: memref<64x128xbf16, #tpu.memory_space<vmem>>, %arg7: memref<64x128xf32, #tpu.memory_space<vmem>>) attributes {dimension_semantics = [#tpu.dimension_semantics<parallel>, #tpu.dimension_semantics<parallel>, #tpu.dimension_semantics<arbitrary>], iteration_bounds = array<i64: 2, 1, 1>, scalar_prefetch = 0 : i64, scratch_operands = 1 : i64, tpu.core_type = #tpu.core_type<tc>, window_params = [{transform_indices = @transform_0, window_bounds = array<i64: 64, 128>}, {transform_indices = @transform_1, window_bounds = array<i64: 128, 128>}, {transform_indices = @transform_2, window_bounds = array<i64: 1, 128>}, {transform_indices = @transform_3, window_bounds = array<i64: 64, 128>}]} {
    %c0_i32 = arith.constant 0 : i32
    %0 = arith.cmpi eq, %arg2, %c0_i32 : i32
    %1 = arith.extui %0 : i1 to i32
    %c0_i32_0 = arith.constant 0 : i32
    %2 = arith.cmpi ne, %1, %c0_i32_0 : i32
    scf.if %2 {
      %cst_10 = arith.constant 0.000000e+00 : f32
      %12 = vector.broadcast %cst_10 : f32 to vector<64x128xf32>
      %c0_11 = arith.constant 0 : index
      %c0_12 = arith.constant 0 : index
      %13 = vector.load %arg7[%c0_11, %c0_12] : memref<64x128xf32, #tpu.memory_space<vmem>>, vector<64x128xf32>
      tpu.vector_store %arg7[%c0_11, %c0_12], %12 {strides = array<i32>} : memref<64x128xf32, #tpu.memory_space<vmem>>, vector<64x128xf32>,
    } else {
    }
    %c0 = arith.constant 0 : index
    %c0_1 = arith.constant 0 : index
    %3 = vector.load %arg7[%c0, %c0_1] : memref<64x128xf32, #tpu.memory_space<vmem>>, vector<64x128xf32>
    %c0_2 = arith.constant 0 : index
    %c0_3 = arith.constant 0 : index
    %4 = vector.load %arg3[%c0_2, %c0_3] : memref<64x128xbf16, #tpu.memory_space<vmem>>, vector<64x128xbf16>
    %c0_4 = arith.constant 0 : index
    %c0_5 = arith.constant 0 : index
    %5 = vector.load %arg4[%c0_4, %c0_5] : memref<128x128xbf16, #tpu.memory_space<vmem>>, vector<128x128xbf16>
    %cst = arith.constant dense<0.000000e+00> : vector<64x128xf32>
    %6 = tpu.matmul %4, %5, %cst {dimension_numbers = #tpu.dot_dimension_numbers<[1], [0], [0], [1], [0, 0, 1, 1], [], []>} : vector<64x128xbf16>, vector<128x128xbf16>, vector<64x128xf32> -> vector<64x128xf32>
    %7 = arith.addf %3, %6 : vector<64x128xf32>
    %c0_6 = arith.constant 0 : index
    %c0_7 = arith.constant 0 : index
    %8 = vector.load %arg7[%c0_6, %c0_7] : memref<64x128xf32, #tpu.memory_space<vmem>>, vector<64x128xf32>
    tpu.vector_store %arg7[%c0_6, %c0_7], %7 {strides = array<i32>} : memref<64x128xf32, #tpu.memory_space<vmem>>, vector<64x128xf32>,
    %c0_i32_8 = arith.constant 0 : i32
    %9 = arith.cmpi eq, %arg2, %c0_i32_8 : i32
    %10 = arith.extui %9 : i1 to i32
    %c0_i32_9 = arith.constant 0 : i32
    %11 = arith.cmpi ne, %10, %c0_i32_9 : i32
    scf.if %11 {
      %c0_10 = arith.constant 0 : index
      %c0_11 = arith.constant 0 : index
      %12 = vector.load %arg7[%c0_10, %c0_11] : memref<64x128xf32, #tpu.memory_space<vmem>>, vector<64x128xf32>
      %c0_12 = arith.constant 0 : index
      %c0_13 = arith.constant 0 : index
      %13 = vector.load %arg5[%c0_12, %c0_13] : memref<1x128xf32, #tpu.memory_space<vmem>>, vector<1x128xf32>
      %14 = vector.broadcast %13 : vector<1x128xf32> to vector<64x128xf32>
      %15 = arith.addf %12, %14 : vector<64x128xf32>
      %cst_14 = arith.constant 0.000000e+00 : f32
      %16 = vector.broadcast %cst_14 : f32 to vector<64x128xf32>
      %17 = arith.maximumf %15, %16 : vector<64x128xf32>
      %18 = arith.truncf %17 : vector<64x128xf32> to vector<64x128xbf16>
      %c0_15 = arith.constant 0 : index
      %c0_16 = arith.constant 0 : index
      %19 = vector.load %arg6[%c0_15, %c0_16] : memref<64x128xbf16, #tpu.memory_space<vmem>>, vector<64x128xbf16>
      tpu.vector_store %arg6[%c0_15, %c0_16], %18 {strides = array<i32>} : memref<64x128xbf16, #tpu.memory_space<vmem>>, vector<64x128xbf16>,
    } else {
    }
    return
  }
  func.func @transform_0(%arg0: i32, %arg1: i32, %arg2: i32) -> (i32, i32) {
    %c0_i32 = arith.constant 0 : i32
    return %arg0, %arg2 : i32, i32
  }
  func.func @transform_1(%arg0: i32, %arg1: i32, %arg2: i32) -> (i32, i32) {
    %c0_i32 = arith.constant 0 : i32
    return %arg2, %arg1 : i32, i32
  }
  func.func @transform_2(%arg0: i32, %arg1: i32, %arg2: i32) -> (i32, i32) {
    %c0_i32 = arith.constant 0 : i32
    %c0_i32_0 = arith.constant 0 : i32
    return %c0_i32, %arg1 : i32, i32
  }
  func.func @transform_3(%arg0: i32, %arg1: i32, %arg2: i32) -> (i32, i32) {
    %c0_i32 = arith.constant 0 : i32
    return %arg0, %arg1 : i32, i32
  }
}

module attributes {stable_mosaic.version = 11 : i64} {
  func.func @_mm_bias_res_relu_kernel(%arg0: i32, %arg1: i32, %arg2: i32, %arg3: memref<64x128xbf16, #tpu.memory_space<vmem>>, %arg4: memref<128x128xbf16, #tpu.memory_space<vmem>>, %arg5: memref<1x128xf32, #tpu.memory_space<vmem>>, %arg6: memref<64x128xbf16, #tpu.memory_space<vmem>>, %arg7: memref<64x128xbf16, #tpu.memory_space<vmem>>, %arg8: memref<64x128xf32, #tpu.memory_space<vmem>>) attributes {dimension_semantics = [#tpu.dimension_semantics<parallel>, #tpu.dimension_semantics<parallel>, #tpu.dimension_semantics<arbitrary>], iteration_bounds = array<i64: 2, 1, 1>, scalar_prefetch = 0 : i64, scratch_operands = 1 : i64, tpu.core_type = #tpu.core_type<tc>, window_params = [{transform_indices = @transform_0, window_bounds = array<i64: 64, 128>}, {transform_indices = @transform_1, window_bounds = array<i64: 128, 128>}, {transform_indices = @transform_2, window_bounds = array<i64: 1, 128>}, {transform_indices = @transform_3, window_bounds = array<i64: 64, 128>}, {transform_indices = @transform_4, window_bounds = array<i64: 64, 128>}]} {
    %c0_i32 = arith.constant 0 : i32
    %0 = arith.cmpi eq, %arg2, %c0_i32 : i32
    %1 = arith.extui %0 : i1 to i32
    %c0_i32_0 = arith.constant 0 : i32
    %2 = arith.cmpi ne, %1, %c0_i32_0 : i32
    scf.if %2 {
      %cst_10 = arith.constant 0.000000e+00 : f32
      %12 = vector.broadcast %cst_10 : f32 to vector<64x128xf32>
      %c0_11 = arith.constant 0 : index
      %c0_12 = arith.constant 0 : index
      %13 = vector.load %arg8[%c0_11, %c0_12] : memref<64x128xf32, #tpu.memory_space<vmem>>, vector<64x128xf32>
      tpu.vector_store %arg8[%c0_11, %c0_12], %12 {strides = array<i32>} : memref<64x128xf32, #tpu.memory_space<vmem>>, vector<64x128xf32>,
    } else {
    }
    %c0 = arith.constant 0 : index
    %c0_1 = arith.constant 0 : index
    %3 = vector.load %arg8[%c0, %c0_1] : memref<64x128xf32, #tpu.memory_space<vmem>>, vector<64x128xf32>
    %c0_2 = arith.constant 0 : index
    %c0_3 = arith.constant 0 : index
    %4 = vector.load %arg3[%c0_2, %c0_3] : memref<64x128xbf16, #tpu.memory_space<vmem>>, vector<64x128xbf16>
    %c0_4 = arith.constant 0 : index
    %c0_5 = arith.constant 0 : index
    %5 = vector.load %arg4[%c0_4, %c0_5] : memref<128x128xbf16, #tpu.memory_space<vmem>>, vector<128x128xbf16>
    %cst = arith.constant dense<0.000000e+00> : vector<64x128xf32>
    %6 = tpu.matmul %4, %5, %cst {dimension_numbers = #tpu.dot_dimension_numbers<[1], [0], [0], [1], [0, 0, 1, 1], [], []>} : vector<64x128xbf16>, vector<128x128xbf16>, vector<64x128xf32> -> vector<64x128xf32>
    %7 = arith.addf %3, %6 : vector<64x128xf32>
    %c0_6 = arith.constant 0 : index
    %c0_7 = arith.constant 0 : index
    %8 = vector.load %arg8[%c0_6, %c0_7] : memref<64x128xf32, #tpu.memory_space<vmem>>, vector<64x128xf32>
    tpu.vector_store %arg8[%c0_6, %c0_7], %7 {strides = array<i32>} : memref<64x128xf32, #tpu.memory_space<vmem>>, vector<64x128xf32>,
    %c0_i32_8 = arith.constant 0 : i32
    %9 = arith.cmpi eq, %arg2, %c0_i32_8 : i32
    %10 = arith.extui %9 : i1 to i32
    %c0_i32_9 = arith.constant 0 : i32
    %11 = arith.cmpi ne, %10, %c0_i32_9 : i32
    scf.if %11 {
      %c0_10 = arith.constant 0 : index
      %c0_11 = arith.constant 0 : index
      %12 = vector.load %arg8[%c0_10, %c0_11] : memref<64x128xf32, #tpu.memory_space<vmem>>, vector<64x128xf32>
      %c0_12 = arith.constant 0 : index
      %c0_13 = arith.constant 0 : index
      %13 = vector.load %arg5[%c0_12, %c0_13] : memref<1x128xf32, #tpu.memory_space<vmem>>, vector<1x128xf32>
      %14 = vector.broadcast %13 : vector<1x128xf32> to vector<64x128xf32>
      %15 = arith.addf %12, %14 : vector<64x128xf32>
      %c0_14 = arith.constant 0 : index
      %c0_15 = arith.constant 0 : index
      %16 = vector.load %arg6[%c0_14, %c0_15] : memref<64x128xbf16, #tpu.memory_space<vmem>>, vector<64x128xbf16>
      %17 = arith.extf %16 : vector<64x128xbf16> to vector<64x128xf32>
      %18 = arith.addf %15, %17 : vector<64x128xf32>
      %cst_16 = arith.constant 0.000000e+00 : f32
      %19 = vector.broadcast %cst_16 : f32 to vector<64x128xf32>
      %20 = arith.maximumf %18, %19 : vector<64x128xf32>
      %21 = arith.truncf %20 : vector<64x128xf32> to vector<64x128xbf16>
      %c0_17 = arith.constant 0 : index
      %c0_18 = arith.constant 0 : index
      %22 = vector.load %arg7[%c0_17, %c0_18] : memref<64x128xbf16, #tpu.memory_space<vmem>>, vector<64x128xbf16>
      tpu.vector_store %arg7[%c0_17, %c0_18], %21 {strides = array<i32>} : memref<64x128xbf16, #tpu.memory_space<vmem>>, vector<64x128xbf16>,
    } else {
    }
    return
  }
  func.func @transform_0(%arg0: i32, %arg1: i32, %arg2: i32) -> (i32, i32) {
    %c0_i32 = arith.constant 0 : i32
    return %arg0, %arg2 : i32, i32
  }
  func.func @transform_1(%arg0: i32, %arg1: i32, %arg2: i32) -> (i32, i32) {
    %c0_i32 = arith.constant 0 : i32
    return %arg2, %arg1 : i32, i32
  }
  func.func @transform_2(%arg0: i32, %arg1: i32, %arg2: i32) -> (i32, i32) {
    %c0_i32 = arith.constant 0 : i32
    %c0_i32_0 = arith.constant 0 : i32
    return %c0_i32, %arg1 : i32, i32
  }
  func.func @transform_3(%arg0: i32, %arg1: i32, %arg2: i32) -> (i32, i32) {
    %c0_i32 = arith.constant 0 : i32
    return %arg0, %arg1 : i32, i32
  }
  func.func @transform_4(%arg0: i32, %arg1: i32, %arg2: i32) -> (i32, i32) {
    %c0_i32 = arith.constant 0 : i32
    return %arg0, %arg1 : i32, i32
  }
}

module attributes {stable_mosaic.version = 11 : i64} {
  func.func @_mm_bias_kernel(%arg0: i32, %arg1: i32, %arg2: i32, %arg3: memref<16x128xbf16, #tpu.memory_space<vmem>>, %arg4: memref<128x128xbf16, #tpu.memory_space<vmem>>, %arg5: memref<1x128xf32, #tpu.memory_space<vmem>>, %arg6: memref<16x128xbf16, #tpu.memory_space<vmem>>, %arg7: memref<16x128xf32, #tpu.memory_space<vmem>>) attributes {dimension_semantics = [#tpu.dimension_semantics<parallel>, #tpu.dimension_semantics<parallel>, #tpu.dimension_semantics<arbitrary>], iteration_bounds = array<i64: 2, 1, 1>, scalar_prefetch = 0 : i64, scratch_operands = 1 : i64, tpu.core_type = #tpu.core_type<tc>, window_params = [{transform_indices = @transform_0, window_bounds = array<i64: 16, 128>}, {transform_indices = @transform_1, window_bounds = array<i64: 128, 128>}, {transform_indices = @transform_2, window_bounds = array<i64: 1, 128>}, {transform_indices = @transform_3, window_bounds = array<i64: 16, 128>}]} {
    %c0_i32 = arith.constant 0 : i32
    %0 = arith.cmpi eq, %arg2, %c0_i32 : i32
    %1 = arith.extui %0 : i1 to i32
    %c0_i32_0 = arith.constant 0 : i32
    %2 = arith.cmpi ne, %1, %c0_i32_0 : i32
    scf.if %2 {
      %cst_10 = arith.constant 0.000000e+00 : f32
      %12 = vector.broadcast %cst_10 : f32 to vector<16x128xf32>
      %c0_11 = arith.constant 0 : index
      %c0_12 = arith.constant 0 : index
      %13 = vector.load %arg7[%c0_11, %c0_12] : memref<16x128xf32, #tpu.memory_space<vmem>>, vector<16x128xf32>
      tpu.vector_store %arg7[%c0_11, %c0_12], %12 {strides = array<i32>} : memref<16x128xf32, #tpu.memory_space<vmem>>, vector<16x128xf32>,
    } else {
    }
    %c0 = arith.constant 0 : index
    %c0_1 = arith.constant 0 : index
    %3 = vector.load %arg7[%c0, %c0_1] : memref<16x128xf32, #tpu.memory_space<vmem>>, vector<16x128xf32>
    %c0_2 = arith.constant 0 : index
    %c0_3 = arith.constant 0 : index
    %4 = vector.load %arg3[%c0_2, %c0_3] : memref<16x128xbf16, #tpu.memory_space<vmem>>, vector<16x128xbf16>
    %c0_4 = arith.constant 0 : index
    %c0_5 = arith.constant 0 : index
    %5 = vector.load %arg4[%c0_4, %c0_5] : memref<128x128xbf16, #tpu.memory_space<vmem>>, vector<128x128xbf16>
    %cst = arith.constant dense<0.000000e+00> : vector<16x128xf32>
    %6 = tpu.matmul %4, %5, %cst {dimension_numbers = #tpu.dot_dimension_numbers<[1], [0], [0], [1], [0, 0, 1, 1], [], []>} : vector<16x128xbf16>, vector<128x128xbf16>, vector<16x128xf32> -> vector<16x128xf32>
    %7 = arith.addf %3, %6 : vector<16x128xf32>
    %c0_6 = arith.constant 0 : index
    %c0_7 = arith.constant 0 : index
    %8 = vector.load %arg7[%c0_6, %c0_7] : memref<16x128xf32, #tpu.memory_space<vmem>>, vector<16x128xf32>
    tpu.vector_store %arg7[%c0_6, %c0_7], %7 {strides = array<i32>} : memref<16x128xf32, #tpu.memory_space<vmem>>, vector<16x128xf32>,
    %c0_i32_8 = arith.constant 0 : i32
    %9 = arith.cmpi eq, %arg2, %c0_i32_8 : i32
    %10 = arith.extui %9 : i1 to i32
    %c0_i32_9 = arith.constant 0 : i32
    %11 = arith.cmpi ne, %10, %c0_i32_9 : i32
    scf.if %11 {
      %c0_10 = arith.constant 0 : index
      %c0_11 = arith.constant 0 : index
      %12 = vector.load %arg7[%c0_10, %c0_11] : memref<16x128xf32, #tpu.memory_space<vmem>>, vector<16x128xf32>
      %c0_12 = arith.constant 0 : index
      %c0_13 = arith.constant 0 : index
      %13 = vector.load %arg5[%c0_12, %c0_13] : memref<1x128xf32, #tpu.memory_space<vmem>>, vector<1x128xf32>
      %14 = vector.broadcast %13 : vector<1x128xf32> to vector<16x128xf32>
      %15 = arith.addf %12, %14 : vector<16x128xf32>
      %cst_14 = arith.constant 0.000000e+00 : f32
      %16 = vector.broadcast %cst_14 : f32 to vector<16x128xf32>
      %17 = arith.maximumf %15, %16 : vector<16x128xf32>
      %18 = arith.truncf %17 : vector<16x128xf32> to vector<16x128xbf16>
      %c0_15 = arith.constant 0 : index
      %c0_16 = arith.constant 0 : index
      %19 = vector.load %arg6[%c0_15, %c0_16] : memref<16x128xbf16, #tpu.memory_space<vmem>>, vector<16x128xbf16>
      tpu.vector_store %arg6[%c0_15, %c0_16], %18 {strides = array<i32>} : memref<16x128xbf16, #tpu.memory_space<vmem>>, vector<16x128xbf16>,
    } else {
    }
    return
  }
  func.func @transform_0(%arg0: i32, %arg1: i32, %arg2: i32) -> (i32, i32) {
    %c0_i32 = arith.constant 0 : i32
    return %arg0, %arg2 : i32, i32
  }
  func.func @transform_1(%arg0: i32, %arg1: i32, %arg2: i32) -> (i32, i32) {
    %c0_i32 = arith.constant 0 : i32
    return %arg2, %arg1 : i32, i32
  }
  func.func @transform_2(%arg0: i32, %arg1: i32, %arg2: i32) -> (i32, i32) {
    %c0_i32 = arith.constant 0 : i32
    %c0_i32_0 = arith.constant 0 : i32
    return %c0_i32, %arg1 : i32, i32
  }
  func.func @transform_3(%arg0: i32, %arg1: i32, %arg2: i32) -> (i32, i32) {
    %c0_i32 = arith.constant 0 : i32
    return %arg0, %arg1 : i32, i32
  }
}

module attributes {stable_mosaic.version = 11 : i64} {
  func.func @_mm_bias_res_relu_kernel(%arg0: i32, %arg1: i32, %arg2: i32, %arg3: memref<16x256xbf16, #tpu.memory_space<vmem>>, %arg4: memref<256x128xbf16, #tpu.memory_space<vmem>>, %arg5: memref<1x128xf32, #tpu.memory_space<vmem>>, %arg6: memref<16x128xbf16, #tpu.memory_space<vmem>>, %arg7: memref<16x128xbf16, #tpu.memory_space<vmem>>, %arg8: memref<16x128xf32, #tpu.memory_space<vmem>>) attributes {dimension_semantics = [#tpu.dimension_semantics<parallel>, #tpu.dimension_semantics<parallel>, #tpu.dimension_semantics<arbitrary>], iteration_bounds = array<i64: 2, 1, 1>, scalar_prefetch = 0 : i64, scratch_operands = 1 : i64, tpu.core_type = #tpu.core_type<tc>, window_params = [{transform_indices = @transform_0, window_bounds = array<i64: 16, 256>}, {transform_indices = @transform_1, window_bounds = array<i64: 256, 128>}, {transform_indices = @transform_2, window_bounds = array<i64: 1, 128>}, {transform_indices = @transform_3, window_bounds = array<i64: 16, 128>}, {transform_indices = @transform_4, window_bounds = array<i64: 16, 128>}]} {
    %c0_i32 = arith.constant 0 : i32
    %0 = arith.cmpi eq, %arg2, %c0_i32 : i32
    %1 = arith.extui %0 : i1 to i32
    %c0_i32_0 = arith.constant 0 : i32
    %2 = arith.cmpi ne, %1, %c0_i32_0 : i32
    scf.if %2 {
      %cst_10 = arith.constant 0.000000e+00 : f32
      %12 = vector.broadcast %cst_10 : f32 to vector<16x128xf32>
      %c0_11 = arith.constant 0 : index
      %c0_12 = arith.constant 0 : index
      %13 = vector.load %arg8[%c0_11, %c0_12] : memref<16x128xf32, #tpu.memory_space<vmem>>, vector<16x128xf32>
      tpu.vector_store %arg8[%c0_11, %c0_12], %12 {strides = array<i32>} : memref<16x128xf32, #tpu.memory_space<vmem>>, vector<16x128xf32>,
    } else {
    }
    %c0 = arith.constant 0 : index
    %c0_1 = arith.constant 0 : index
    %3 = vector.load %arg8[%c0, %c0_1] : memref<16x128xf32, #tpu.memory_space<vmem>>, vector<16x128xf32>
    %c0_2 = arith.constant 0 : index
    %c0_3 = arith.constant 0 : index
    %4 = vector.load %arg3[%c0_2, %c0_3] : memref<16x256xbf16, #tpu.memory_space<vmem>>, vector<16x256xbf16>
    %c0_4 = arith.constant 0 : index
    %c0_5 = arith.constant 0 : index
    %5 = vector.load %arg4[%c0_4, %c0_5] : memref<256x128xbf16, #tpu.memory_space<vmem>>, vector<256x128xbf16>
    %cst = arith.constant dense<0.000000e+00> : vector<16x128xf32>
    %6 = tpu.matmul %4, %5, %cst {dimension_numbers = #tpu.dot_dimension_numbers<[1], [0], [0], [1], [0, 0, 1, 1], [], []>} : vector<16x256xbf16>, vector<256x128xbf16>, vector<16x128xf32> -> vector<16x128xf32>
    %7 = arith.addf %3, %6 : vector<16x128xf32>
    %c0_6 = arith.constant 0 : index
    %c0_7 = arith.constant 0 : index
    %8 = vector.load %arg8[%c0_6, %c0_7] : memref<16x128xf32, #tpu.memory_space<vmem>>, vector<16x128xf32>
    tpu.vector_store %arg8[%c0_6, %c0_7], %7 {strides = array<i32>} : memref<16x128xf32, #tpu.memory_space<vmem>>, vector<16x128xf32>,
    %c0_i32_8 = arith.constant 0 : i32
    %9 = arith.cmpi eq, %arg2, %c0_i32_8 : i32
    %10 = arith.extui %9 : i1 to i32
    %c0_i32_9 = arith.constant 0 : i32
    %11 = arith.cmpi ne, %10, %c0_i32_9 : i32
    scf.if %11 {
      %c0_10 = arith.constant 0 : index
      %c0_11 = arith.constant 0 : index
      %12 = vector.load %arg8[%c0_10, %c0_11] : memref<16x128xf32, #tpu.memory_space<vmem>>, vector<16x128xf32>
      %c0_12 = arith.constant 0 : index
      %c0_13 = arith.constant 0 : index
      %13 = vector.load %arg5[%c0_12, %c0_13] : memref<1x128xf32, #tpu.memory_space<vmem>>, vector<1x128xf32>
      %14 = vector.broadcast %13 : vector<1x128xf32> to vector<16x128xf32>
      %15 = arith.addf %12, %14 : vector<16x128xf32>
      %c0_14 = arith.constant 0 : index
      %c0_15 = arith.constant 0 : index
      %16 = vector.load %arg6[%c0_14, %c0_15] : memref<16x128xbf16, #tpu.memory_space<vmem>>, vector<16x128xbf16>
      %17 = arith.extf %16 : vector<16x128xbf16> to vector<16x128xf32>
      %18 = arith.addf %15, %17 : vector<16x128xf32>
      %cst_16 = arith.constant 0.000000e+00 : f32
      %19 = vector.broadcast %cst_16 : f32 to vector<16x128xf32>
      %20 = arith.maximumf %18, %19 : vector<16x128xf32>
      %21 = arith.truncf %20 : vector<16x128xf32> to vector<16x128xbf16>
      %c0_17 = arith.constant 0 : index
      %c0_18 = arith.constant 0 : index
      %22 = vector.load %arg7[%c0_17, %c0_18] : memref<16x128xbf16, #tpu.memory_space<vmem>>, vector<16x128xbf16>
      tpu.vector_store %arg7[%c0_17, %c0_18], %21 {strides = array<i32>} : memref<16x128xbf16, #tpu.memory_space<vmem>>, vector<16x128xbf16>,
    } else {
    }
    return
  }
  func.func @transform_0(%arg0: i32, %arg1: i32, %arg2: i32) -> (i32, i32) {
    %c0_i32 = arith.constant 0 : i32
    return %arg0, %arg2 : i32, i32
  }
  func.func @transform_1(%arg0: i32, %arg1: i32, %arg2: i32) -> (i32, i32) {
    %c0_i32 = arith.constant 0 : i32
    return %arg2, %arg1 : i32, i32
  }
  func.func @transform_2(%arg0: i32, %arg1: i32, %arg2: i32) -> (i32, i32) {
    %c0_i32 = arith.constant 0 : i32
    %c0_i32_0 = arith.constant 0 : i32
    return %c0_i32, %arg1 : i32, i32
  }
  func.func @transform_3(%arg0: i32, %arg1: i32, %arg2: i32) -> (i32, i32) {
    %c0_i32 = arith.constant 0 : i32
    return %arg0, %arg1 : i32, i32
  }
  func.func @transform_4(%arg0: i32, %arg1: i32, %arg2: i32) -> (i32, i32) {
    %c0_i32 = arith.constant 0 : i32
    return %arg0, %arg1 : i32, i32
  }
}

module attributes {stable_mosaic.version = 11 : i64} {
  func.func @_mm_bias_kernel(%arg0: i32, %arg1: i32, %arg2: i32, %arg3: memref<16x128xbf16, #tpu.memory_space<vmem>>, %arg4: memref<128x128xbf16, #tpu.memory_space<vmem>>, %arg5: memref<1x128xf32, #tpu.memory_space<vmem>>, %arg6: memref<16x128xbf16, #tpu.memory_space<vmem>>, %arg7: memref<16x128xf32, #tpu.memory_space<vmem>>) attributes {dimension_semantics = [#tpu.dimension_semantics<parallel>, #tpu.dimension_semantics<parallel>, #tpu.dimension_semantics<arbitrary>], iteration_bounds = array<i64: 2, 1, 1>, scalar_prefetch = 0 : i64, scratch_operands = 1 : i64, tpu.core_type = #tpu.core_type<tc>, window_params = [{transform_indices = @transform_0, window_bounds = array<i64: 16, 128>}, {transform_indices = @transform_1, window_bounds = array<i64: 128, 128>}, {transform_indices = @transform_2, window_bounds = array<i64: 1, 128>}, {transform_indices = @transform_3, window_bounds = array<i64: 16, 128>}]} {
    %c0_i32 = arith.constant 0 : i32
    %0 = arith.cmpi eq, %arg2, %c0_i32 : i32
    %1 = arith.extui %0 : i1 to i32
    %c0_i32_0 = arith.constant 0 : i32
    %2 = arith.cmpi ne, %1, %c0_i32_0 : i32
    scf.if %2 {
      %cst_10 = arith.constant 0.000000e+00 : f32
      %12 = vector.broadcast %cst_10 : f32 to vector<16x128xf32>
      %c0_11 = arith.constant 0 : index
      %c0_12 = arith.constant 0 : index
      %13 = vector.load %arg7[%c0_11, %c0_12] : memref<16x128xf32, #tpu.memory_space<vmem>>, vector<16x128xf32>
      tpu.vector_store %arg7[%c0_11, %c0_12], %12 {strides = array<i32>} : memref<16x128xf32, #tpu.memory_space<vmem>>, vector<16x128xf32>,
    } else {
    }
    %c0 = arith.constant 0 : index
    %c0_1 = arith.constant 0 : index
    %3 = vector.load %arg7[%c0, %c0_1] : memref<16x128xf32, #tpu.memory_space<vmem>>, vector<16x128xf32>
    %c0_2 = arith.constant 0 : index
    %c0_3 = arith.constant 0 : index
    %4 = vector.load %arg3[%c0_2, %c0_3] : memref<16x128xbf16, #tpu.memory_space<vmem>>, vector<16x128xbf16>
    %c0_4 = arith.constant 0 : index
    %c0_5 = arith.constant 0 : index
    %5 = vector.load %arg4[%c0_4, %c0_5] : memref<128x128xbf16, #tpu.memory_space<vmem>>, vector<128x128xbf16>
    %cst = arith.constant dense<0.000000e+00> : vector<16x128xf32>
    %6 = tpu.matmul %4, %5, %cst {dimension_numbers = #tpu.dot_dimension_numbers<[1], [0], [0], [1], [0, 0, 1, 1], [], []>} : vector<16x128xbf16>, vector<128x128xbf16>, vector<16x128xf32> -> vector<16x128xf32>
    %7 = arith.addf %3, %6 : vector<16x128xf32>
    %c0_6 = arith.constant 0 : index
    %c0_7 = arith.constant 0 : index
    %8 = vector.load %arg7[%c0_6, %c0_7] : memref<16x128xf32, #tpu.memory_space<vmem>>, vector<16x128xf32>
    tpu.vector_store %arg7[%c0_6, %c0_7], %7 {strides = array<i32>} : memref<16x128xf32, #tpu.memory_space<vmem>>, vector<16x128xf32>,
    %c0_i32_8 = arith.constant 0 : i32
    %9 = arith.cmpi eq, %arg2, %c0_i32_8 : i32
    %10 = arith.extui %9 : i1 to i32
    %c0_i32_9 = arith.constant 0 : i32
    %11 = arith.cmpi ne, %10, %c0_i32_9 : i32
    scf.if %11 {
      %c0_10 = arith.constant 0 : index
      %c0_11 = arith.constant 0 : index
      %12 = vector.load %arg7[%c0_10, %c0_11] : memref<16x128xf32, #tpu.memory_space<vmem>>, vector<16x128xf32>
      %c0_12 = arith.constant 0 : index
      %c0_13 = arith.constant 0 : index
      %13 = vector.load %arg5[%c0_12, %c0_13] : memref<1x128xf32, #tpu.memory_space<vmem>>, vector<1x128xf32>
      %14 = vector.broadcast %13 : vector<1x128xf32> to vector<16x128xf32>
      %15 = arith.addf %12, %14 : vector<16x128xf32>
      %16 = arith.truncf %15 : vector<16x128xf32> to vector<16x128xbf16>
      %c0_14 = arith.constant 0 : index
      %c0_15 = arith.constant 0 : index
      %17 = vector.load %arg6[%c0_14, %c0_15] : memref<16x128xbf16, #tpu.memory_space<vmem>>, vector<16x128xbf16>
      tpu.vector_store %arg6[%c0_14, %c0_15], %16 {strides = array<i32>} : memref<16x128xbf16, #tpu.memory_space<vmem>>, vector<16x128xbf16>,
    } else {
    }
    return
  }
  func.func @transform_0(%arg0: i32, %arg1: i32, %arg2: i32) -> (i32, i32) {
    %c0_i32 = arith.constant 0 : i32
    return %arg0, %arg2 : i32, i32
  }
  func.func @transform_1(%arg0: i32, %arg1: i32, %arg2: i32) -> (i32, i32) {
    %c0_i32 = arith.constant 0 : i32
    return %arg2, %arg1 : i32, i32
  }
  func.func @transform_2(%arg0: i32, %arg1: i32, %arg2: i32) -> (i32, i32) {
    %c0_i32 = arith.constant 0 : i32
    %c0_i32_0 = arith.constant 0 : i32
    return %c0_i32, %arg1 : i32, i32
  }
  func.func @transform_3(%arg0: i32, %arg1: i32, %arg2: i32) -> (i32, i32) {
    %c0_i32 = arith.constant 0 : i32
    return %arg0, %arg1 : i32, i32
  }
}

module attributes {stable_mosaic.version = 11 : i64} {
  func.func @_mm_bias_kernel(%arg0: i32, %arg1: i32, %arg2: i32, %arg3: memref<16x256xbf16, #tpu.memory_space<vmem>>, %arg4: memref<256x128xbf16, #tpu.memory_space<vmem>>, %arg5: memref<1x128xf32, #tpu.memory_space<vmem>>, %arg6: memref<16x128xbf16, #tpu.memory_space<vmem>>, %arg7: memref<16x128xf32, #tpu.memory_space<vmem>>) attributes {dimension_semantics = [#tpu.dimension_semantics<parallel>, #tpu.dimension_semantics<parallel>, #tpu.dimension_semantics<arbitrary>], iteration_bounds = array<i64: 2, 1, 1>, scalar_prefetch = 0 : i64, scratch_operands = 1 : i64, tpu.core_type = #tpu.core_type<tc>, window_params = [{transform_indices = @transform_0, window_bounds = array<i64: 16, 256>}, {transform_indices = @transform_1, window_bounds = array<i64: 256, 128>}, {transform_indices = @transform_2, window_bounds = array<i64: 1, 128>}, {transform_indices = @transform_3, window_bounds = array<i64: 16, 128>}]} {
    %c0_i32 = arith.constant 0 : i32
    %0 = arith.cmpi eq, %arg2, %c0_i32 : i32
    %1 = arith.extui %0 : i1 to i32
    %c0_i32_0 = arith.constant 0 : i32
    %2 = arith.cmpi ne, %1, %c0_i32_0 : i32
    scf.if %2 {
      %cst_10 = arith.constant 0.000000e+00 : f32
      %12 = vector.broadcast %cst_10 : f32 to vector<16x128xf32>
      %c0_11 = arith.constant 0 : index
      %c0_12 = arith.constant 0 : index
      %13 = vector.load %arg7[%c0_11, %c0_12] : memref<16x128xf32, #tpu.memory_space<vmem>>, vector<16x128xf32>
      tpu.vector_store %arg7[%c0_11, %c0_12], %12 {strides = array<i32>} : memref<16x128xf32, #tpu.memory_space<vmem>>, vector<16x128xf32>,
    } else {
    }
    %c0 = arith.constant 0 : index
    %c0_1 = arith.constant 0 : index
    %3 = vector.load %arg7[%c0, %c0_1] : memref<16x128xf32, #tpu.memory_space<vmem>>, vector<16x128xf32>
    %c0_2 = arith.constant 0 : index
    %c0_3 = arith.constant 0 : index
    %4 = vector.load %arg3[%c0_2, %c0_3] : memref<16x256xbf16, #tpu.memory_space<vmem>>, vector<16x256xbf16>
    %c0_4 = arith.constant 0 : index
    %c0_5 = arith.constant 0 : index
    %5 = vector.load %arg4[%c0_4, %c0_5] : memref<256x128xbf16, #tpu.memory_space<vmem>>, vector<256x128xbf16>
    %cst = arith.constant dense<0.000000e+00> : vector<16x128xf32>
    %6 = tpu.matmul %4, %5, %cst {dimension_numbers = #tpu.dot_dimension_numbers<[1], [0], [0], [1], [0, 0, 1, 1], [], []>} : vector<16x256xbf16>, vector<256x128xbf16>, vector<16x128xf32> -> vector<16x128xf32>
    %7 = arith.addf %3, %6 : vector<16x128xf32>
    %c0_6 = arith.constant 0 : index
    %c0_7 = arith.constant 0 : index
    %8 = vector.load %arg7[%c0_6, %c0_7] : memref<16x128xf32, #tpu.memory_space<vmem>>, vector<16x128xf32>
    tpu.vector_store %arg7[%c0_6, %c0_7], %7 {strides = array<i32>} : memref<16x128xf32, #tpu.memory_space<vmem>>, vector<16x128xf32>,
    %c0_i32_8 = arith.constant 0 : i32
    %9 = arith.cmpi eq, %arg2, %c0_i32_8 : i32
    %10 = arith.extui %9 : i1 to i32
    %c0_i32_9 = arith.constant 0 : i32
    %11 = arith.cmpi ne, %10, %c0_i32_9 : i32
    scf.if %11 {
      %c0_10 = arith.constant 0 : index
      %c0_11 = arith.constant 0 : index
      %12 = vector.load %arg7[%c0_10, %c0_11] : memref<16x128xf32, #tpu.memory_space<vmem>>, vector<16x128xf32>
      %c0_12 = arith.constant 0 : index
      %c0_13 = arith.constant 0 : index
      %13 = vector.load %arg5[%c0_12, %c0_13] : memref<1x128xf32, #tpu.memory_space<vmem>>, vector<1x128xf32>
      %14 = vector.broadcast %13 : vector<1x128xf32> to vector<16x128xf32>
      %15 = arith.addf %12, %14 : vector<16x128xf32>
      %cst_14 = arith.constant 0.000000e+00 : f32
      %16 = vector.broadcast %cst_14 : f32 to vector<16x128xf32>
      %17 = arith.maximumf %15, %16 : vector<16x128xf32>
      %18 = arith.truncf %17 : vector<16x128xf32> to vector<16x128xbf16>
      %c0_15 = arith.constant 0 : index
      %c0_16 = arith.constant 0 : index
      %19 = vector.load %arg6[%c0_15, %c0_16] : memref<16x128xbf16, #tpu.memory_space<vmem>>, vector<16x128xbf16>
      tpu.vector_store %arg6[%c0_15, %c0_16], %18 {strides = array<i32>} : memref<16x128xbf16, #tpu.memory_space<vmem>>, vector<16x128xbf16>,
    } else {
    }
    return
  }
  func.func @transform_0(%arg0: i32, %arg1: i32, %arg2: i32) -> (i32, i32) {
    %c0_i32 = arith.constant 0 : i32
    return %arg0, %arg2 : i32, i32
  }
  func.func @transform_1(%arg0: i32, %arg1: i32, %arg2: i32) -> (i32, i32) {
    %c0_i32 = arith.constant 0 : i32
    return %arg2, %arg1 : i32, i32
  }
  func.func @transform_2(%arg0: i32, %arg1: i32, %arg2: i32) -> (i32, i32) {
    %c0_i32 = arith.constant 0 : i32
    %c0_i32_0 = arith.constant 0 : i32
    return %c0_i32, %arg1 : i32, i32
  }
  func.func @transform_3(%arg0: i32, %arg1: i32, %arg2: i32) -> (i32, i32) {
    %c0_i32 = arith.constant 0 : i32
    return %arg0, %arg1 : i32, i32
  }
}

module attributes {stable_mosaic.version = 11 : i64} {
  func.func @_mm_bias_kernel(%arg0: i32, %arg1: i32, %arg2: i32, %arg3: memref<16x256xbf16, #tpu.memory_space<vmem>>, %arg4: memref<256x128xbf16, #tpu.memory_space<vmem>>, %arg5: memref<1x128xf32, #tpu.memory_space<vmem>>, %arg6: memref<16x128xbf16, #tpu.memory_space<vmem>>, %arg7: memref<16x128xf32, #tpu.memory_space<vmem>>) attributes {dimension_semantics = [#tpu.dimension_semantics<parallel>, #tpu.dimension_semantics<parallel>, #tpu.dimension_semantics<arbitrary>], iteration_bounds = array<i64: 1, 1, 1>, scalar_prefetch = 0 : i64, scratch_operands = 1 : i64, tpu.core_type = #tpu.core_type<tc>, window_params = [{transform_indices = @transform_0, window_bounds = array<i64: 16, 256>}, {transform_indices = @transform_1, window_bounds = array<i64: 256, 128>}, {transform_indices = @transform_2, window_bounds = array<i64: 1, 128>}, {transform_indices = @transform_3, window_bounds = array<i64: 16, 128>}]} {
    %c0_i32 = arith.constant 0 : i32
    %0 = arith.cmpi eq, %arg2, %c0_i32 : i32
    %1 = arith.extui %0 : i1 to i32
    %c0_i32_0 = arith.constant 0 : i32
    %2 = arith.cmpi ne, %1, %c0_i32_0 : i32
    scf.if %2 {
      %cst_10 = arith.constant 0.000000e+00 : f32
      %12 = vector.broadcast %cst_10 : f32 to vector<16x128xf32>
      %c0_11 = arith.constant 0 : index
      %c0_12 = arith.constant 0 : index
      %13 = vector.load %arg7[%c0_11, %c0_12] : memref<16x128xf32, #tpu.memory_space<vmem>>, vector<16x128xf32>
      tpu.vector_store %arg7[%c0_11, %c0_12], %12 {strides = array<i32>} : memref<16x128xf32, #tpu.memory_space<vmem>>, vector<16x128xf32>,
    } else {
    }
    %c0 = arith.constant 0 : index
    %c0_1 = arith.constant 0 : index
    %3 = vector.load %arg7[%c0, %c0_1] : memref<16x128xf32, #tpu.memory_space<vmem>>, vector<16x128xf32>
    %c0_2 = arith.constant 0 : index
    %c0_3 = arith.constant 0 : index
    %4 = vector.load %arg3[%c0_2, %c0_3] : memref<16x256xbf16, #tpu.memory_space<vmem>>, vector<16x256xbf16>
    %c0_4 = arith.constant 0 : index
    %c0_5 = arith.constant 0 : index
    %5 = vector.load %arg4[%c0_4, %c0_5] : memref<256x128xbf16, #tpu.memory_space<vmem>>, vector<256x128xbf16>
    %cst = arith.constant dense<0.000000e+00> : vector<16x128xf32>
    %6 = tpu.matmul %4, %5, %cst {dimension_numbers = #tpu.dot_dimension_numbers<[1], [0], [0], [1], [0, 0, 1, 1], [], []>} : vector<16x256xbf16>, vector<256x128xbf16>, vector<16x128xf32> -> vector<16x128xf32>
    %7 = arith.addf %3, %6 : vector<16x128xf32>
    %c0_6 = arith.constant 0 : index
    %c0_7 = arith.constant 0 : index
    %8 = vector.load %arg7[%c0_6, %c0_7] : memref<16x128xf32, #tpu.memory_space<vmem>>, vector<16x128xf32>
    tpu.vector_store %arg7[%c0_6, %c0_7], %7 {strides = array<i32>} : memref<16x128xf32, #tpu.memory_space<vmem>>, vector<16x128xf32>,
    %c0_i32_8 = arith.constant 0 : i32
    %9 = arith.cmpi eq, %arg2, %c0_i32_8 : i32
    %10 = arith.extui %9 : i1 to i32
    %c0_i32_9 = arith.constant 0 : i32
    %11 = arith.cmpi ne, %10, %c0_i32_9 : i32
    scf.if %11 {
      %c0_10 = arith.constant 0 : index
      %c0_11 = arith.constant 0 : index
      %12 = vector.load %arg7[%c0_10, %c0_11] : memref<16x128xf32, #tpu.memory_space<vmem>>, vector<16x128xf32>
      %c0_12 = arith.constant 0 : index
      %c0_13 = arith.constant 0 : index
      %13 = vector.load %arg5[%c0_12, %c0_13] : memref<1x128xf32, #tpu.memory_space<vmem>>, vector<1x128xf32>
      %14 = vector.broadcast %13 : vector<1x128xf32> to vector<16x128xf32>
      %15 = arith.addf %12, %14 : vector<16x128xf32>
      %cst_14 = arith.constant 0.000000e+00 : f32
      %16 = vector.broadcast %cst_14 : f32 to vector<16x128xf32>
      %17 = arith.maximumf %15, %16 : vector<16x128xf32>
      %18 = arith.truncf %17 : vector<16x128xf32> to vector<16x128xbf16>
      %c0_15 = arith.constant 0 : index
      %c0_16 = arith.constant 0 : index
      %19 = vector.load %arg6[%c0_15, %c0_16] : memref<16x128xbf16, #tpu.memory_space<vmem>>, vector<16x128xbf16>
      tpu.vector_store %arg6[%c0_15, %c0_16], %18 {strides = array<i32>} : memref<16x128xbf16, #tpu.memory_space<vmem>>, vector<16x128xbf16>,
    } else {
    }
    return
  }
  func.func @transform_0(%arg0: i32, %arg1: i32, %arg2: i32) -> (i32, i32) {
    %c0_i32 = arith.constant 0 : i32
    return %arg0, %arg2 : i32, i32
  }
  func.func @transform_1(%arg0: i32, %arg1: i32, %arg2: i32) -> (i32, i32) {
    %c0_i32 = arith.constant 0 : i32
    return %arg2, %arg1 : i32, i32
  }
  func.func @transform_2(%arg0: i32, %arg1: i32, %arg2: i32) -> (i32, i32) {
    %c0_i32 = arith.constant 0 : i32
    %c0_i32_0 = arith.constant 0 : i32
    return %c0_i32, %arg1 : i32, i32
  }
  func.func @transform_3(%arg0: i32, %arg1: i32, %arg2: i32) -> (i32, i32) {
    %c0_i32 = arith.constant 0 : i32
    return %arg0, %arg1 : i32, i32
  }
}

module attributes {stable_mosaic.version = 11 : i64} {
  func.func @_mm_bias_kernel(%arg0: i32, %arg1: i32, %arg2: i32, %arg3: memref<16x128xbf16, #tpu.memory_space<vmem>>, %arg4: memref<128x128xbf16, #tpu.memory_space<vmem>>, %arg5: memref<1x128xf32, #tpu.memory_space<vmem>>, %arg6: memref<16x128xbf16, #tpu.memory_space<vmem>>, %arg7: memref<16x128xf32, #tpu.memory_space<vmem>>) attributes {dimension_semantics = [#tpu.dimension_semantics<parallel>, #tpu.dimension_semantics<parallel>, #tpu.dimension_semantics<arbitrary>], iteration_bounds = array<i64: 1, 1, 1>, scalar_prefetch = 0 : i64, scratch_operands = 1 : i64, tpu.core_type = #tpu.core_type<tc>, window_params = [{transform_indices = @transform_0, window_bounds = array<i64: 16, 128>}, {transform_indices = @transform_1, window_bounds = array<i64: 128, 128>}, {transform_indices = @transform_2, window_bounds = array<i64: 1, 128>}, {transform_indices = @transform_3, window_bounds = array<i64: 16, 128>}]} {
    %c0_i32 = arith.constant 0 : i32
    %0 = arith.cmpi eq, %arg2, %c0_i32 : i32
    %1 = arith.extui %0 : i1 to i32
    %c0_i32_0 = arith.constant 0 : i32
    %2 = arith.cmpi ne, %1, %c0_i32_0 : i32
    scf.if %2 {
      %cst_10 = arith.constant 0.000000e+00 : f32
      %12 = vector.broadcast %cst_10 : f32 to vector<16x128xf32>
      %c0_11 = arith.constant 0 : index
      %c0_12 = arith.constant 0 : index
      %13 = vector.load %arg7[%c0_11, %c0_12] : memref<16x128xf32, #tpu.memory_space<vmem>>, vector<16x128xf32>
      tpu.vector_store %arg7[%c0_11, %c0_12], %12 {strides = array<i32>} : memref<16x128xf32, #tpu.memory_space<vmem>>, vector<16x128xf32>,
    } else {
    }
    %c0 = arith.constant 0 : index
    %c0_1 = arith.constant 0 : index
    %3 = vector.load %arg7[%c0, %c0_1] : memref<16x128xf32, #tpu.memory_space<vmem>>, vector<16x128xf32>
    %c0_2 = arith.constant 0 : index
    %c0_3 = arith.constant 0 : index
    %4 = vector.load %arg3[%c0_2, %c0_3] : memref<16x128xbf16, #tpu.memory_space<vmem>>, vector<16x128xbf16>
    %c0_4 = arith.constant 0 : index
    %c0_5 = arith.constant 0 : index
    %5 = vector.load %arg4[%c0_4, %c0_5] : memref<128x128xbf16, #tpu.memory_space<vmem>>, vector<128x128xbf16>
    %cst = arith.constant dense<0.000000e+00> : vector<16x128xf32>
    %6 = tpu.matmul %4, %5, %cst {dimension_numbers = #tpu.dot_dimension_numbers<[1], [0], [0], [1], [0, 0, 1, 1], [], []>} : vector<16x128xbf16>, vector<128x128xbf16>, vector<16x128xf32> -> vector<16x128xf32>
    %7 = arith.addf %3, %6 : vector<16x128xf32>
    %c0_6 = arith.constant 0 : index
    %c0_7 = arith.constant 0 : index
    %8 = vector.load %arg7[%c0_6, %c0_7] : memref<16x128xf32, #tpu.memory_space<vmem>>, vector<16x128xf32>
    tpu.vector_store %arg7[%c0_6, %c0_7], %7 {strides = array<i32>} : memref<16x128xf32, #tpu.memory_space<vmem>>, vector<16x128xf32>,
    %c0_i32_8 = arith.constant 0 : i32
    %9 = arith.cmpi eq, %arg2, %c0_i32_8 : i32
    %10 = arith.extui %9 : i1 to i32
    %c0_i32_9 = arith.constant 0 : i32
    %11 = arith.cmpi ne, %10, %c0_i32_9 : i32
    scf.if %11 {
      %c0_10 = arith.constant 0 : index
      %c0_11 = arith.constant 0 : index
      %12 = vector.load %arg7[%c0_10, %c0_11] : memref<16x128xf32, #tpu.memory_space<vmem>>, vector<16x128xf32>
      %c0_12 = arith.constant 0 : index
      %c0_13 = arith.constant 0 : index
      %13 = vector.load %arg5[%c0_12, %c0_13] : memref<1x128xf32, #tpu.memory_space<vmem>>, vector<1x128xf32>
      %14 = vector.broadcast %13 : vector<1x128xf32> to vector<16x128xf32>
      %15 = arith.addf %12, %14 : vector<16x128xf32>
      %16 = arith.truncf %15 : vector<16x128xf32> to vector<16x128xbf16>
      %c0_14 = arith.constant 0 : index
      %c0_15 = arith.constant 0 : index
      %17 = vector.load %arg6[%c0_14, %c0_15] : memref<16x128xbf16, #tpu.memory_space<vmem>>, vector<16x128xbf16>
      tpu.vector_store %arg6[%c0_14, %c0_15], %16 {strides = array<i32>} : memref<16x128xbf16, #tpu.memory_space<vmem>>, vector<16x128xbf16>,
    } else {
    }
    return
  }
  func.func @transform_0(%arg0: i32, %arg1: i32, %arg2: i32) -> (i32, i32) {
    %c0_i32 = arith.constant 0 : i32
    return %arg0, %arg2 : i32, i32
  }
  func.func @transform_1(%arg0: i32, %arg1: i32, %arg2: i32) -> (i32, i32) {
    %c0_i32 = arith.constant 0 : i32
    return %arg2, %arg1 : i32, i32
  }
  func.func @transform_2(%arg0: i32, %arg1: i32, %arg2: i32) -> (i32, i32) {
    %c0_i32 = arith.constant 0 : i32
    %c0_i32_0 = arith.constant 0 : i32
    return %c0_i32, %arg1 : i32, i32
  }
  func.func @transform_3(%arg0: i32, %arg1: i32, %arg2: i32) -> (i32, i32) {
    %c0_i32 = arith.constant 0 : i32
    return %arg0, %arg1 : i32, i32
  }
}

module attributes {stable_mosaic.version = 11 : i64} {
  func.func @_mm_bias_res_relu_kernel(%arg0: i32, %arg1: i32, %arg2: i32, %arg3: memref<16x384xbf16, #tpu.memory_space<vmem>>, %arg4: memref<384x128xbf16, #tpu.memory_space<vmem>>, %arg5: memref<1x128xf32, #tpu.memory_space<vmem>>, %arg6: memref<16x128xbf16, #tpu.memory_space<vmem>>, %arg7: memref<16x128xbf16, #tpu.memory_space<vmem>>, %arg8: memref<16x128xf32, #tpu.memory_space<vmem>>) attributes {dimension_semantics = [#tpu.dimension_semantics<parallel>, #tpu.dimension_semantics<parallel>, #tpu.dimension_semantics<arbitrary>], iteration_bounds = array<i64: 1, 1, 1>, scalar_prefetch = 0 : i64, scratch_operands = 1 : i64, tpu.core_type = #tpu.core_type<tc>, window_params = [{transform_indices = @transform_0, window_bounds = array<i64: 16, 384>}, {transform_indices = @transform_1, window_bounds = array<i64: 384, 128>}, {transform_indices = @transform_2, window_bounds = array<i64: 1, 128>}, {transform_indices = @transform_3, window_bounds = array<i64: 16, 128>}, {transform_indices = @transform_4, window_bounds = array<i64: 16, 128>}]} {
    %c0_i32 = arith.constant 0 : i32
    %0 = arith.cmpi eq, %arg2, %c0_i32 : i32
    %1 = arith.extui %0 : i1 to i32
    %c0_i32_0 = arith.constant 0 : i32
    %2 = arith.cmpi ne, %1, %c0_i32_0 : i32
    scf.if %2 {
      %cst_10 = arith.constant 0.000000e+00 : f32
      %12 = vector.broadcast %cst_10 : f32 to vector<16x128xf32>
      %c0_11 = arith.constant 0 : index
      %c0_12 = arith.constant 0 : index
      %13 = vector.load %arg8[%c0_11, %c0_12] : memref<16x128xf32, #tpu.memory_space<vmem>>, vector<16x128xf32>
      tpu.vector_store %arg8[%c0_11, %c0_12], %12 {strides = array<i32>} : memref<16x128xf32, #tpu.memory_space<vmem>>, vector<16x128xf32>,
    } else {
    }
    %c0 = arith.constant 0 : index
    %c0_1 = arith.constant 0 : index
    %3 = vector.load %arg8[%c0, %c0_1] : memref<16x128xf32, #tpu.memory_space<vmem>>, vector<16x128xf32>
    %c0_2 = arith.constant 0 : index
    %c0_3 = arith.constant 0 : index
    %4 = vector.load %arg3[%c0_2, %c0_3] : memref<16x384xbf16, #tpu.memory_space<vmem>>, vector<16x384xbf16>
    %c0_4 = arith.constant 0 : index
    %c0_5 = arith.constant 0 : index
    %5 = vector.load %arg4[%c0_4, %c0_5] : memref<384x128xbf16, #tpu.memory_space<vmem>>, vector<384x128xbf16>
    %cst = arith.constant dense<0.000000e+00> : vector<16x128xf32>
    %6 = tpu.matmul %4, %5, %cst {dimension_numbers = #tpu.dot_dimension_numbers<[1], [0], [0], [1], [0, 0, 1, 1], [], []>} : vector<16x384xbf16>, vector<384x128xbf16>, vector<16x128xf32> -> vector<16x128xf32>
    %7 = arith.addf %3, %6 : vector<16x128xf32>
    %c0_6 = arith.constant 0 : index
    %c0_7 = arith.constant 0 : index
    %8 = vector.load %arg8[%c0_6, %c0_7] : memref<16x128xf32, #tpu.memory_space<vmem>>, vector<16x128xf32>
    tpu.vector_store %arg8[%c0_6, %c0_7], %7 {strides = array<i32>} : memref<16x128xf32, #tpu.memory_space<vmem>>, vector<16x128xf32>,
    %c0_i32_8 = arith.constant 0 : i32
    %9 = arith.cmpi eq, %arg2, %c0_i32_8 : i32
    %10 = arith.extui %9 : i1 to i32
    %c0_i32_9 = arith.constant 0 : i32
    %11 = arith.cmpi ne, %10, %c0_i32_9 : i32
    scf.if %11 {
      %c0_10 = arith.constant 0 : index
      %c0_11 = arith.constant 0 : index
      %12 = vector.load %arg8[%c0_10, %c0_11] : memref<16x128xf32, #tpu.memory_space<vmem>>, vector<16x128xf32>
      %c0_12 = arith.constant 0 : index
      %c0_13 = arith.constant 0 : index
      %13 = vector.load %arg5[%c0_12, %c0_13] : memref<1x128xf32, #tpu.memory_space<vmem>>, vector<1x128xf32>
      %14 = vector.broadcast %13 : vector<1x128xf32> to vector<16x128xf32>
      %15 = arith.addf %12, %14 : vector<16x128xf32>
      %c0_14 = arith.constant 0 : index
      %c0_15 = arith.constant 0 : index
      %16 = vector.load %arg6[%c0_14, %c0_15] : memref<16x128xbf16, #tpu.memory_space<vmem>>, vector<16x128xbf16>
      %17 = arith.extf %16 : vector<16x128xbf16> to vector<16x128xf32>
      %18 = arith.addf %15, %17 : vector<16x128xf32>
      %cst_16 = arith.constant 0.000000e+00 : f32
      %19 = vector.broadcast %cst_16 : f32 to vector<16x128xf32>
      %20 = arith.maximumf %18, %19 : vector<16x128xf32>
      %21 = arith.truncf %20 : vector<16x128xf32> to vector<16x128xbf16>
      %c0_17 = arith.constant 0 : index
      %c0_18 = arith.constant 0 : index
      %22 = vector.load %arg7[%c0_17, %c0_18] : memref<16x128xbf16, #tpu.memory_space<vmem>>, vector<16x128xbf16>
      tpu.vector_store %arg7[%c0_17, %c0_18], %21 {strides = array<i32>} : memref<16x128xbf16, #tpu.memory_space<vmem>>, vector<16x128xbf16>,
    } else {
    }
    return
  }
  func.func @transform_0(%arg0: i32, %arg1: i32, %arg2: i32) -> (i32, i32) {
    %c0_i32 = arith.constant 0 : i32
    return %arg0, %arg2 : i32, i32
  }
  func.func @transform_1(%arg0: i32, %arg1: i32, %arg2: i32) -> (i32, i32) {
    %c0_i32 = arith.constant 0 : i32
    return %arg2, %arg1 : i32, i32
  }
  func.func @transform_2(%arg0: i32, %arg1: i32, %arg2: i32) -> (i32, i32) {
    %c0_i32 = arith.constant 0 : i32
    %c0_i32_0 = arith.constant 0 : i32
    return %c0_i32, %arg1 : i32, i32
  }
  func.func @transform_3(%arg0: i32, %arg1: i32, %arg2: i32) -> (i32, i32) {
    %c0_i32 = arith.constant 0 : i32
    return %arg0, %arg1 : i32, i32
  }
  func.func @transform_4(%arg0: i32, %arg1: i32, %arg2: i32) -> (i32, i32) {
    %c0_i32 = arith.constant 0 : i32
    return %arg0, %arg1 : i32, i32
  }
}

module attributes {stable_mosaic.version = 11 : i64} {
  func.func @_mm_bias_kernel(%arg0: i32, %arg1: i32, %arg2: i32, %arg3: memref<16x384xbf16, #tpu.memory_space<vmem>>, %arg4: memref<384x128xbf16, #tpu.memory_space<vmem>>, %arg5: memref<1x128xf32, #tpu.memory_space<vmem>>, %arg6: memref<16x128xbf16, #tpu.memory_space<vmem>>, %arg7: memref<16x128xf32, #tpu.memory_space<vmem>>) attributes {dimension_semantics = [#tpu.dimension_semantics<parallel>, #tpu.dimension_semantics<parallel>, #tpu.dimension_semantics<arbitrary>], iteration_bounds = array<i64: 1, 1, 1>, scalar_prefetch = 0 : i64, scratch_operands = 1 : i64, tpu.core_type = #tpu.core_type<tc>, window_params = [{transform_indices = @transform_0, window_bounds = array<i64: 16, 384>}, {transform_indices = @transform_1, window_bounds = array<i64: 384, 128>}, {transform_indices = @transform_2, window_bounds = array<i64: 1, 128>}, {transform_indices = @transform_3, window_bounds = array<i64: 16, 128>}]} {
    %c0_i32 = arith.constant 0 : i32
    %0 = arith.cmpi eq, %arg2, %c0_i32 : i32
    %1 = arith.extui %0 : i1 to i32
    %c0_i32_0 = arith.constant 0 : i32
    %2 = arith.cmpi ne, %1, %c0_i32_0 : i32
    scf.if %2 {
      %cst_10 = arith.constant 0.000000e+00 : f32
      %12 = vector.broadcast %cst_10 : f32 to vector<16x128xf32>
      %c0_11 = arith.constant 0 : index
      %c0_12 = arith.constant 0 : index
      %13 = vector.load %arg7[%c0_11, %c0_12] : memref<16x128xf32, #tpu.memory_space<vmem>>, vector<16x128xf32>
      tpu.vector_store %arg7[%c0_11, %c0_12], %12 {strides = array<i32>} : memref<16x128xf32, #tpu.memory_space<vmem>>, vector<16x128xf32>,
    } else {
    }
    %c0 = arith.constant 0 : index
    %c0_1 = arith.constant 0 : index
    %3 = vector.load %arg7[%c0, %c0_1] : memref<16x128xf32, #tpu.memory_space<vmem>>, vector<16x128xf32>
    %c0_2 = arith.constant 0 : index
    %c0_3 = arith.constant 0 : index
    %4 = vector.load %arg3[%c0_2, %c0_3] : memref<16x384xbf16, #tpu.memory_space<vmem>>, vector<16x384xbf16>
    %c0_4 = arith.constant 0 : index
    %c0_5 = arith.constant 0 : index
    %5 = vector.load %arg4[%c0_4, %c0_5] : memref<384x128xbf16, #tpu.memory_space<vmem>>, vector<384x128xbf16>
    %cst = arith.constant dense<0.000000e+00> : vector<16x128xf32>
    %6 = tpu.matmul %4, %5, %cst {dimension_numbers = #tpu.dot_dimension_numbers<[1], [0], [0], [1], [0, 0, 1, 1], [], []>} : vector<16x384xbf16>, vector<384x128xbf16>, vector<16x128xf32> -> vector<16x128xf32>
    %7 = arith.addf %3, %6 : vector<16x128xf32>
    %c0_6 = arith.constant 0 : index
    %c0_7 = arith.constant 0 : index
    %8 = vector.load %arg7[%c0_6, %c0_7] : memref<16x128xf32, #tpu.memory_space<vmem>>, vector<16x128xf32>
    tpu.vector_store %arg7[%c0_6, %c0_7], %7 {strides = array<i32>} : memref<16x128xf32, #tpu.memory_space<vmem>>, vector<16x128xf32>,
    %c0_i32_8 = arith.constant 0 : i32
    %9 = arith.cmpi eq, %arg2, %c0_i32_8 : i32
    %10 = arith.extui %9 : i1 to i32
    %c0_i32_9 = arith.constant 0 : i32
    %11 = arith.cmpi ne, %10, %c0_i32_9 : i32
    scf.if %11 {
      %c0_10 = arith.constant 0 : index
      %c0_11 = arith.constant 0 : index
      %12 = vector.load %arg7[%c0_10, %c0_11] : memref<16x128xf32, #tpu.memory_space<vmem>>, vector<16x128xf32>
      %c0_12 = arith.constant 0 : index
      %c0_13 = arith.constant 0 : index
      %13 = vector.load %arg5[%c0_12, %c0_13] : memref<1x128xf32, #tpu.memory_space<vmem>>, vector<1x128xf32>
      %14 = vector.broadcast %13 : vector<1x128xf32> to vector<16x128xf32>
      %15 = arith.addf %12, %14 : vector<16x128xf32>
      %cst_14 = arith.constant 0.000000e+00 : f32
      %16 = vector.broadcast %cst_14 : f32 to vector<16x128xf32>
      %17 = arith.maximumf %15, %16 : vector<16x128xf32>
      %18 = arith.truncf %17 : vector<16x128xf32> to vector<16x128xbf16>
      %c0_15 = arith.constant 0 : index
      %c0_16 = arith.constant 0 : index
      %19 = vector.load %arg6[%c0_15, %c0_16] : memref<16x128xbf16, #tpu.memory_space<vmem>>, vector<16x128xbf16>
      tpu.vector_store %arg6[%c0_15, %c0_16], %18 {strides = array<i32>} : memref<16x128xbf16, #tpu.memory_space<vmem>>, vector<16x128xbf16>,
    } else {
    }
    return
  }
  func.func @transform_0(%arg0: i32, %arg1: i32, %arg2: i32) -> (i32, i32) {
    %c0_i32 = arith.constant 0 : i32
    return %arg0, %arg2 : i32, i32
  }
  func.func @transform_1(%arg0: i32, %arg1: i32, %arg2: i32) -> (i32, i32) {
    %c0_i32 = arith.constant 0 : i32
    return %arg2, %arg1 : i32, i32
  }
  func.func @transform_2(%arg0: i32, %arg1: i32, %arg2: i32) -> (i32, i32) {
    %c0_i32 = arith.constant 0 : i32
    %c0_i32_0 = arith.constant 0 : i32
    return %c0_i32, %arg1 : i32, i32
  }
  func.func @transform_3(%arg0: i32, %arg1: i32, %arg2: i32) -> (i32, i32) {
    %c0_i32 = arith.constant 0 : i32
    return %arg0, %arg1 : i32, i32
  }
}

module attributes {stable_mosaic.version = 11 : i64} {
  func.func @_mm_bias_res_relu_kernel(%arg0: i32, %arg1: i32, %arg2: i32, %arg3: memref<16x256xbf16, #tpu.memory_space<vmem>>, %arg4: memref<256x128xbf16, #tpu.memory_space<vmem>>, %arg5: memref<1x128xf32, #tpu.memory_space<vmem>>, %arg6: memref<16x128xbf16, #tpu.memory_space<vmem>>, %arg7: memref<16x128xbf16, #tpu.memory_space<vmem>>, %arg8: memref<16x128xf32, #tpu.memory_space<vmem>>) attributes {dimension_semantics = [#tpu.dimension_semantics<parallel>, #tpu.dimension_semantics<parallel>, #tpu.dimension_semantics<arbitrary>], iteration_bounds = array<i64: 1, 1, 3>, scalar_prefetch = 0 : i64, scratch_operands = 1 : i64, tpu.core_type = #tpu.core_type<tc>, window_params = [{transform_indices = @transform_0, window_bounds = array<i64: 16, 256>}, {transform_indices = @transform_1, window_bounds = array<i64: 256, 128>}, {transform_indices = @transform_2, window_bounds = array<i64: 1, 128>}, {transform_indices = @transform_3, window_bounds = array<i64: 16, 128>}, {transform_indices = @transform_4, window_bounds = array<i64: 16, 128>}]} {
    %c0_i32 = arith.constant 0 : i32
    %0 = arith.cmpi eq, %arg2, %c0_i32 : i32
    %1 = arith.extui %0 : i1 to i32
    %c0_i32_0 = arith.constant 0 : i32
    %2 = arith.cmpi ne, %1, %c0_i32_0 : i32
    scf.if %2 {
      %cst_9 = arith.constant 0.000000e+00 : f32
      %12 = vector.broadcast %cst_9 : f32 to vector<16x128xf32>
      %c0_10 = arith.constant 0 : index
      %c0_11 = arith.constant 0 : index
      %13 = vector.load %arg8[%c0_10, %c0_11] : memref<16x128xf32, #tpu.memory_space<vmem>>, vector<16x128xf32>
      tpu.vector_store %arg8[%c0_10, %c0_11], %12 {strides = array<i32>} : memref<16x128xf32, #tpu.memory_space<vmem>>, vector<16x128xf32>,
    } else {
    }
    %c0 = arith.constant 0 : index
    %c0_1 = arith.constant 0 : index
    %3 = vector.load %arg8[%c0, %c0_1] : memref<16x128xf32, #tpu.memory_space<vmem>>, vector<16x128xf32>
    %c0_2 = arith.constant 0 : index
    %c0_3 = arith.constant 0 : index
    %4 = vector.load %arg3[%c0_2, %c0_3] : memref<16x256xbf16, #tpu.memory_space<vmem>>, vector<16x256xbf16>
    %c0_4 = arith.constant 0 : index
    %c0_5 = arith.constant 0 : index
    %5 = vector.load %arg4[%c0_4, %c0_5] : memref<256x128xbf16, #tpu.memory_space<vmem>>, vector<256x128xbf16>
    %cst = arith.constant dense<0.000000e+00> : vector<16x128xf32>
    %6 = tpu.matmul %4, %5, %cst {dimension_numbers = #tpu.dot_dimension_numbers<[1], [0], [0], [1], [0, 0, 1, 1], [], []>} : vector<16x256xbf16>, vector<256x128xbf16>, vector<16x128xf32> -> vector<16x128xf32>
    %7 = arith.addf %3, %6 : vector<16x128xf32>
    %c0_6 = arith.constant 0 : index
    %c0_7 = arith.constant 0 : index
    %8 = vector.load %arg8[%c0_6, %c0_7] : memref<16x128xf32, #tpu.memory_space<vmem>>, vector<16x128xf32>
    tpu.vector_store %arg8[%c0_6, %c0_7], %7 {strides = array<i32>} : memref<16x128xf32, #tpu.memory_space<vmem>>, vector<16x128xf32>,
    %c2_i32 = arith.constant 2 : i32
    %9 = arith.cmpi eq, %arg2, %c2_i32 : i32
    %10 = arith.extui %9 : i1 to i32
    %c0_i32_8 = arith.constant 0 : i32
    %11 = arith.cmpi ne, %10, %c0_i32_8 : i32
    scf.if %11 {
      %c0_9 = arith.constant 0 : index
      %c0_10 = arith.constant 0 : index
      %12 = vector.load %arg8[%c0_9, %c0_10] : memref<16x128xf32, #tpu.memory_space<vmem>>, vector<16x128xf32>
      %c0_11 = arith.constant 0 : index
      %c0_12 = arith.constant 0 : index
      %13 = vector.load %arg5[%c0_11, %c0_12] : memref<1x128xf32, #tpu.memory_space<vmem>>, vector<1x128xf32>
      %14 = vector.broadcast %13 : vector<1x128xf32> to vector<16x128xf32>
      %15 = arith.addf %12, %14 : vector<16x128xf32>
      %c0_13 = arith.constant 0 : index
      %c0_14 = arith.constant 0 : index
      %16 = vector.load %arg6[%c0_13, %c0_14] : memref<16x128xbf16, #tpu.memory_space<vmem>>, vector<16x128xbf16>
      %17 = arith.extf %16 : vector<16x128xbf16> to vector<16x128xf32>
      %18 = arith.addf %15, %17 : vector<16x128xf32>
      %cst_15 = arith.constant 0.000000e+00 : f32
      %19 = vector.broadcast %cst_15 : f32 to vector<16x128xf32>
      %20 = arith.maximumf %18, %19 : vector<16x128xf32>
      %21 = arith.truncf %20 : vector<16x128xf32> to vector<16x128xbf16>
      %c0_16 = arith.constant 0 : index
      %c0_17 = arith.constant 0 : index
      %22 = vector.load %arg7[%c0_16, %c0_17] : memref<16x128xbf16, #tpu.memory_space<vmem>>, vector<16x128xbf16>
      tpu.vector_store %arg7[%c0_16, %c0_17], %21 {strides = array<i32>} : memref<16x128xbf16, #tpu.memory_space<vmem>>, vector<16x128xbf16>,
    } else {
    }
    return
  }
  func.func @transform_0(%arg0: i32, %arg1: i32, %arg2: i32) -> (i32, i32) {
    %c0_i32 = arith.constant 0 : i32
    return %arg0, %arg2 : i32, i32
  }
  func.func @transform_1(%arg0: i32, %arg1: i32, %arg2: i32) -> (i32, i32) {
    %c0_i32 = arith.constant 0 : i32
    return %arg2, %arg1 : i32, i32
  }
  func.func @transform_2(%arg0: i32, %arg1: i32, %arg2: i32) -> (i32, i32) {
    %c0_i32 = arith.constant 0 : i32
    %c0_i32_0 = arith.constant 0 : i32
    return %c0_i32, %arg1 : i32, i32
  }
  func.func @transform_3(%arg0: i32, %arg1: i32, %arg2: i32) -> (i32, i32) {
    %c0_i32 = arith.constant 0 : i32
    return %arg0, %arg1 : i32, i32
  }
  func.func @transform_4(%arg0: i32, %arg1: i32, %arg2: i32) -> (i32, i32) {
    %c0_i32 = arith.constant 0 : i32
    return %arg0, %arg1 : i32, i32
  }
}

module attributes {stable_mosaic.version = 11 : i64} {
  func.func @_mm_bias_kernel(%arg0: i32, %arg1: i32, %arg2: i32, %arg3: memref<16x256xbf16, #tpu.memory_space<vmem>>, %arg4: memref<256x128xbf16, #tpu.memory_space<vmem>>, %arg5: memref<1x128xf32, #tpu.memory_space<vmem>>, %arg6: memref<16x128xbf16, #tpu.memory_space<vmem>>, %arg7: memref<16x128xf32, #tpu.memory_space<vmem>>) attributes {dimension_semantics = [#tpu.dimension_semantics<parallel>, #tpu.dimension_semantics<parallel>, #tpu.dimension_semantics<arbitrary>], iteration_bounds = array<i64: 1, 1, 3>, scalar_prefetch = 0 : i64, scratch_operands = 1 : i64, tpu.core_type = #tpu.core_type<tc>, window_params = [{transform_indices = @transform_0, window_bounds = array<i64: 16, 256>}, {transform_indices = @transform_1, window_bounds = array<i64: 256, 128>}, {transform_indices = @transform_2, window_bounds = array<i64: 1, 128>}, {transform_indices = @transform_3, window_bounds = array<i64: 16, 128>}]} {
    %c0_i32 = arith.constant 0 : i32
    %0 = arith.cmpi eq, %arg2, %c0_i32 : i32
    %1 = arith.extui %0 : i1 to i32
    %c0_i32_0 = arith.constant 0 : i32
    %2 = arith.cmpi ne, %1, %c0_i32_0 : i32
    scf.if %2 {
      %cst_9 = arith.constant 0.000000e+00 : f32
      %12 = vector.broadcast %cst_9 : f32 to vector<16x128xf32>
      %c0_10 = arith.constant 0 : index
      %c0_11 = arith.constant 0 : index
      %13 = vector.load %arg7[%c0_10, %c0_11] : memref<16x128xf32, #tpu.memory_space<vmem>>, vector<16x128xf32>
      tpu.vector_store %arg7[%c0_10, %c0_11], %12 {strides = array<i32>} : memref<16x128xf32, #tpu.memory_space<vmem>>, vector<16x128xf32>,
    } else {
    }
    %c0 = arith.constant 0 : index
    %c0_1 = arith.constant 0 : index
    %3 = vector.load %arg7[%c0, %c0_1] : memref<16x128xf32, #tpu.memory_space<vmem>>, vector<16x128xf32>
    %c0_2 = arith.constant 0 : index
    %c0_3 = arith.constant 0 : index
    %4 = vector.load %arg3[%c0_2, %c0_3] : memref<16x256xbf16, #tpu.memory_space<vmem>>, vector<16x256xbf16>
    %c0_4 = arith.constant 0 : index
    %c0_5 = arith.constant 0 : index
    %5 = vector.load %arg4[%c0_4, %c0_5] : memref<256x128xbf16, #tpu.memory_space<vmem>>, vector<256x128xbf16>
    %cst = arith.constant dense<0.000000e+00> : vector<16x128xf32>
    %6 = tpu.matmul %4, %5, %cst {dimension_numbers = #tpu.dot_dimension_numbers<[1], [0], [0], [1], [0, 0, 1, 1], [], []>} : vector<16x256xbf16>, vector<256x128xbf16>, vector<16x128xf32> -> vector<16x128xf32>
    %7 = arith.addf %3, %6 : vector<16x128xf32>
    %c0_6 = arith.constant 0 : index
    %c0_7 = arith.constant 0 : index
    %8 = vector.load %arg7[%c0_6, %c0_7] : memref<16x128xf32, #tpu.memory_space<vmem>>, vector<16x128xf32>
    tpu.vector_store %arg7[%c0_6, %c0_7], %7 {strides = array<i32>} : memref<16x128xf32, #tpu.memory_space<vmem>>, vector<16x128xf32>,
    %c2_i32 = arith.constant 2 : i32
    %9 = arith.cmpi eq, %arg2, %c2_i32 : i32
    %10 = arith.extui %9 : i1 to i32
    %c0_i32_8 = arith.constant 0 : i32
    %11 = arith.cmpi ne, %10, %c0_i32_8 : i32
    scf.if %11 {
      %c0_9 = arith.constant 0 : index
      %c0_10 = arith.constant 0 : index
      %12 = vector.load %arg7[%c0_9, %c0_10] : memref<16x128xf32, #tpu.memory_space<vmem>>, vector<16x128xf32>
      %c0_11 = arith.constant 0 : index
      %c0_12 = arith.constant 0 : index
      %13 = vector.load %arg5[%c0_11, %c0_12] : memref<1x128xf32, #tpu.memory_space<vmem>>, vector<1x128xf32>
      %14 = vector.broadcast %13 : vector<1x128xf32> to vector<16x128xf32>
      %15 = arith.addf %12, %14 : vector<16x128xf32>
      %cst_13 = arith.constant 0.000000e+00 : f32
      %16 = vector.broadcast %cst_13 : f32 to vector<16x128xf32>
      %17 = arith.maximumf %15, %16 : vector<16x128xf32>
      %18 = arith.truncf %17 : vector<16x128xf32> to vector<16x128xbf16>
      %c0_14 = arith.constant 0 : index
      %c0_15 = arith.constant 0 : index
      %19 = vector.load %arg6[%c0_14, %c0_15] : memref<16x128xbf16, #tpu.memory_space<vmem>>, vector<16x128xbf16>
      tpu.vector_store %arg6[%c0_14, %c0_15], %18 {strides = array<i32>} : memref<16x128xbf16, #tpu.memory_space<vmem>>, vector<16x128xbf16>,
    } else {
    }
    return
  }
  func.func @transform_0(%arg0: i32, %arg1: i32, %arg2: i32) -> (i32, i32) {
    %c0_i32 = arith.constant 0 : i32
    return %arg0, %arg2 : i32, i32
  }
  func.func @transform_1(%arg0: i32, %arg1: i32, %arg2: i32) -> (i32, i32) {
    %c0_i32 = arith.constant 0 : i32
    return %arg2, %arg1 : i32, i32
  }
  func.func @transform_2(%arg0: i32, %arg1: i32, %arg2: i32) -> (i32, i32) {
    %c0_i32 = arith.constant 0 : i32
    %c0_i32_0 = arith.constant 0 : i32
    return %c0_i32, %arg1 : i32, i32
  }
  func.func @transform_3(%arg0: i32, %arg1: i32, %arg2: i32) -> (i32, i32) {
    %c0_i32 = arith.constant 0 : i32
    return %arg0, %arg1 : i32, i32
  }
}

</mosaic_0001>

<llo_original>
// kernel: _resnet_forward_impl.20
$region0: #{_resnet_forward_impl.20}
  #allocation0 [shape = 'u32[]', space=smem, size = 0x4, offset = 0x4, fixed_abs, tag = 'smem constant byte address 0x4 - core index']
  #allocation1 [shape = 'u32[72,128]{1,0:T(1,128)}', space=vmem, size = 0x9000, scoped, tag = 'internal scratch']
  #allocation2 [shape = 'f32[128,128]{1,0:T(8,128)}', space=vmem, size = 0x10000, scoped, tag = 'scratch operand']
  %s0 = inlined_call_operand.vmem [shape: bf16[512,256], index: 0, kind: input, shape index: {}]
  %s1 = inlined_call_operand.vmem [shape: bf16[256,128], index: 1, kind: input, shape index: {}]
  %s2 = inlined_call_operand.vmem [shape: f32[1,128], index: 2, kind: input, shape index: {}]
  %s3 = inlined_call_operand.vmem [shape: bf16[512,128], index: 3, kind: output, shape index: {}]
  %s4 = sld [smem:[#allocation0]]
  $region53: #{_resnet_forward_impl.20} parent=0
    _
  %s6 = ssub.s32 1, %s4
  %s7 = scalar_select 0, %s6, %s4
  loop: start=0, step=1, limit=6
  $region2: #{_resnet_forward_impl.20} parent=0 // loop_pre_header
    _
  $region3: #{_resnet_forward_impl.20} parent=0 // loop_header
    %s9 = sphi 0, %s13
    %p10 = scmp.ge.s32.totalorder %s9, 6
    %s16 = sphi 0, %s35
    %s17 = sphi 0, %s31
    %s18 = sphi 0, %s27
    %s19 = sphi 0, %s16
    %s20 = sphi 0, %s17
    %s21 = sphi 0, %s18
    %s22 = sphi 0, %s19
    %s23 = sphi 0, %s20
    %s24 = sphi 0, %s21
    %s40 = sphi 0, %s42
    %s43 = sphi 0, %s40
    %s44 = sphi 0, %s43
    %s60 = sphi 0, %s44
    %s68 = sphi 0, %s70
    %s71 = sphi 0, %s68
    %s72 = sphi 0, %s71
    %s88 = sphi 0, %s72
    %s94 = sphi 0, %s96
    %s97 = sphi 0, %s94
    %s98 = sphi 0, %s97
    %s114 = sphi 0, %s98
    %s122 = sphi 0, %s124
    %s125 = sphi 0, %s122
    %s126 = sphi 0, %s125
    %s142 = sphi 0, %s126
  $region4: #{_resnet_forward_impl.20} parent=0 // loop_header_branch
    %12 = sbr.rel (%p10) target = $region8
  $region5: #{_resnet_forward_impl.20} parent=0 // loop_body
    %s14 = ssub.s32 %s9, 1
    %s15 = ssub.s32 %s9, 2
    %s25 = sadd.s32 1, %s18
    %p26 = scmp.ge.s32.totalorder %s25, 1
    %s27 = scalar_select %p26, 0, %s25
    %s28 = sadd.s32 1, %s17
    %s29 = scalar_select %p26, %s28, %s17
    %p30 = scmp.ge.s32.totalorder %s29, 1
    %s31 = scalar_select %p30, 0, %s29
    %s32 = sadd.s32 1, %s16
    %s33 = scalar_select %p30, %s32, %s16
    %p34 = scmp.ge.s32.totalorder %s33, 4
    %s35 = scalar_select %p34, 0, %s33
    %s36 = ssub.s32 %s16, %s35
    %s37 = ssub.s32 %s18, %s27
    %s38 = sor.u32 %s36, %s37
    %p39 = scmp.eq.s32.totalorder %s38, 0
    %s41 = sadd.s32 %s40, 1
    %s42 = scalar_select %p39, %s40, %s41
    %p45 = pneg %p39
    %p46 = scmp.eq.s32.totalorder %s9, 3
    %p47 = por %p45, %p46
    %p48 = scmp.ne.s32.totalorder %s40, %s43
    %p49 = scmp.eq.s32.totalorder %s9, 0
    %p50 = por %p48, %p49
    %p51 = scmp.ne.s32.totalorder %s40, %s43
    %p52 = scmp.eq.s32.totalorder %s14, 3
    %p53 = por %p51, %p52
    %p54 = scmp.ne.s32.totalorder %s43, %s44
    %p55 = scmp.eq.s32.totalorder %s14, 0
    %p56 = por %p54, %p55
    %p57 = scmp.ne.s32.totalorder %s43, %s44
    %p58 = scmp.eq.s32.totalorder %s15, 3
    %p59 = por %p57, %p58
    %p61 = scmp.ne.s32.totalorder %s44, %s60
    %p62 = scmp.eq.s32.totalorder %s15, 0
    %p63 = por %p61, %p62
    %s64 = ssub.s32 %s18, %s27
    %s65 = ssub.s32 %s17, %s31
    %s66 = sor.u32 %s64, %s65
    %p67 = scmp.eq.s32.totalorder %s66, 0
    %s69 = sadd.s32 %s68, 1
    %s70 = scalar_select %p67, %s68, %s69
    %p73 = pneg %p67
    %p74 = scmp.eq.s32.totalorder %s9, 3
    %p75 = por %p73, %p74
    %p76 = scmp.ne.s32.totalorder %s68, %s71
    %p77 = scmp.eq.s32.totalorder %s9, 0
    %p78 = por %p76, %p77
    %p79 = scmp.ne.s32.totalorder %s68, %s71
    %p80 = scmp.eq.s32.totalorder %s14, 3
    %p81 = por %p79, %p80
    %p82 = scmp.ne.s32.totalorder %s71, %s72
    %p83 = scmp.eq.s32.totalorder %s14, 0
    %p84 = por %p82, %p83
    %p85 = scmp.ne.s32.totalorder %s71, %s72
    %p86 = scmp.eq.s32.totalorder %s15, 3
    %p87 = por %p85, %p86
    %p89 = scmp.ne.s32.totalorder %s72, %s88
    %p90 = scmp.eq.s32.totalorder %s15, 0
    %p91 = por %p89, %p90
    %s92 = ssub.s32 %s17, %s31
    %p93 = scmp.eq.s32.totalorder %s92, 0
    %s95 = sadd.s32 %s94, 1
    %s96 = scalar_select %p93, %s94, %s95
    %p99 = pneg %p93
    %p100 = scmp.eq.s32.totalorder %s9, 3
    %p101 = por %p99, %p100
    %p102 = scmp.ne.s32.totalorder %s94, %s97
    %p103 = scmp.eq.s32.totalorder %s9, 0
    %p104 = por %p102, %p103
    %p105 = scmp.ne.s32.totalorder %s94, %s97
    %p106 = scmp.eq.s32.totalorder %s14, 3
    %p107 = por %p105, %p106
    %p108 = scmp.ne.s32.totalorder %s97, %s98
    %p109 = scmp.eq.s32.totalorder %s14, 0
    %p110 = por %p108, %p109
    %p111 = scmp.ne.s32.totalorder %s97, %s98
    %p112 = scmp.eq.s32.totalorder %s15, 3
    %p113 = por %p111, %p112
    %p115 = scmp.ne.s32.totalorder %s98, %s114
    %p116 = scmp.eq.s32.totalorder %s15, 0
    %p117 = por %p115, %p116
    %s118 = ssub.s32 %s16, %s35
    %s119 = ssub.s32 %s17, %s31
    %s120 = sor.u32 %s118, %s119
    %p121 = scmp.eq.s32.totalorder %s120, 0
    %s123 = sadd.s32 %s122, 1
    %s124 = scalar_select %p121, %s122, %s123
    %p127 = pneg %p121
    %p128 = scmp.eq.s32.totalorder %s9, 3
    %p129 = por %p127, %p128
    %p130 = scmp.ne.s32.totalorder %s122, %s125
    %p131 = scmp.eq.s32.totalorder %s9, 0
    %p132 = por %p130, %p131
    %p133 = scmp.ne.s32.totalorder %s122, %s125
    %p134 = scmp.eq.s32.totalorder %s14, 3
    %p135 = por %p133, %p134
    %p136 = scmp.ne.s32.totalorder %s125, %s126
    %p137 = scmp.eq.s32.totalorder %s14, 0
    %p138 = por %p136, %p137
    %p139 = scmp.ne.s32.totalorder %s125, %s126
    %p140 = scmp.eq.s32.totalorder %s15, 3
    %p141 = por %p139, %p140
    %p143 = scmp.ne.s32.totalorder %s126, %s142
    %p144 = scmp.eq.s32.totalorder %s15, 0
    %p145 = por %p143, %p144
    %p146 = scmp.le.s32.totalorder 1, %s9
    %p147 = scmp.lt.s32.totalorder %s9, 5
    %p148 = pnand %p146, %p147
    %p149 = pneg %p148
    // Predicated region
    $region9: #{_resnet_forward_impl.20} parent=5 // pred_check
      _
    $region10: #{_resnet_forward_impl.20} parent=5 // pred_check_branch
      %151 = sbr.rel (%p148) target = $region12
    $region11: #{_resnet_forward_impl.20} parent=5 // pred_region
      %s152 = ssub.s32 %s9, 1
      // Predicated region
      $region13: #{_resnet_forward_impl.20} parent=11 // pred_check
        %p153 = pneg %p84
      $region14: #{_resnet_forward_impl.20} parent=11 // pred_check_branch
        %155 = sbr.rel (%p153) target = $region16
      $region15: #{_resnet_forward_impl.20} parent=11 // pred_region
        %s156 = smul.u32 32, %s21
        %p157 = scmp.lt.s32.totalorder %s156, 31
        %s158 = scalar_select %p157, %s156, 31
        %p159 = scmp.lt.s32.totalorder %s20, 0
        %s160 = scalar_select %p159, %s20, 0
        %s161 = sadd.s32 %s160, %s158
        %s162 = smul.addr %s161, 4
        %s163 = scalar_lea.vmem %s1, %s162
        %s164 = smul.u32 32, %s21
      $region16: #{_resnet_forward_impl.20} parent=11 // pred_fallthru
        _
      // Predicated region
      $region17: #{_resnet_forward_impl.20} parent=11 // pred_check
        %p165 = pneg %p110
      $region18: #{_resnet_forward_impl.20} parent=11 // pred_check_branch
        %167 = sbr.rel (%p165) target = $region20
      $region19: #{_resnet_forward_impl.20} parent=11 // pred_region
        %p168 = scmp.lt.s32.totalorder %s20, 0
        %s169 = scalar_select %p168, %s20, 0
        %s170 = scalar_lea.vmem %s2, %s169
      $region20: #{_resnet_forward_impl.20} parent=11 // pred_fallthru
        _
    $region12: #{_resnet_forward_impl.20} parent=5 // pred_fallthru
      _
    %p171 = scmp.lt.s32.totalorder %s9, 4
    // Predicated region
    $region21: #{_resnet_forward_impl.20} parent=5 // pred_check
      %p172 = pneg %p171
    $region22: #{_resnet_forward_impl.20} parent=5 // pred_check_branch
      %174 = sbr.rel (%p172) target = $region24
    $region23: #{_resnet_forward_impl.20} parent=5 // pred_region
      // Predicated region
      $region25: #{_resnet_forward_impl.20} parent=23 // pred_check
        %p175 = pneg %p50
      $region26: #{_resnet_forward_impl.20} parent=23 // pred_check_branch
        %177 = sbr.rel (%p175) target = $region28
      $region27: #{_resnet_forward_impl.20} parent=23 // pred_region
        %s178 = smul.u32 16, %s16
        %s179 = smul.u32 2, %s18
        %p180 = scmp.lt.s32.totalorder %s178, 63
        %s181 = scalar_select %p180, %s178, 63
        %p182 = scmp.lt.s32.totalorder %s179, 1
        %s183 = scalar_select %p182, %s179, 1
        %s184 = smul.addr %s181, 2
        %s185 = sadd.s32 %s183, %s184
        %s186 = smul.addr %s185, 4
        %s187 = scalar_lea.vmem %s0, %s186
        %s188 = smul.u32 16, %s16
        %s189 = smul.u32 2, %s18
      $region28: #{_resnet_forward_impl.20} parent=23 // pred_fallthru
        _
    $region24: #{_resnet_forward_impl.20} parent=5 // pred_fallthru
      _
    %p190 = scmp.le.s32.totalorder 1, %s9
    %p191 = scmp.lt.s32.totalorder %s9, 5
    %p192 = pnand %p190, %p191
    %p193 = pneg %p192
    // Predicated region
    $region29: #{_resnet_forward_impl.20} parent=5 // pred_check
      _
    $region30: #{_resnet_forward_impl.20} parent=5 // pred_check_branch
      %195 = sbr.rel (%p192) target = $region32
    $region31: #{_resnet_forward_impl.20} parent=5 // pred_region
      %s196 = ssub.s32 %s9, 1
      %s197 = smul.u32 16, %s19
      %s198 = smul.u32 2, %s21
      %p199 = scmp.lt.s32.totalorder %s197, 63
      %s200 = scalar_select %p199, %s197, 63
      %p201 = scmp.lt.s32.totalorder %s198, 1
      %s202 = scalar_select %p201, %s198, 1
      %s203 = smul.addr %s200, 2
      %s204 = sadd.s32 %s202, %s203
      %s205 = smul.addr %s204, 4
      %s206 = scalar_lea.vmem %s0, %s205
      %p207 = pneg %p56
      %p208 = pneg %p53
      %s209 = smul.u32 32, %s21
      %p210 = scmp.lt.s32.totalorder %s209, 31
      %s211 = scalar_select %p210, %s209, 31
      %p212 = scmp.lt.s32.totalorder %s20, 0
      %s213 = scalar_select %p212, %s20, 0
      %s214 = sadd.s32 %s213, %s211
      %s215 = smul.addr %s214, 4
      %s216 = scalar_lea.vmem %s1, %s215
      %p217 = pneg %p84
      %p218 = pneg %p81
      %p219 = scmp.lt.s32.totalorder %s20, 0
      %s220 = scalar_select %p219, %s20, 0
      %s221 = scalar_lea.vmem %s2, %s220
      %p222 = pneg %p110
      %p223 = pneg %p107
      %p224 = pneg %p138
      %p225 = pneg %p135
      %s226 = smul.u32 16, %s19
      %p227 = scmp.lt.s32.totalorder %s226, 63
      %s228 = scalar_select %p227, %s226, 63
      %p229 = scmp.lt.s32.totalorder %s20, 0
      %s230 = scalar_select %p229, %s20, 0
      %s231 = sadd.s32 %s230, %s228
      %s232 = smul.addr %s231, 4
      %s233 = scalar_lea.vmem %s3, %s232
      %s234 = smul.u32 16, %s19
      %s235 = smul.u32 2, %s21
      %p236 = scmp.lt.s32.totalorder %s234, 63
      %s237 = scalar_select %p236, %s234, 63
      %p238 = scmp.lt.s32.totalorder %s235, 1
      %s239 = scalar_select %p238, %s235, 1
      %s240 = smul.addr %s237, 2
      %s241 = sadd.s32 %s239, %s240
      %s242 = smul.addr %s241, 4
      %s243 = scalar_lea.vmem %s0, %s242
      %s244 = smul.u32 16, %s19
      %s245 = smul.u32 2, %s21
      %s246 = smul.u32 32, %s21
      %p247 = scmp.lt.s32.totalorder %s246, 31
      %s248 = scalar_select %p247, %s246, 31
      %p249 = scmp.lt.s32.totalorder %s20, 0
      %s250 = scalar_select %p249, %s20, 0
      %s251 = sadd.s32 %s250, %s248
      %s252 = smul.addr %s251, 4
      %s253 = scalar_lea.vmem %s1, %s252
      %s254 = smul.u32 32, %s21
      %p255 = scmp.lt.s32.totalorder %s20, 0
      %s256 = scalar_select %p255, %s20, 0
      %s257 = scalar_lea.vmem %s2, %s256
      %s258 = smul.u32 16, %s19
      %p259 = scmp.lt.s32.totalorder %s258, 63
      %s260 = scalar_select %p259, %s258, 63
      %p261 = scmp.lt.s32.totalorder %s20, 0
      %s262 = scalar_select %p261, %s20, 0
      %s263 = sadd.s32 %s262, %s260
      %s264 = smul.addr %s263, 4
      %s265 = scalar_lea.vmem %s3, %s264
      %s266 = smul.u32 16, %s19
      %p267 = scmp.eq.s32.totalorder %s21, 0
      // Predicated region
      $region33: #{_resnet_forward_impl.20} parent=31 // pred_check
        %p268 = pneg %p267
      $region34: #{_resnet_forward_impl.20} parent=31 // pred_check_branch
        %270 = sbr.rel (%p268) target = $region36
      $region35: #{_resnet_forward_impl.20} parent=31 // pred_region
        %271 = vst [vmem:[#allocation2] sm:$0xff] 0.0
        %272 = vst [vmem:[#allocation2 + $0x8] sm:$0xff] 0.0
        %273 = vst [vmem:[#allocation2 + $0x10] sm:$0xff] 0.0
        %274 = vst [vmem:[#allocation2 + $0x18] sm:$0xff] 0.0
        %275 = vst [vmem:[#allocation2 + $0x20] sm:$0xff] 0.0
        %276 = vst [vmem:[#allocation2 + $0x28] sm:$0xff] 0.0
        %277 = vst [vmem:[#allocation2 + $0x30] sm:$0xff] 0.0
        %278 = vst [vmem:[#allocation2 + $0x38] sm:$0xff] 0.0
        %279 = vst [vmem:[#allocation2 + $0x40] sm:$0xff] 0.0
        %280 = vst [vmem:[#allocation2 + $0x48] sm:$0xff] 0.0
        %281 = vst [vmem:[#allocation2 + $0x50] sm:$0xff] 0.0
        %282 = vst [vmem:[#allocation2 + $0x58] sm:$0xff] 0.0
        %283 = vst [vmem:[#allocation2 + $0x60] sm:$0xff] 0.0
        %284 = vst [vmem:[#allocation2 + $0x68] sm:$0xff] 0.0
        %285 = vst [vmem:[#allocation2 + $0x70] sm:$0xff] 0.0
        %286 = vst [vmem:[#allocation2 + $0x78] sm:$0xff] 0.0
      $region36: #{_resnet_forward_impl.20} parent=31 // pred_fallthru
        _
      %v287 = vld [vmem:[#allocation2] sm:$0xff]
      %v288 = vld [vmem:[#allocation2 + $0x8] sm:$0xff]
      %v289 = vld [vmem:[#allocation2 + $0x10] sm:$0xff]
      %v290 = vld [vmem:[#allocation2 + $0x18] sm:$0xff]
      %v291 = vld [vmem:[#allocation2 + $0x20] sm:$0xff]
      %v292 = vld [vmem:[#allocation2 + $0x28] sm:$0xff]
      %v293 = vld [vmem:[#allocation2 + $0x30] sm:$0xff]
      %v294 = vld [vmem:[#allocation2 + $0x38] sm:$0xff]
      %v295 = vld [vmem:[#allocation2 + $0x40] sm:$0xff]
      %v296 = vld [vmem:[#allocation2 + $0x48] sm:$0xff]
      %v297 = vld [vmem:[#allocation2 + $0x50] sm:$0xff]
      %v298 = vld [vmem:[#allocation2 + $0x58] sm:$0xff]
      %v299 = vld [vmem:[#allocation2 + $0x60] sm:$0xff]
      %v300 = vld [vmem:[#allocation2 + $0x68] sm:$0xff]
      %v301 = vld [vmem:[#allocation2 + $0x70] sm:$0xff]
      %v302 = vld [vmem:[#allocation2 + $0x78] sm:$0xff]
      %v303 = vld [vmem:[%s243] sm:$0xff]
      %v304 = vld [vmem:[%s243 + $0x8] sm:$0xff]
      %v305 = vld [vmem:[%s243 + $0x10] sm:$0xff]
      %v306 = vld [vmem:[%s243 + $0x18] sm:$0xff]
      %v307 = vld [vmem:[%s243 + $0x20] sm:$0xff]
      %v308 = vld [vmem:[%s243 + $0x28] sm:$0xff]
      %v309 = vld [vmem:[%s243 + $0x30] sm:$0xff]
      %v310 = vld [vmem:[%s243 + $0x38] sm:$0xff]
      %v311 = vld [vmem:[%s243 + $0x40] sm:$0xff]
      %v312 = vld [vmem:[%s243 + $0x48] sm:$0xff]
      %v313 = vld [vmem:[%s243 + $0x50] sm:$0xff]
      %v314 = vld [vmem:[%s243 + $0x58] sm:$0xff]
      %v315 = vld [vmem:[%s243 + $0x60] sm:$0xff]
      %v316 = vld [vmem:[%s243 + $0x68] sm:$0xff]
      %v317 = vld [vmem:[%s243 + $0x70] sm:$0xff]
      %v318 = vld [vmem:[%s243 + $0x78] sm:$0xff]
      %v319 = vld [vmem:[%s253] sm:$0xf]
      %v320 = vld [vmem:[%s253 + $0x4] sm:$0xf]
      %v321 = vld [vmem:[%s253 + $0x8] sm:$0xf]
      %v322 = vld [vmem:[%s253 + $0xc] sm:$0xf]
      %v323 = vld [vmem:[%s253 + $0x10] sm:$0xf]
      %v324 = vld [vmem:[%s253 + $0x14] sm:$0xf]
      %v325 = vld [vmem:[%s253 + $0x18] sm:$0xf]
      %v326 = vld [vmem:[%s253 + $0x1c] sm:$0xf]
      %v327 = vld [vmem:[%s253 + $0x20] sm:$0xf]
      %v328 = vld [vmem:[%s253 + $0x24] sm:$0xf]
      %v329 = vld [vmem:[%s253 + $0x28] sm:$0xf]
      %v330 = vld [vmem:[%s253 + $0x2c] sm:$0xf]
      %v331 = vld [vmem:[%s253 + $0x30] sm:$0xf]
      %v332 = vld [vmem:[%s253 + $0x34] sm:$0xf]
      %v333 = vld [vmem:[%s253 + $0x38] sm:$0xf]
      %v334 = vld [vmem:[%s253 + $0x3c] sm:$0xf]
      %v335 = vld [vmem:[%s253 + $0x40] sm:$0xf]
      %v336 = vld [vmem:[%s253 + $0x44] sm:$0xf]
      %v337 = vld [vmem:[%s253 + $0x48] sm:$0xf]
      %v338 = vld [vmem:[%s253 + $0x4c] sm:$0xf]
      %v339 = vld [vmem:[%s253 + $0x50] sm:$0xf]
      %v340 = vld [vmem:[%s253 + $0x54] sm:$0xf]
      %v341 = vld [vmem:[%s253 + $0x58] sm:$0xf]
      %v342 = vld [vmem:[%s253 + $0x5c] sm:$0xf]
      %v343 = vld [vmem:[%s253 + $0x60] sm:$0xf]
      %v344 = vld [vmem:[%s253 + $0x64] sm:$0xf]
      %v345 = vld [vmem:[%s253 + $0x68] sm:$0xf]
      %v346 = vld [vmem:[%s253 + $0x6c] sm:$0xf]
      %v347 = vld [vmem:[%s253 + $0x70] sm:$0xf]
      %v348 = vld [vmem:[%s253 + $0x74] sm:$0xf]
      %v349 = vld [vmem:[%s253 + $0x78] sm:$0xf]
      %v350 = vld [vmem:[%s253 + $0x7c] sm:$0xf]
      %v367 = vunpack.c.l.b16 %v303
      %v368 = vunpack.c.h.b16 %v303
      %v369 = vunpack.c.l.b16 %v304
      %v370 = vunpack.c.h.b16 %v304
      %v371 = vunpack.c.l.b16 %v305
      %v372 = vunpack.c.h.b16 %v305
      %v373 = vunpack.c.l.b16 %v306
      %v374 = vunpack.c.h.b16 %v306
      %v375 = vunpack.c.l.b16 %v307
      %v376 = vunpack.c.h.b16 %v307
      %v377 = vunpack.c.l.b16 %v308
      %v378 = vunpack.c.h.b16 %v308
      %v379 = vunpack.c.l.b16 %v309
      %v380 = vunpack.c.h.b16 %v309
      %v381 = vunpack.c.l.b16 %v310
      %v382 = vunpack.c.h.b16 %v310
      %v383 = vunpack.c.l.b16 %v311
      %v384 = vunpack.c.h.b16 %v311
      %v385 = vunpack.c.l.b16 %v312
      %v386 = vunpack.c.h.b16 %v312
      %v387 = vunpack.c.l.b16 %v313
      %v388 = vunpack.c.h.b16 %v313
      %v389 = vunpack.c.l.b16 %v314
      %v390 = vunpack.c.h.b16 %v314
      %v391 = vunpack.c.l.b16 %v315
      %v392 = vunpack.c.h.b16 %v315
      %v393 = vunpack.c.l.b16 %v316
      %v394 = vunpack.c.h.b16 %v316
      %v395 = vunpack.c.l.b16 %v317
      %v396 = vunpack.c.h.b16 %v317
      %v397 = vunpack.c.l.b16 %v318
      %v398 = vunpack.c.h.b16 %v318
      %v399 = vpack.c.b16 %v369, %v367
      %v400 = vpack.c.b16 %v370, %v368
      %v401 = vpack.c.b16 %v373, %v371
      %v402 = vpack.c.b16 %v374, %v372
      %v403 = vpack.c.b16 %v377, %v375
      %v404 = vpack.c.b16 %v378, %v376
      %v405 = vpack.c.b16 %v381, %v379
      %v406 = vpack.c.b16 %v382, %v380
      %v407 = vpack.c.b16 %v385, %v383
      %v408 = vpack.c.b16 %v386, %v384
      %v409 = vpack.c.b16 %v389, %v387
      %v410 = vpack.c.b16 %v390, %v388
      %v411 = vpack.c.b16 %v393, %v391
      %v412 = vpack.c.b16 %v394, %v392
      %v413 = vpack.c.b16 %v397, %v395
      %v414 = vpack.c.b16 %v398, %v396
      %v463 = vunpack.c.l.b16 %v319
      %v464 = vunpack.c.l.b16 %v320
      %v465 = vunpack.c.l.b16 %v321
      %v466 = vunpack.c.l.b16 %v322
      %v467 = vunpack.c.l.b16 %v323
      %v468 = vunpack.c.l.b16 %v324
      %v469 = vunpack.c.l.b16 %v325
      %v470 = vunpack.c.l.b16 %v326
      %v471 = vunpack.c.l.b16 %v327
      %v472 = vunpack.c.l.b16 %v328
      %v473 = vunpack.c.l.b16 %v329
      %v474 = vunpack.c.l.b16 %v330
      %v475 = vunpack.c.l.b16 %v331
      %v476 = vunpack.c.l.b16 %v332
      %v477 = vunpack.c.l.b16 %v333
      %v478 = vunpack.c.l.b16 %v334
      %v479 = vunpack.c.l.b16 %v335
      %v480 = vunpack.c.l.b16 %v336
      %v481 = vunpack.c.l.b16 %v337
      %v482 = vunpack.c.l.b16 %v338
      %v483 = vunpack.c.l.b16 %v339
      %v484 = vunpack.c.l.b16 %v340
      %v485 = vunpack.c.l.b16 %v341
      %v486 = vunpack.c.l.b16 %v342
      %v487 = vunpack.c.l.b16 %v343
      %v488 = vunpack.c.l.b16 %v344
      %v489 = vunpack.c.l.b16 %v345
      %v490 = vunpack.c.l.b16 %v346
      %v491 = vunpack.c.l.b16 %v347
      %v492 = vunpack.c.l.b16 %v348
      %v493 = vunpack.c.l.b16 %v349
      %v494 = vunpack.c.l.b16 %v350
      %v495 = vpack.c.b16 %v464, %v463
      %v496 = vpack.c.b16 %v466, %v465
      %v497 = vpack.c.b16 %v468, %v467
      %v498 = vpack.c.b16 %v470, %v469
      %v499 = vpack.c.b16 %v472, %v471
      %v500 = vpack.c.b16 %v474, %v473
      %v501 = vpack.c.b16 %v476, %v475
      %v502 = vpack.c.b16 %v478, %v477
      %v503 = vpack.c.b16 %v480, %v479
      %v504 = vpack.c.b16 %v482, %v481
      %v505 = vpack.c.b16 %v484, %v483
      %v506 = vpack.c.b16 %v486, %v485
      %v507 = vpack.c.b16 %v488, %v487
      %v508 = vpack.c.b16 %v490, %v489
      %v509 = vpack.c.b16 %v492, %v491
      %v510 = vpack.c.b16 %v494, %v493
      %527 = vmatpush.bf16.msra.mxu0 %v502
      %528 = vmatpush.bf16.msra.mxu0 %v501
      %529 = vmatpush.bf16.msra.mxu0 %v500
      %530 = vmatpush.bf16.msra.mxu0 %v499
      %531 = vmatpush.bf16.msra.mxu0 %v498
      %532 = vmatpush.bf16.msra.mxu0 %v497
      %533 = vmatpush.bf16.msra.mxu0 %v496
      %534 = vmatpush.bf16.msra.mxu0 %v495
      %535 = vmatmul.bf16.gmra.mxu0 %v399
      %v536 = vpop.f32.mrf.mxu0
      %v537 = vadd.f32 0.0, %v536
      %v538 = vpop.f32.mrf.mxu0
      %v539 = vadd.f32 0.0, %v538
      %540 = vmatmul.bf16.gmra.mxu0 %v401
      %v541 = vpop.f32.mrf.mxu0
      %v542 = vadd.f32 0.0, %v541
      %v543 = vpop.f32.mrf.mxu0
      %v544 = vadd.f32 0.0, %v543
      %545 = vmatmul.bf16.gmra.mxu0 %v403
      %v546 = vpop.f32.mrf.mxu0
      %v547 = vadd.f32 0.0, %v546
      %v548 = vpop.f32.mrf.mxu0
      %v549 = vadd.f32 0.0, %v548
      %550 = vmatmul.bf16.gmra.mxu0 %v405
      %v551 = vpop.f32.mrf.mxu0
      %v552 = vadd.f32 0.0, %v551
      %v553 = vpop.f32.mrf.mxu0
      %v554 = vadd.f32 0.0, %v553
      %555 = vmatmul.bf16.gmra.mxu0 %v407
      %v556 = vpop.f32.mrf.mxu0
      %v557 = vadd.f32 0.0, %v556
      %v558 = vpop.f32.mrf.mxu0
      %v559 = vadd.f32 0.0, %v558
      %560 = vmatmul.bf16.gmra.mxu0 %v409
      %v561 = vpop.f32.mrf.mxu0
      %v562 = vadd.f32 0.0, %v561
      %v563 = vpop.f32.mrf.mxu0
      %v564 = vadd.f32 0.0, %v563
      %565 = vmatmul.bf16.gmra.mxu0 %v411
      %v566 = vpop.f32.mrf.mxu0
      %v567 = vadd.f32 0.0, %v566
      %v568 = vpop.f32.mrf.mxu0
      %v569 = vadd.f32 0.0, %v568
      %570 = vmatmul.bf16.gmra.mxu0 %v413
      %v571 = vpop.f32.mrf.mxu0
      %v572 = vadd.f32 0.0, %v571
      %v573 = vpop.f32.mrf.mxu0
      %v574 = vadd.f32 0.0, %v573
      %575 = vdwg.mxu0
      %576 = vmatpush.bf16.msra.mxu0 %v510
      %577 = vmatpush.bf16.msra.mxu0 %v509
      %578 = vmatpush.bf16.msra.mxu0 %v508
      %579 = vmatpush.bf16.msra.mxu0 %v507
      %580 = vmatpush.bf16.msra.mxu0 %v506
      %581 = vmatpush.bf16.msra.mxu0 %v505
      %582 = vmatpush.bf16.msra.mxu0 %v504
      %583 = vmatpush.bf16.msra.mxu0 %v503
      %584 = vmatmul.bf16.gmra.mxu0 %v400
      %v585 = vpop.f32.mrf.mxu0
      %v586 = vadd.f32 %v537, %v585
      %v587 = vpop.f32.mrf.mxu0
      %v588 = vadd.f32 %v539, %v587
      %589 = vmatmul.bf16.gmra.mxu0 %v402
      %v590 = vpop.f32.mrf.mxu0
      %v591 = vadd.f32 %v542, %v590
      %v592 = vpop.f32.mrf.mxu0
      %v593 = vadd.f32 %v544, %v592
      %594 = vmatmul.bf16.gmra.mxu0 %v404
      %v595 = vpop.f32.mrf.mxu0
      %v596 = vadd.f32 %v547, %v595
      %v597 = vpop.f32.mrf.mxu0
      %v598 = vadd.f32 %v549, %v597
      %599 = vmatmul.bf16.gmra.mxu0 %v406
      %v600 = vpop.f32.mrf.mxu0
      %v601 = vadd.f32 %v552, %v600
      %v602 = vpop.f32.mrf.mxu0
      %v603 = vadd.f32 %v554, %v602
      %604 = vmatmul.bf16.gmra.mxu0 %v408
      %v605 = vpop.f32.mrf.mxu0
      %v606 = vadd.f32 %v557, %v605
      %v607 = vpop.f32.mrf.mxu0
      %v608 = vadd.f32 %v559, %v607
      %609 = vmatmul.bf16.gmra.mxu0 %v410
      %v610 = vpop.f32.mrf.mxu0
      %v611 = vadd.f32 %v562, %v610
      %v612 = vpop.f32.mrf.mxu0
      %v613 = vadd.f32 %v564, %v612
      %614 = vmatmul.bf16.gmra.mxu0 %v412
      %v615 = vpop.f32.mrf.mxu0
      %v616 = vadd.f32 %v567, %v615
      %v617 = vpop.f32.mrf.mxu0
      %v618 = vadd.f32 %v569, %v617
      %619 = vmatmul.bf16.gmra.mxu0 %v414
      %v620 = vpop.f32.mrf.mxu0
      %v621 = vadd.f32 %v572, %v620
      %v622 = vpop.f32.mrf.mxu0
      %v623 = vadd.f32 %v574, %v622
      %624 = vdwg.mxu0
      %v625 = vadd.f32 %v287, %v586
      %v626 = vadd.f32 %v288, %v588
      %v627 = vadd.f32 %v289, %v591
      %v628 = vadd.f32 %v290, %v593
      %v629 = vadd.f32 %v291, %v596
      %v630 = vadd.f32 %v292, %v598
      %v631 = vadd.f32 %v293, %v601
      %v632 = vadd.f32 %v294, %v603
      %v633 = vadd.f32 %v295, %v606
      %v634 = vadd.f32 %v296, %v608
      %v635 = vadd.f32 %v297, %v611
      %v636 = vadd.f32 %v298, %v613
      %v637 = vadd.f32 %v299, %v616
      %v638 = vadd.f32 %v300, %v618
      %v639 = vadd.f32 %v301, %v621
      %v640 = vadd.f32 %v302, %v623
      %641 = vst [vmem:[#allocation2] sm:$0xff] %v625
      %642 = vst [vmem:[#allocation2 + $0x8] sm:$0xff] %v626
      %643 = vst [vmem:[#allocation2 + $0x10] sm:$0xff] %v627
      %644 = vst [vmem:[#allocation2 + $0x18] sm:$0xff] %v628
      %645 = vst [vmem:[#allocation2 + $0x20] sm:$0xff] %v629
      %646 = vst [vmem:[#allocation2 + $0x28] sm:$0xff] %v630
      %647 = vst [vmem:[#allocation2 + $0x30] sm:$0xff] %v631
      %648 = vst [vmem:[#allocation2 + $0x38] sm:$0xff] %v632
      %649 = vst [vmem:[#allocation2 + $0x40] sm:$0xff] %v633
      %650 = vst [vmem:[#allocation2 + $0x48] sm:$0xff] %v634
      %651 = vst [vmem:[#allocation2 + $0x50] sm:$0xff] %v635
      %652 = vst [vmem:[#allocation2 + $0x58] sm:$0xff] %v636
      %653 = vst [vmem:[#allocation2 + $0x60] sm:$0xff] %v637
      %654 = vst [vmem:[#allocation2 + $0x68] sm:$0xff] %v638
      %655 = vst [vmem:[#allocation2 + $0x70] sm:$0xff] %v639
      %656 = vst [vmem:[#allocation2 + $0x78] sm:$0xff] %v640
      // Predicated region
      $region37: #{_resnet_forward_impl.20} parent=31 // pred_check
        %p657 = pneg %p267
      $region38: #{_resnet_forward_impl.20} parent=31 // pred_check_branch
        %659 = sbr.rel (%p657) target = $region40
      $region39: #{_resnet_forward_impl.20} parent=31 // pred_region
        %v660 = vld [vmem:[#allocation2] sm:$0xff]
        %v661 = vld [vmem:[#allocation2 + $0x8] sm:$0xff]
        %v662 = vld [vmem:[#allocation2 + $0x10] sm:$0xff]
        %v663 = vld [vmem:[#allocation2 + $0x18] sm:$0xff]
        %v664 = vld [vmem:[#allocation2 + $0x20] sm:$0xff]
        %v665 = vld [vmem:[#allocation2 + $0x28] sm:$0xff]
        %v666 = vld [vmem:[#allocation2 + $0x30] sm:$0xff]
        %v667 = vld [vmem:[#allocation2 + $0x38] sm:$0xff]
        %v668 = vld [vmem:[#allocation2 + $0x40] sm:$0xff]
        %v669 = vld [vmem:[#allocation2 + $0x48] sm:$0xff]
        %v670 = vld [vmem:[#allocation2 + $0x50] sm:$0xff]
        %v671 = vld [vmem:[#allocation2 + $0x58] sm:$0xff]
        %v672 = vld [vmem:[#allocation2 + $0x60] sm:$0xff]
        %v673 = vld [vmem:[#allocation2 + $0x68] sm:$0xff]
        %v674 = vld [vmem:[#allocation2 + $0x70] sm:$0xff]
        %v675 = vld [vmem:[#allocation2 + $0x78] sm:$0xff]
        %v676 = vld [vmem:[%s257] sm:$0x1]
        %v678 = vperm.slane %v676, 0
        %v680 = vadd.f32 %v660, %v678
        %v681 = vadd.f32 %v661, %v678
        %v682 = vadd.f32 %v662, %v678
        %v683 = vadd.f32 %v663, %v678
        %v684 = vadd.f32 %v664, %v678
        %v685 = vadd.f32 %v665, %v678
        %v686 = vadd.f32 %v666, %v678
        %v687 = vadd.f32 %v667, %v678
        %v688 = vadd.f32 %v668, %v678
        %v689 = vadd.f32 %v669, %v678
        %v690 = vadd.f32 %v670, %v678
        %v691 = vadd.f32 %v671, %v678
        %v692 = vadd.f32 %v672, %v678
        %v693 = vadd.f32 %v673, %v678
        %v694 = vadd.f32 %v674, %v678
        %v695 = vadd.f32 %v675, %v678
        %v696 = vmax.f32 %v680, 0.0
        %v697 = vmax.f32 %v681, 0.0
        %v698 = vmax.f32 %v682, 0.0
        %v699 = vmax.f32 %v683, 0.0
        %v700 = vmax.f32 %v684, 0.0
        %v701 = vmax.f32 %v685, 0.0
        %v702 = vmax.f32 %v686, 0.0
        %v703 = vmax.f32 %v687, 0.0
        %v704 = vmax.f32 %v688, 0.0
        %v705 = vmax.f32 %v689, 0.0
        %v706 = vmax.f32 %v690, 0.0
        %v707 = vmax.f32 %v691, 0.0
        %v708 = vmax.f32 %v692, 0.0
        %v709 = vmax.f32 %v693, 0.0
        %v710 = vmax.f32 %v694, 0.0
        %v711 = vmax.f32 %v695, 0.0
        %v712 = vpack.c.bf16 %v696, %v696
        %v713 = vpack.c.bf16 %v697, %v697
        %v714 = vpack.c.bf16 %v698, %v698
        %v715 = vpack.c.bf16 %v699, %v699
        %v716 = vpack.c.bf16 %v700, %v700
        %v717 = vpack.c.bf16 %v701, %v701
        %v718 = vpack.c.bf16 %v702, %v702
        %v719 = vpack.c.bf16 %v703, %v703
        %v720 = vpack.c.bf16 %v704, %v704
        %v721 = vpack.c.bf16 %v705, %v705
        %v722 = vpack.c.bf16 %v706, %v706
        %v723 = vpack.c.bf16 %v707, %v707
        %v724 = vpack.c.bf16 %v708, %v708
        %v725 = vpack.c.bf16 %v709, %v709
        %v726 = vpack.c.bf16 %v710, %v710
        %v727 = vpack.c.bf16 %v711, %v711
        %728 = vst [vmem:[%s265] sm:$0xf] %v712
        %729 = vst [vmem:[%s265 + $0x4] sm:$0xf] %v713
        %730 = vst [vmem:[%s265 + $0x8] sm:$0xf] %v714
        %731 = vst [vmem:[%s265 + $0xc] sm:$0xf] %v715
        %732 = vst [vmem:[%s265 + $0x10] sm:$0xf] %v716
        %733 = vst [vmem:[%s265 + $0x14] sm:$0xf] %v717
        %734 = vst [vmem:[%s265 + $0x18] sm:$0xf] %v718
        %735 = vst [vmem:[%s265 + $0x1c] sm:$0xf] %v719
        %736 = vst [vmem:[%s265 + $0x20] sm:$0xf] %v720
        %737 = vst [vmem:[%s265 + $0x24] sm:$0xf] %v721
        %738 = vst [vmem:[%s265 + $0x28] sm:$0xf] %v722
        %739 = vst [vmem:[%s265 + $0x2c] sm:$0xf] %v723
        %740 = vst [vmem:[%s265 + $0x30] sm:$0xf] %v724
        %741 = vst [vmem:[%s265 + $0x34] sm:$0xf] %v725
        %742 = vst [vmem:[%s265 + $0x38] sm:$0xf] %v726
        %743 = vst [vmem:[%s265 + $0x3c] sm:$0xf] %v727
      $region40: #{_resnet_forward_impl.20} parent=31 // pred_fallthru
        _
      %s744 = smul.u32 16, %s19
      %p745 = scmp.lt.s32.totalorder %s744, 63
      %s746 = scalar_select %p745, %s744, 63
      %p747 = scmp.lt.s32.totalorder %s20, 0
      %s748 = scalar_select %p747, %s20, 0
      %s749 = sadd.s32 %s748, %s746
      %s750 = smul.addr %s749, 4
      %s751 = scalar_lea.vmem %s3, %s750
      // Predicated region
      $region41: #{_resnet_forward_impl.20} parent=31 // pred_check
        %p752 = pneg %p135
      $region42: #{_resnet_forward_impl.20} parent=31 // pred_check_branch
        %754 = sbr.rel (%p752) target = $region44
      $region43: #{_resnet_forward_impl.20} parent=31 // pred_region
        %s755 = smul.u32 16, %s19
      $region44: #{_resnet_forward_impl.20} parent=31 // pred_fallthru
        _
    $region32: #{_resnet_forward_impl.20} parent=5 // pred_fallthru
      _
    %p756 = scmp.le.s32.totalorder 2, %s9
    // Predicated region
    $region45: #{_resnet_forward_impl.20} parent=5 // pred_check
      %p757 = pneg %p756
    $region46: #{_resnet_forward_impl.20} parent=5 // pred_check_branch
      %759 = sbr.rel (%p757) target = $region48
    $region47: #{_resnet_forward_impl.20} parent=5 // pred_region
      %s760 = ssub.s32 %s9, 2
      // Predicated region
      $region49: #{_resnet_forward_impl.20} parent=47 // pred_check
        %p761 = pneg %p141
      $region50: #{_resnet_forward_impl.20} parent=47 // pred_check_branch
        %763 = sbr.rel (%p761) target = $region52
      $region51: #{_resnet_forward_impl.20} parent=47 // pred_region
        %s764 = smul.u32 16, %s22
        %p765 = scmp.lt.s32.totalorder %s764, 63
        %s766 = scalar_select %p765, %s764, 63
        %p767 = scmp.lt.s32.totalorder %s23, 0
        %s768 = scalar_select %p767, %s23, 0
        %s769 = sadd.s32 %s768, %s766
        %s770 = smul.addr %s769, 4
        %s771 = scalar_lea.vmem %s3, %s770
      $region52: #{_resnet_forward_impl.20} parent=47 // pred_fallthru
        _
    $region48: #{_resnet_forward_impl.20} parent=5 // pred_fallthru
      _
  $region6: #{_resnet_forward_impl.20} parent=0 // loop_footer
    %s13 = sadd.s32 1, %s9
  $region7: #{_resnet_forward_impl.20} parent=0 // loop_footer_branch
    %8 = sbr.rel target = $region3
  $region8: #{_resnet_forward_impl.20} parent=0 // loop_exit
    _

// kernel: _resnet_forward_impl.21
$region0: #{_resnet_forward_impl.21}
  #allocation0 [shape = 'u32[]', space=smem, size = 0x4, offset = 0x4, fixed_abs, tag = 'smem constant byte address 0x4 - core index']
  #allocation1 [shape = 'u32[72,128]{1,0:T(1,128)}', space=vmem, size = 0x9000, scoped, tag = 'internal scratch']
  #allocation2 [shape = 'f32[64,128]{1,0:T(8,128)}', space=vmem, size = 0x8000, scoped, tag = 'scratch operand']
  %s0 = inlined_call_operand.vmem [shape: bf16[128,128], index: 0, kind: input, shape index: {}]
  %s1 = inlined_call_operand.vmem [shape: bf16[128,128], index: 1, kind: input, shape index: {}]
  %s2 = inlined_call_operand.vmem [shape: f32[1,128], index: 2, kind: input, shape index: {}]
  %s3 = inlined_call_operand.vmem [shape: bf16[128,128], index: 3, kind: output, shape index: {}]
  %s4 = sld [smem:[#allocation0]]
  $region53: #{_resnet_forward_impl.21} parent=0
    _
  %s6 = ssub.s32 1, %s4
  %s7 = scalar_select 0, %s6, %s4
  loop: start=0, step=1, limit=4
  $region2: #{_resnet_forward_impl.21} parent=0 // loop_pre_header
    _
  $region3: #{_resnet_forward_impl.21} parent=0 // loop_header
    %s9 = sphi 0, %s13
    %p10 = scmp.ge.s32.totalorder %s9, 4
    %s16 = sphi 0, %s35
    %s17 = sphi 0, %s31
    %s18 = sphi 0, %s27
    %s19 = sphi 0, %s16
    %s20 = sphi 0, %s17
    %s21 = sphi 0, %s18
    %s22 = sphi 0, %s19
    %s23 = sphi 0, %s20
    %s24 = sphi 0, %s21
    %s40 = sphi 0, %s42
    %s43 = sphi 0, %s40
    %s44 = sphi 0, %s43
    %s60 = sphi 0, %s44
    %s68 = sphi 0, %s70
    %s71 = sphi 0, %s68
    %s72 = sphi 0, %s71
    %s88 = sphi 0, %s72
    %s94 = sphi 0, %s96
    %s97 = sphi 0, %s94
    %s98 = sphi 0, %s97
    %s114 = sphi 0, %s98
    %s122 = sphi 0, %s124
    %s125 = sphi 0, %s122
    %s126 = sphi 0, %s125
    %s142 = sphi 0, %s126
  $region4: #{_resnet_forward_impl.21} parent=0 // loop_header_branch
    %12 = sbr.rel (%p10) target = $region8
  $region5: #{_resnet_forward_impl.21} parent=0 // loop_body
    %s14 = ssub.s32 %s9, 1
    %s15 = ssub.s32 %s9, 2
    %s25 = sadd.s32 1, %s18
    %p26 = scmp.ge.s32.totalorder %s25, 1
    %s27 = scalar_select %p26, 0, %s25
    %s28 = sadd.s32 1, %s17
    %s29 = scalar_select %p26, %s28, %s17
    %p30 = scmp.ge.s32.totalorder %s29, 1
    %s31 = scalar_select %p30, 0, %s29
    %s32 = sadd.s32 1, %s16
    %s33 = scalar_select %p30, %s32, %s16
    %p34 = scmp.ge.s32.totalorder %s33, 2
    %s35 = scalar_select %p34, 0, %s33
    %s36 = ssub.s32 %s16, %s35
    %s37 = ssub.s32 %s18, %s27
    %s38 = sor.u32 %s36, %s37
    %p39 = scmp.eq.s32.totalorder %s38, 0
    %s41 = sadd.s32 %s40, 1
    %s42 = scalar_select %p39, %s40, %s41
    %p45 = pneg %p39
    %p46 = scmp.eq.s32.totalorder %s9, 1
    %p47 = por %p45, %p46
    %p48 = scmp.ne.s32.totalorder %s40, %s43
    %p49 = scmp.eq.s32.totalorder %s9, 0
    %p50 = por %p48, %p49
    %p51 = scmp.ne.s32.totalorder %s40, %s43
    %p52 = scmp.eq.s32.totalorder %s14, 1
    %p53 = por %p51, %p52
    %p54 = scmp.ne.s32.totalorder %s43, %s44
    %p55 = scmp.eq.s32.totalorder %s14, 0
    %p56 = por %p54, %p55
    %p57 = scmp.ne.s32.totalorder %s43, %s44
    %p58 = scmp.eq.s32.totalorder %s15, 1
    %p59 = por %p57, %p58
    %p61 = scmp.ne.s32.totalorder %s44, %s60
    %p62 = scmp.eq.s32.totalorder %s15, 0
    %p63 = por %p61, %p62
    %s64 = ssub.s32 %s18, %s27
    %s65 = ssub.s32 %s17, %s31
    %s66 = sor.u32 %s64, %s65
    %p67 = scmp.eq.s32.totalorder %s66, 0
    %s69 = sadd.s32 %s68, 1
    %s70 = scalar_select %p67, %s68, %s69
    %p73 = pneg %p67
    %p74 = scmp.eq.s32.totalorder %s9, 1
    %p75 = por %p73, %p74
    %p76 = scmp.ne.s32.totalorder %s68, %s71
    %p77 = scmp.eq.s32.totalorder %s9, 0
    %p78 = por %p76, %p77
    %p79 = scmp.ne.s32.totalorder %s68, %s71
    %p80 = scmp.eq.s32.totalorder %s14, 1
    %p81 = por %p79, %p80
    %p82 = scmp.ne.s32.totalorder %s71, %s72
    %p83 = scmp.eq.s32.totalorder %s14, 0
    %p84 = por %p82, %p83
    %p85 = scmp.ne.s32.totalorder %s71, %s72
    %p86 = scmp.eq.s32.totalorder %s15, 1
    %p87 = por %p85, %p86
    %p89 = scmp.ne.s32.totalorder %s72, %s88
    %p90 = scmp.eq.s32.totalorder %s15, 0
    %p91 = por %p89, %p90
    %s92 = ssub.s32 %s17, %s31
    %p93 = scmp.eq.s32.totalorder %s92, 0
    %s95 = sadd.s32 %s94, 1
    %s96 = scalar_select %p93, %s94, %s95
    %p99 = pneg %p93
    %p100 = scmp.eq.s32.totalorder %s9, 1
    %p101 = por %p99, %p100
    %p102 = scmp.ne.s32.totalorder %s94, %s97
    %p103 = scmp.eq.s32.totalorder %s9, 0
    %p104 = por %p102, %p103
    %p105 = scmp.ne.s32.totalorder %s94, %s97
    %p106 = scmp.eq.s32.totalorder %s14, 1
    %p107 = por %p105, %p106
    %p108 = scmp.ne.s32.totalorder %s97, %s98
    %p109 = scmp.eq.s32.totalorder %s14, 0
    %p110 = por %p108, %p109
    %p111 = scmp.ne.s32.totalorder %s97, %s98
    %p112 = scmp.eq.s32.totalorder %s15, 1
    %p113 = por %p111, %p112
    %p115 = scmp.ne.s32.totalorder %s98, %s114
    %p116 = scmp.eq.s32.totalorder %s15, 0
    %p117 = por %p115, %p116
    %s118 = ssub.s32 %s16, %s35
    %s119 = ssub.s32 %s17, %s31
    %s120 = sor.u32 %s118, %s119
    %p121 = scmp.eq.s32.totalorder %s120, 0
    %s123 = sadd.s32 %s122, 1
    %s124 = scalar_select %p121, %s122, %s123
    %p127 = pneg %p121
    %p128 = scmp.eq.s32.totalorder %s9, 1
    %p129 = por %p127, %p128
    %p130 = scmp.ne.s32.totalorder %s122, %s125
    %p131 = scmp.eq.s32.totalorder %s9, 0
    %p132 = por %p130, %p131
    %p133 = scmp.ne.s32.totalorder %s122, %s125
    %p134 = scmp.eq.s32.totalorder %s14, 1
    %p135 = por %p133, %p134
    %p136 = scmp.ne.s32.totalorder %s125, %s126
    %p137 = scmp.eq.s32.totalorder %s14, 0
    %p138 = por %p136, %p137
    %p139 = scmp.ne.s32.totalorder %s125, %s126
    %p140 = scmp.eq.s32.totalorder %s15, 1
    %p141 = por %p139, %p140
    %p143 = scmp.ne.s32.totalorder %s126, %s142
    %p144 = scmp.eq.s32.totalorder %s15, 0
    %p145 = por %p143, %p144
    %p146 = scmp.le.s32.totalorder 1, %s9
    %p147 = scmp.lt.s32.totalorder %s9, 3
    %p148 = pnand %p146, %p147
    %p149 = pneg %p148
    // Predicated region
    $region9: #{_resnet_forward_impl.21} parent=5 // pred_check
      _
    $region10: #{_resnet_forward_impl.21} parent=5 // pred_check_branch
      %151 = sbr.rel (%p148) target = $region12
    $region11: #{_resnet_forward_impl.21} parent=5 // pred_region
      %s152 = ssub.s32 %s9, 1
      // Predicated region
      $region13: #{_resnet_forward_impl.21} parent=11 // pred_check
        %p153 = pneg %p84
      $region14: #{_resnet_forward_impl.21} parent=11 // pred_check_branch
        %155 = sbr.rel (%p153) target = $region16
      $region15: #{_resnet_forward_impl.21} parent=11 // pred_region
        %s156 = smul.u32 16, %s21
        %p157 = scmp.lt.s32.totalorder %s156, 15
        %s158 = scalar_select %p157, %s156, 15
        %p159 = scmp.lt.s32.totalorder %s20, 0
        %s160 = scalar_select %p159, %s20, 0
        %s161 = sadd.s32 %s160, %s158
        %s162 = smul.addr %s161, 4
        %s163 = scalar_lea.vmem %s1, %s162
        %s164 = smul.u32 16, %s21
      $region16: #{_resnet_forward_impl.21} parent=11 // pred_fallthru
        _
      // Predicated region
      $region17: #{_resnet_forward_impl.21} parent=11 // pred_check
        %p165 = pneg %p110
      $region18: #{_resnet_forward_impl.21} parent=11 // pred_check_branch
        %167 = sbr.rel (%p165) target = $region20
      $region19: #{_resnet_forward_impl.21} parent=11 // pred_region
        %p168 = scmp.lt.s32.totalorder %s20, 0
        %s169 = scalar_select %p168, %s20, 0
        %s170 = scalar_lea.vmem %s2, %s169
      $region20: #{_resnet_forward_impl.21} parent=11 // pred_fallthru
        _
    $region12: #{_resnet_forward_impl.21} parent=5 // pred_fallthru
      _
    %p171 = scmp.lt.s32.totalorder %s9, 2
    // Predicated region
    $region21: #{_resnet_forward_impl.21} parent=5 // pred_check
      %p172 = pneg %p171
    $region22: #{_resnet_forward_impl.21} parent=5 // pred_check_branch
      %174 = sbr.rel (%p172) target = $region24
    $region23: #{_resnet_forward_impl.21} parent=5 // pred_region
      // Predicated region
      $region25: #{_resnet_forward_impl.21} parent=23 // pred_check
        %p175 = pneg %p50
      $region26: #{_resnet_forward_impl.21} parent=23 // pred_check_branch
        %177 = sbr.rel (%p175) target = $region28
      $region27: #{_resnet_forward_impl.21} parent=23 // pred_region
        %s178 = smul.u32 8, %s16
        %p179 = scmp.lt.s32.totalorder %s178, 15
        %s180 = scalar_select %p179, %s178, 15
        %p181 = scmp.lt.s32.totalorder %s18, 0
        %s182 = scalar_select %p181, %s18, 0
        %s183 = sadd.s32 %s182, %s180
        %s184 = smul.addr %s183, 4
        %s185 = scalar_lea.vmem %s0, %s184
        %s186 = smul.u32 8, %s16
      $region28: #{_resnet_forward_impl.21} parent=23 // pred_fallthru
        _
    $region24: #{_resnet_forward_impl.21} parent=5 // pred_fallthru
      _
    %p187 = scmp.le.s32.totalorder 1, %s9
    %p188 = scmp.lt.s32.totalorder %s9, 3
    %p189 = pnand %p187, %p188
    %p190 = pneg %p189
    // Predicated region
    $region29: #{_resnet_forward_impl.21} parent=5 // pred_check
      _
    $region30: #{_resnet_forward_impl.21} parent=5 // pred_check_branch
      %192 = sbr.rel (%p189) target = $region32
    $region31: #{_resnet_forward_impl.21} parent=5 // pred_region
      %s193 = ssub.s32 %s9, 1
      %s194 = smul.u32 8, %s19
      %p195 = scmp.lt.s32.totalorder %s194, 15
      %s196 = scalar_select %p195, %s194, 15
      %p197 = scmp.lt.s32.totalorder %s21, 0
      %s198 = scalar_select %p197, %s21, 0
      %s199 = sadd.s32 %s198, %s196
      %s200 = smul.addr %s199, 4
      %s201 = scalar_lea.vmem %s0, %s200
      %p202 = pneg %p56
      %p203 = pneg %p53
      %s204 = smul.u32 16, %s21
      %p205 = scmp.lt.s32.totalorder %s204, 15
      %s206 = scalar_select %p205, %s204, 15
      %p207 = scmp.lt.s32.totalorder %s20, 0
      %s208 = scalar_select %p207, %s20, 0
      %s209 = sadd.s32 %s208, %s206
      %s210 = smul.addr %s209, 4
      %s211 = scalar_lea.vmem %s1, %s210
      %p212 = pneg %p84
      %p213 = pneg %p81
      %p214 = scmp.lt.s32.totalorder %s20, 0
      %s215 = scalar_select %p214, %s20, 0
      %s216 = scalar_lea.vmem %s2, %s215
      %p217 = pneg %p110
      %p218 = pneg %p107
      %p219 = pneg %p138
      %p220 = pneg %p135
      %s221 = smul.u32 8, %s19
      %p222 = scmp.lt.s32.totalorder %s221, 15
      %s223 = scalar_select %p222, %s221, 15
      %p224 = scmp.lt.s32.totalorder %s20, 0
      %s225 = scalar_select %p224, %s20, 0
      %s226 = sadd.s32 %s225, %s223
      %s227 = smul.addr %s226, 4
      %s228 = scalar_lea.vmem %s3, %s227
      %s229 = smul.u32 8, %s19
      %p230 = scmp.lt.s32.totalorder %s229, 15
      %s231 = scalar_select %p230, %s229, 15
      %p232 = scmp.lt.s32.totalorder %s21, 0
      %s233 = scalar_select %p232, %s21, 0
      %s234 = sadd.s32 %s233, %s231
      %s235 = smul.addr %s234, 4
      %s236 = scalar_lea.vmem %s0, %s235
      %s237 = smul.u32 8, %s19
      %s238 = smul.u32 16, %s21
      %p239 = scmp.lt.s32.totalorder %s238, 15
      %s240 = scalar_select %p239, %s238, 15
      %p241 = scmp.lt.s32.totalorder %s20, 0
      %s242 = scalar_select %p241, %s20, 0
      %s243 = sadd.s32 %s242, %s240
      %s244 = smul.addr %s243, 4
      %s245 = scalar_lea.vmem %s1, %s244
      %s246 = smul.u32 16, %s21
      %p247 = scmp.lt.s32.totalorder %s20, 0
      %s248 = scalar_select %p247, %s20, 0
      %s249 = scalar_lea.vmem %s2, %s248
      %s250 = smul.u32 8, %s19
      %p251 = scmp.lt.s32.totalorder %s250, 15
      %s252 = scalar_select %p251, %s250, 15
      %p253 = scmp.lt.s32.totalorder %s20, 0
      %s254 = scalar_select %p253, %s20, 0
      %s255 = sadd.s32 %s254, %s252
      %s256 = smul.addr %s255, 4
      %s257 = scalar_lea.vmem %s3, %s256
      %s258 = smul.u32 8, %s19
      %p259 = scmp.eq.s32.totalorder %s21, 0
      // Predicated region
      $region33: #{_resnet_forward_impl.21} parent=31 // pred_check
        %p260 = pneg %p259
      $region34: #{_resnet_forward_impl.21} parent=31 // pred_check_branch
        %262 = sbr.rel (%p260) target = $region36
      $region35: #{_resnet_forward_impl.21} parent=31 // pred_region
        %263 = vst [vmem:[#allocation2] sm:$0xff] 0.0
        %264 = vst [vmem:[#allocation2 + $0x8] sm:$0xff] 0.0
        %265 = vst [vmem:[#allocation2 + $0x10] sm:$0xff] 0.0
        %266 = vst [vmem:[#allocation2 + $0x18] sm:$0xff] 0.0
        %267 = vst [vmem:[#allocation2 + $0x20] sm:$0xff] 0.0
        %268 = vst [vmem:[#allocation2 + $0x28] sm:$0xff] 0.0
        %269 = vst [vmem:[#allocation2 + $0x30] sm:$0xff] 0.0
        %270 = vst [vmem:[#allocation2 + $0x38] sm:$0xff] 0.0
      $region36: #{_resnet_forward_impl.21} parent=31 // pred_fallthru
        _
      %v271 = vld [vmem:[#allocation2] sm:$0xff]
      %v272 = vld [vmem:[#allocation2 + $0x8] sm:$0xff]
      %v273 = vld [vmem:[#allocation2 + $0x10] sm:$0xff]
      %v274 = vld [vmem:[#allocation2 + $0x18] sm:$0xff]
      %v275 = vld [vmem:[#allocation2 + $0x20] sm:$0xff]
      %v276 = vld [vmem:[#allocation2 + $0x28] sm:$0xff]
      %v277 = vld [vmem:[#allocation2 + $0x30] sm:$0xff]
      %v278 = vld [vmem:[#allocation2 + $0x38] sm:$0xff]
      %v279 = vld [vmem:[%s236] sm:$0xf]
      %v280 = vld [vmem:[%s236 + $0x4] sm:$0xf]
      %v281 = vld [vmem:[%s236 + $0x8] sm:$0xf]
      %v282 = vld [vmem:[%s236 + $0xc] sm:$0xf]
      %v283 = vld [vmem:[%s236 + $0x10] sm:$0xf]
      %v284 = vld [vmem:[%s236 + $0x14] sm:$0xf]
      %v285 = vld [vmem:[%s236 + $0x18] sm:$0xf]
      %v286 = vld [vmem:[%s236 + $0x1c] sm:$0xf]
      %v287 = vld [vmem:[%s245] sm:$0xf]
      %v288 = vld [vmem:[%s245 + $0x4] sm:$0xf]
      %v289 = vld [vmem:[%s245 + $0x8] sm:$0xf]
      %v290 = vld [vmem:[%s245 + $0xc] sm:$0xf]
      %v291 = vld [vmem:[%s245 + $0x10] sm:$0xf]
      %v292 = vld [vmem:[%s245 + $0x14] sm:$0xf]
      %v293 = vld [vmem:[%s245 + $0x18] sm:$0xf]
      %v294 = vld [vmem:[%s245 + $0x1c] sm:$0xf]
      %v295 = vld [vmem:[%s245 + $0x20] sm:$0xf]
      %v296 = vld [vmem:[%s245 + $0x24] sm:$0xf]
      %v297 = vld [vmem:[%s245 + $0x28] sm:$0xf]
      %v298 = vld [vmem:[%s245 + $0x2c] sm:$0xf]
      %v299 = vld [vmem:[%s245 + $0x30] sm:$0xf]
      %v300 = vld [vmem:[%s245 + $0x34] sm:$0xf]
      %v301 = vld [vmem:[%s245 + $0x38] sm:$0xf]
      %v302 = vld [vmem:[%s245 + $0x3c] sm:$0xf]
      %v311 = vunpack.c.l.b16 %v279
      %v312 = vunpack.c.l.b16 %v280
      %v313 = vunpack.c.l.b16 %v281
      %v314 = vunpack.c.l.b16 %v282
      %v315 = vunpack.c.l.b16 %v283
      %v316 = vunpack.c.l.b16 %v284
      %v317 = vunpack.c.l.b16 %v285
      %v318 = vunpack.c.l.b16 %v286
      %v319 = vpack.c.b16 %v312, %v311
      %v320 = vpack.c.b16 %v314, %v313
      %v321 = vpack.c.b16 %v316, %v315
      %v322 = vpack.c.b16 %v318, %v317
      %v343 = vunpack.c.l.b16 %v287
      %v344 = vunpack.c.l.b16 %v288
      %v345 = vunpack.c.l.b16 %v289
      %v346 = vunpack.c.l.b16 %v290
      %v347 = vunpack.c.l.b16 %v291
      %v348 = vunpack.c.l.b16 %v292
      %v349 = vunpack.c.l.b16 %v293
      %v350 = vunpack.c.l.b16 %v294
      %v351 = vunpack.c.l.b16 %v295
      %v352 = vunpack.c.l.b16 %v296
      %v353 = vunpack.c.l.b16 %v297
      %v354 = vunpack.c.l.b16 %v298
      %v355 = vunpack.c.l.b16 %v299
      %v356 = vunpack.c.l.b16 %v300
      %v357 = vunpack.c.l.b16 %v301
      %v358 = vunpack.c.l.b16 %v302
      %v359 = vpack.c.b16 %v344, %v343
      %v360 = vpack.c.b16 %v346, %v345
      %v361 = vpack.c.b16 %v348, %v347
      %v362 = vpack.c.b16 %v350, %v349
      %v363 = vpack.c.b16 %v352, %v351
      %v364 = vpack.c.b16 %v354, %v353
      %v365 = vpack.c.b16 %v356, %v355
      %v366 = vpack.c.b16 %v358, %v357
      %375 = vmatpush.bf16.msra.mxu0 %v366
      %376 = vmatpush.bf16.msra.mxu0 %v365
      %377 = vmatpush.bf16.msra.mxu0 %v364
      %378 = vmatpush.bf16.msra.mxu0 %v363
      %379 = vmatpush.bf16.msra.mxu0 %v362
      %380 = vmatpush.bf16.msra.mxu0 %v361
      %381 = vmatpush.bf16.msra.mxu0 %v360
      %382 = vmatpush.bf16.msra.mxu0 %v359
      %383 = vmatmul.bf16.gmra.mxu0 %v319
      %v384 = vpop.f32.mrf.mxu0
      %v385 = vadd.f32 0.0, %v384
      %v386 = vpop.f32.mrf.mxu0
      %v387 = vadd.f32 0.0, %v386
      %388 = vmatmul.bf16.gmra.mxu0 %v320
      %v389 = vpop.f32.mrf.mxu0
      %v390 = vadd.f32 0.0, %v389
      %v391 = vpop.f32.mrf.mxu0
      %v392 = vadd.f32 0.0, %v391
      %393 = vmatmul.bf16.gmra.mxu0 %v321
      %v394 = vpop.f32.mrf.mxu0
      %v395 = vadd.f32 0.0, %v394
      %v396 = vpop.f32.mrf.mxu0
      %v397 = vadd.f32 0.0, %v396
      %398 = vmatmul.bf16.gmra.mxu0 %v322
      %v399 = vpop.f32.mrf.mxu0
      %v400 = vadd.f32 0.0, %v399
      %v401 = vpop.f32.mrf.mxu0
      %v402 = vadd.f32 0.0, %v401
      %403 = vdwg.mxu0
      %v404 = vadd.f32 %v271, %v385
      %v405 = vadd.f32 %v272, %v387
      %v406 = vadd.f32 %v273, %v390
      %v407 = vadd.f32 %v274, %v392
      %v408 = vadd.f32 %v275, %v395
      %v409 = vadd.f32 %v276, %v397
      %v410 = vadd.f32 %v277, %v400
      %v411 = vadd.f32 %v278, %v402
      %412 = vst [vmem:[#allocation2] sm:$0xff] %v404
      %413 = vst [vmem:[#allocation2 + $0x8] sm:$0xff] %v405
      %414 = vst [vmem:[#allocation2 + $0x10] sm:$0xff] %v406
      %415 = vst [vmem:[#allocation2 + $0x18] sm:$0xff] %v407
      %416 = vst [vmem:[#allocation2 + $0x20] sm:$0xff] %v408
      %417 = vst [vmem:[#allocation2 + $0x28] sm:$0xff] %v409
      %418 = vst [vmem:[#allocation2 + $0x30] sm:$0xff] %v410
      %419 = vst [vmem:[#allocation2 + $0x38] sm:$0xff] %v411
      // Predicated region
      $region37: #{_resnet_forward_impl.21} parent=31 // pred_check
        %p420 = pneg %p259
      $region38: #{_resnet_forward_impl.21} parent=31 // pred_check_branch
        %422 = sbr.rel (%p420) target = $region40
      $region39: #{_resnet_forward_impl.21} parent=31 // pred_region
        %v423 = vld [vmem:[#allocation2] sm:$0xff]
        %v424 = vld [vmem:[#allocation2 + $0x8] sm:$0xff]
        %v425 = vld [vmem:[#allocation2 + $0x10] sm:$0xff]
        %v426 = vld [vmem:[#allocation2 + $0x18] sm:$0xff]
        %v427 = vld [vmem:[#allocation2 + $0x20] sm:$0xff]
        %v428 = vld [vmem:[#allocation2 + $0x28] sm:$0xff]
        %v429 = vld [vmem:[#allocation2 + $0x30] sm:$0xff]
        %v430 = vld [vmem:[#allocation2 + $0x38] sm:$0xff]
        %v431 = vld [vmem:[%s249] sm:$0x1]
        %v433 = vperm.slane %v431, 0
        %v435 = vadd.f32 %v423, %v433
        %v436 = vadd.f32 %v424, %v433
        %v437 = vadd.f32 %v425, %v433
        %v438 = vadd.f32 %v426, %v433
        %v439 = vadd.f32 %v427, %v433
        %v440 = vadd.f32 %v428, %v433
        %v441 = vadd.f32 %v429, %v433
        %v442 = vadd.f32 %v430, %v433
        %v443 = vmax.f32 %v435, 0.0
        %v444 = vmax.f32 %v436, 0.0
        %v445 = vmax.f32 %v437, 0.0
        %v446 = vmax.f32 %v438, 0.0
        %v447 = vmax.f32 %v439, 0.0
        %v448 = vmax.f32 %v440, 0.0
        %v449 = vmax.f32 %v441, 0.0
        %v450 = vmax.f32 %v442, 0.0
        %v451 = vpack.c.bf16 %v443, %v443
        %v452 = vpack.c.bf16 %v444, %v444
        %v453 = vpack.c.bf16 %v445, %v445
        %v454 = vpack.c.bf16 %v446, %v446
        %v455 = vpack.c.bf16 %v447, %v447
        %v456 = vpack.c.bf16 %v448, %v448
        %v457 = vpack.c.bf16 %v449, %v449
        %v458 = vpack.c.bf16 %v450, %v450
        %459 = vst [vmem:[%s257] sm:$0xf] %v451
        %460 = vst [vmem:[%s257 + $0x4] sm:$0xf] %v452
        %461 = vst [vmem:[%s257 + $0x8] sm:$0xf] %v453
        %462 = vst [vmem:[%s257 + $0xc] sm:$0xf] %v454
        %463 = vst [vmem:[%s257 + $0x10] sm:$0xf] %v455
        %464 = vst [vmem:[%s257 + $0x14] sm:$0xf] %v456
        %465 = vst [vmem:[%s257 + $0x18] sm:$0xf] %v457
        %466 = vst [vmem:[%s257 + $0x1c] sm:$0xf] %v458
      $region40: #{_resnet_forward_impl.21} parent=31 // pred_fallthru
        _
      %s467 = smul.u32 8, %s19
      %p468 = scmp.lt.s32.totalorder %s467, 15
      %s469 = scalar_select %p468, %s467, 15
      %p470 = scmp.lt.s32.totalorder %s20, 0
      %s471 = scalar_select %p470, %s20, 0
      %s472 = sadd.s32 %s471, %s469
      %s473 = smul.addr %s472, 4
      %s474 = scalar_lea.vmem %s3, %s473
      // Predicated region
      $region41: #{_resnet_forward_impl.21} parent=31 // pred_check
        %p475 = pneg %p135
      $region42: #{_resnet_forward_impl.21} parent=31 // pred_check_branch
        %477 = sbr.rel (%p475) target = $region44
      $region43: #{_resnet_forward_impl.21} parent=31 // pred_region
        %s478 = smul.u32 8, %s19
      $region44: #{_resnet_forward_impl.21} parent=31 // pred_fallthru
        _
    $region32: #{_resnet_forward_impl.21} parent=5 // pred_fallthru
      _
    %p479 = scmp.le.s32.totalorder 2, %s9
    // Predicated region
    $region45: #{_resnet_forward_impl.21} parent=5 // pred_check
      %p480 = pneg %p479
    $region46: #{_resnet_forward_impl.21} parent=5 // pred_check_branch
      %482 = sbr.rel (%p480) target = $region48
    $region47: #{_resnet_forward_impl.21} parent=5 // pred_region
      %s483 = ssub.s32 %s9, 2
      // Predicated region
      $region49: #{_resnet_forward_impl.21} parent=47 // pred_check
        %p484 = pneg %p141
      $region50: #{_resnet_forward_impl.21} parent=47 // pred_check_branch
        %486 = sbr.rel (%p484) target = $region52
      $region51: #{_resnet_forward_impl.21} parent=47 // pred_region
        %s487 = smul.u32 8, %s22
        %p488 = scmp.lt.s32.totalorder %s487, 15
        %s489 = scalar_select %p488, %s487, 15
        %p490 = scmp.lt.s32.totalorder %s23, 0
        %s491 = scalar_select %p490, %s23, 0
        %s492 = sadd.s32 %s491, %s489
        %s493 = smul.addr %s492, 4
        %s494 = scalar_lea.vmem %s3, %s493
      $region52: #{_resnet_forward_impl.21} parent=47 // pred_fallthru
        _
    $region48: #{_resnet_forward_impl.21} parent=5 // pred_fallthru
      _
  $region6: #{_resnet_forward_impl.21} parent=0 // loop_footer
    %s13 = sadd.s32 1, %s9
  $region7: #{_resnet_forward_impl.21} parent=0 // loop_footer_branch
    %8 = sbr.rel target = $region3
  $region8: #{_resnet_forward_impl.21} parent=0 // loop_exit
    _

// kernel: _resnet_forward_impl.22
$region0: #{_resnet_forward_impl.22}
  #allocation0 [shape = 'u32[]', space=smem, size = 0x4, offset = 0x4, fixed_abs, tag = 'smem constant byte address 0x4 - core index']
  #allocation1 [shape = 'u32[72,128]{1,0:T(1,128)}', space=vmem, size = 0x9000, scoped, tag = 'internal scratch']
  #allocation2 [shape = 'f32[64,128]{1,0:T(8,128)}', space=vmem, size = 0x8000, scoped, tag = 'scratch operand']
  %s0 = inlined_call_operand.vmem [shape: bf16[128,128], index: 0, kind: input, shape index: {}]
  %s1 = inlined_call_operand.vmem [shape: bf16[128,128], index: 1, kind: input, shape index: {}]
  %s2 = inlined_call_operand.vmem [shape: f32[1,128], index: 2, kind: input, shape index: {}]
  %s3 = inlined_call_operand.vmem [shape: bf16[128,128], index: 3, kind: input, shape index: {}]
  %s4 = inlined_call_operand.vmem [shape: bf16[128,128], index: 4, kind: output, shape index: {}]
  %s5 = sld [smem:[#allocation0]]
  $region57: #{_resnet_forward_impl.22} parent=0
    _
  %s7 = ssub.s32 1, %s5
  %s8 = scalar_select 0, %s7, %s5
  loop: start=0, step=1, limit=4
  $region2: #{_resnet_forward_impl.22} parent=0 // loop_pre_header
    _
  $region3: #{_resnet_forward_impl.22} parent=0 // loop_header
    %s10 = sphi 0, %s14
    %p11 = scmp.ge.s32.totalorder %s10, 4
    %s17 = sphi 0, %s36
    %s18 = sphi 0, %s32
    %s19 = sphi 0, %s28
    %s20 = sphi 0, %s17
    %s21 = sphi 0, %s18
    %s22 = sphi 0, %s19
    %s23 = sphi 0, %s20
    %s24 = sphi 0, %s21
    %s25 = sphi 0, %s22
    %s41 = sphi 0, %s43
    %s44 = sphi 0, %s41
    %s45 = sphi 0, %s44
    %s61 = sphi 0, %s45
    %s69 = sphi 0, %s71
    %s72 = sphi 0, %s69
    %s73 = sphi 0, %s72
    %s89 = sphi 0, %s73
    %s95 = sphi 0, %s97
    %s98 = sphi 0, %s95
    %s99 = sphi 0, %s98
    %s115 = sphi 0, %s99
    %s123 = sphi 0, %s125
    %s126 = sphi 0, %s123
    %s127 = sphi 0, %s126
    %s143 = sphi 0, %s127
    %s151 = sphi 0, %s153
    %s154 = sphi 0, %s151
    %s155 = sphi 0, %s154
    %s171 = sphi 0, %s155
  $region4: #{_resnet_forward_impl.22} parent=0 // loop_header_branch
    %13 = sbr.rel (%p11) target = $region8
  $region5: #{_resnet_forward_impl.22} parent=0 // loop_body
    %s15 = ssub.s32 %s10, 1
    %s16 = ssub.s32 %s10, 2
    %s26 = sadd.s32 1, %s19
    %p27 = scmp.ge.s32.totalorder %s26, 1
    %s28 = scalar_select %p27, 0, %s26
    %s29 = sadd.s32 1, %s18
    %s30 = scalar_select %p27, %s29, %s18
    %p31 = scmp.ge.s32.totalorder %s30, 1
    %s32 = scalar_select %p31, 0, %s30
    %s33 = sadd.s32 1, %s17
    %s34 = scalar_select %p31, %s33, %s17
    %p35 = scmp.ge.s32.totalorder %s34, 2
    %s36 = scalar_select %p35, 0, %s34
    %s37 = ssub.s32 %s17, %s36
    %s38 = ssub.s32 %s19, %s28
    %s39 = sor.u32 %s37, %s38
    %p40 = scmp.eq.s32.totalorder %s39, 0
    %s42 = sadd.s32 %s41, 1
    %s43 = scalar_select %p40, %s41, %s42
    %p46 = pneg %p40
    %p47 = scmp.eq.s32.totalorder %s10, 1
    %p48 = por %p46, %p47
    %p49 = scmp.ne.s32.totalorder %s41, %s44
    %p50 = scmp.eq.s32.totalorder %s10, 0
    %p51 = por %p49, %p50
    %p52 = scmp.ne.s32.totalorder %s41, %s44
    %p53 = scmp.eq.s32.totalorder %s15, 1
    %p54 = por %p52, %p53
    %p55 = scmp.ne.s32.totalorder %s44, %s45
    %p56 = scmp.eq.s32.totalorder %s15, 0
    %p57 = por %p55, %p56
    %p58 = scmp.ne.s32.totalorder %s44, %s45
    %p59 = scmp.eq.s32.totalorder %s16, 1
    %p60 = por %p58, %p59
    %p62 = scmp.ne.s32.totalorder %s45, %s61
    %p63 = scmp.eq.s32.totalorder %s16, 0
    %p64 = por %p62, %p63
    %s65 = ssub.s32 %s19, %s28
    %s66 = ssub.s32 %s18, %s32
    %s67 = sor.u32 %s65, %s66
    %p68 = scmp.eq.s32.totalorder %s67, 0
    %s70 = sadd.s32 %s69, 1
    %s71 = scalar_select %p68, %s69, %s70
    %p74 = pneg %p68
    %p75 = scmp.eq.s32.totalorder %s10, 1
    %p76 = por %p74, %p75
    %p77 = scmp.ne.s32.totalorder %s69, %s72
    %p78 = scmp.eq.s32.totalorder %s10, 0
    %p79 = por %p77, %p78
    %p80 = scmp.ne.s32.totalorder %s69, %s72
    %p81 = scmp.eq.s32.totalorder %s15, 1
    %p82 = por %p80, %p81
    %p83 = scmp.ne.s32.totalorder %s72, %s73
    %p84 = scmp.eq.s32.totalorder %s15, 0
    %p85 = por %p83, %p84
    %p86 = scmp.ne.s32.totalorder %s72, %s73
    %p87 = scmp.eq.s32.totalorder %s16, 1
    %p88 = por %p86, %p87
    %p90 = scmp.ne.s32.totalorder %s73, %s89
    %p91 = scmp.eq.s32.totalorder %s16, 0
    %p92 = por %p90, %p91
    %s93 = ssub.s32 %s18, %s32
    %p94 = scmp.eq.s32.totalorder %s93, 0
    %s96 = sadd.s32 %s95, 1
    %s97 = scalar_select %p94, %s95, %s96
    %p100 = pneg %p94
    %p101 = scmp.eq.s32.totalorder %s10, 1
    %p102 = por %p100, %p101
    %p103 = scmp.ne.s32.totalorder %s95, %s98
    %p104 = scmp.eq.s32.totalorder %s10, 0
    %p105 = por %p103, %p104
    %p106 = scmp.ne.s32.totalorder %s95, %s98
    %p107 = scmp.eq.s32.totalorder %s15, 1
    %p108 = por %p106, %p107
    %p109 = scmp.ne.s32.totalorder %s98, %s99
    %p110 = scmp.eq.s32.totalorder %s15, 0
    %p111 = por %p109, %p110
    %p112 = scmp.ne.s32.totalorder %s98, %s99
    %p113 = scmp.eq.s32.totalorder %s16, 1
    %p114 = por %p112, %p113
    %p116 = scmp.ne.s32.totalorder %s99, %s115
    %p117 = scmp.eq.s32.totalorder %s16, 0
    %p118 = por %p116, %p117
    %s119 = ssub.s32 %s17, %s36
    %s120 = ssub.s32 %s18, %s32
    %s121 = sor.u32 %s119, %s120
    %p122 = scmp.eq.s32.totalorder %s121, 0
    %s124 = sadd.s32 %s123, 1
    %s125 = scalar_select %p122, %s123, %s124
    %p128 = pneg %p122
    %p129 = scmp.eq.s32.totalorder %s10, 1
    %p130 = por %p128, %p129
    %p131 = scmp.ne.s32.totalorder %s123, %s126
    %p132 = scmp.eq.s32.totalorder %s10, 0
    %p133 = por %p131, %p132
    %p134 = scmp.ne.s32.totalorder %s123, %s126
    %p135 = scmp.eq.s32.totalorder %s15, 1
    %p136 = por %p134, %p135
    %p137 = scmp.ne.s32.totalorder %s126, %s127
    %p138 = scmp.eq.s32.totalorder %s15, 0
    %p139 = por %p137, %p138
    %p140 = scmp.ne.s32.totalorder %s126, %s127
    %p141 = scmp.eq.s32.totalorder %s16, 1
    %p142 = por %p140, %p141
    %p144 = scmp.ne.s32.totalorder %s127, %s143
    %p145 = scmp.eq.s32.totalorder %s16, 0
    %p146 = por %p144, %p145
    %s147 = ssub.s32 %s17, %s36
    %s148 = ssub.s32 %s18, %s32
    %s149 = sor.u32 %s147, %s148
    %p150 = scmp.eq.s32.totalorder %s149, 0
    %s152 = sadd.s32 %s151, 1
    %s153 = scalar_select %p150, %s151, %s152
    %p156 = pneg %p150
    %p157 = scmp.eq.s32.totalorder %s10, 1
    %p158 = por %p156, %p157
    %p159 = scmp.ne.s32.totalorder %s151, %s154
    %p160 = scmp.eq.s32.totalorder %s10, 0
    %p161 = por %p159, %p160
    %p162 = scmp.ne.s32.totalorder %s151, %s154
    %p163 = scmp.eq.s32.totalorder %s15, 1
    %p164 = por %p162, %p163
    %p165 = scmp.ne.s32.totalorder %s154, %s155
    %p166 = scmp.eq.s32.totalorder %s15, 0
    %p167 = por %p165, %p166
    %p168 = scmp.ne.s32.totalorder %s154, %s155
    %p169 = scmp.eq.s32.totalorder %s16, 1
    %p170 = por %p168, %p169
    %p172 = scmp.ne.s32.totalorder %s155, %s171
    %p173 = scmp.eq.s32.totalorder %s16, 0
    %p174 = por %p172, %p173
    %p175 = scmp.le.s32.totalorder 1, %s10
    %p176 = scmp.lt.s32.totalorder %s10, 3
    %p177 = pnand %p175, %p176
    %p178 = pneg %p177
    // Predicated region
    $region9: #{_resnet_forward_impl.22} parent=5 // pred_check
      _
    $region10: #{_resnet_forward_impl.22} parent=5 // pred_check_branch
      %180 = sbr.rel (%p177) target = $region12
    $region11: #{_resnet_forward_impl.22} parent=5 // pred_region
      %s181 = ssub.s32 %s10, 1
      // Predicated region
      $region13: #{_resnet_forward_impl.22} parent=11 // pred_check
        %p182 = pneg %p85
      $region14: #{_resnet_forward_impl.22} parent=11 // pred_check_branch
        %184 = sbr.rel (%p182) target = $region16
      $region15: #{_resnet_forward_impl.22} parent=11 // pred_region
        %s185 = smul.u32 16, %s22
        %p186 = scmp.lt.s32.totalorder %s185, 15
        %s187 = scalar_select %p186, %s185, 15
        %p188 = scmp.lt.s32.totalorder %s21, 0
        %s189 = scalar_select %p188, %s21, 0
        %s190 = sadd.s32 %s189, %s187
        %s191 = smul.addr %s190, 4
        %s192 = scalar_lea.vmem %s1, %s191
        %s193 = smul.u32 16, %s22
      $region16: #{_resnet_forward_impl.22} parent=11 // pred_fallthru
        _
      // Predicated region
      $region17: #{_resnet_forward_impl.22} parent=11 // pred_check
        %p194 = pneg %p111
      $region18: #{_resnet_forward_impl.22} parent=11 // pred_check_branch
        %196 = sbr.rel (%p194) target = $region20
      $region19: #{_resnet_forward_impl.22} parent=11 // pred_region
        %p197 = scmp.lt.s32.totalorder %s21, 0
        %s198 = scalar_select %p197, %s21, 0
        %s199 = scalar_lea.vmem %s2, %s198
      $region20: #{_resnet_forward_impl.22} parent=11 // pred_fallthru
        _
    $region12: #{_resnet_forward_impl.22} parent=5 // pred_fallthru
      _
    %p200 = scmp.lt.s32.totalorder %s10, 2
    // Predicated region
    $region21: #{_resnet_forward_impl.22} parent=5 // pred_check
      %p201 = pneg %p200
    $region22: #{_resnet_forward_impl.22} parent=5 // pred_check_branch
      %203 = sbr.rel (%p201) target = $region24
    $region23: #{_resnet_forward_impl.22} parent=5 // pred_region
      // Predicated region
      $region25: #{_resnet_forward_impl.22} parent=23 // pred_check
        %p204 = pneg %p51
      $region26: #{_resnet_forward_impl.22} parent=23 // pred_check_branch
        %206 = sbr.rel (%p204) target = $region28
      $region27: #{_resnet_forward_impl.22} parent=23 // pred_region
        %s207 = smul.u32 8, %s17
        %p208 = scmp.lt.s32.totalorder %s207, 15
        %s209 = scalar_select %p208, %s207, 15
        %p210 = scmp.lt.s32.totalorder %s19, 0
        %s211 = scalar_select %p210, %s19, 0
        %s212 = sadd.s32 %s211, %s209
        %s213 = smul.addr %s212, 4
        %s214 = scalar_lea.vmem %s0, %s213
        %s215 = smul.u32 8, %s17
      $region28: #{_resnet_forward_impl.22} parent=23 // pred_fallthru
        _
      // Predicated region
      $region29: #{_resnet_forward_impl.22} parent=23 // pred_check
        %p216 = pneg %p133
      $region30: #{_resnet_forward_impl.22} parent=23 // pred_check_branch
        %218 = sbr.rel (%p216) target = $region32
      $region31: #{_resnet_forward_impl.22} parent=23 // pred_region
        %s219 = smul.u32 8, %s17
        %p220 = scmp.lt.s32.totalorder %s219, 15
        %s221 = scalar_select %p220, %s219, 15
        %p222 = scmp.lt.s32.totalorder %s18, 0
        %s223 = scalar_select %p222, %s18, 0
        %s224 = sadd.s32 %s223, %s221
        %s225 = smul.addr %s224, 4
        %s226 = scalar_lea.vmem %s3, %s225
        %s227 = smul.u32 8, %s17
      $region32: #{_resnet_forward_impl.22} parent=23 // pred_fallthru
        _
    $region24: #{_resnet_forward_impl.22} parent=5 // pred_fallthru
      _
    %p228 = scmp.le.s32.totalorder 1, %s10
    %p229 = scmp.lt.s32.totalorder %s10, 3
    %p230 = pnand %p228, %p229
    %p231 = pneg %p230
    // Predicated region
    $region33: #{_resnet_forward_impl.22} parent=5 // pred_check
      _
    $region34: #{_resnet_forward_impl.22} parent=5 // pred_check_branch
      %233 = sbr.rel (%p230) target = $region36
    $region35: #{_resnet_forward_impl.22} parent=5 // pred_region
      %s234 = ssub.s32 %s10, 1
      %s235 = smul.u32 8, %s20
      %p236 = scmp.lt.s32.totalorder %s235, 15
      %s237 = scalar_select %p236, %s235, 15
      %p238 = scmp.lt.s32.totalorder %s22, 0
      %s239 = scalar_select %p238, %s22, 0
      %s240 = sadd.s32 %s239, %s237
      %s241 = smul.addr %s240, 4
      %s242 = scalar_lea.vmem %s0, %s241
      %p243 = pneg %p57
      %p244 = pneg %p54
      %s245 = smul.u32 16, %s22
      %p246 = scmp.lt.s32.totalorder %s245, 15
      %s247 = scalar_select %p246, %s245, 15
      %p248 = scmp.lt.s32.totalorder %s21, 0
      %s249 = scalar_select %p248, %s21, 0
      %s250 = sadd.s32 %s249, %s247
      %s251 = smul.addr %s250, 4
      %s252 = scalar_lea.vmem %s1, %s251
      %p253 = pneg %p85
      %p254 = pneg %p82
      %p255 = scmp.lt.s32.totalorder %s21, 0
      %s256 = scalar_select %p255, %s21, 0
      %s257 = scalar_lea.vmem %s2, %s256
      %p258 = pneg %p111
      %p259 = pneg %p108
      %s260 = smul.u32 8, %s20
      %p261 = scmp.lt.s32.totalorder %s260, 15
      %s262 = scalar_select %p261, %s260, 15
      %p263 = scmp.lt.s32.totalorder %s21, 0
      %s264 = scalar_select %p263, %s21, 0
      %s265 = sadd.s32 %s264, %s262
      %s266 = smul.addr %s265, 4
      %s267 = scalar_lea.vmem %s3, %s266
      %p268 = pneg %p139
      %p269 = pneg %p136
      %p270 = pneg %p167
      %p271 = pneg %p164
      %s272 = smul.u32 8, %s20
      %p273 = scmp.lt.s32.totalorder %s272, 15
      %s274 = scalar_select %p273, %s272, 15
      %p275 = scmp.lt.s32.totalorder %s21, 0
      %s276 = scalar_select %p275, %s21, 0
      %s277 = sadd.s32 %s276, %s274
      %s278 = smul.addr %s277, 4
      %s279 = scalar_lea.vmem %s4, %s278
      %s280 = smul.u32 8, %s20
      %p281 = scmp.lt.s32.totalorder %s280, 15
      %s282 = scalar_select %p281, %s280, 15
      %p283 = scmp.lt.s32.totalorder %s22, 0
      %s284 = scalar_select %p283, %s22, 0
      %s285 = sadd.s32 %s284, %s282
      %s286 = smul.addr %s285, 4
      %s287 = scalar_lea.vmem %s0, %s286
      %s288 = smul.u32 8, %s20
      %s289 = smul.u32 16, %s22
      %p290 = scmp.lt.s32.totalorder %s289, 15
      %s291 = scalar_select %p290, %s289, 15
      %p292 = scmp.lt.s32.totalorder %s21, 0
      %s293 = scalar_select %p292, %s21, 0
      %s294 = sadd.s32 %s293, %s291
      %s295 = smul.addr %s294, 4
      %s296 = scalar_lea.vmem %s1, %s295
      %s297 = smul.u32 16, %s22
      %p298 = scmp.lt.s32.totalorder %s21, 0
      %s299 = scalar_select %p298, %s21, 0
      %s300 = scalar_lea.vmem %s2, %s299
      %s301 = smul.u32 8, %s20
      %p302 = scmp.lt.s32.totalorder %s301, 15
      %s303 = scalar_select %p302, %s301, 15
      %p304 = scmp.lt.s32.totalorder %s21, 0
      %s305 = scalar_select %p304, %s21, 0
      %s306 = sadd.s32 %s305, %s303
      %s307 = smul.addr %s306, 4
      %s308 = scalar_lea.vmem %s3, %s307
      %s309 = smul.u32 8, %s20
      %s310 = smul.u32 8, %s20
      %p311 = scmp.lt.s32.totalorder %s310, 15
      %s312 = scalar_select %p311, %s310, 15
      %p313 = scmp.lt.s32.totalorder %s21, 0
      %s314 = scalar_select %p313, %s21, 0
      %s315 = sadd.s32 %s314, %s312
      %s316 = smul.addr %s315, 4
      %s317 = scalar_lea.vmem %s4, %s316
      %s318 = smul.u32 8, %s20
      %p319 = scmp.eq.s32.totalorder %s22, 0
      // Predicated region
      $region37: #{_resnet_forward_impl.22} parent=35 // pred_check
        %p320 = pneg %p319
      $region38: #{_resnet_forward_impl.22} parent=35 // pred_check_branch
        %322 = sbr.rel (%p320) target = $region40
      $region39: #{_resnet_forward_impl.22} parent=35 // pred_region
        %323 = vst [vmem:[#allocation2] sm:$0xff] 0.0
        %324 = vst [vmem:[#allocation2 + $0x8] sm:$0xff] 0.0
        %325 = vst [vmem:[#allocation2 + $0x10] sm:$0xff] 0.0
        %326 = vst [vmem:[#allocation2 + $0x18] sm:$0xff] 0.0
        %327 = vst [vmem:[#allocation2 + $0x20] sm:$0xff] 0.0
        %328 = vst [vmem:[#allocation2 + $0x28] sm:$0xff] 0.0
        %329 = vst [vmem:[#allocation2 + $0x30] sm:$0xff] 0.0
        %330 = vst [vmem:[#allocation2 + $0x38] sm:$0xff] 0.0
      $region40: #{_resnet_forward_impl.22} parent=35 // pred_fallthru
        _
      %v331 = vld [vmem:[#allocation2] sm:$0xff]
      %v332 = vld [vmem:[#allocation2 + $0x8] sm:$0xff]
      %v333 = vld [vmem:[#allocation2 + $0x10] sm:$0xff]
      %v334 = vld [vmem:[#allocation2 + $0x18] sm:$0xff]
      %v335 = vld [vmem:[#allocation2 + $0x20] sm:$0xff]
      %v336 = vld [vmem:[#allocation2 + $0x28] sm:$0xff]
      %v337 = vld [vmem:[#allocation2 + $0x30] sm:$0xff]
      %v338 = vld [vmem:[#allocation2 + $0x38] sm:$0xff]
      %v339 = vld [vmem:[%s287] sm:$0xf]
      %v340 = vld [vmem:[%s287 + $0x4] sm:$0xf]
      %v341 = vld [vmem:[%s287 + $0x8] sm:$0xf]
      %v342 = vld [vmem:[%s287 + $0xc] sm:$0xf]
      %v343 = vld [vmem:[%s287 + $0x10] sm:$0xf]
      %v344 = vld [vmem:[%s287 + $0x14] sm:$0xf]
      %v345 = vld [vmem:[%s287 + $0x18] sm:$0xf]
      %v346 = vld [vmem:[%s287 + $0x1c] sm:$0xf]
      %v347 = vld [vmem:[%s296] sm:$0xf]
      %v348 = vld [vmem:[%s296 + $0x4] sm:$0xf]
      %v349 = vld [vmem:[%s296 + $0x8] sm:$0xf]
      %v350 = vld [vmem:[%s296 + $0xc] sm:$0xf]
      %v351 = vld [vmem:[%s296 + $0x10] sm:$0xf]
      %v352 = vld [vmem:[%s296 + $0x14] sm:$0xf]
      %v353 = vld [vmem:[%s296 + $0x18] sm:$0xf]
      %v354 = vld [vmem:[%s296 + $0x1c] sm:$0xf]
      %v355 = vld [vmem:[%s296 + $0x20] sm:$0xf]
      %v356 = vld [vmem:[%s296 + $0x24] sm:$0xf]
      %v357 = vld [vmem:[%s296 + $0x28] sm:$0xf]
      %v358 = vld [vmem:[%s296 + $0x2c] sm:$0xf]
      %v359 = vld [vmem:[%s296 + $0x30] sm:$0xf]
      %v360 = vld [vmem:[%s296 + $0x34] sm:$0xf]
      %v361 = vld [vmem:[%s296 + $0x38] sm:$0xf]
      %v362 = vld [vmem:[%s296 + $0x3c] sm:$0xf]
      %v371 = vunpack.c.l.b16 %v339
      %v372 = vunpack.c.l.b16 %v340
      %v373 = vunpack.c.l.b16 %v341
      %v374 = vunpack.c.l.b16 %v342
      %v375 = vunpack.c.l.b16 %v343
      %v376 = vunpack.c.l.b16 %v344
      %v377 = vunpack.c.l.b16 %v345
      %v378 = vunpack.c.l.b16 %v346
      %v379 = vpack.c.b16 %v372, %v371
      %v380 = vpack.c.b16 %v374, %v373
      %v381 = vpack.c.b16 %v376, %v375
      %v382 = vpack.c.b16 %v378, %v377
      %v403 = vunpack.c.l.b16 %v347
      %v404 = vunpack.c.l.b16 %v348
      %v405 = vunpack.c.l.b16 %v349
      %v406 = vunpack.c.l.b16 %v350
      %v407 = vunpack.c.l.b16 %v351
      %v408 = vunpack.c.l.b16 %v352
      %v409 = vunpack.c.l.b16 %v353
      %v410 = vunpack.c.l.b16 %v354
      %v411 = vunpack.c.l.b16 %v355
      %v412 = vunpack.c.l.b16 %v356
      %v413 = vunpack.c.l.b16 %v357
      %v414 = vunpack.c.l.b16 %v358
      %v415 = vunpack.c.l.b16 %v359
      %v416 = vunpack.c.l.b16 %v360
      %v417 = vunpack.c.l.b16 %v361
      %v418 = vunpack.c.l.b16 %v362
      %v419 = vpack.c.b16 %v404, %v403
      %v420 = vpack.c.b16 %v406, %v405
      %v421 = vpack.c.b16 %v408, %v407
      %v422 = vpack.c.b16 %v410, %v409
      %v423 = vpack.c.b16 %v412, %v411
      %v424 = vpack.c.b16 %v414, %v413
      %v425 = vpack.c.b16 %v416, %v415
      %v426 = vpack.c.b16 %v418, %v417
      %435 = vmatpush.bf16.msra.mxu0 %v426
      %436 = vmatpush.bf16.msra.mxu0 %v425
      %437 = vmatpush.bf16.msra.mxu0 %v424
      %438 = vmatpush.bf16.msra.mxu0 %v423
      %439 = vmatpush.bf16.msra.mxu0 %v422
      %440 = vmatpush.bf16.msra.mxu0 %v421
      %441 = vmatpush.bf16.msra.mxu0 %v420
      %442 = vmatpush.bf16.msra.mxu0 %v419
      %443 = vmatmul.bf16.gmra.mxu0 %v379
      %v444 = vpop.f32.mrf.mxu0
      %v445 = vadd.f32 0.0, %v444
      %v446 = vpop.f32.mrf.mxu0
      %v447 = vadd.f32 0.0, %v446
      %448 = vmatmul.bf16.gmra.mxu0 %v380
      %v449 = vpop.f32.mrf.mxu0
      %v450 = vadd.f32 0.0, %v449
      %v451 = vpop.f32.mrf.mxu0
      %v452 = vadd.f32 0.0, %v451
      %453 = vmatmul.bf16.gmra.mxu0 %v381
      %v454 = vpop.f32.mrf.mxu0
      %v455 = vadd.f32 0.0, %v454
      %v456 = vpop.f32.mrf.mxu0
      %v457 = vadd.f32 0.0, %v456
      %458 = vmatmul.bf16.gmra.mxu0 %v382
      %v459 = vpop.f32.mrf.mxu0
      %v460 = vadd.f32 0.0, %v459
      %v461 = vpop.f32.mrf.mxu0
      %v462 = vadd.f32 0.0, %v461
      %463 = vdwg.mxu0
      %v464 = vadd.f32 %v331, %v445
      %v465 = vadd.f32 %v332, %v447
      %v466 = vadd.f32 %v333, %v450
      %v467 = vadd.f32 %v334, %v452
      %v468 = vadd.f32 %v335, %v455
      %v469 = vadd.f32 %v336, %v457
      %v470 = vadd.f32 %v337, %v460
      %v471 = vadd.f32 %v338, %v462
      %472 = vst [vmem:[#allocation2] sm:$0xff] %v464
      %473 = vst [vmem:[#allocation2 + $0x8] sm:$0xff] %v465
      %474 = vst [vmem:[#allocation2 + $0x10] sm:$0xff] %v466
      %475 = vst [vmem:[#allocation2 + $0x18] sm:$0xff] %v467
      %476 = vst [vmem:[#allocation2 + $0x20] sm:$0xff] %v468
      %477 = vst [vmem:[#allocation2 + $0x28] sm:$0xff] %v469
      %478 = vst [vmem:[#allocation2 + $0x30] sm:$0xff] %v470
      %479 = vst [vmem:[#allocation2 + $0x38] sm:$0xff] %v471
      // Predicated region
      $region41: #{_resnet_forward_impl.22} parent=35 // pred_check
        %p480 = pneg %p319
      $region42: #{_resnet_forward_impl.22} parent=35 // pred_check_branch
        %482 = sbr.rel (%p480) target = $region44
      $region43: #{_resnet_forward_impl.22} parent=35 // pred_region
        %v483 = vld [vmem:[#allocation2] sm:$0xff]
        %v484 = vld [vmem:[#allocation2 + $0x8] sm:$0xff]
        %v485 = vld [vmem:[#allocation2 + $0x10] sm:$0xff]
        %v486 = vld [vmem:[#allocation2 + $0x18] sm:$0xff]
        %v487 = vld [vmem:[#allocation2 + $0x20] sm:$0xff]
        %v488 = vld [vmem:[#allocation2 + $0x28] sm:$0xff]
        %v489 = vld [vmem:[#allocation2 + $0x30] sm:$0xff]
        %v490 = vld [vmem:[#allocation2 + $0x38] sm:$0xff]
        %v491 = vld [vmem:[%s300] sm:$0x1]
        %v493 = vperm.slane %v491, 0
        %v495 = vadd.f32 %v483, %v493
        %v496 = vadd.f32 %v484, %v493
        %v497 = vadd.f32 %v485, %v493
        %v498 = vadd.f32 %v486, %v493
        %v499 = vadd.f32 %v487, %v493
        %v500 = vadd.f32 %v488, %v493
        %v501 = vadd.f32 %v489, %v493
        %v502 = vadd.f32 %v490, %v493
        %v503 = vld [vmem:[%s308] sm:$0xf]
        %v504 = vld [vmem:[%s308 + $0x4] sm:$0xf]
        %v505 = vld [vmem:[%s308 + $0x8] sm:$0xf]
        %v506 = vld [vmem:[%s308 + $0xc] sm:$0xf]
        %v507 = vld [vmem:[%s308 + $0x10] sm:$0xf]
        %v508 = vld [vmem:[%s308 + $0x14] sm:$0xf]
        %v509 = vld [vmem:[%s308 + $0x18] sm:$0xf]
        %v510 = vld [vmem:[%s308 + $0x1c] sm:$0xf]
        %v511 = vunpack.c.l.bf16 %v503
        %v512 = vunpack.c.l.bf16 %v504
        %v513 = vunpack.c.l.bf16 %v505
        %v514 = vunpack.c.l.bf16 %v506
        %v515 = vunpack.c.l.bf16 %v507
        %v516 = vunpack.c.l.bf16 %v508
        %v517 = vunpack.c.l.bf16 %v509
        %v518 = vunpack.c.l.bf16 %v510
        %v519 = vadd.f32 %v495, %v511
        %v520 = vadd.f32 %v496, %v512
        %v521 = vadd.f32 %v497, %v513
        %v522 = vadd.f32 %v498, %v514
        %v523 = vadd.f32 %v499, %v515
        %v524 = vadd.f32 %v500, %v516
        %v525 = vadd.f32 %v501, %v517
        %v526 = vadd.f32 %v502, %v518
        %v527 = vmax.f32 %v519, 0.0
        %v528 = vmax.f32 %v520, 0.0
        %v529 = vmax.f32 %v521, 0.0
        %v530 = vmax.f32 %v522, 0.0
        %v531 = vmax.f32 %v523, 0.0
        %v532 = vmax.f32 %v524, 0.0
        %v533 = vmax.f32 %v525, 0.0
        %v534 = vmax.f32 %v526, 0.0
        %v535 = vpack.c.bf16 %v527, %v527
        %v536 = vpack.c.bf16 %v528, %v528
        %v537 = vpack.c.bf16 %v529, %v529
        %v538 = vpack.c.bf16 %v530, %v530
        %v539 = vpack.c.bf16 %v531, %v531
        %v540 = vpack.c.bf16 %v532, %v532
        %v541 = vpack.c.bf16 %v533, %v533
        %v542 = vpack.c.bf16 %v534, %v534
        %543 = vst [vmem:[%s317] sm:$0xf] %v535
        %544 = vst [vmem:[%s317 + $0x4] sm:$0xf] %v536
        %545 = vst [vmem:[%s317 + $0x8] sm:$0xf] %v537
        %546 = vst [vmem:[%s317 + $0xc] sm:$0xf] %v538
        %547 = vst [vmem:[%s317 + $0x10] sm:$0xf] %v539
        %548 = vst [vmem:[%s317 + $0x14] sm:$0xf] %v540
        %549 = vst [vmem:[%s317 + $0x18] sm:$0xf] %v541
        %550 = vst [vmem:[%s317 + $0x1c] sm:$0xf] %v542
      $region44: #{_resnet_forward_impl.22} parent=35 // pred_fallthru
        _
      %s551 = smul.u32 8, %s20
      %p552 = scmp.lt.s32.totalorder %s551, 15
      %s553 = scalar_select %p552, %s551, 15
      %p554 = scmp.lt.s32.totalorder %s21, 0
      %s555 = scalar_select %p554, %s21, 0
      %s556 = sadd.s32 %s555, %s553
      %s557 = smul.addr %s556, 4
      %s558 = scalar_lea.vmem %s4, %s557
      // Predicated region
      $region45: #{_resnet_forward_impl.22} parent=35 // pred_check
        %p559 = pneg %p164
      $region46: #{_resnet_forward_impl.22} parent=35 // pred_check_branch
        %561 = sbr.rel (%p559) target = $region48
      $region47: #{_resnet_forward_impl.22} parent=35 // pred_region
        %s562 = smul.u32 8, %s20
      $region48: #{_resnet_forward_impl.22} parent=35 // pred_fallthru
        _
    $region36: #{_resnet_forward_impl.22} parent=5 // pred_fallthru
      _
    %p563 = scmp.le.s32.totalorder 2, %s10
    // Predicated region
    $region49: #{_resnet_forward_impl.22} parent=5 // pred_check
      %p564 = pneg %p563
    $region50: #{_resnet_forward_impl.22} parent=5 // pred_check_branch
      %566 = sbr.rel (%p564) target = $region52
    $region51: #{_resnet_forward_impl.22} parent=5 // pred_region
      %s567 = ssub.s32 %s10, 2
      // Predicated region
      $region53: #{_resnet_forward_impl.22} parent=51 // pred_check
        %p568 = pneg %p170
      $region54: #{_resnet_forward_impl.22} parent=51 // pred_check_branch
        %570 = sbr.rel (%p568) target = $region56
      $region55: #{_resnet_forward_impl.22} parent=51 // pred_region
        %s571 = smul.u32 8, %s23
        %p572 = scmp.lt.s32.totalorder %s571, 15
        %s573 = scalar_select %p572, %s571, 15
        %p574 = scmp.lt.s32.totalorder %s24, 0
        %s575 = scalar_select %p574, %s24, 0
        %s576 = sadd.s32 %s575, %s573
        %s577 = smul.addr %s576, 4
        %s578 = scalar_lea.vmem %s4, %s577
      $region56: #{_resnet_forward_impl.22} parent=51 // pred_fallthru
        _
    $region52: #{_resnet_forward_impl.22} parent=5 // pred_fallthru
      _
  $region6: #{_resnet_forward_impl.22} parent=0 // loop_footer
    %s14 = sadd.s32 1, %s10
  $region7: #{_resnet_forward_impl.22} parent=0 // loop_footer_branch
    %9 = sbr.rel target = $region3
  $region8: #{_resnet_forward_impl.22} parent=0 // loop_exit
    _

// kernel: _resnet_forward_impl.26
$region0: #{_resnet_forward_impl.26}
  #allocation0 [shape = 'u32[]', space=smem, size = 0x4, offset = 0x4, fixed_abs, tag = 'smem constant byte address 0x4 - core index']
  #allocation1 [shape = 'u32[72,128]{1,0:T(1,128)}', space=vmem, size = 0x9000, scoped, tag = 'internal scratch']
  #allocation2 [shape = 'f32[16,128]{1,0:T(8,128)}', space=vmem, size = 0x2000, scoped, tag = 'scratch operand']
  %s0 = inlined_call_operand.vmem [shape: bf16[32,128], index: 0, kind: input, shape index: {}]
  %s1 = inlined_call_operand.vmem [shape: bf16[128,128], index: 1, kind: input, shape index: {}]
  %s2 = inlined_call_operand.vmem [shape: f32[1,128], index: 2, kind: input, shape index: {}]
  %s3 = inlined_call_operand.vmem [shape: bf16[32,128], index: 3, kind: output, shape index: {}]
  %s4 = sld [smem:[#allocation0]]
  $region53: #{_resnet_forward_impl.26} parent=0
    _
  %s6 = ssub.s32 1, %s4
  %s7 = scalar_select 0, %s6, %s4
  loop: start=0, step=1, limit=4
  $region2: #{_resnet_forward_impl.26} parent=0 // loop_pre_header
    _
  $region3: #{_resnet_forward_impl.26} parent=0 // loop_header
    %s9 = sphi 0, %s13
    %p10 = scmp.ge.s32.totalorder %s9, 4
    %s16 = sphi 0, %s35
    %s17 = sphi 0, %s31
    %s18 = sphi 0, %s27
    %s19 = sphi 0, %s16
    %s20 = sphi 0, %s17
    %s21 = sphi 0, %s18
    %s22 = sphi 0, %s19
    %s23 = sphi 0, %s20
    %s24 = sphi 0, %s21
    %s40 = sphi 0, %s42
    %s43 = sphi 0, %s40
    %s44 = sphi 0, %s43
    %s60 = sphi 0, %s44
    %s68 = sphi 0, %s70
    %s71 = sphi 0, %s68
    %s72 = sphi 0, %s71
    %s88 = sphi 0, %s72
    %s94 = sphi 0, %s96
    %s97 = sphi 0, %s94
    %s98 = sphi 0, %s97
    %s114 = sphi 0, %s98
    %s122 = sphi 0, %s124
    %s125 = sphi 0, %s122
    %s126 = sphi 0, %s125
    %s142 = sphi 0, %s126
  $region4: #{_resnet_forward_impl.26} parent=0 // loop_header_branch
    %12 = sbr.rel (%p10) target = $region8
  $region5: #{_resnet_forward_impl.26} parent=0 // loop_body
    %s14 = ssub.s32 %s9, 1
    %s15 = ssub.s32 %s9, 2
    %s25 = sadd.s32 1, %s18
    %p26 = scmp.ge.s32.totalorder %s25, 1
    %s27 = scalar_select %p26, 0, %s25
    %s28 = sadd.s32 1, %s17
    %s29 = scalar_select %p26, %s28, %s17
    %p30 = scmp.ge.s32.totalorder %s29, 1
    %s31 = scalar_select %p30, 0, %s29
    %s32 = sadd.s32 1, %s16
    %s33 = scalar_select %p30, %s32, %s16
    %p34 = scmp.ge.s32.totalorder %s33, 2
    %s35 = scalar_select %p34, 0, %s33
    %s36 = ssub.s32 %s16, %s35
    %s37 = ssub.s32 %s18, %s27
    %s38 = sor.u32 %s36, %s37
    %p39 = scmp.eq.s32.totalorder %s38, 0
    %s41 = sadd.s32 %s40, 1
    %s42 = scalar_select %p39, %s40, %s41
    %p45 = pneg %p39
    %p46 = scmp.eq.s32.totalorder %s9, 1
    %p47 = por %p45, %p46
    %p48 = scmp.ne.s32.totalorder %s40, %s43
    %p49 = scmp.eq.s32.totalorder %s9, 0
    %p50 = por %p48, %p49
    %p51 = scmp.ne.s32.totalorder %s40, %s43
    %p52 = scmp.eq.s32.totalorder %s14, 1
    %p53 = por %p51, %p52
    %p54 = scmp.ne.s32.totalorder %s43, %s44
    %p55 = scmp.eq.s32.totalorder %s14, 0
    %p56 = por %p54, %p55
    %p57 = scmp.ne.s32.totalorder %s43, %s44
    %p58 = scmp.eq.s32.totalorder %s15, 1
    %p59 = por %p57, %p58
    %p61 = scmp.ne.s32.totalorder %s44, %s60
    %p62 = scmp.eq.s32.totalorder %s15, 0
    %p63 = por %p61, %p62
    %s64 = ssub.s32 %s18, %s27
    %s65 = ssub.s32 %s17, %s31
    %s66 = sor.u32 %s64, %s65
    %p67 = scmp.eq.s32.totalorder %s66, 0
    %s69 = sadd.s32 %s68, 1
    %s70 = scalar_select %p67, %s68, %s69
    %p73 = pneg %p67
    %p74 = scmp.eq.s32.totalorder %s9, 1
    %p75 = por %p73, %p74
    %p76 = scmp.ne.s32.totalorder %s68, %s71
    %p77 = scmp.eq.s32.totalorder %s9, 0
    %p78 = por %p76, %p77
    %p79 = scmp.ne.s32.totalorder %s68, %s71
    %p80 = scmp.eq.s32.totalorder %s14, 1
    %p81 = por %p79, %p80
    %p82 = scmp.ne.s32.totalorder %s71, %s72
    %p83 = scmp.eq.s32.totalorder %s14, 0
    %p84 = por %p82, %p83
    %p85 = scmp.ne.s32.totalorder %s71, %s72
    %p86 = scmp.eq.s32.totalorder %s15, 1
    %p87 = por %p85, %p86
    %p89 = scmp.ne.s32.totalorder %s72, %s88
    %p90 = scmp.eq.s32.totalorder %s15, 0
    %p91 = por %p89, %p90
    %s92 = ssub.s32 %s17, %s31
    %p93 = scmp.eq.s32.totalorder %s92, 0
    %s95 = sadd.s32 %s94, 1
    %s96 = scalar_select %p93, %s94, %s95
    %p99 = pneg %p93
    %p100 = scmp.eq.s32.totalorder %s9, 1
    %p101 = por %p99, %p100
    %p102 = scmp.ne.s32.totalorder %s94, %s97
    %p103 = scmp.eq.s32.totalorder %s9, 0
    %p104 = por %p102, %p103
    %p105 = scmp.ne.s32.totalorder %s94, %s97
    %p106 = scmp.eq.s32.totalorder %s14, 1
    %p107 = por %p105, %p106
    %p108 = scmp.ne.s32.totalorder %s97, %s98
    %p109 = scmp.eq.s32.totalorder %s14, 0
    %p110 = por %p108, %p109
    %p111 = scmp.ne.s32.totalorder %s97, %s98
    %p112 = scmp.eq.s32.totalorder %s15, 1
    %p113 = por %p111, %p112
    %p115 = scmp.ne.s32.totalorder %s98, %s114
    %p116 = scmp.eq.s32.totalorder %s15, 0
    %p117 = por %p115, %p116
    %s118 = ssub.s32 %s16, %s35
    %s119 = ssub.s32 %s17, %s31
    %s120 = sor.u32 %s118, %s119
    %p121 = scmp.eq.s32.totalorder %s120, 0
    %s123 = sadd.s32 %s122, 1
    %s124 = scalar_select %p121, %s122, %s123
    %p127 = pneg %p121
    %p128 = scmp.eq.s32.totalorder %s9, 1
    %p129 = por %p127, %p128
    %p130 = scmp.ne.s32.totalorder %s122, %s125
    %p131 = scmp.eq.s32.totalorder %s9, 0
    %p132 = por %p130, %p131
    %p133 = scmp.ne.s32.totalorder %s122, %s125
    %p134 = scmp.eq.s32.totalorder %s14, 1
    %p135 = por %p133, %p134
    %p136 = scmp.ne.s32.totalorder %s125, %s126
    %p137 = scmp.eq.s32.totalorder %s14, 0
    %p138 = por %p136, %p137
    %p139 = scmp.ne.s32.totalorder %s125, %s126
    %p140 = scmp.eq.s32.totalorder %s15, 1
    %p141 = por %p139, %p140
    %p143 = scmp.ne.s32.totalorder %s126, %s142
    %p144 = scmp.eq.s32.totalorder %s15, 0
    %p145 = por %p143, %p144
    %p146 = scmp.le.s32.totalorder 1, %s9
    %p147 = scmp.lt.s32.totalorder %s9, 3
    %p148 = pnand %p146, %p147
    %p149 = pneg %p148
    // Predicated region
    $region9: #{_resnet_forward_impl.26} parent=5 // pred_check
      _
    $region10: #{_resnet_forward_impl.26} parent=5 // pred_check_branch
      %151 = sbr.rel (%p148) target = $region12
    $region11: #{_resnet_forward_impl.26} parent=5 // pred_region
      %s152 = ssub.s32 %s9, 1
      // Predicated region
      $region13: #{_resnet_forward_impl.26} parent=11 // pred_check
        %p153 = pneg %p84
      $region14: #{_resnet_forward_impl.26} parent=11 // pred_check_branch
        %155 = sbr.rel (%p153) target = $region16
      $region15: #{_resnet_forward_impl.26} parent=11 // pred_region
        %s156 = smul.u32 16, %s21
        %p157 = scmp.lt.s32.totalorder %s156, 15
        %s158 = scalar_select %p157, %s156, 15
        %p159 = scmp.lt.s32.totalorder %s20, 0
        %s160 = scalar_select %p159, %s20, 0
        %s161 = sadd.s32 %s160, %s158
        %s162 = smul.addr %s161, 4
        %s163 = scalar_lea.vmem %s1, %s162
        %s164 = smul.u32 16, %s21
      $region16: #{_resnet_forward_impl.26} parent=11 // pred_fallthru
        _
      // Predicated region
      $region17: #{_resnet_forward_impl.26} parent=11 // pred_check
        %p165 = pneg %p110
      $region18: #{_resnet_forward_impl.26} parent=11 // pred_check_branch
        %167 = sbr.rel (%p165) target = $region20
      $region19: #{_resnet_forward_impl.26} parent=11 // pred_region
        %p168 = scmp.lt.s32.totalorder %s20, 0
        %s169 = scalar_select %p168, %s20, 0
        %s170 = scalar_lea.vmem %s2, %s169
      $region20: #{_resnet_forward_impl.26} parent=11 // pred_fallthru
        _
    $region12: #{_resnet_forward_impl.26} parent=5 // pred_fallthru
      _
    %p171 = scmp.lt.s32.totalorder %s9, 2
    // Predicated region
    $region21: #{_resnet_forward_impl.26} parent=5 // pred_check
      %p172 = pneg %p171
    $region22: #{_resnet_forward_impl.26} parent=5 // pred_check_branch
      %174 = sbr.rel (%p172) target = $region24
    $region23: #{_resnet_forward_impl.26} parent=5 // pred_region
      // Predicated region
      $region25: #{_resnet_forward_impl.26} parent=23 // pred_check
        %p175 = pneg %p50
      $region26: #{_resnet_forward_impl.26} parent=23 // pred_check_branch
        %177 = sbr.rel (%p175) target = $region28
      $region27: #{_resnet_forward_impl.26} parent=23 // pred_region
        %s178 = smul.u32 2, %s16
        %p179 = scmp.lt.s32.totalorder %s178, 3
        %s180 = scalar_select %p179, %s178, 3
        %p181 = scmp.lt.s32.totalorder %s18, 0
        %s182 = scalar_select %p181, %s18, 0
        %s183 = sadd.s32 %s182, %s180
        %s184 = smul.addr %s183, 4
        %s185 = scalar_lea.vmem %s0, %s184
        %s186 = smul.u32 2, %s16
      $region28: #{_resnet_forward_impl.26} parent=23 // pred_fallthru
        _
    $region24: #{_resnet_forward_impl.26} parent=5 // pred_fallthru
      _
    %p187 = scmp.le.s32.totalorder 1, %s9
    %p188 = scmp.lt.s32.totalorder %s9, 3
    %p189 = pnand %p187, %p188
    %p190 = pneg %p189
    // Predicated region
    $region29: #{_resnet_forward_impl.26} parent=5 // pred_check
      _
    $region30: #{_resnet_forward_impl.26} parent=5 // pred_check_branch
      %192 = sbr.rel (%p189) target = $region32
    $region31: #{_resnet_forward_impl.26} parent=5 // pred_region
      %s193 = ssub.s32 %s9, 1
      %s194 = smul.u32 2, %s19
      %p195 = scmp.lt.s32.totalorder %s194, 3
      %s196 = scalar_select %p195, %s194, 3
      %p197 = scmp.lt.s32.totalorder %s21, 0
      %s198 = scalar_select %p197, %s21, 0
      %s199 = sadd.s32 %s198, %s196
      %s200 = smul.addr %s199, 4
      %s201 = scalar_lea.vmem %s0, %s200
      %p202 = pneg %p56
      %p203 = pneg %p53
      %s204 = smul.u32 16, %s21
      %p205 = scmp.lt.s32.totalorder %s204, 15
      %s206 = scalar_select %p205, %s204, 15
      %p207 = scmp.lt.s32.totalorder %s20, 0
      %s208 = scalar_select %p207, %s20, 0
      %s209 = sadd.s32 %s208, %s206
      %s210 = smul.addr %s209, 4
      %s211 = scalar_lea.vmem %s1, %s210
      %p212 = pneg %p84
      %p213 = pneg %p81
      %p214 = scmp.lt.s32.totalorder %s20, 0
      %s215 = scalar_select %p214, %s20, 0
      %s216 = scalar_lea.vmem %s2, %s215
      %p217 = pneg %p110
      %p218 = pneg %p107
      %p219 = pneg %p138
      %p220 = pneg %p135
      %s221 = smul.u32 2, %s19
      %p222 = scmp.lt.s32.totalorder %s221, 3
      %s223 = scalar_select %p222, %s221, 3
      %p224 = scmp.lt.s32.totalorder %s20, 0
      %s225 = scalar_select %p224, %s20, 0
      %s226 = sadd.s32 %s225, %s223
      %s227 = smul.addr %s226, 4
      %s228 = scalar_lea.vmem %s3, %s227
      %s229 = smul.u32 2, %s19
      %p230 = scmp.lt.s32.totalorder %s229, 3
      %s231 = scalar_select %p230, %s229, 3
      %p232 = scmp.lt.s32.totalorder %s21, 0
      %s233 = scalar_select %p232, %s21, 0
      %s234 = sadd.s32 %s233, %s231
      %s235 = smul.addr %s234, 4
      %s236 = scalar_lea.vmem %s0, %s235
      %s237 = smul.u32 2, %s19
      %s238 = smul.u32 16, %s21
      %p239 = scmp.lt.s32.totalorder %s238, 15
      %s240 = scalar_select %p239, %s238, 15
      %p241 = scmp.lt.s32.totalorder %s20, 0
      %s242 = scalar_select %p241, %s20, 0
      %s243 = sadd.s32 %s242, %s240
      %s244 = smul.addr %s243, 4
      %s245 = scalar_lea.vmem %s1, %s244
      %s246 = smul.u32 16, %s21
      %p247 = scmp.lt.s32.totalorder %s20, 0
      %s248 = scalar_select %p247, %s20, 0
      %s249 = scalar_lea.vmem %s2, %s248
      %s250 = smul.u32 2, %s19
      %p251 = scmp.lt.s32.totalorder %s250, 3
      %s252 = scalar_select %p251, %s250, 3
      %p253 = scmp.lt.s32.totalorder %s20, 0
      %s254 = scalar_select %p253, %s20, 0
      %s255 = sadd.s32 %s254, %s252
      %s256 = smul.addr %s255, 4
      %s257 = scalar_lea.vmem %s3, %s256
      %s258 = smul.u32 2, %s19
      %p259 = scmp.eq.s32.totalorder %s21, 0
      // Predicated region
      $region33: #{_resnet_forward_impl.26} parent=31 // pred_check
        %p260 = pneg %p259
      $region34: #{_resnet_forward_impl.26} parent=31 // pred_check_branch
        %262 = sbr.rel (%p260) target = $region36
      $region35: #{_resnet_forward_impl.26} parent=31 // pred_region
        %263 = vst [vmem:[#allocation2] sm:$0xff] 0.0
        %264 = vst [vmem:[#allocation2 + $0x8] sm:$0xff] 0.0
      $region36: #{_resnet_forward_impl.26} parent=31 // pred_fallthru
        _
      %v265 = vld [vmem:[#allocation2] sm:$0xff]
      %v266 = vld [vmem:[#allocation2 + $0x8] sm:$0xff]
      %v267 = vld [vmem:[%s236] sm:$0xf]
      %v268 = vld [vmem:[%s236 + $0x4] sm:$0xf]
      %v269 = vld [vmem:[%s245] sm:$0xf]
      %v270 = vld [vmem:[%s245 + $0x4] sm:$0xf]
      %v271 = vld [vmem:[%s245 + $0x8] sm:$0xf]
      %v272 = vld [vmem:[%s245 + $0xc] sm:$0xf]
      %v273 = vld [vmem:[%s245 + $0x10] sm:$0xf]
      %v274 = vld [vmem:[%s245 + $0x14] sm:$0xf]
      %v275 = vld [vmem:[%s245 + $0x18] sm:$0xf]
      %v276 = vld [vmem:[%s245 + $0x1c] sm:$0xf]
      %v277 = vld [vmem:[%s245 + $0x20] sm:$0xf]
      %v278 = vld [vmem:[%s245 + $0x24] sm:$0xf]
      %v279 = vld [vmem:[%s245 + $0x28] sm:$0xf]
      %v280 = vld [vmem:[%s245 + $0x2c] sm:$0xf]
      %v281 = vld [vmem:[%s245 + $0x30] sm:$0xf]
      %v282 = vld [vmem:[%s245 + $0x34] sm:$0xf]
      %v283 = vld [vmem:[%s245 + $0x38] sm:$0xf]
      %v284 = vld [vmem:[%s245 + $0x3c] sm:$0xf]
      %v287 = vunpack.c.l.b16 %v267
      %v288 = vunpack.c.l.b16 %v268
      %v289 = vpack.c.b16 %v288, %v287
      %v307 = vunpack.c.l.b16 %v269
      %v308 = vunpack.c.l.b16 %v270
      %v309 = vunpack.c.l.b16 %v271
      %v310 = vunpack.c.l.b16 %v272
      %v311 = vunpack.c.l.b16 %v273
      %v312 = vunpack.c.l.b16 %v274
      %v313 = vunpack.c.l.b16 %v275
      %v314 = vunpack.c.l.b16 %v276
      %v315 = vunpack.c.l.b16 %v277
      %v316 = vunpack.c.l.b16 %v278
      %v317 = vunpack.c.l.b16 %v279
      %v318 = vunpack.c.l.b16 %v280
      %v319 = vunpack.c.l.b16 %v281
      %v320 = vunpack.c.l.b16 %v282
      %v321 = vunpack.c.l.b16 %v283
      %v322 = vunpack.c.l.b16 %v284
      %v323 = vpack.c.b16 %v308, %v307
      %v324 = vpack.c.b16 %v310, %v309
      %v325 = vpack.c.b16 %v312, %v311
      %v326 = vpack.c.b16 %v314, %v313
      %v327 = vpack.c.b16 %v316, %v315
      %v328 = vpack.c.b16 %v318, %v317
      %v329 = vpack.c.b16 %v320, %v319
      %v330 = vpack.c.b16 %v322, %v321
      %339 = vmatpush.bf16.msra.mxu0 %v330
      %340 = vmatpush.bf16.msra.mxu0 %v329
      %341 = vmatpush.bf16.msra.mxu0 %v328
      %342 = vmatpush.bf16.msra.mxu0 %v327
      %343 = vmatpush.bf16.msra.mxu0 %v326
      %344 = vmatpush.bf16.msra.mxu0 %v325
      %345 = vmatpush.bf16.msra.mxu0 %v324
      %346 = vmatpush.bf16.msra.mxu0 %v323
      %347 = vmatmul.bf16.gmra.mxu0 %v289
      %v348 = vpop.f32.mrf.mxu0
      %v349 = vadd.f32 0.0, %v348
      %v350 = vpop.f32.mrf.mxu0
      %v351 = vadd.f32 0.0, %v350
      %352 = vdwg.mxu0
      %v353 = vadd.f32 %v265, %v349
      %v354 = vadd.f32 %v266, %v351
      %355 = vst [vmem:[#allocation2] sm:$0xff] %v353
      %356 = vst [vmem:[#allocation2 + $0x8] sm:$0xff] %v354
      // Predicated region
      $region37: #{_resnet_forward_impl.26} parent=31 // pred_check
        %p357 = pneg %p259
      $region38: #{_resnet_forward_impl.26} parent=31 // pred_check_branch
        %359 = sbr.rel (%p357) target = $region40
      $region39: #{_resnet_forward_impl.26} parent=31 // pred_region
        %v360 = vld [vmem:[#allocation2] sm:$0xff]
        %v361 = vld [vmem:[#allocation2 + $0x8] sm:$0xff]
        %v362 = vld [vmem:[%s249] sm:$0x1]
        %v364 = vperm.slane %v362, 0
        %v366 = vadd.f32 %v360, %v364
        %v367 = vadd.f32 %v361, %v364
        %v368 = vmax.f32 %v366, 0.0
        %v369 = vmax.f32 %v367, 0.0
        %v370 = vpack.c.bf16 %v368, %v368
        %v371 = vpack.c.bf16 %v369, %v369
        %372 = vst [vmem:[%s257] sm:$0xf] %v370
        %373 = vst [vmem:[%s257 + $0x4] sm:$0xf] %v371
      $region40: #{_resnet_forward_impl.26} parent=31 // pred_fallthru
        _
      %s374 = smul.u32 2, %s19
      %p375 = scmp.lt.s32.totalorder %s374, 3
      %s376 = scalar_select %p375, %s374, 3
      %p377 = scmp.lt.s32.totalorder %s20, 0
      %s378 = scalar_select %p377, %s20, 0
      %s379 = sadd.s32 %s378, %s376
      %s380 = smul.addr %s379, 4
      %s381 = scalar_lea.vmem %s3, %s380
      // Predicated region
      $region41: #{_resnet_forward_impl.26} parent=31 // pred_check
        %p382 = pneg %p135
      $region42: #{_resnet_forward_impl.26} parent=31 // pred_check_branch
        %384 = sbr.rel (%p382) target = $region44
      $region43: #{_resnet_forward_impl.26} parent=31 // pred_region
        %s385 = smul.u32 2, %s19
      $region44: #{_resnet_forward_impl.26} parent=31 // pred_fallthru
        _
    $region32: #{_resnet_forward_impl.26} parent=5 // pred_fallthru
      _
    %p386 = scmp.le.s32.totalorder 2, %s9
    // Predicated region
    $region45: #{_resnet_forward_impl.26} parent=5 // pred_check
      %p387 = pneg %p386
    $region46: #{_resnet_forward_impl.26} parent=5 // pred_check_branch
      %389 = sbr.rel (%p387) target = $region48
    $region47: #{_resnet_forward_impl.26} parent=5 // pred_region
      %s390 = ssub.s32 %s9, 2
      // Predicated region
      $region49: #{_resnet_forward_impl.26} parent=47 // pred_check
        %p391 = pneg %p141
      $region50: #{_resnet_forward_impl.26} parent=47 // pred_check_branch
        %393 = sbr.rel (%p391) target = $region52
      $region51: #{_resnet_forward_impl.26} parent=47 // pred_region
        %s394 = smul.u32 2, %s22
        %p395 = scmp.lt.s32.totalorder %s394, 3
        %s396 = scalar_select %p395, %s394, 3
        %p397 = scmp.lt.s32.totalorder %s23, 0
        %s398 = scalar_select %p397, %s23, 0
        %s399 = sadd.s32 %s398, %s396
        %s400 = smul.addr %s399, 4
        %s401 = scalar_lea.vmem %s3, %s400
      $region52: #{_resnet_forward_impl.26} parent=47 // pred_fallthru
        _
    $region48: #{_resnet_forward_impl.26} parent=5 // pred_fallthru
      _
  $region6: #{_resnet_forward_impl.26} parent=0 // loop_footer
    %s13 = sadd.s32 1, %s9
  $region7: #{_resnet_forward_impl.26} parent=0 // loop_footer_branch
    %8 = sbr.rel target = $region3
  $region8: #{_resnet_forward_impl.26} parent=0 // loop_exit
    _

// kernel: _resnet_forward_impl.25
$region0: #{_resnet_forward_impl.25}
  #allocation0 [shape = 'u32[]', space=smem, size = 0x4, offset = 0x4, fixed_abs, tag = 'smem constant byte address 0x4 - core index']
  #allocation1 [shape = 'u32[72,128]{1,0:T(1,128)}', space=vmem, size = 0x9000, scoped, tag = 'internal scratch']
  #allocation2 [shape = 'f32[16,128]{1,0:T(8,128)}', space=vmem, size = 0x2000, scoped, tag = 'scratch operand']
  %s0 = inlined_call_operand.vmem [shape: bf16[32,128], index: 0, kind: input, shape index: {}]
  %s1 = inlined_call_operand.vmem [shape: bf16[128,128], index: 1, kind: input, shape index: {}]
  %s2 = inlined_call_operand.vmem [shape: f32[1,128], index: 2, kind: input, shape index: {}]
  %s3 = inlined_call_operand.vmem [shape: bf16[32,128], index: 3, kind: output, shape index: {}]
  %s4 = sld [smem:[#allocation0]]
  $region53: #{_resnet_forward_impl.25} parent=0
    _
  %s6 = ssub.s32 1, %s4
  %s7 = scalar_select 0, %s6, %s4
  loop: start=0, step=1, limit=4
  $region2: #{_resnet_forward_impl.25} parent=0 // loop_pre_header
    _
  $region3: #{_resnet_forward_impl.25} parent=0 // loop_header
    %s9 = sphi 0, %s13
    %p10 = scmp.ge.s32.totalorder %s9, 4
    %s16 = sphi 0, %s35
    %s17 = sphi 0, %s31
    %s18 = sphi 0, %s27
    %s19 = sphi 0, %s16
    %s20 = sphi 0, %s17
    %s21 = sphi 0, %s18
    %s22 = sphi 0, %s19
    %s23 = sphi 0, %s20
    %s24 = sphi 0, %s21
    %s40 = sphi 0, %s42
    %s43 = sphi 0, %s40
    %s44 = sphi 0, %s43
    %s60 = sphi 0, %s44
    %s68 = sphi 0, %s70
    %s71 = sphi 0, %s68
    %s72 = sphi 0, %s71
    %s88 = sphi 0, %s72
    %s94 = sphi 0, %s96
    %s97 = sphi 0, %s94
    %s98 = sphi 0, %s97
    %s114 = sphi 0, %s98
    %s122 = sphi 0, %s124
    %s125 = sphi 0, %s122
    %s126 = sphi 0, %s125
    %s142 = sphi 0, %s126
  $region4: #{_resnet_forward_impl.25} parent=0 // loop_header_branch
    %12 = sbr.rel (%p10) target = $region8
  $region5: #{_resnet_forward_impl.25} parent=0 // loop_body
    %s14 = ssub.s32 %s9, 1
    %s15 = ssub.s32 %s9, 2
    %s25 = sadd.s32 1, %s18
    %p26 = scmp.ge.s32.totalorder %s25, 1
    %s27 = scalar_select %p26, 0, %s25
    %s28 = sadd.s32 1, %s17
    %s29 = scalar_select %p26, %s28, %s17
    %p30 = scmp.ge.s32.totalorder %s29, 1
    %s31 = scalar_select %p30, 0, %s29
    %s32 = sadd.s32 1, %s16
    %s33 = scalar_select %p30, %s32, %s16
    %p34 = scmp.ge.s32.totalorder %s33, 2
    %s35 = scalar_select %p34, 0, %s33
    %s36 = ssub.s32 %s16, %s35
    %s37 = ssub.s32 %s18, %s27
    %s38 = sor.u32 %s36, %s37
    %p39 = scmp.eq.s32.totalorder %s38, 0
    %s41 = sadd.s32 %s40, 1
    %s42 = scalar_select %p39, %s40, %s41
    %p45 = pneg %p39
    %p46 = scmp.eq.s32.totalorder %s9, 1
    %p47 = por %p45, %p46
    %p48 = scmp.ne.s32.totalorder %s40, %s43
    %p49 = scmp.eq.s32.totalorder %s9, 0
    %p50 = por %p48, %p49
    %p51 = scmp.ne.s32.totalorder %s40, %s43
    %p52 = scmp.eq.s32.totalorder %s14, 1
    %p53 = por %p51, %p52
    %p54 = scmp.ne.s32.totalorder %s43, %s44
    %p55 = scmp.eq.s32.totalorder %s14, 0
    %p56 = por %p54, %p55
    %p57 = scmp.ne.s32.totalorder %s43, %s44
    %p58 = scmp.eq.s32.totalorder %s15, 1
    %p59 = por %p57, %p58
    %p61 = scmp.ne.s32.totalorder %s44, %s60
    %p62 = scmp.eq.s32.totalorder %s15, 0
    %p63 = por %p61, %p62
    %s64 = ssub.s32 %s18, %s27
    %s65 = ssub.s32 %s17, %s31
    %s66 = sor.u32 %s64, %s65
    %p67 = scmp.eq.s32.totalorder %s66, 0
    %s69 = sadd.s32 %s68, 1
    %s70 = scalar_select %p67, %s68, %s69
    %p73 = pneg %p67
    %p74 = scmp.eq.s32.totalorder %s9, 1
    %p75 = por %p73, %p74
    %p76 = scmp.ne.s32.totalorder %s68, %s71
    %p77 = scmp.eq.s32.totalorder %s9, 0
    %p78 = por %p76, %p77
    %p79 = scmp.ne.s32.totalorder %s68, %s71
    %p80 = scmp.eq.s32.totalorder %s14, 1
    %p81 = por %p79, %p80
    %p82 = scmp.ne.s32.totalorder %s71, %s72
    %p83 = scmp.eq.s32.totalorder %s14, 0
    %p84 = por %p82, %p83
    %p85 = scmp.ne.s32.totalorder %s71, %s72
    %p86 = scmp.eq.s32.totalorder %s15, 1
    %p87 = por %p85, %p86
    %p89 = scmp.ne.s32.totalorder %s72, %s88
    %p90 = scmp.eq.s32.totalorder %s15, 0
    %p91 = por %p89, %p90
    %s92 = ssub.s32 %s17, %s31
    %p93 = scmp.eq.s32.totalorder %s92, 0
    %s95 = sadd.s32 %s94, 1
    %s96 = scalar_select %p93, %s94, %s95
    %p99 = pneg %p93
    %p100 = scmp.eq.s32.totalorder %s9, 1
    %p101 = por %p99, %p100
    %p102 = scmp.ne.s32.totalorder %s94, %s97
    %p103 = scmp.eq.s32.totalorder %s9, 0
    %p104 = por %p102, %p103
    %p105 = scmp.ne.s32.totalorder %s94, %s97
    %p106 = scmp.eq.s32.totalorder %s14, 1
    %p107 = por %p105, %p106
    %p108 = scmp.ne.s32.totalorder %s97, %s98
    %p109 = scmp.eq.s32.totalorder %s14, 0
    %p110 = por %p108, %p109
    %p111 = scmp.ne.s32.totalorder %s97, %s98
    %p112 = scmp.eq.s32.totalorder %s15, 1
    %p113 = por %p111, %p112
    %p115 = scmp.ne.s32.totalorder %s98, %s114
    %p116 = scmp.eq.s32.totalorder %s15, 0
    %p117 = por %p115, %p116
    %s118 = ssub.s32 %s16, %s35
    %s119 = ssub.s32 %s17, %s31
    %s120 = sor.u32 %s118, %s119
    %p121 = scmp.eq.s32.totalorder %s120, 0
    %s123 = sadd.s32 %s122, 1
    %s124 = scalar_select %p121, %s122, %s123
    %p127 = pneg %p121
    %p128 = scmp.eq.s32.totalorder %s9, 1
    %p129 = por %p127, %p128
    %p130 = scmp.ne.s32.totalorder %s122, %s125
    %p131 = scmp.eq.s32.totalorder %s9, 0
    %p132 = por %p130, %p131
    %p133 = scmp.ne.s32.totalorder %s122, %s125
    %p134 = scmp.eq.s32.totalorder %s14, 1
    %p135 = por %p133, %p134
    %p136 = scmp.ne.s32.totalorder %s125, %s126
    %p137 = scmp.eq.s32.totalorder %s14, 0
    %p138 = por %p136, %p137
    %p139 = scmp.ne.s32.totalorder %s125, %s126
    %p140 = scmp.eq.s32.totalorder %s15, 1
    %p141 = por %p139, %p140
    %p143 = scmp.ne.s32.totalorder %s126, %s142
    %p144 = scmp.eq.s32.totalorder %s15, 0
    %p145 = por %p143, %p144
    %p146 = scmp.le.s32.totalorder 1, %s9
    %p147 = scmp.lt.s32.totalorder %s9, 3
    %p148 = pnand %p146, %p147
    %p149 = pneg %p148
    // Predicated region
    $region9: #{_resnet_forward_impl.25} parent=5 // pred_check
      _
    $region10: #{_resnet_forward_impl.25} parent=5 // pred_check_branch
      %151 = sbr.rel (%p148) target = $region12
    $region11: #{_resnet_forward_impl.25} parent=5 // pred_region
      %s152 = ssub.s32 %s9, 1
      // Predicated region
      $region13: #{_resnet_forward_impl.25} parent=11 // pred_check
        %p153 = pneg %p84
      $region14: #{_resnet_forward_impl.25} parent=11 // pred_check_branch
        %155 = sbr.rel (%p153) target = $region16
      $region15: #{_resnet_forward_impl.25} parent=11 // pred_region
        %s156 = smul.u32 16, %s21
        %p157 = scmp.lt.s32.totalorder %s156, 15
        %s158 = scalar_select %p157, %s156, 15
        %p159 = scmp.lt.s32.totalorder %s20, 0
        %s160 = scalar_select %p159, %s20, 0
        %s161 = sadd.s32 %s160, %s158
        %s162 = smul.addr %s161, 4
        %s163 = scalar_lea.vmem %s1, %s162
        %s164 = smul.u32 16, %s21
      $region16: #{_resnet_forward_impl.25} parent=11 // pred_fallthru
        _
      // Predicated region
      $region17: #{_resnet_forward_impl.25} parent=11 // pred_check
        %p165 = pneg %p110
      $region18: #{_resnet_forward_impl.25} parent=11 // pred_check_branch
        %167 = sbr.rel (%p165) target = $region20
      $region19: #{_resnet_forward_impl.25} parent=11 // pred_region
        %p168 = scmp.lt.s32.totalorder %s20, 0
        %s169 = scalar_select %p168, %s20, 0
        %s170 = scalar_lea.vmem %s2, %s169
      $region20: #{_resnet_forward_impl.25} parent=11 // pred_fallthru
        _
    $region12: #{_resnet_forward_impl.25} parent=5 // pred_fallthru
      _
    %p171 = scmp.lt.s32.totalorder %s9, 2
    // Predicated region
    $region21: #{_resnet_forward_impl.25} parent=5 // pred_check
      %p172 = pneg %p171
    $region22: #{_resnet_forward_impl.25} parent=5 // pred_check_branch
      %174 = sbr.rel (%p172) target = $region24
    $region23: #{_resnet_forward_impl.25} parent=5 // pred_region
      // Predicated region
      $region25: #{_resnet_forward_impl.25} parent=23 // pred_check
        %p175 = pneg %p50
      $region26: #{_resnet_forward_impl.25} parent=23 // pred_check_branch
        %177 = sbr.rel (%p175) target = $region28
      $region27: #{_resnet_forward_impl.25} parent=23 // pred_region
        %s178 = smul.u32 2, %s16
        %p179 = scmp.lt.s32.totalorder %s178, 3
        %s180 = scalar_select %p179, %s178, 3
        %p181 = scmp.lt.s32.totalorder %s18, 0
        %s182 = scalar_select %p181, %s18, 0
        %s183 = sadd.s32 %s182, %s180
        %s184 = smul.addr %s183, 4
        %s185 = scalar_lea.vmem %s0, %s184
        %s186 = smul.u32 2, %s16
      $region28: #{_resnet_forward_impl.25} parent=23 // pred_fallthru
        _
    $region24: #{_resnet_forward_impl.25} parent=5 // pred_fallthru
      _
    %p187 = scmp.le.s32.totalorder 1, %s9
    %p188 = scmp.lt.s32.totalorder %s9, 3
    %p189 = pnand %p187, %p188
    %p190 = pneg %p189
    // Predicated region
    $region29: #{_resnet_forward_impl.25} parent=5 // pred_check
      _
    $region30: #{_resnet_forward_impl.25} parent=5 // pred_check_branch
      %192 = sbr.rel (%p189) target = $region32
    $region31: #{_resnet_forward_impl.25} parent=5 // pred_region
      %s193 = ssub.s32 %s9, 1
      %s194 = smul.u32 2, %s19
      %p195 = scmp.lt.s32.totalorder %s194, 3
      %s196 = scalar_select %p195, %s194, 3
      %p197 = scmp.lt.s32.totalorder %s21, 0
      %s198 = scalar_select %p197, %s21, 0
      %s199 = sadd.s32 %s198, %s196
      %s200 = smul.addr %s199, 4
      %s201 = scalar_lea.vmem %s0, %s200
      %p202 = pneg %p56
      %p203 = pneg %p53
      %s204 = smul.u32 16, %s21
      %p205 = scmp.lt.s32.totalorder %s204, 15
      %s206 = scalar_select %p205, %s204, 15
      %p207 = scmp.lt.s32.totalorder %s20, 0
      %s208 = scalar_select %p207, %s20, 0
      %s209 = sadd.s32 %s208, %s206
      %s210 = smul.addr %s209, 4
      %s211 = scalar_lea.vmem %s1, %s210
      %p212 = pneg %p84
      %p213 = pneg %p81
      %p214 = scmp.lt.s32.totalorder %s20, 0
      %s215 = scalar_select %p214, %s20, 0
      %s216 = scalar_lea.vmem %s2, %s215
      %p217 = pneg %p110
      %p218 = pneg %p107
      %p219 = pneg %p138
      %p220 = pneg %p135
      %s221 = smul.u32 2, %s19
      %p222 = scmp.lt.s32.totalorder %s221, 3
      %s223 = scalar_select %p222, %s221, 3
      %p224 = scmp.lt.s32.totalorder %s20, 0
      %s225 = scalar_select %p224, %s20, 0
      %s226 = sadd.s32 %s225, %s223
      %s227 = smul.addr %s226, 4
      %s228 = scalar_lea.vmem %s3, %s227
      %s229 = smul.u32 2, %s19
      %p230 = scmp.lt.s32.totalorder %s229, 3
      %s231 = scalar_select %p230, %s229, 3
      %p232 = scmp.lt.s32.totalorder %s21, 0
      %s233 = scalar_select %p232, %s21, 0
      %s234 = sadd.s32 %s233, %s231
      %s235 = smul.addr %s234, 4
      %s236 = scalar_lea.vmem %s0, %s235
      %s237 = smul.u32 2, %s19
      %s238 = smul.u32 16, %s21
      %p239 = scmp.lt.s32.totalorder %s238, 15
      %s240 = scalar_select %p239, %s238, 15
      %p241 = scmp.lt.s32.totalorder %s20, 0
      %s242 = scalar_select %p241, %s20, 0
      %s243 = sadd.s32 %s242, %s240
      %s244 = smul.addr %s243, 4
      %s245 = scalar_lea.vmem %s1, %s244
      %s246 = smul.u32 16, %s21
      %p247 = scmp.lt.s32.totalorder %s20, 0
      %s248 = scalar_select %p247, %s20, 0
      %s249 = scalar_lea.vmem %s2, %s248
      %s250 = smul.u32 2, %s19
      %p251 = scmp.lt.s32.totalorder %s250, 3
      %s252 = scalar_select %p251, %s250, 3
      %p253 = scmp.lt.s32.totalorder %s20, 0
      %s254 = scalar_select %p253, %s20, 0
      %s255 = sadd.s32 %s254, %s252
      %s256 = smul.addr %s255, 4
      %s257 = scalar_lea.vmem %s3, %s256
      %s258 = smul.u32 2, %s19
      %p259 = scmp.eq.s32.totalorder %s21, 0
      // Predicated region
      $region33: #{_resnet_forward_impl.25} parent=31 // pred_check
        %p260 = pneg %p259
      $region34: #{_resnet_forward_impl.25} parent=31 // pred_check_branch
        %262 = sbr.rel (%p260) target = $region36
      $region35: #{_resnet_forward_impl.25} parent=31 // pred_region
        %263 = vst [vmem:[#allocation2] sm:$0xff] 0.0
        %264 = vst [vmem:[#allocation2 + $0x8] sm:$0xff] 0.0
      $region36: #{_resnet_forward_impl.25} parent=31 // pred_fallthru
        _
      %v265 = vld [vmem:[#allocation2] sm:$0xff]
      %v266 = vld [vmem:[#allocation2 + $0x8] sm:$0xff]
      %v267 = vld [vmem:[%s236] sm:$0xf]
      %v268 = vld [vmem:[%s236 + $0x4] sm:$0xf]
      %v269 = vld [vmem:[%s245] sm:$0xf]
      %v270 = vld [vmem:[%s245 + $0x4] sm:$0xf]
      %v271 = vld [vmem:[%s245 + $0x8] sm:$0xf]
      %v272 = vld [vmem:[%s245 + $0xc] sm:$0xf]
      %v273 = vld [vmem:[%s245 + $0x10] sm:$0xf]
      %v274 = vld [vmem:[%s245 + $0x14] sm:$0xf]
      %v275 = vld [vmem:[%s245 + $0x18] sm:$0xf]
      %v276 = vld [vmem:[%s245 + $0x1c] sm:$0xf]
      %v277 = vld [vmem:[%s245 + $0x20] sm:$0xf]
      %v278 = vld [vmem:[%s245 + $0x24] sm:$0xf]
      %v279 = vld [vmem:[%s245 + $0x28] sm:$0xf]
      %v280 = vld [vmem:[%s245 + $0x2c] sm:$0xf]
      %v281 = vld [vmem:[%s245 + $0x30] sm:$0xf]
      %v282 = vld [vmem:[%s245 + $0x34] sm:$0xf]
      %v283 = vld [vmem:[%s245 + $0x38] sm:$0xf]
      %v284 = vld [vmem:[%s245 + $0x3c] sm:$0xf]
      %v287 = vunpack.c.l.b16 %v267
      %v288 = vunpack.c.l.b16 %v268
      %v289 = vpack.c.b16 %v288, %v287
      %v307 = vunpack.c.l.b16 %v269
      %v308 = vunpack.c.l.b16 %v270
      %v309 = vunpack.c.l.b16 %v271
      %v310 = vunpack.c.l.b16 %v272
      %v311 = vunpack.c.l.b16 %v273
      %v312 = vunpack.c.l.b16 %v274
      %v313 = vunpack.c.l.b16 %v275
      %v314 = vunpack.c.l.b16 %v276
      %v315 = vunpack.c.l.b16 %v277
      %v316 = vunpack.c.l.b16 %v278
      %v317 = vunpack.c.l.b16 %v279
      %v318 = vunpack.c.l.b16 %v280
      %v319 = vunpack.c.l.b16 %v281
      %v320 = vunpack.c.l.b16 %v282
      %v321 = vunpack.c.l.b16 %v283
      %v322 = vunpack.c.l.b16 %v284
      %v323 = vpack.c.b16 %v308, %v307
      %v324 = vpack.c.b16 %v310, %v309
      %v325 = vpack.c.b16 %v312, %v311
      %v326 = vpack.c.b16 %v314, %v313
      %v327 = vpack.c.b16 %v316, %v315
      %v328 = vpack.c.b16 %v318, %v317
      %v329 = vpack.c.b16 %v320, %v319
      %v330 = vpack.c.b16 %v322, %v321
      %339 = vmatpush.bf16.msra.mxu0 %v330
      %340 = vmatpush.bf16.msra.mxu0 %v329
      %341 = vmatpush.bf16.msra.mxu0 %v328
      %342 = vmatpush.bf16.msra.mxu0 %v327
      %343 = vmatpush.bf16.msra.mxu0 %v326
      %344 = vmatpush.bf16.msra.mxu0 %v325
      %345 = vmatpush.bf16.msra.mxu0 %v324
      %346 = vmatpush.bf16.msra.mxu0 %v323
      %347 = vmatmul.bf16.gmra.mxu0 %v289
      %v348 = vpop.f32.mrf.mxu0
      %v349 = vadd.f32 0.0, %v348
      %v350 = vpop.f32.mrf.mxu0
      %v351 = vadd.f32 0.0, %v350
      %352 = vdwg.mxu0
      %v353 = vadd.f32 %v265, %v349
      %v354 = vadd.f32 %v266, %v351
      %355 = vst [vmem:[#allocation2] sm:$0xff] %v353
      %356 = vst [vmem:[#allocation2 + $0x8] sm:$0xff] %v354
      // Predicated region
      $region37: #{_resnet_forward_impl.25} parent=31 // pred_check
        %p357 = pneg %p259
      $region38: #{_resnet_forward_impl.25} parent=31 // pred_check_branch
        %359 = sbr.rel (%p357) target = $region40
      $region39: #{_resnet_forward_impl.25} parent=31 // pred_region
        %v360 = vld [vmem:[#allocation2] sm:$0xff]
        %v361 = vld [vmem:[#allocation2 + $0x8] sm:$0xff]
        %v362 = vld [vmem:[%s249] sm:$0x1]
        %v364 = vperm.slane %v362, 0
        %v366 = vadd.f32 %v360, %v364
        %v367 = vadd.f32 %v361, %v364
        %v368 = vpack.c.bf16 %v366, %v366
        %v369 = vpack.c.bf16 %v367, %v367
        %370 = vst [vmem:[%s257] sm:$0xf] %v368
        %371 = vst [vmem:[%s257 + $0x4] sm:$0xf] %v369
      $region40: #{_resnet_forward_impl.25} parent=31 // pred_fallthru
        _
      %s372 = smul.u32 2, %s19
      %p373 = scmp.lt.s32.totalorder %s372, 3
      %s374 = scalar_select %p373, %s372, 3
      %p375 = scmp.lt.s32.totalorder %s20, 0
      %s376 = scalar_select %p375, %s20, 0
      %s377 = sadd.s32 %s376, %s374
      %s378 = smul.addr %s377, 4
      %s379 = scalar_lea.vmem %s3, %s378
      // Predicated region
      $region41: #{_resnet_forward_impl.25} parent=31 // pred_check
        %p380 = pneg %p135
      $region42: #{_resnet_forward_impl.25} parent=31 // pred_check_branch
        %382 = sbr.rel (%p380) target = $region44
      $region43: #{_resnet_forward_impl.25} parent=31 // pred_region
        %s383 = smul.u32 2, %s19
      $region44: #{_resnet_forward_impl.25} parent=31 // pred_fallthru
        _
    $region32: #{_resnet_forward_impl.25} parent=5 // pred_fallthru
      _
    %p384 = scmp.le.s32.totalorder 2, %s9
    // Predicated region
    $region45: #{_resnet_forward_impl.25} parent=5 // pred_check
      %p385 = pneg %p384
    $region46: #{_resnet_forward_impl.25} parent=5 // pred_check_branch
      %387 = sbr.rel (%p385) target = $region48
    $region47: #{_resnet_forward_impl.25} parent=5 // pred_region
      %s388 = ssub.s32 %s9, 2
      // Predicated region
      $region49: #{_resnet_forward_impl.25} parent=47 // pred_check
        %p389 = pneg %p141
      $region50: #{_resnet_forward_impl.25} parent=47 // pred_check_branch
        %391 = sbr.rel (%p389) target = $region52
      $region51: #{_resnet_forward_impl.25} parent=47 // pred_region
        %s392 = smul.u32 2, %s22
        %p393 = scmp.lt.s32.totalorder %s392, 3
        %s394 = scalar_select %p393, %s392, 3
        %p395 = scmp.lt.s32.totalorder %s23, 0
        %s396 = scalar_select %p395, %s23, 0
        %s397 = sadd.s32 %s396, %s394
        %s398 = smul.addr %s397, 4
        %s399 = scalar_lea.vmem %s3, %s398
      $region52: #{_resnet_forward_impl.25} parent=47 // pred_fallthru
        _
    $region48: #{_resnet_forward_impl.25} parent=5 // pred_fallthru
      _
  $region6: #{_resnet_forward_impl.25} parent=0 // loop_footer
    %s13 = sadd.s32 1, %s9
  $region7: #{_resnet_forward_impl.25} parent=0 // loop_footer_branch
    %8 = sbr.rel target = $region3
  $region8: #{_resnet_forward_impl.25} parent=0 // loop_exit
    _

// kernel: _resnet_forward_impl.27
$region0: #{_resnet_forward_impl.27}
  #allocation0 [shape = 'u32[]', space=smem, size = 0x4, offset = 0x4, fixed_abs, tag = 'smem constant byte address 0x4 - core index']
  #allocation1 [shape = 'u32[72,128]{1,0:T(1,128)}', space=vmem, size = 0x9000, scoped, tag = 'internal scratch']
  #allocation2 [shape = 'f32[16,128]{1,0:T(8,128)}', space=vmem, size = 0x2000, scoped, tag = 'scratch operand']
  %s0 = inlined_call_operand.vmem [shape: bf16[32,256], index: 0, kind: input, shape index: {}]
  %s1 = inlined_call_operand.vmem [shape: bf16[256,128], index: 1, kind: input, shape index: {}]
  %s2 = inlined_call_operand.vmem [shape: f32[1,128], index: 2, kind: input, shape index: {}]
  %s3 = inlined_call_operand.vmem [shape: bf16[32,128], index: 3, kind: input, shape index: {}]
  %s4 = inlined_call_operand.vmem [shape: bf16[32,128], index: 4, kind: output, shape index: {}]
  %s5 = sld [smem:[#allocation0]]
  $region57: #{_resnet_forward_impl.27} parent=0
    _
  %s7 = ssub.s32 1, %s5
  %s8 = scalar_select 0, %s7, %s5
  loop: start=0, step=1, limit=4
  $region2: #{_resnet_forward_impl.27} parent=0 // loop_pre_header
    _
  $region3: #{_resnet_forward_impl.27} parent=0 // loop_header
    %s10 = sphi 0, %s14
    %p11 = scmp.ge.s32.totalorder %s10, 4
    %s17 = sphi 0, %s36
    %s18 = sphi 0, %s32
    %s19 = sphi 0, %s28
    %s20 = sphi 0, %s17
    %s21 = sphi 0, %s18
    %s22 = sphi 0, %s19
    %s23 = sphi 0, %s20
    %s24 = sphi 0, %s21
    %s25 = sphi 0, %s22
    %s41 = sphi 0, %s43
    %s44 = sphi 0, %s41
    %s45 = sphi 0, %s44
    %s61 = sphi 0, %s45
    %s69 = sphi 0, %s71
    %s72 = sphi 0, %s69
    %s73 = sphi 0, %s72
    %s89 = sphi 0, %s73
    %s95 = sphi 0, %s97
    %s98 = sphi 0, %s95
    %s99 = sphi 0, %s98
    %s115 = sphi 0, %s99
    %s123 = sphi 0, %s125
    %s126 = sphi 0, %s123
    %s127 = sphi 0, %s126
    %s143 = sphi 0, %s127
    %s151 = sphi 0, %s153
    %s154 = sphi 0, %s151
    %s155 = sphi 0, %s154
    %s171 = sphi 0, %s155
  $region4: #{_resnet_forward_impl.27} parent=0 // loop_header_branch
    %13 = sbr.rel (%p11) target = $region8
  $region5: #{_resnet_forward_impl.27} parent=0 // loop_body
    %s15 = ssub.s32 %s10, 1
    %s16 = ssub.s32 %s10, 2
    %s26 = sadd.s32 1, %s19
    %p27 = scmp.ge.s32.totalorder %s26, 1
    %s28 = scalar_select %p27, 0, %s26
    %s29 = sadd.s32 1, %s18
    %s30 = scalar_select %p27, %s29, %s18
    %p31 = scmp.ge.s32.totalorder %s30, 1
    %s32 = scalar_select %p31, 0, %s30
    %s33 = sadd.s32 1, %s17
    %s34 = scalar_select %p31, %s33, %s17
    %p35 = scmp.ge.s32.totalorder %s34, 2
    %s36 = scalar_select %p35, 0, %s34
    %s37 = ssub.s32 %s17, %s36
    %s38 = ssub.s32 %s19, %s28
    %s39 = sor.u32 %s37, %s38
    %p40 = scmp.eq.s32.totalorder %s39, 0
    %s42 = sadd.s32 %s41, 1
    %s43 = scalar_select %p40, %s41, %s42
    %p46 = pneg %p40
    %p47 = scmp.eq.s32.totalorder %s10, 1
    %p48 = por %p46, %p47
    %p49 = scmp.ne.s32.totalorder %s41, %s44
    %p50 = scmp.eq.s32.totalorder %s10, 0
    %p51 = por %p49, %p50
    %p52 = scmp.ne.s32.totalorder %s41, %s44
    %p53 = scmp.eq.s32.totalorder %s15, 1
    %p54 = por %p52, %p53
    %p55 = scmp.ne.s32.totalorder %s44, %s45
    %p56 = scmp.eq.s32.totalorder %s15, 0
    %p57 = por %p55, %p56
    %p58 = scmp.ne.s32.totalorder %s44, %s45
    %p59 = scmp.eq.s32.totalorder %s16, 1
    %p60 = por %p58, %p59
    %p62 = scmp.ne.s32.totalorder %s45, %s61
    %p63 = scmp.eq.s32.totalorder %s16, 0
    %p64 = por %p62, %p63
    %s65 = ssub.s32 %s19, %s28
    %s66 = ssub.s32 %s18, %s32
    %s67 = sor.u32 %s65, %s66
    %p68 = scmp.eq.s32.totalorder %s67, 0
    %s70 = sadd.s32 %s69, 1
    %s71 = scalar_select %p68, %s69, %s70
    %p74 = pneg %p68
    %p75 = scmp.eq.s32.totalorder %s10, 1
    %p76 = por %p74, %p75
    %p77 = scmp.ne.s32.totalorder %s69, %s72
    %p78 = scmp.eq.s32.totalorder %s10, 0
    %p79 = por %p77, %p78
    %p80 = scmp.ne.s32.totalorder %s69, %s72
    %p81 = scmp.eq.s32.totalorder %s15, 1
    %p82 = por %p80, %p81
    %p83 = scmp.ne.s32.totalorder %s72, %s73
    %p84 = scmp.eq.s32.totalorder %s15, 0
    %p85 = por %p83, %p84
    %p86 = scmp.ne.s32.totalorder %s72, %s73
    %p87 = scmp.eq.s32.totalorder %s16, 1
    %p88 = por %p86, %p87
    %p90 = scmp.ne.s32.totalorder %s73, %s89
    %p91 = scmp.eq.s32.totalorder %s16, 0
    %p92 = por %p90, %p91
    %s93 = ssub.s32 %s18, %s32
    %p94 = scmp.eq.s32.totalorder %s93, 0
    %s96 = sadd.s32 %s95, 1
    %s97 = scalar_select %p94, %s95, %s96
    %p100 = pneg %p94
    %p101 = scmp.eq.s32.totalorder %s10, 1
    %p102 = por %p100, %p101
    %p103 = scmp.ne.s32.totalorder %s95, %s98
    %p104 = scmp.eq.s32.totalorder %s10, 0
    %p105 = por %p103, %p104
    %p106 = scmp.ne.s32.totalorder %s95, %s98
    %p107 = scmp.eq.s32.totalorder %s15, 1
    %p108 = por %p106, %p107
    %p109 = scmp.ne.s32.totalorder %s98, %s99
    %p110 = scmp.eq.s32.totalorder %s15, 0
    %p111 = por %p109, %p110
    %p112 = scmp.ne.s32.totalorder %s98, %s99
    %p113 = scmp.eq.s32.totalorder %s16, 1
    %p114 = por %p112, %p113
    %p116 = scmp.ne.s32.totalorder %s99, %s115
    %p117 = scmp.eq.s32.totalorder %s16, 0
    %p118 = por %p116, %p117
    %s119 = ssub.s32 %s17, %s36
    %s120 = ssub.s32 %s18, %s32
    %s121 = sor.u32 %s119, %s120
    %p122 = scmp.eq.s32.totalorder %s121, 0
    %s124 = sadd.s32 %s123, 1
    %s125 = scalar_select %p122, %s123, %s124
    %p128 = pneg %p122
    %p129 = scmp.eq.s32.totalorder %s10, 1
    %p130 = por %p128, %p129
    %p131 = scmp.ne.s32.totalorder %s123, %s126
    %p132 = scmp.eq.s32.totalorder %s10, 0
    %p133 = por %p131, %p132
    %p134 = scmp.ne.s32.totalorder %s123, %s126
    %p135 = scmp.eq.s32.totalorder %s15, 1
    %p136 = por %p134, %p135
    %p137 = scmp.ne.s32.totalorder %s126, %s127
    %p138 = scmp.eq.s32.totalorder %s15, 0
    %p139 = por %p137, %p138
    %p140 = scmp.ne.s32.totalorder %s126, %s127
    %p141 = scmp.eq.s32.totalorder %s16, 1
    %p142 = por %p140, %p141
    %p144 = scmp.ne.s32.totalorder %s127, %s143
    %p145 = scmp.eq.s32.totalorder %s16, 0
    %p146 = por %p144, %p145
    %s147 = ssub.s32 %s17, %s36
    %s148 = ssub.s32 %s18, %s32
    %s149 = sor.u32 %s147, %s148
    %p150 = scmp.eq.s32.totalorder %s149, 0
    %s152 = sadd.s32 %s151, 1
    %s153 = scalar_select %p150, %s151, %s152
    %p156 = pneg %p150
    %p157 = scmp.eq.s32.totalorder %s10, 1
    %p158 = por %p156, %p157
    %p159 = scmp.ne.s32.totalorder %s151, %s154
    %p160 = scmp.eq.s32.totalorder %s10, 0
    %p161 = por %p159, %p160
    %p162 = scmp.ne.s32.totalorder %s151, %s154
    %p163 = scmp.eq.s32.totalorder %s15, 1
    %p164 = por %p162, %p163
    %p165 = scmp.ne.s32.totalorder %s154, %s155
    %p166 = scmp.eq.s32.totalorder %s15, 0
    %p167 = por %p165, %p166
    %p168 = scmp.ne.s32.totalorder %s154, %s155
    %p169 = scmp.eq.s32.totalorder %s16, 1
    %p170 = por %p168, %p169
    %p172 = scmp.ne.s32.totalorder %s155, %s171
    %p173 = scmp.eq.s32.totalorder %s16, 0
    %p174 = por %p172, %p173
    %p175 = scmp.le.s32.totalorder 1, %s10
    %p176 = scmp.lt.s32.totalorder %s10, 3
    %p177 = pnand %p175, %p176
    %p178 = pneg %p177
    // Predicated region
    $region9: #{_resnet_forward_impl.27} parent=5 // pred_check
      _
    $region10: #{_resnet_forward_impl.27} parent=5 // pred_check_branch
      %180 = sbr.rel (%p177) target = $region12
    $region11: #{_resnet_forward_impl.27} parent=5 // pred_region
      %s181 = ssub.s32 %s10, 1
      // Predicated region
      $region13: #{_resnet_forward_impl.27} parent=11 // pred_check
        %p182 = pneg %p85
      $region14: #{_resnet_forward_impl.27} parent=11 // pred_check_branch
        %184 = sbr.rel (%p182) target = $region16
      $region15: #{_resnet_forward_impl.27} parent=11 // pred_region
        %s185 = smul.u32 32, %s22
        %p186 = scmp.lt.s32.totalorder %s185, 31
        %s187 = scalar_select %p186, %s185, 31
        %p188 = scmp.lt.s32.totalorder %s21, 0
        %s189 = scalar_select %p188, %s21, 0
        %s190 = sadd.s32 %s189, %s187
        %s191 = smul.addr %s190, 4
        %s192 = scalar_lea.vmem %s1, %s191
        %s193 = smul.u32 32, %s22
      $region16: #{_resnet_forward_impl.27} parent=11 // pred_fallthru
        _
      // Predicated region
      $region17: #{_resnet_forward_impl.27} parent=11 // pred_check
        %p194 = pneg %p111
      $region18: #{_resnet_forward_impl.27} parent=11 // pred_check_branch
        %196 = sbr.rel (%p194) target = $region20
      $region19: #{_resnet_forward_impl.27} parent=11 // pred_region
        %p197 = scmp.lt.s32.totalorder %s21, 0
        %s198 = scalar_select %p197, %s21, 0
        %s199 = scalar_lea.vmem %s2, %s198
      $region20: #{_resnet_forward_impl.27} parent=11 // pred_fallthru
        _
    $region12: #{_resnet_forward_impl.27} parent=5 // pred_fallthru
      _
    %p200 = scmp.lt.s32.totalorder %s10, 2
    // Predicated region
    $region21: #{_resnet_forward_impl.27} parent=5 // pred_check
      %p201 = pneg %p200
    $region22: #{_resnet_forward_impl.27} parent=5 // pred_check_branch
      %203 = sbr.rel (%p201) target = $region24
    $region23: #{_resnet_forward_impl.27} parent=5 // pred_region
      // Predicated region
      $region25: #{_resnet_forward_impl.27} parent=23 // pred_check
        %p204 = pneg %p51
      $region26: #{_resnet_forward_impl.27} parent=23 // pred_check_branch
        %206 = sbr.rel (%p204) target = $region28
      $region27: #{_resnet_forward_impl.27} parent=23 // pred_region
        %s207 = smul.u32 2, %s17
        %s208 = smul.u32 2, %s19
        %p209 = scmp.lt.s32.totalorder %s207, 3
        %s210 = scalar_select %p209, %s207, 3
        %p211 = scmp.lt.s32.totalorder %s208, 1
        %s212 = scalar_select %p211, %s208, 1
        %s213 = smul.addr %s210, 2
        %s214 = sadd.s32 %s212, %s213
        %s215 = smul.addr %s214, 4
        %s216 = scalar_lea.vmem %s0, %s215
        %s217 = smul.u32 2, %s17
        %s218 = smul.u32 2, %s19
      $region28: #{_resnet_forward_impl.27} parent=23 // pred_fallthru
        _
      // Predicated region
      $region29: #{_resnet_forward_impl.27} parent=23 // pred_check
        %p219 = pneg %p133
      $region30: #{_resnet_forward_impl.27} parent=23 // pred_check_branch
        %221 = sbr.rel (%p219) target = $region32
      $region31: #{_resnet_forward_impl.27} parent=23 // pred_region
        %s222 = smul.u32 2, %s17
        %p223 = scmp.lt.s32.totalorder %s222, 3
        %s224 = scalar_select %p223, %s222, 3
        %p225 = scmp.lt.s32.totalorder %s18, 0
        %s226 = scalar_select %p225, %s18, 0
        %s227 = sadd.s32 %s226, %s224
        %s228 = smul.addr %s227, 4
        %s229 = scalar_lea.vmem %s3, %s228
        %s230 = smul.u32 2, %s17
      $region32: #{_resnet_forward_impl.27} parent=23 // pred_fallthru
        _
    $region24: #{_resnet_forward_impl.27} parent=5 // pred_fallthru
      _
    %p231 = scmp.le.s32.totalorder 1, %s10
    %p232 = scmp.lt.s32.totalorder %s10, 3
    %p233 = pnand %p231, %p232
    %p234 = pneg %p233
    // Predicated region
    $region33: #{_resnet_forward_impl.27} parent=5 // pred_check
      _
    $region34: #{_resnet_forward_impl.27} parent=5 // pred_check_branch
      %236 = sbr.rel (%p233) target = $region36
    $region35: #{_resnet_forward_impl.27} parent=5 // pred_region
      %s237 = ssub.s32 %s10, 1
      %s238 = smul.u32 2, %s20
      %s239 = smul.u32 2, %s22
      %p240 = scmp.lt.s32.totalorder %s238, 3
      %s241 = scalar_select %p240, %s238, 3
      %p242 = scmp.lt.s32.totalorder %s239, 1
      %s243 = scalar_select %p242, %s239, 1
      %s244 = smul.addr %s241, 2
      %s245 = sadd.s32 %s243, %s244
      %s246 = smul.addr %s245, 4
      %s247 = scalar_lea.vmem %s0, %s246
      %p248 = pneg %p57
      %p249 = pneg %p54
      %s250 = smul.u32 32, %s22
      %p251 = scmp.lt.s32.totalorder %s250, 31
      %s252 = scalar_select %p251, %s250, 31
      %p253 = scmp.lt.s32.totalorder %s21, 0
      %s254 = scalar_select %p253, %s21, 0
      %s255 = sadd.s32 %s254, %s252
      %s256 = smul.addr %s255, 4
      %s257 = scalar_lea.vmem %s1, %s256
      %p258 = pneg %p85
      %p259 = pneg %p82
      %p260 = scmp.lt.s32.totalorder %s21, 0
      %s261 = scalar_select %p260, %s21, 0
      %s262 = scalar_lea.vmem %s2, %s261
      %p263 = pneg %p111
      %p264 = pneg %p108
      %s265 = smul.u32 2, %s20
      %p266 = scmp.lt.s32.totalorder %s265, 3
      %s267 = scalar_select %p266, %s265, 3
      %p268 = scmp.lt.s32.totalorder %s21, 0
      %s269 = scalar_select %p268, %s21, 0
      %s270 = sadd.s32 %s269, %s267
      %s271 = smul.addr %s270, 4
      %s272 = scalar_lea.vmem %s3, %s271
      %p273 = pneg %p139
      %p274 = pneg %p136
      %p275 = pneg %p167
      %p276 = pneg %p164
      %s277 = smul.u32 2, %s20
      %p278 = scmp.lt.s32.totalorder %s277, 3
      %s279 = scalar_select %p278, %s277, 3
      %p280 = scmp.lt.s32.totalorder %s21, 0
      %s281 = scalar_select %p280, %s21, 0
      %s282 = sadd.s32 %s281, %s279
      %s283 = smul.addr %s282, 4
      %s284 = scalar_lea.vmem %s4, %s283
      %s285 = smul.u32 2, %s20
      %s286 = smul.u32 2, %s22
      %p287 = scmp.lt.s32.totalorder %s285, 3
      %s288 = scalar_select %p287, %s285, 3
      %p289 = scmp.lt.s32.totalorder %s286, 1
      %s290 = scalar_select %p289, %s286, 1
      %s291 = smul.addr %s288, 2
      %s292 = sadd.s32 %s290, %s291
      %s293 = smul.addr %s292, 4
      %s294 = scalar_lea.vmem %s0, %s293
      %s295 = smul.u32 2, %s20
      %s296 = smul.u32 2, %s22
      %s297 = smul.u32 32, %s22
      %p298 = scmp.lt.s32.totalorder %s297, 31
      %s299 = scalar_select %p298, %s297, 31
      %p300 = scmp.lt.s32.totalorder %s21, 0
      %s301 = scalar_select %p300, %s21, 0
      %s302 = sadd.s32 %s301, %s299
      %s303 = smul.addr %s302, 4
      %s304 = scalar_lea.vmem %s1, %s303
      %s305 = smul.u32 32, %s22
      %p306 = scmp.lt.s32.totalorder %s21, 0
      %s307 = scalar_select %p306, %s21, 0
      %s308 = scalar_lea.vmem %s2, %s307
      %s309 = smul.u32 2, %s20
      %p310 = scmp.lt.s32.totalorder %s309, 3
      %s311 = scalar_select %p310, %s309, 3
      %p312 = scmp.lt.s32.totalorder %s21, 0
      %s313 = scalar_select %p312, %s21, 0
      %s314 = sadd.s32 %s313, %s311
      %s315 = smul.addr %s314, 4
      %s316 = scalar_lea.vmem %s3, %s315
      %s317 = smul.u32 2, %s20
      %s318 = smul.u32 2, %s20
      %p319 = scmp.lt.s32.totalorder %s318, 3
      %s320 = scalar_select %p319, %s318, 3
      %p321 = scmp.lt.s32.totalorder %s21, 0
      %s322 = scalar_select %p321, %s21, 0
      %s323 = sadd.s32 %s322, %s320
      %s324 = smul.addr %s323, 4
      %s325 = scalar_lea.vmem %s4, %s324
      %s326 = smul.u32 2, %s20
      %p327 = scmp.eq.s32.totalorder %s22, 0
      // Predicated region
      $region37: #{_resnet_forward_impl.27} parent=35 // pred_check
        %p328 = pneg %p327
      $region38: #{_resnet_forward_impl.27} parent=35 // pred_check_branch
        %330 = sbr.rel (%p328) target = $region40
      $region39: #{_resnet_forward_impl.27} parent=35 // pred_region
        %331 = vst [vmem:[#allocation2] sm:$0xff] 0.0
        %332 = vst [vmem:[#allocation2 + $0x8] sm:$0xff] 0.0
      $region40: #{_resnet_forward_impl.27} parent=35 // pred_fallthru
        _
      %v333 = vld [vmem:[#allocation2] sm:$0xff]
      %v334 = vld [vmem:[#allocation2 + $0x8] sm:$0xff]
      %v335 = vld [vmem:[%s294] sm:$0xff]
      %v336 = vld [vmem:[%s294 + $0x8] sm:$0xff]
      %v337 = vld [vmem:[%s304] sm:$0xf]
      %v338 = vld [vmem:[%s304 + $0x4] sm:$0xf]
      %v339 = vld [vmem:[%s304 + $0x8] sm:$0xf]
      %v340 = vld [vmem:[%s304 + $0xc] sm:$0xf]
      %v341 = vld [vmem:[%s304 + $0x10] sm:$0xf]
      %v342 = vld [vmem:[%s304 + $0x14] sm:$0xf]
      %v343 = vld [vmem:[%s304 + $0x18] sm:$0xf]
      %v344 = vld [vmem:[%s304 + $0x1c] sm:$0xf]
      %v345 = vld [vmem:[%s304 + $0x20] sm:$0xf]
      %v346 = vld [vmem:[%s304 + $0x24] sm:$0xf]
      %v347 = vld [vmem:[%s304 + $0x28] sm:$0xf]
      %v348 = vld [vmem:[%s304 + $0x2c] sm:$0xf]
      %v349 = vld [vmem:[%s304 + $0x30] sm:$0xf]
      %v350 = vld [vmem:[%s304 + $0x34] sm:$0xf]
      %v351 = vld [vmem:[%s304 + $0x38] sm:$0xf]
      %v352 = vld [vmem:[%s304 + $0x3c] sm:$0xf]
      %v353 = vld [vmem:[%s304 + $0x40] sm:$0xf]
      %v354 = vld [vmem:[%s304 + $0x44] sm:$0xf]
      %v355 = vld [vmem:[%s304 + $0x48] sm:$0xf]
      %v356 = vld [vmem:[%s304 + $0x4c] sm:$0xf]
      %v357 = vld [vmem:[%s304 + $0x50] sm:$0xf]
      %v358 = vld [vmem:[%s304 + $0x54] sm:$0xf]
      %v359 = vld [vmem:[%s304 + $0x58] sm:$0xf]
      %v360 = vld [vmem:[%s304 + $0x5c] sm:$0xf]
      %v361 = vld [vmem:[%s304 + $0x60] sm:$0xf]
      %v362 = vld [vmem:[%s304 + $0x64] sm:$0xf]
      %v363 = vld [vmem:[%s304 + $0x68] sm:$0xf]
      %v364 = vld [vmem:[%s304 + $0x6c] sm:$0xf]
      %v365 = vld [vmem:[%s304 + $0x70] sm:$0xf]
      %v366 = vld [vmem:[%s304 + $0x74] sm:$0xf]
      %v367 = vld [vmem:[%s304 + $0x78] sm:$0xf]
      %v368 = vld [vmem:[%s304 + $0x7c] sm:$0xf]
      %v371 = vunpack.c.l.b16 %v335
      %v372 = vunpack.c.h.b16 %v335
      %v373 = vunpack.c.l.b16 %v336
      %v374 = vunpack.c.h.b16 %v336
      %v375 = vpack.c.b16 %v373, %v371
      %v376 = vpack.c.b16 %v374, %v372
      %v411 = vunpack.c.l.b16 %v337
      %v412 = vunpack.c.l.b16 %v338
      %v413 = vunpack.c.l.b16 %v339
      %v414 = vunpack.c.l.b16 %v340
      %v415 = vunpack.c.l.b16 %v341
      %v416 = vunpack.c.l.b16 %v342
      %v417 = vunpack.c.l.b16 %v343
      %v418 = vunpack.c.l.b16 %v344
      %v419 = vunpack.c.l.b16 %v345
      %v420 = vunpack.c.l.b16 %v346
      %v421 = vunpack.c.l.b16 %v347
      %v422 = vunpack.c.l.b16 %v348
      %v423 = vunpack.c.l.b16 %v349
      %v424 = vunpack.c.l.b16 %v350
      %v425 = vunpack.c.l.b16 %v351
      %v426 = vunpack.c.l.b16 %v352
      %v427 = vunpack.c.l.b16 %v353
      %v428 = vunpack.c.l.b16 %v354
      %v429 = vunpack.c.l.b16 %v355
      %v430 = vunpack.c.l.b16 %v356
      %v431 = vunpack.c.l.b16 %v357
      %v432 = vunpack.c.l.b16 %v358
      %v433 = vunpack.c.l.b16 %v359
      %v434 = vunpack.c.l.b16 %v360
      %v435 = vunpack.c.l.b16 %v361
      %v436 = vunpack.c.l.b16 %v362
      %v437 = vunpack.c.l.b16 %v363
      %v438 = vunpack.c.l.b16 %v364
      %v439 = vunpack.c.l.b16 %v365
      %v440 = vunpack.c.l.b16 %v366
      %v441 = vunpack.c.l.b16 %v367
      %v442 = vunpack.c.l.b16 %v368
      %v443 = vpack.c.b16 %v412, %v411
      %v444 = vpack.c.b16 %v414, %v413
      %v445 = vpack.c.b16 %v416, %v415
      %v446 = vpack.c.b16 %v418, %v417
      %v447 = vpack.c.b16 %v420, %v419
      %v448 = vpack.c.b16 %v422, %v421
      %v449 = vpack.c.b16 %v424, %v423
      %v450 = vpack.c.b16 %v426, %v425
      %v451 = vpack.c.b16 %v428, %v427
      %v452 = vpack.c.b16 %v430, %v429
      %v453 = vpack.c.b16 %v432, %v431
      %v454 = vpack.c.b16 %v434, %v433
      %v455 = vpack.c.b16 %v436, %v435
      %v456 = vpack.c.b16 %v438, %v437
      %v457 = vpack.c.b16 %v440, %v439
      %v458 = vpack.c.b16 %v442, %v441
      %475 = vmatpush.bf16.msra.mxu0 %v450
      %476 = vmatpush.bf16.msra.mxu0 %v449
      %477 = vmatpush.bf16.msra.mxu0 %v448
      %478 = vmatpush.bf16.msra.mxu0 %v447
      %479 = vmatpush.bf16.msra.mxu0 %v446
      %480 = vmatpush.bf16.msra.mxu0 %v445
      %481 = vmatpush.bf16.msra.mxu0 %v444
      %482 = vmatpush.bf16.msra.mxu0 %v443
      %483 = vmatmul.bf16.gmra.mxu0 %v375
      %v484 = vpop.f32.mrf.mxu0
      %v485 = vadd.f32 0.0, %v484
      %v486 = vpop.f32.mrf.mxu0
      %v487 = vadd.f32 0.0, %v486
      %488 = vdwg.mxu0
      %489 = vmatpush.bf16.msra.mxu0 %v458
      %490 = vmatpush.bf16.msra.mxu0 %v457
      %491 = vmatpush.bf16.msra.mxu0 %v456
      %492 = vmatpush.bf16.msra.mxu0 %v455
      %493 = vmatpush.bf16.msra.mxu0 %v454
      %494 = vmatpush.bf16.msra.mxu0 %v453
      %495 = vmatpush.bf16.msra.mxu0 %v452
      %496 = vmatpush.bf16.msra.mxu0 %v451
      %497 = vmatmul.bf16.gmra.mxu0 %v376
      %v498 = vpop.f32.mrf.mxu0
      %v499 = vadd.f32 %v485, %v498
      %v500 = vpop.f32.mrf.mxu0
      %v501 = vadd.f32 %v487, %v500
      %502 = vdwg.mxu0
      %v503 = vadd.f32 %v333, %v499
      %v504 = vadd.f32 %v334, %v501
      %505 = vst [vmem:[#allocation2] sm:$0xff] %v503
      %506 = vst [vmem:[#allocation2 + $0x8] sm:$0xff] %v504
      // Predicated region
      $region41: #{_resnet_forward_impl.27} parent=35 // pred_check
        %p507 = pneg %p327
      $region42: #{_resnet_forward_impl.27} parent=35 // pred_check_branch
        %509 = sbr.rel (%p507) target = $region44
      $region43: #{_resnet_forward_impl.27} parent=35 // pred_region
        %v510 = vld [vmem:[#allocation2] sm:$0xff]
        %v511 = vld [vmem:[#allocation2 + $0x8] sm:$0xff]
        %v512 = vld [vmem:[%s308] sm:$0x1]
        %v514 = vperm.slane %v512, 0
        %v516 = vadd.f32 %v510, %v514
        %v517 = vadd.f32 %v511, %v514
        %v518 = vld [vmem:[%s316] sm:$0xf]
        %v519 = vld [vmem:[%s316 + $0x4] sm:$0xf]
        %v520 = vunpack.c.l.bf16 %v518
        %v521 = vunpack.c.l.bf16 %v519
        %v522 = vadd.f32 %v516, %v520
        %v523 = vadd.f32 %v517, %v521
        %v524 = vmax.f32 %v522, 0.0
        %v525 = vmax.f32 %v523, 0.0
        %v526 = vpack.c.bf16 %v524, %v524
        %v527 = vpack.c.bf16 %v525, %v525
        %528 = vst [vmem:[%s325] sm:$0xf] %v526
        %529 = vst [vmem:[%s325 + $0x4] sm:$0xf] %v527
      $region44: #{_resnet_forward_impl.27} parent=35 // pred_fallthru
        _
      %s530 = smul.u32 2, %s20
      %p531 = scmp.lt.s32.totalorder %s530, 3
      %s532 = scalar_select %p531, %s530, 3
      %p533 = scmp.lt.s32.totalorder %s21, 0
      %s534 = scalar_select %p533, %s21, 0
      %s535 = sadd.s32 %s534, %s532
      %s536 = smul.addr %s535, 4
      %s537 = scalar_lea.vmem %s4, %s536
      // Predicated region
      $region45: #{_resnet_forward_impl.27} parent=35 // pred_check
        %p538 = pneg %p164
      $region46: #{_resnet_forward_impl.27} parent=35 // pred_check_branch
        %540 = sbr.rel (%p538) target = $region48
      $region47: #{_resnet_forward_impl.27} parent=35 // pred_region
        %s541 = smul.u32 2, %s20
      $region48: #{_resnet_forward_impl.27} parent=35 // pred_fallthru
        _
    $region36: #{_resnet_forward_impl.27} parent=5 // pred_fallthru
      _
    %p542 = scmp.le.s32.totalorder 2, %s10
    // Predicated region
    $region49: #{_resnet_forward_impl.27} parent=5 // pred_check
      %p543 = pneg %p542
    $region50: #{_resnet_forward_impl.27} parent=5 // pred_check_branch
      %545 = sbr.rel (%p543) target = $region52
    $region51: #{_resnet_forward_impl.27} parent=5 // pred_region
      %s546 = ssub.s32 %s10, 2
      // Predicated region
      $region53: #{_resnet_forward_impl.27} parent=51 // pred_check
        %p547 = pneg %p170
      $region54: #{_resnet_forward_impl.27} parent=51 // pred_check_branch
        %549 = sbr.rel (%p547) target = $region56
      $region55: #{_resnet_forward_impl.27} parent=51 // pred_region
        %s550 = smul.u32 2, %s23
        %p551 = scmp.lt.s32.totalorder %s550, 3
        %s552 = scalar_select %p551, %s550, 3
        %p553 = scmp.lt.s32.totalorder %s24, 0
        %s554 = scalar_select %p553, %s24, 0
        %s555 = sadd.s32 %s554, %s552
        %s556 = smul.addr %s555, 4
        %s557 = scalar_lea.vmem %s4, %s556
      $region56: #{_resnet_forward_impl.27} parent=51 // pred_fallthru
        _
    $region52: #{_resnet_forward_impl.27} parent=5 // pred_fallthru
      _
  $region6: #{_resnet_forward_impl.27} parent=0 // loop_footer
    %s14 = sadd.s32 1, %s10
  $region7: #{_resnet_forward_impl.27} parent=0 // loop_footer_branch
    %9 = sbr.rel target = $region3
  $region8: #{_resnet_forward_impl.27} parent=0 // loop_exit
    _

// kernel: _resnet_forward_impl.28
$region0: #{_resnet_forward_impl.28}
  #allocation0 [shape = 'u32[]', space=smem, size = 0x4, offset = 0x4, fixed_abs, tag = 'smem constant byte address 0x4 - core index']
  #allocation1 [shape = 'u32[72,128]{1,0:T(1,128)}', space=vmem, size = 0x9000, scoped, tag = 'internal scratch']
  #allocation2 [shape = 'f32[16,128]{1,0:T(8,128)}', space=vmem, size = 0x2000, scoped, tag = 'scratch operand']
  %s0 = inlined_call_operand.vmem [shape: bf16[32,256], index: 0, kind: input, shape index: {}]
  %s1 = inlined_call_operand.vmem [shape: bf16[256,128], index: 1, kind: input, shape index: {}]
  %s2 = inlined_call_operand.vmem [shape: f32[1,128], index: 2, kind: input, shape index: {}]
  %s3 = inlined_call_operand.vmem [shape: bf16[32,128], index: 3, kind: output, shape index: {}]
  %s4 = sld [smem:[#allocation0]]
  $region53: #{_resnet_forward_impl.28} parent=0
    _
  %s6 = ssub.s32 1, %s4
  %s7 = scalar_select 0, %s6, %s4
  loop: start=0, step=1, limit=4
  $region2: #{_resnet_forward_impl.28} parent=0 // loop_pre_header
    _
  $region3: #{_resnet_forward_impl.28} parent=0 // loop_header
    %s9 = sphi 0, %s13
    %p10 = scmp.ge.s32.totalorder %s9, 4
    %s16 = sphi 0, %s35
    %s17 = sphi 0, %s31
    %s18 = sphi 0, %s27
    %s19 = sphi 0, %s16
    %s20 = sphi 0, %s17
    %s21 = sphi 0, %s18
    %s22 = sphi 0, %s19
    %s23 = sphi 0, %s20
    %s24 = sphi 0, %s21
    %s40 = sphi 0, %s42
    %s43 = sphi 0, %s40
    %s44 = sphi 0, %s43
    %s60 = sphi 0, %s44
    %s68 = sphi 0, %s70
    %s71 = sphi 0, %s68
    %s72 = sphi 0, %s71
    %s88 = sphi 0, %s72
    %s94 = sphi 0, %s96
    %s97 = sphi 0, %s94
    %s98 = sphi 0, %s97
    %s114 = sphi 0, %s98
    %s122 = sphi 0, %s124
    %s125 = sphi 0, %s122
    %s126 = sphi 0, %s125
    %s142 = sphi 0, %s126
  $region4: #{_resnet_forward_impl.28} parent=0 // loop_header_branch
    %12 = sbr.rel (%p10) target = $region8
  $region5: #{_resnet_forward_impl.28} parent=0 // loop_body
    %s14 = ssub.s32 %s9, 1
    %s15 = ssub.s32 %s9, 2
    %s25 = sadd.s32 1, %s18
    %p26 = scmp.ge.s32.totalorder %s25, 1
    %s27 = scalar_select %p26, 0, %s25
    %s28 = sadd.s32 1, %s17
    %s29 = scalar_select %p26, %s28, %s17
    %p30 = scmp.ge.s32.totalorder %s29, 1
    %s31 = scalar_select %p30, 0, %s29
    %s32 = sadd.s32 1, %s16
    %s33 = scalar_select %p30, %s32, %s16
    %p34 = scmp.ge.s32.totalorder %s33, 2
    %s35 = scalar_select %p34, 0, %s33
    %s36 = ssub.s32 %s16, %s35
    %s37 = ssub.s32 %s18, %s27
    %s38 = sor.u32 %s36, %s37
    %p39 = scmp.eq.s32.totalorder %s38, 0
    %s41 = sadd.s32 %s40, 1
    %s42 = scalar_select %p39, %s40, %s41
    %p45 = pneg %p39
    %p46 = scmp.eq.s32.totalorder %s9, 1
    %p47 = por %p45, %p46
    %p48 = scmp.ne.s32.totalorder %s40, %s43
    %p49 = scmp.eq.s32.totalorder %s9, 0
    %p50 = por %p48, %p49
    %p51 = scmp.ne.s32.totalorder %s40, %s43
    %p52 = scmp.eq.s32.totalorder %s14, 1
    %p53 = por %p51, %p52
    %p54 = scmp.ne.s32.totalorder %s43, %s44
    %p55 = scmp.eq.s32.totalorder %s14, 0
    %p56 = por %p54, %p55
    %p57 = scmp.ne.s32.totalorder %s43, %s44
    %p58 = scmp.eq.s32.totalorder %s15, 1
    %p59 = por %p57, %p58
    %p61 = scmp.ne.s32.totalorder %s44, %s60
    %p62 = scmp.eq.s32.totalorder %s15, 0
    %p63 = por %p61, %p62
    %s64 = ssub.s32 %s18, %s27
    %s65 = ssub.s32 %s17, %s31
    %s66 = sor.u32 %s64, %s65
    %p67 = scmp.eq.s32.totalorder %s66, 0
    %s69 = sadd.s32 %s68, 1
    %s70 = scalar_select %p67, %s68, %s69
    %p73 = pneg %p67
    %p74 = scmp.eq.s32.totalorder %s9, 1
    %p75 = por %p73, %p74
    %p76 = scmp.ne.s32.totalorder %s68, %s71
    %p77 = scmp.eq.s32.totalorder %s9, 0
    %p78 = por %p76, %p77
    %p79 = scmp.ne.s32.totalorder %s68, %s71
    %p80 = scmp.eq.s32.totalorder %s14, 1
    %p81 = por %p79, %p80
    %p82 = scmp.ne.s32.totalorder %s71, %s72
    %p83 = scmp.eq.s32.totalorder %s14, 0
    %p84 = por %p82, %p83
    %p85 = scmp.ne.s32.totalorder %s71, %s72
    %p86 = scmp.eq.s32.totalorder %s15, 1
    %p87 = por %p85, %p86
    %p89 = scmp.ne.s32.totalorder %s72, %s88
    %p90 = scmp.eq.s32.totalorder %s15, 0
    %p91 = por %p89, %p90
    %s92 = ssub.s32 %s17, %s31
    %p93 = scmp.eq.s32.totalorder %s92, 0
    %s95 = sadd.s32 %s94, 1
    %s96 = scalar_select %p93, %s94, %s95
    %p99 = pneg %p93
    %p100 = scmp.eq.s32.totalorder %s9, 1
    %p101 = por %p99, %p100
    %p102 = scmp.ne.s32.totalorder %s94, %s97
    %p103 = scmp.eq.s32.totalorder %s9, 0
    %p104 = por %p102, %p103
    %p105 = scmp.ne.s32.totalorder %s94, %s97
    %p106 = scmp.eq.s32.totalorder %s14, 1
    %p107 = por %p105, %p106
    %p108 = scmp.ne.s32.totalorder %s97, %s98
    %p109 = scmp.eq.s32.totalorder %s14, 0
    %p110 = por %p108, %p109
    %p111 = scmp.ne.s32.totalorder %s97, %s98
    %p112 = scmp.eq.s32.totalorder %s15, 1
    %p113 = por %p111, %p112
    %p115 = scmp.ne.s32.totalorder %s98, %s114
    %p116 = scmp.eq.s32.totalorder %s15, 0
    %p117 = por %p115, %p116
    %s118 = ssub.s32 %s16, %s35
    %s119 = ssub.s32 %s17, %s31
    %s120 = sor.u32 %s118, %s119
    %p121 = scmp.eq.s32.totalorder %s120, 0
    %s123 = sadd.s32 %s122, 1
    %s124 = scalar_select %p121, %s122, %s123
    %p127 = pneg %p121
    %p128 = scmp.eq.s32.totalorder %s9, 1
    %p129 = por %p127, %p128
    %p130 = scmp.ne.s32.totalorder %s122, %s125
    %p131 = scmp.eq.s32.totalorder %s9, 0
    %p132 = por %p130, %p131
    %p133 = scmp.ne.s32.totalorder %s122, %s125
    %p134 = scmp.eq.s32.totalorder %s14, 1
    %p135 = por %p133, %p134
    %p136 = scmp.ne.s32.totalorder %s125, %s126
    %p137 = scmp.eq.s32.totalorder %s14, 0
    %p138 = por %p136, %p137
    %p139 = scmp.ne.s32.totalorder %s125, %s126
    %p140 = scmp.eq.s32.totalorder %s15, 1
    %p141 = por %p139, %p140
    %p143 = scmp.ne.s32.totalorder %s126, %s142
    %p144 = scmp.eq.s32.totalorder %s15, 0
    %p145 = por %p143, %p144
    %p146 = scmp.le.s32.totalorder 1, %s9
    %p147 = scmp.lt.s32.totalorder %s9, 3
    %p148 = pnand %p146, %p147
    %p149 = pneg %p148
    // Predicated region
    $region9: #{_resnet_forward_impl.28} parent=5 // pred_check
      _
    $region10: #{_resnet_forward_impl.28} parent=5 // pred_check_branch
      %151 = sbr.rel (%p148) target = $region12
    $region11: #{_resnet_forward_impl.28} parent=5 // pred_region
      %s152 = ssub.s32 %s9, 1
      // Predicated region
      $region13: #{_resnet_forward_impl.28} parent=11 // pred_check
        %p153 = pneg %p84
      $region14: #{_resnet_forward_impl.28} parent=11 // pred_check_branch
        %155 = sbr.rel (%p153) target = $region16
      $region15: #{_resnet_forward_impl.28} parent=11 // pred_region
        %s156 = smul.u32 32, %s21
        %p157 = scmp.lt.s32.totalorder %s156, 31
        %s158 = scalar_select %p157, %s156, 31
        %p159 = scmp.lt.s32.totalorder %s20, 0
        %s160 = scalar_select %p159, %s20, 0
        %s161 = sadd.s32 %s160, %s158
        %s162 = smul.addr %s161, 4
        %s163 = scalar_lea.vmem %s1, %s162
        %s164 = smul.u32 32, %s21
      $region16: #{_resnet_forward_impl.28} parent=11 // pred_fallthru
        _
      // Predicated region
      $region17: #{_resnet_forward_impl.28} parent=11 // pred_check
        %p165 = pneg %p110
      $region18: #{_resnet_forward_impl.28} parent=11 // pred_check_branch
        %167 = sbr.rel (%p165) target = $region20
      $region19: #{_resnet_forward_impl.28} parent=11 // pred_region
        %p168 = scmp.lt.s32.totalorder %s20, 0
        %s169 = scalar_select %p168, %s20, 0
        %s170 = scalar_lea.vmem %s2, %s169
      $region20: #{_resnet_forward_impl.28} parent=11 // pred_fallthru
        _
    $region12: #{_resnet_forward_impl.28} parent=5 // pred_fallthru
      _
    %p171 = scmp.lt.s32.totalorder %s9, 2
    // Predicated region
    $region21: #{_resnet_forward_impl.28} parent=5 // pred_check
      %p172 = pneg %p171
    $region22: #{_resnet_forward_impl.28} parent=5 // pred_check_branch
      %174 = sbr.rel (%p172) target = $region24
    $region23: #{_resnet_forward_impl.28} parent=5 // pred_region
      // Predicated region
      $region25: #{_resnet_forward_impl.28} parent=23 // pred_check
        %p175 = pneg %p50
      $region26: #{_resnet_forward_impl.28} parent=23 // pred_check_branch
        %177 = sbr.rel (%p175) target = $region28
      $region27: #{_resnet_forward_impl.28} parent=23 // pred_region
        %s178 = smul.u32 2, %s16
        %s179 = smul.u32 2, %s18
        %p180 = scmp.lt.s32.totalorder %s178, 3
        %s181 = scalar_select %p180, %s178, 3
        %p182 = scmp.lt.s32.totalorder %s179, 1
        %s183 = scalar_select %p182, %s179, 1
        %s184 = smul.addr %s181, 2
        %s185 = sadd.s32 %s183, %s184
        %s186 = smul.addr %s185, 4
        %s187 = scalar_lea.vmem %s0, %s186
        %s188 = smul.u32 2, %s16
        %s189 = smul.u32 2, %s18
      $region28: #{_resnet_forward_impl.28} parent=23 // pred_fallthru
        _
    $region24: #{_resnet_forward_impl.28} parent=5 // pred_fallthru
      _
    %p190 = scmp.le.s32.totalorder 1, %s9
    %p191 = scmp.lt.s32.totalorder %s9, 3
    %p192 = pnand %p190, %p191
    %p193 = pneg %p192
    // Predicated region
    $region29: #{_resnet_forward_impl.28} parent=5 // pred_check
      _
    $region30: #{_resnet_forward_impl.28} parent=5 // pred_check_branch
      %195 = sbr.rel (%p192) target = $region32
    $region31: #{_resnet_forward_impl.28} parent=5 // pred_region
      %s196 = ssub.s32 %s9, 1
      %s197 = smul.u32 2, %s19
      %s198 = smul.u32 2, %s21
      %p199 = scmp.lt.s32.totalorder %s197, 3
      %s200 = scalar_select %p199, %s197, 3
      %p201 = scmp.lt.s32.totalorder %s198, 1
      %s202 = scalar_select %p201, %s198, 1
      %s203 = smul.addr %s200, 2
      %s204 = sadd.s32 %s202, %s203
      %s205 = smul.addr %s204, 4
      %s206 = scalar_lea.vmem %s0, %s205
      %p207 = pneg %p56
      %p208 = pneg %p53
      %s209 = smul.u32 32, %s21
      %p210 = scmp.lt.s32.totalorder %s209, 31
      %s211 = scalar_select %p210, %s209, 31
      %p212 = scmp.lt.s32.totalorder %s20, 0
      %s213 = scalar_select %p212, %s20, 0
      %s214 = sadd.s32 %s213, %s211
      %s215 = smul.addr %s214, 4
      %s216 = scalar_lea.vmem %s1, %s215
      %p217 = pneg %p84
      %p218 = pneg %p81
      %p219 = scmp.lt.s32.totalorder %s20, 0
      %s220 = scalar_select %p219, %s20, 0
      %s221 = scalar_lea.vmem %s2, %s220
      %p222 = pneg %p110
      %p223 = pneg %p107
      %p224 = pneg %p138
      %p225 = pneg %p135
      %s226 = smul.u32 2, %s19
      %p227 = scmp.lt.s32.totalorder %s226, 3
      %s228 = scalar_select %p227, %s226, 3
      %p229 = scmp.lt.s32.totalorder %s20, 0
      %s230 = scalar_select %p229, %s20, 0
      %s231 = sadd.s32 %s230, %s228
      %s232 = smul.addr %s231, 4
      %s233 = scalar_lea.vmem %s3, %s232
      %s234 = smul.u32 2, %s19
      %s235 = smul.u32 2, %s21
      %p236 = scmp.lt.s32.totalorder %s234, 3
      %s237 = scalar_select %p236, %s234, 3
      %p238 = scmp.lt.s32.totalorder %s235, 1
      %s239 = scalar_select %p238, %s235, 1
      %s240 = smul.addr %s237, 2
      %s241 = sadd.s32 %s239, %s240
      %s242 = smul.addr %s241, 4
      %s243 = scalar_lea.vmem %s0, %s242
      %s244 = smul.u32 2, %s19
      %s245 = smul.u32 2, %s21
      %s246 = smul.u32 32, %s21
      %p247 = scmp.lt.s32.totalorder %s246, 31
      %s248 = scalar_select %p247, %s246, 31
      %p249 = scmp.lt.s32.totalorder %s20, 0
      %s250 = scalar_select %p249, %s20, 0
      %s251 = sadd.s32 %s250, %s248
      %s252 = smul.addr %s251, 4
      %s253 = scalar_lea.vmem %s1, %s252
      %s254 = smul.u32 32, %s21
      %p255 = scmp.lt.s32.totalorder %s20, 0
      %s256 = scalar_select %p255, %s20, 0
      %s257 = scalar_lea.vmem %s2, %s256
      %s258 = smul.u32 2, %s19
      %p259 = scmp.lt.s32.totalorder %s258, 3
      %s260 = scalar_select %p259, %s258, 3
      %p261 = scmp.lt.s32.totalorder %s20, 0
      %s262 = scalar_select %p261, %s20, 0
      %s263 = sadd.s32 %s262, %s260
      %s264 = smul.addr %s263, 4
      %s265 = scalar_lea.vmem %s3, %s264
      %s266 = smul.u32 2, %s19
      %p267 = scmp.eq.s32.totalorder %s21, 0
      // Predicated region
      $region33: #{_resnet_forward_impl.28} parent=31 // pred_check
        %p268 = pneg %p267
      $region34: #{_resnet_forward_impl.28} parent=31 // pred_check_branch
        %270 = sbr.rel (%p268) target = $region36
      $region35: #{_resnet_forward_impl.28} parent=31 // pred_region
        %271 = vst [vmem:[#allocation2] sm:$0xff] 0.0
        %272 = vst [vmem:[#allocation2 + $0x8] sm:$0xff] 0.0
      $region36: #{_resnet_forward_impl.28} parent=31 // pred_fallthru
        _
      %v273 = vld [vmem:[#allocation2] sm:$0xff]
      %v274 = vld [vmem:[#allocation2 + $0x8] sm:$0xff]
      %v275 = vld [vmem:[%s243] sm:$0xff]
      %v276 = vld [vmem:[%s243 + $0x8] sm:$0xff]
      %v277 = vld [vmem:[%s253] sm:$0xf]
      %v278 = vld [vmem:[%s253 + $0x4] sm:$0xf]
      %v279 = vld [vmem:[%s253 + $0x8] sm:$0xf]
      %v280 = vld [vmem:[%s253 + $0xc] sm:$0xf]
      %v281 = vld [vmem:[%s253 + $0x10] sm:$0xf]
      %v282 = vld [vmem:[%s253 + $0x14] sm:$0xf]
      %v283 = vld [vmem:[%s253 + $0x18] sm:$0xf]
      %v284 = vld [vmem:[%s253 + $0x1c] sm:$0xf]
      %v285 = vld [vmem:[%s253 + $0x20] sm:$0xf]
      %v286 = vld [vmem:[%s253 + $0x24] sm:$0xf]
      %v287 = vld [vmem:[%s253 + $0x28] sm:$0xf]
      %v288 = vld [vmem:[%s253 + $0x2c] sm:$0xf]
      %v289 = vld [vmem:[%s253 + $0x30] sm:$0xf]
      %v290 = vld [vmem:[%s253 + $0x34] sm:$0xf]
      %v291 = vld [vmem:[%s253 + $0x38] sm:$0xf]
      %v292 = vld [vmem:[%s253 + $0x3c] sm:$0xf]
      %v293 = vld [vmem:[%s253 + $0x40] sm:$0xf]
      %v294 = vld [vmem:[%s253 + $0x44] sm:$0xf]
      %v295 = vld [vmem:[%s253 + $0x48] sm:$0xf]
      %v296 = vld [vmem:[%s253 + $0x4c] sm:$0xf]
      %v297 = vld [vmem:[%s253 + $0x50] sm:$0xf]
      %v298 = vld [vmem:[%s253 + $0x54] sm:$0xf]
      %v299 = vld [vmem:[%s253 + $0x58] sm:$0xf]
      %v300 = vld [vmem:[%s253 + $0x5c] sm:$0xf]
      %v301 = vld [vmem:[%s253 + $0x60] sm:$0xf]
      %v302 = vld [vmem:[%s253 + $0x64] sm:$0xf]
      %v303 = vld [vmem:[%s253 + $0x68] sm:$0xf]
      %v304 = vld [vmem:[%s253 + $0x6c] sm:$0xf]
      %v305 = vld [vmem:[%s253 + $0x70] sm:$0xf]
      %v306 = vld [vmem:[%s253 + $0x74] sm:$0xf]
      %v307 = vld [vmem:[%s253 + $0x78] sm:$0xf]
      %v308 = vld [vmem:[%s253 + $0x7c] sm:$0xf]
      %v311 = vunpack.c.l.b16 %v275
      %v312 = vunpack.c.h.b16 %v275
      %v313 = vunpack.c.l.b16 %v276
      %v314 = vunpack.c.h.b16 %v276
      %v315 = vpack.c.b16 %v313, %v311
      %v316 = vpack.c.b16 %v314, %v312
      %v351 = vunpack.c.l.b16 %v277
      %v352 = vunpack.c.l.b16 %v278
      %v353 = vunpack.c.l.b16 %v279
      %v354 = vunpack.c.l.b16 %v280
      %v355 = vunpack.c.l.b16 %v281
      %v356 = vunpack.c.l.b16 %v282
      %v357 = vunpack.c.l.b16 %v283
      %v358 = vunpack.c.l.b16 %v284
      %v359 = vunpack.c.l.b16 %v285
      %v360 = vunpack.c.l.b16 %v286
      %v361 = vunpack.c.l.b16 %v287
      %v362 = vunpack.c.l.b16 %v288
      %v363 = vunpack.c.l.b16 %v289
      %v364 = vunpack.c.l.b16 %v290
      %v365 = vunpack.c.l.b16 %v291
      %v366 = vunpack.c.l.b16 %v292
      %v367 = vunpack.c.l.b16 %v293
      %v368 = vunpack.c.l.b16 %v294
      %v369 = vunpack.c.l.b16 %v295
      %v370 = vunpack.c.l.b16 %v296
      %v371 = vunpack.c.l.b16 %v297
      %v372 = vunpack.c.l.b16 %v298
      %v373 = vunpack.c.l.b16 %v299
      %v374 = vunpack.c.l.b16 %v300
      %v375 = vunpack.c.l.b16 %v301
      %v376 = vunpack.c.l.b16 %v302
      %v377 = vunpack.c.l.b16 %v303
      %v378 = vunpack.c.l.b16 %v304
      %v379 = vunpack.c.l.b16 %v305
      %v380 = vunpack.c.l.b16 %v306
      %v381 = vunpack.c.l.b16 %v307
      %v382 = vunpack.c.l.b16 %v308
      %v383 = vpack.c.b16 %v352, %v351
      %v384 = vpack.c.b16 %v354, %v353
      %v385 = vpack.c.b16 %v356, %v355
      %v386 = vpack.c.b16 %v358, %v357
      %v387 = vpack.c.b16 %v360, %v359
      %v388 = vpack.c.b16 %v362, %v361
      %v389 = vpack.c.b16 %v364, %v363
      %v390 = vpack.c.b16 %v366, %v365
      %v391 = vpack.c.b16 %v368, %v367
      %v392 = vpack.c.b16 %v370, %v369
      %v393 = vpack.c.b16 %v372, %v371
      %v394 = vpack.c.b16 %v374, %v373
      %v395 = vpack.c.b16 %v376, %v375
      %v396 = vpack.c.b16 %v378, %v377
      %v397 = vpack.c.b16 %v380, %v379
      %v398 = vpack.c.b16 %v382, %v381
      %415 = vmatpush.bf16.msra.mxu0 %v390
      %416 = vmatpush.bf16.msra.mxu0 %v389
      %417 = vmatpush.bf16.msra.mxu0 %v388
      %418 = vmatpush.bf16.msra.mxu0 %v387
      %419 = vmatpush.bf16.msra.mxu0 %v386
      %420 = vmatpush.bf16.msra.mxu0 %v385
      %421 = vmatpush.bf16.msra.mxu0 %v384
      %422 = vmatpush.bf16.msra.mxu0 %v383
      %423 = vmatmul.bf16.gmra.mxu0 %v315
      %v424 = vpop.f32.mrf.mxu0
      %v425 = vadd.f32 0.0, %v424
      %v426 = vpop.f32.mrf.mxu0
      %v427 = vadd.f32 0.0, %v426
      %428 = vdwg.mxu0
      %429 = vmatpush.bf16.msra.mxu0 %v398
      %430 = vmatpush.bf16.msra.mxu0 %v397
      %431 = vmatpush.bf16.msra.mxu0 %v396
      %432 = vmatpush.bf16.msra.mxu0 %v395
      %433 = vmatpush.bf16.msra.mxu0 %v394
      %434 = vmatpush.bf16.msra.mxu0 %v393
      %435 = vmatpush.bf16.msra.mxu0 %v392
      %436 = vmatpush.bf16.msra.mxu0 %v391
      %437 = vmatmul.bf16.gmra.mxu0 %v316
      %v438 = vpop.f32.mrf.mxu0
      %v439 = vadd.f32 %v425, %v438
      %v440 = vpop.f32.mrf.mxu0
      %v441 = vadd.f32 %v427, %v440
      %442 = vdwg.mxu0
      %v443 = vadd.f32 %v273, %v439
      %v444 = vadd.f32 %v274, %v441
      %445 = vst [vmem:[#allocation2] sm:$0xff] %v443
      %446 = vst [vmem:[#allocation2 + $0x8] sm:$0xff] %v444
      // Predicated region
      $region37: #{_resnet_forward_impl.28} parent=31 // pred_check
        %p447 = pneg %p267
      $region38: #{_resnet_forward_impl.28} parent=31 // pred_check_branch
        %449 = sbr.rel (%p447) target = $region40
      $region39: #{_resnet_forward_impl.28} parent=31 // pred_region
        %v450 = vld [vmem:[#allocation2] sm:$0xff]
        %v451 = vld [vmem:[#allocation2 + $0x8] sm:$0xff]
        %v452 = vld [vmem:[%s257] sm:$0x1]
        %v454 = vperm.slane %v452, 0
        %v456 = vadd.f32 %v450, %v454
        %v457 = vadd.f32 %v451, %v454
        %v458 = vmax.f32 %v456, 0.0
        %v459 = vmax.f32 %v457, 0.0
        %v460 = vpack.c.bf16 %v458, %v458
        %v461 = vpack.c.bf16 %v459, %v459
        %462 = vst [vmem:[%s265] sm:$0xf] %v460
        %463 = vst [vmem:[%s265 + $0x4] sm:$0xf] %v461
      $region40: #{_resnet_forward_impl.28} parent=31 // pred_fallthru
        _
      %s464 = smul.u32 2, %s19
      %p465 = scmp.lt.s32.totalorder %s464, 3
      %s466 = scalar_select %p465, %s464, 3
      %p467 = scmp.lt.s32.totalorder %s20, 0
      %s468 = scalar_select %p467, %s20, 0
      %s469 = sadd.s32 %s468, %s466
      %s470 = smul.addr %s469, 4
      %s471 = scalar_lea.vmem %s3, %s470
      // Predicated region
      $region41: #{_resnet_forward_impl.28} parent=31 // pred_check
        %p472 = pneg %p135
      $region42: #{_resnet_forward_impl.28} parent=31 // pred_check_branch
        %474 = sbr.rel (%p472) target = $region44
      $region43: #{_resnet_forward_impl.28} parent=31 // pred_region
        %s475 = smul.u32 2, %s19
      $region44: #{_resnet_forward_impl.28} parent=31 // pred_fallthru
        _
    $region32: #{_resnet_forward_impl.28} parent=5 // pred_fallthru
      _
    %p476 = scmp.le.s32.totalorder 2, %s9
    // Predicated region
    $region45: #{_resnet_forward_impl.28} parent=5 // pred_check
      %p477 = pneg %p476
    $region46: #{_resnet_forward_impl.28} parent=5 // pred_check_branch
      %479 = sbr.rel (%p477) target = $region48
    $region47: #{_resnet_forward_impl.28} parent=5 // pred_region
      %s480 = ssub.s32 %s9, 2
      // Predicated region
      $region49: #{_resnet_forward_impl.28} parent=47 // pred_check
        %p481 = pneg %p141
      $region50: #{_resnet_forward_impl.28} parent=47 // pred_check_branch
        %483 = sbr.rel (%p481) target = $region52
      $region51: #{_resnet_forward_impl.28} parent=47 // pred_region
        %s484 = smul.u32 2, %s22
        %p485 = scmp.lt.s32.totalorder %s484, 3
        %s486 = scalar_select %p485, %s484, 3
        %p487 = scmp.lt.s32.totalorder %s23, 0
        %s488 = scalar_select %p487, %s23, 0
        %s489 = sadd.s32 %s488, %s486
        %s490 = smul.addr %s489, 4
        %s491 = scalar_lea.vmem %s3, %s490
      $region52: #{_resnet_forward_impl.28} parent=47 // pred_fallthru
        _
    $region48: #{_resnet_forward_impl.28} parent=5 // pred_fallthru
      _
  $region6: #{_resnet_forward_impl.28} parent=0 // loop_footer
    %s13 = sadd.s32 1, %s9
  $region7: #{_resnet_forward_impl.28} parent=0 // loop_footer_branch
    %8 = sbr.rel target = $region3
  $region8: #{_resnet_forward_impl.28} parent=0 // loop_exit
    _

// kernel: _resnet_forward_impl.31
$region0: #{_resnet_forward_impl.31}
  #allocation0 [shape = 'u32[]', space=smem, size = 0x4, offset = 0x4, fixed_abs, tag = 'smem constant byte address 0x4 - core index']
  #allocation1 [shape = 'u32[72,128]{1,0:T(1,128)}', space=vmem, size = 0x9000, scoped, tag = 'internal scratch']
  #allocation2 [shape = 'f32[16,128]{1,0:T(8,128)}', space=vmem, size = 0x2000, scoped, tag = 'scratch operand']
  %s0 = inlined_call_operand.vmem [shape: bf16[16,256], index: 0, kind: input, shape index: {}]
  %s1 = inlined_call_operand.vmem [shape: bf16[256,128], index: 1, kind: input, shape index: {}]
  %s2 = inlined_call_operand.vmem [shape: f32[1,128], index: 2, kind: input, shape index: {}]
  %s3 = inlined_call_operand.vmem [shape: bf16[16,128], index: 3, kind: output, shape index: {}]
  %s4 = sld [smem:[#allocation0]]
  $region30: #{_resnet_forward_impl.31} parent=0
    _
  %s6 = ssub.s32 1, %s4
  %s7 = scalar_select 0, %s6, %s4
  // Predicated region
  $region2: #{_resnet_forward_impl.31} parent=0 // pred_check
    _
  $region3: #{_resnet_forward_impl.31} parent=0 // pred_check_branch
    %9 = sbr.rel (0) target = $region5
  $region4: #{_resnet_forward_impl.31} parent=0 // pred_region
    _
  $region5: #{_resnet_forward_impl.31} parent=0 // pred_fallthru
    _
  // Predicated region
  $region6: #{_resnet_forward_impl.31} parent=0 // pred_check
    _
  $region7: #{_resnet_forward_impl.31} parent=0 // pred_check_branch
    %11 = sbr.rel (0) target = $region9
  $region8: #{_resnet_forward_impl.31} parent=0 // pred_region
    _
  $region9: #{_resnet_forward_impl.31} parent=0 // pred_fallthru
    _
  // Predicated region
  $region10: #{_resnet_forward_impl.31} parent=0 // pred_check
    _
  $region11: #{_resnet_forward_impl.31} parent=0 // pred_check_branch
    %13 = sbr.rel (0) target = $region13
  $region12: #{_resnet_forward_impl.31} parent=0 // pred_region
    _
  $region13: #{_resnet_forward_impl.31} parent=0 // pred_fallthru
    _
  %p14 = scmp.eq.s32.totalorder 0, 0
  // Predicated region
  $region14: #{_resnet_forward_impl.31} parent=0 // pred_check
    %p15 = pneg %p14
  $region15: #{_resnet_forward_impl.31} parent=0 // pred_check_branch
    %17 = sbr.rel (%p15) target = $region17
  $region16: #{_resnet_forward_impl.31} parent=0 // pred_region
    %18 = vst [vmem:[#allocation2] sm:$0xff] 0.0
    %19 = vst [vmem:[#allocation2 + $0x8] sm:$0xff] 0.0
  $region17: #{_resnet_forward_impl.31} parent=0 // pred_fallthru
    _
  %v20 = vld [vmem:[#allocation2] sm:$0xff]
  %v21 = vld [vmem:[#allocation2 + $0x8] sm:$0xff]
  %v22 = vld [vmem:[%s0] sm:$0xff]
  %v23 = vld [vmem:[%s0 + $0x8] sm:$0xff]
  %v24 = vld [vmem:[%s1] sm:$0xf]
  %v25 = vld [vmem:[%s1 + $0x4] sm:$0xf]
  %v26 = vld [vmem:[%s1 + $0x8] sm:$0xf]
  %v27 = vld [vmem:[%s1 + $0xc] sm:$0xf]
  %v28 = vld [vmem:[%s1 + $0x10] sm:$0xf]
  %v29 = vld [vmem:[%s1 + $0x14] sm:$0xf]
  %v30 = vld [vmem:[%s1 + $0x18] sm:$0xf]
  %v31 = vld [vmem:[%s1 + $0x1c] sm:$0xf]
  %v32 = vld [vmem:[%s1 + $0x20] sm:$0xf]
  %v33 = vld [vmem:[%s1 + $0x24] sm:$0xf]
  %v34 = vld [vmem:[%s1 + $0x28] sm:$0xf]
  %v35 = vld [vmem:[%s1 + $0x2c] sm:$0xf]
  %v36 = vld [vmem:[%s1 + $0x30] sm:$0xf]
  %v37 = vld [vmem:[%s1 + $0x34] sm:$0xf]
  %v38 = vld [vmem:[%s1 + $0x38] sm:$0xf]
  %v39 = vld [vmem:[%s1 + $0x3c] sm:$0xf]
  %v40 = vld [vmem:[%s1 + $0x40] sm:$0xf]
  %v41 = vld [vmem:[%s1 + $0x44] sm:$0xf]
  %v42 = vld [vmem:[%s1 + $0x48] sm:$0xf]
  %v43 = vld [vmem:[%s1 + $0x4c] sm:$0xf]
  %v44 = vld [vmem:[%s1 + $0x50] sm:$0xf]
  %v45 = vld [vmem:[%s1 + $0x54] sm:$0xf]
  %v46 = vld [vmem:[%s1 + $0x58] sm:$0xf]
  %v47 = vld [vmem:[%s1 + $0x5c] sm:$0xf]
  %v48 = vld [vmem:[%s1 + $0x60] sm:$0xf]
  %v49 = vld [vmem:[%s1 + $0x64] sm:$0xf]
  %v50 = vld [vmem:[%s1 + $0x68] sm:$0xf]
  %v51 = vld [vmem:[%s1 + $0x6c] sm:$0xf]
  %v52 = vld [vmem:[%s1 + $0x70] sm:$0xf]
  %v53 = vld [vmem:[%s1 + $0x74] sm:$0xf]
  %v54 = vld [vmem:[%s1 + $0x78] sm:$0xf]
  %v55 = vld [vmem:[%s1 + $0x7c] sm:$0xf]
  %v58 = vunpack.c.l.b16 %v22
  %v59 = vunpack.c.h.b16 %v22
  %v60 = vunpack.c.l.b16 %v23
  %v61 = vunpack.c.h.b16 %v23
  %v62 = vpack.c.b16 %v60, %v58
  %v63 = vpack.c.b16 %v61, %v59
  %v98 = vunpack.c.l.b16 %v24
  %v99 = vunpack.c.l.b16 %v25
  %v100 = vunpack.c.l.b16 %v26
  %v101 = vunpack.c.l.b16 %v27
  %v102 = vunpack.c.l.b16 %v28
  %v103 = vunpack.c.l.b16 %v29
  %v104 = vunpack.c.l.b16 %v30
  %v105 = vunpack.c.l.b16 %v31
  %v106 = vunpack.c.l.b16 %v32
  %v107 = vunpack.c.l.b16 %v33
  %v108 = vunpack.c.l.b16 %v34
  %v109 = vunpack.c.l.b16 %v35
  %v110 = vunpack.c.l.b16 %v36
  %v111 = vunpack.c.l.b16 %v37
  %v112 = vunpack.c.l.b16 %v38
  %v113 = vunpack.c.l.b16 %v39
  %v114 = vunpack.c.l.b16 %v40
  %v115 = vunpack.c.l.b16 %v41
  %v116 = vunpack.c.l.b16 %v42
  %v117 = vunpack.c.l.b16 %v43
  %v118 = vunpack.c.l.b16 %v44
  %v119 = vunpack.c.l.b16 %v45
  %v120 = vunpack.c.l.b16 %v46
  %v121 = vunpack.c.l.b16 %v47
  %v122 = vunpack.c.l.b16 %v48
  %v123 = vunpack.c.l.b16 %v49
  %v124 = vunpack.c.l.b16 %v50
  %v125 = vunpack.c.l.b16 %v51
  %v126 = vunpack.c.l.b16 %v52
  %v127 = vunpack.c.l.b16 %v53
  %v128 = vunpack.c.l.b16 %v54
  %v129 = vunpack.c.l.b16 %v55
  %v130 = vpack.c.b16 %v99, %v98
  %v131 = vpack.c.b16 %v101, %v100
  %v132 = vpack.c.b16 %v103, %v102
  %v133 = vpack.c.b16 %v105, %v104
  %v134 = vpack.c.b16 %v107, %v106
  %v135 = vpack.c.b16 %v109, %v108
  %v136 = vpack.c.b16 %v111, %v110
  %v137 = vpack.c.b16 %v113, %v112
  %v138 = vpack.c.b16 %v115, %v114
  %v139 = vpack.c.b16 %v117, %v116
  %v140 = vpack.c.b16 %v119, %v118
  %v141 = vpack.c.b16 %v121, %v120
  %v142 = vpack.c.b16 %v123, %v122
  %v143 = vpack.c.b16 %v125, %v124
  %v144 = vpack.c.b16 %v127, %v126
  %v145 = vpack.c.b16 %v129, %v128
  %162 = vmatpush.bf16.msra.mxu0 %v137
  %163 = vmatpush.bf16.msra.mxu0 %v136
  %164 = vmatpush.bf16.msra.mxu0 %v135
  %165 = vmatpush.bf16.msra.mxu0 %v134
  %166 = vmatpush.bf16.msra.mxu0 %v133
  %167 = vmatpush.bf16.msra.mxu0 %v132
  %168 = vmatpush.bf16.msra.mxu0 %v131
  %169 = vmatpush.bf16.msra.mxu0 %v130
  %170 = vmatmul.bf16.gmra.mxu0 %v62
  %v171 = vpop.f32.mrf.mxu0
  %v172 = vadd.f32 0.0, %v171
  %v173 = vpop.f32.mrf.mxu0
  %v174 = vadd.f32 0.0, %v173
  %175 = vdwg.mxu0
  %176 = vmatpush.bf16.msra.mxu0 %v145
  %177 = vmatpush.bf16.msra.mxu0 %v144
  %178 = vmatpush.bf16.msra.mxu0 %v143
  %179 = vmatpush.bf16.msra.mxu0 %v142
  %180 = vmatpush.bf16.msra.mxu0 %v141
  %181 = vmatpush.bf16.msra.mxu0 %v140
  %182 = vmatpush.bf16.msra.mxu0 %v139
  %183 = vmatpush.bf16.msra.mxu0 %v138
  %184 = vmatmul.bf16.gmra.mxu0 %v63
  %v185 = vpop.f32.mrf.mxu0
  %v186 = vadd.f32 %v172, %v185
  %v187 = vpop.f32.mrf.mxu0
  %v188 = vadd.f32 %v174, %v187
  %189 = vdwg.mxu0
  %v190 = vadd.f32 %v20, %v186
  %v191 = vadd.f32 %v21, %v188
  %192 = vst [vmem:[#allocation2] sm:$0xff] %v190
  %193 = vst [vmem:[#allocation2 + $0x8] sm:$0xff] %v191
  // Predicated region
  $region18: #{_resnet_forward_impl.31} parent=0 // pred_check
    %p194 = pneg %p14
  $region19: #{_resnet_forward_impl.31} parent=0 // pred_check_branch
    %196 = sbr.rel (%p194) target = $region21
  $region20: #{_resnet_forward_impl.31} parent=0 // pred_region
    %v197 = vld [vmem:[#allocation2] sm:$0xff]
    %v198 = vld [vmem:[#allocation2 + $0x8] sm:$0xff]
    %v199 = vld [vmem:[%s2] sm:$0x1]
    %v201 = vperm.slane %v199, 0
    %v203 = vadd.f32 %v197, %v201
    %v204 = vadd.f32 %v198, %v201
    %v205 = vmax.f32 %v203, 0.0
    %v206 = vmax.f32 %v204, 0.0
    %v207 = vpack.c.bf16 %v205, %v205
    %v208 = vpack.c.bf16 %v206, %v206
    %209 = vst [vmem:[%s3] sm:$0xf] %v207
    %210 = vst [vmem:[%s3 + $0x4] sm:$0xf] %v208
  $region21: #{_resnet_forward_impl.31} parent=0 // pred_fallthru
    _
  // Predicated region
  $region22: #{_resnet_forward_impl.31} parent=0 // pred_check
    _
  $region23: #{_resnet_forward_impl.31} parent=0 // pred_check_branch
    %212 = sbr.rel (0) target = $region25
  $region24: #{_resnet_forward_impl.31} parent=0 // pred_region
    _
  $region25: #{_resnet_forward_impl.31} parent=0 // pred_fallthru
    _
  // Predicated region
  $region26: #{_resnet_forward_impl.31} parent=0 // pred_check
    _
  $region27: #{_resnet_forward_impl.31} parent=0 // pred_check_branch
    %214 = sbr.rel (0) target = $region29
  $region28: #{_resnet_forward_impl.31} parent=0 // pred_region
    _
  $region29: #{_resnet_forward_impl.31} parent=0 // pred_fallthru
    _

// kernel: _resnet_forward_impl.30
$region0: #{_resnet_forward_impl.30}
  #allocation0 [shape = 'u32[]', space=smem, size = 0x4, offset = 0x4, fixed_abs, tag = 'smem constant byte address 0x4 - core index']
  #allocation1 [shape = 'u32[72,128]{1,0:T(1,128)}', space=vmem, size = 0x9000, scoped, tag = 'internal scratch']
  #allocation2 [shape = 'f32[16,128]{1,0:T(8,128)}', space=vmem, size = 0x2000, scoped, tag = 'scratch operand']
  %s0 = inlined_call_operand.vmem [shape: bf16[16,128], index: 0, kind: input, shape index: {}]
  %s1 = inlined_call_operand.vmem [shape: bf16[128,128], index: 1, kind: input, shape index: {}]
  %s2 = inlined_call_operand.vmem [shape: f32[1,128], index: 2, kind: input, shape index: {}]
  %s3 = inlined_call_operand.vmem [shape: bf16[16,128], index: 3, kind: output, shape index: {}]
  %s4 = sld [smem:[#allocation0]]
  $region30: #{_resnet_forward_impl.30} parent=0
    _
  %s6 = ssub.s32 1, %s4
  %s7 = scalar_select 0, %s6, %s4
  // Predicated region
  $region2: #{_resnet_forward_impl.30} parent=0 // pred_check
    _
  $region3: #{_resnet_forward_impl.30} parent=0 // pred_check_branch
    %9 = sbr.rel (0) target = $region5
  $region4: #{_resnet_forward_impl.30} parent=0 // pred_region
    _
  $region5: #{_resnet_forward_impl.30} parent=0 // pred_fallthru
    _
  // Predicated region
  $region6: #{_resnet_forward_impl.30} parent=0 // pred_check
    _
  $region7: #{_resnet_forward_impl.30} parent=0 // pred_check_branch
    %11 = sbr.rel (0) target = $region9
  $region8: #{_resnet_forward_impl.30} parent=0 // pred_region
    _
  $region9: #{_resnet_forward_impl.30} parent=0 // pred_fallthru
    _
  // Predicated region
  $region10: #{_resnet_forward_impl.30} parent=0 // pred_check
    _
  $region11: #{_resnet_forward_impl.30} parent=0 // pred_check_branch
    %13 = sbr.rel (0) target = $region13
  $region12: #{_resnet_forward_impl.30} parent=0 // pred_region
    _
  $region13: #{_resnet_forward_impl.30} parent=0 // pred_fallthru
    _
  %p14 = scmp.eq.s32.totalorder 0, 0
  // Predicated region
  $region14: #{_resnet_forward_impl.30} parent=0 // pred_check
    %p15 = pneg %p14
  $region15: #{_resnet_forward_impl.30} parent=0 // pred_check_branch
    %17 = sbr.rel (%p15) target = $region17
  $region16: #{_resnet_forward_impl.30} parent=0 // pred_region
    %18 = vst [vmem:[#allocation2] sm:$0xff] 0.0
    %19 = vst [vmem:[#allocation2 + $0x8] sm:$0xff] 0.0
  $region17: #{_resnet_forward_impl.30} parent=0 // pred_fallthru
    _
  %v20 = vld [vmem:[#allocation2] sm:$0xff]
  %v21 = vld [vmem:[#allocation2 + $0x8] sm:$0xff]
  %v22 = vld [vmem:[%s0] sm:$0xf]
  %v23 = vld [vmem:[%s0 + $0x4] sm:$0xf]
  %v24 = vld [vmem:[%s1] sm:$0xf]
  %v25 = vld [vmem:[%s1 + $0x4] sm:$0xf]
  %v26 = vld [vmem:[%s1 + $0x8] sm:$0xf]
  %v27 = vld [vmem:[%s1 + $0xc] sm:$0xf]
  %v28 = vld [vmem:[%s1 + $0x10] sm:$0xf]
  %v29 = vld [vmem:[%s1 + $0x14] sm:$0xf]
  %v30 = vld [vmem:[%s1 + $0x18] sm:$0xf]
  %v31 = vld [vmem:[%s1 + $0x1c] sm:$0xf]
  %v32 = vld [vmem:[%s1 + $0x20] sm:$0xf]
  %v33 = vld [vmem:[%s1 + $0x24] sm:$0xf]
  %v34 = vld [vmem:[%s1 + $0x28] sm:$0xf]
  %v35 = vld [vmem:[%s1 + $0x2c] sm:$0xf]
  %v36 = vld [vmem:[%s1 + $0x30] sm:$0xf]
  %v37 = vld [vmem:[%s1 + $0x34] sm:$0xf]
  %v38 = vld [vmem:[%s1 + $0x38] sm:$0xf]
  %v39 = vld [vmem:[%s1 + $0x3c] sm:$0xf]
  %v42 = vunpack.c.l.b16 %v22
  %v43 = vunpack.c.l.b16 %v23
  %v44 = vpack.c.b16 %v43, %v42
  %v62 = vunpack.c.l.b16 %v24
  %v63 = vunpack.c.l.b16 %v25
  %v64 = vunpack.c.l.b16 %v26
  %v65 = vunpack.c.l.b16 %v27
  %v66 = vunpack.c.l.b16 %v28
  %v67 = vunpack.c.l.b16 %v29
  %v68 = vunpack.c.l.b16 %v30
  %v69 = vunpack.c.l.b16 %v31
  %v70 = vunpack.c.l.b16 %v32
  %v71 = vunpack.c.l.b16 %v33
  %v72 = vunpack.c.l.b16 %v34
  %v73 = vunpack.c.l.b16 %v35
  %v74 = vunpack.c.l.b16 %v36
  %v75 = vunpack.c.l.b16 %v37
  %v76 = vunpack.c.l.b16 %v38
  %v77 = vunpack.c.l.b16 %v39
  %v78 = vpack.c.b16 %v63, %v62
  %v79 = vpack.c.b16 %v65, %v64
  %v80 = vpack.c.b16 %v67, %v66
  %v81 = vpack.c.b16 %v69, %v68
  %v82 = vpack.c.b16 %v71, %v70
  %v83 = vpack.c.b16 %v73, %v72
  %v84 = vpack.c.b16 %v75, %v74
  %v85 = vpack.c.b16 %v77, %v76
  %94 = vmatpush.bf16.msra.mxu0 %v85
  %95 = vmatpush.bf16.msra.mxu0 %v84
  %96 = vmatpush.bf16.msra.mxu0 %v83
  %97 = vmatpush.bf16.msra.mxu0 %v82
  %98 = vmatpush.bf16.msra.mxu0 %v81
  %99 = vmatpush.bf16.msra.mxu0 %v80
  %100 = vmatpush.bf16.msra.mxu0 %v79
  %101 = vmatpush.bf16.msra.mxu0 %v78
  %102 = vmatmul.bf16.gmra.mxu0 %v44
  %v103 = vpop.f32.mrf.mxu0
  %v104 = vadd.f32 0.0, %v103
  %v105 = vpop.f32.mrf.mxu0
  %v106 = vadd.f32 0.0, %v105
  %107 = vdwg.mxu0
  %v108 = vadd.f32 %v20, %v104
  %v109 = vadd.f32 %v21, %v106
  %110 = vst [vmem:[#allocation2] sm:$0xff] %v108
  %111 = vst [vmem:[#allocation2 + $0x8] sm:$0xff] %v109
  // Predicated region
  $region18: #{_resnet_forward_impl.30} parent=0 // pred_check
    %p112 = pneg %p14
  $region19: #{_resnet_forward_impl.30} parent=0 // pred_check_branch
    %114 = sbr.rel (%p112) target = $region21
  $region20: #{_resnet_forward_impl.30} parent=0 // pred_region
    %v115 = vld [vmem:[#allocation2] sm:$0xff]
    %v116 = vld [vmem:[#allocation2 + $0x8] sm:$0xff]
    %v117 = vld [vmem:[%s2] sm:$0x1]
    %v119 = vperm.slane %v117, 0
    %v121 = vadd.f32 %v115, %v119
    %v122 = vadd.f32 %v116, %v119
    %v123 = vpack.c.bf16 %v121, %v121
    %v124 = vpack.c.bf16 %v122, %v122
    %125 = vst [vmem:[%s3] sm:$0xf] %v123
    %126 = vst [vmem:[%s3 + $0x4] sm:$0xf] %v124
  $region21: #{_resnet_forward_impl.30} parent=0 // pred_fallthru
    _
  // Predicated region
  $region22: #{_resnet_forward_impl.30} parent=0 // pred_check
    _
  $region23: #{_resnet_forward_impl.30} parent=0 // pred_check_branch
    %128 = sbr.rel (0) target = $region25
  $region24: #{_resnet_forward_impl.30} parent=0 // pred_region
    _
  $region25: #{_resnet_forward_impl.30} parent=0 // pred_fallthru
    _
  // Predicated region
  $region26: #{_resnet_forward_impl.30} parent=0 // pred_check
    _
  $region27: #{_resnet_forward_impl.30} parent=0 // pred_check_branch
    %130 = sbr.rel (0) target = $region29
  $region28: #{_resnet_forward_impl.30} parent=0 // pred_region
    _
  $region29: #{_resnet_forward_impl.30} parent=0 // pred_fallthru
    _

// kernel: _resnet_forward_impl.32
$region0: #{_resnet_forward_impl.32}
  #allocation0 [shape = 'u32[]', space=smem, size = 0x4, offset = 0x4, fixed_abs, tag = 'smem constant byte address 0x4 - core index']
  #allocation1 [shape = 'u32[72,128]{1,0:T(1,128)}', space=vmem, size = 0x9000, scoped, tag = 'internal scratch']
  #allocation2 [shape = 'f32[16,128]{1,0:T(8,128)}', space=vmem, size = 0x2000, scoped, tag = 'scratch operand']
  %s0 = inlined_call_operand.vmem [shape: bf16[16,384], index: 0, kind: input, shape index: {}]
  %s1 = inlined_call_operand.vmem [shape: bf16[384,128], index: 1, kind: input, shape index: {}]
  %s2 = inlined_call_operand.vmem [shape: f32[1,128], index: 2, kind: input, shape index: {}]
  %s3 = inlined_call_operand.vmem [shape: bf16[16,128], index: 3, kind: input, shape index: {}]
  %s4 = inlined_call_operand.vmem [shape: bf16[16,128], index: 4, kind: output, shape index: {}]
  %s5 = sld [smem:[#allocation0]]
  $region34: #{_resnet_forward_impl.32} parent=0
    _
  %s7 = ssub.s32 1, %s5
  %s8 = scalar_select 0, %s7, %s5
  // Predicated region
  $region2: #{_resnet_forward_impl.32} parent=0 // pred_check
    _
  $region3: #{_resnet_forward_impl.32} parent=0 // pred_check_branch
    %10 = sbr.rel (0) target = $region5
  $region4: #{_resnet_forward_impl.32} parent=0 // pred_region
    _
  $region5: #{_resnet_forward_impl.32} parent=0 // pred_fallthru
    _
  // Predicated region
  $region6: #{_resnet_forward_impl.32} parent=0 // pred_check
    _
  $region7: #{_resnet_forward_impl.32} parent=0 // pred_check_branch
    %12 = sbr.rel (0) target = $region9
  $region8: #{_resnet_forward_impl.32} parent=0 // pred_region
    _
  $region9: #{_resnet_forward_impl.32} parent=0 // pred_fallthru
    _
  // Predicated region
  $region10: #{_resnet_forward_impl.32} parent=0 // pred_check
    _
  $region11: #{_resnet_forward_impl.32} parent=0 // pred_check_branch
    %14 = sbr.rel (0) target = $region13
  $region12: #{_resnet_forward_impl.32} parent=0 // pred_region
    _
  $region13: #{_resnet_forward_impl.32} parent=0 // pred_fallthru
    _
  // Predicated region
  $region14: #{_resnet_forward_impl.32} parent=0 // pred_check
    _
  $region15: #{_resnet_forward_impl.32} parent=0 // pred_check_branch
    %16 = sbr.rel (0) target = $region17
  $region16: #{_resnet_forward_impl.32} parent=0 // pred_region
    _
  $region17: #{_resnet_forward_impl.32} parent=0 // pred_fallthru
    _
  %p17 = scmp.eq.s32.totalorder 0, 0
  // Predicated region
  $region18: #{_resnet_forward_impl.32} parent=0 // pred_check
    %p18 = pneg %p17
  $region19: #{_resnet_forward_impl.32} parent=0 // pred_check_branch
    %20 = sbr.rel (%p18) target = $region21
  $region20: #{_resnet_forward_impl.32} parent=0 // pred_region
    %21 = vst [vmem:[#allocation2] sm:$0xff] 0.0
    %22 = vst [vmem:[#allocation2 + $0x8] sm:$0xff] 0.0
  $region21: #{_resnet_forward_impl.32} parent=0 // pred_fallthru
    _
  %v23 = vld [vmem:[#allocation2] sm:$0xff]
  %v24 = vld [vmem:[#allocation2 + $0x8] sm:$0xff]
  %v25 = vld [vmem:[%s0] sm:$0xff]
  %v26 = vld [vmem:[%s0 + $0x8] sm:$0xf]
  %v27 = vld [vmem:[%s0 + $0xc] sm:$0xff]
  %v28 = vld [vmem:[%s0 + $0x14] sm:$0xf]
  %v29 = vld [vmem:[%s1] sm:$0xf]
  %v30 = vld [vmem:[%s1 + $0x4] sm:$0xf]
  %v31 = vld [vmem:[%s1 + $0x8] sm:$0xf]
  %v32 = vld [vmem:[%s1 + $0xc] sm:$0xf]
  %v33 = vld [vmem:[%s1 + $0x10] sm:$0xf]
  %v34 = vld [vmem:[%s1 + $0x14] sm:$0xf]
  %v35 = vld [vmem:[%s1 + $0x18] sm:$0xf]
  %v36 = vld [vmem:[%s1 + $0x1c] sm:$0xf]
  %v37 = vld [vmem:[%s1 + $0x20] sm:$0xf]
  %v38 = vld [vmem:[%s1 + $0x24] sm:$0xf]
  %v39 = vld [vmem:[%s1 + $0x28] sm:$0xf]
  %v40 = vld [vmem:[%s1 + $0x2c] sm:$0xf]
  %v41 = vld [vmem:[%s1 + $0x30] sm:$0xf]
  %v42 = vld [vmem:[%s1 + $0x34] sm:$0xf]
  %v43 = vld [vmem:[%s1 + $0x38] sm:$0xf]
  %v44 = vld [vmem:[%s1 + $0x3c] sm:$0xf]
  %v45 = vld [vmem:[%s1 + $0x40] sm:$0xf]
  %v46 = vld [vmem:[%s1 + $0x44] sm:$0xf]
  %v47 = vld [vmem:[%s1 + $0x48] sm:$0xf]
  %v48 = vld [vmem:[%s1 + $0x4c] sm:$0xf]
  %v49 = vld [vmem:[%s1 + $0x50] sm:$0xf]
  %v50 = vld [vmem:[%s1 + $0x54] sm:$0xf]
  %v51 = vld [vmem:[%s1 + $0x58] sm:$0xf]
  %v52 = vld [vmem:[%s1 + $0x5c] sm:$0xf]
  %v53 = vld [vmem:[%s1 + $0x60] sm:$0xf]
  %v54 = vld [vmem:[%s1 + $0x64] sm:$0xf]
  %v55 = vld [vmem:[%s1 + $0x68] sm:$0xf]
  %v56 = vld [vmem:[%s1 + $0x6c] sm:$0xf]
  %v57 = vld [vmem:[%s1 + $0x70] sm:$0xf]
  %v58 = vld [vmem:[%s1 + $0x74] sm:$0xf]
  %v59 = vld [vmem:[%s1 + $0x78] sm:$0xf]
  %v60 = vld [vmem:[%s1 + $0x7c] sm:$0xf]
  %v61 = vld [vmem:[%s1 + $0x80] sm:$0xf]
  %v62 = vld [vmem:[%s1 + $0x84] sm:$0xf]
  %v63 = vld [vmem:[%s1 + $0x88] sm:$0xf]
  %v64 = vld [vmem:[%s1 + $0x8c] sm:$0xf]
  %v65 = vld [vmem:[%s1 + $0x90] sm:$0xf]
  %v66 = vld [vmem:[%s1 + $0x94] sm:$0xf]
  %v67 = vld [vmem:[%s1 + $0x98] sm:$0xf]
  %v68 = vld [vmem:[%s1 + $0x9c] sm:$0xf]
  %v69 = vld [vmem:[%s1 + $0xa0] sm:$0xf]
  %v70 = vld [vmem:[%s1 + $0xa4] sm:$0xf]
  %v71 = vld [vmem:[%s1 + $0xa8] sm:$0xf]
  %v72 = vld [vmem:[%s1 + $0xac] sm:$0xf]
  %v73 = vld [vmem:[%s1 + $0xb0] sm:$0xf]
  %v74 = vld [vmem:[%s1 + $0xb4] sm:$0xf]
  %v75 = vld [vmem:[%s1 + $0xb8] sm:$0xf]
  %v76 = vld [vmem:[%s1 + $0xbc] sm:$0xf]
  %v81 = vunpack.c.l.b16 %v25
  %v82 = vunpack.c.h.b16 %v25
  %v83 = vunpack.c.l.b16 %v26
  %v84 = vunpack.c.l.b16 %v27
  %v85 = vunpack.c.h.b16 %v27
  %v86 = vunpack.c.l.b16 %v28
  %v87 = vpack.c.b16 %v84, %v81
  %v88 = vpack.c.b16 %v85, %v82
  %v89 = vpack.c.b16 %v86, %v83
  %v141 = vunpack.c.l.b16 %v29
  %v142 = vunpack.c.l.b16 %v30
  %v143 = vunpack.c.l.b16 %v31
  %v144 = vunpack.c.l.b16 %v32
  %v145 = vunpack.c.l.b16 %v33
  %v146 = vunpack.c.l.b16 %v34
  %v147 = vunpack.c.l.b16 %v35
  %v148 = vunpack.c.l.b16 %v36
  %v149 = vunpack.c.l.b16 %v37
  %v150 = vunpack.c.l.b16 %v38
  %v151 = vunpack.c.l.b16 %v39
  %v152 = vunpack.c.l.b16 %v40
  %v153 = vunpack.c.l.b16 %v41
  %v154 = vunpack.c.l.b16 %v42
  %v155 = vunpack.c.l.b16 %v43
  %v156 = vunpack.c.l.b16 %v44
  %v157 = vunpack.c.l.b16 %v45
  %v158 = vunpack.c.l.b16 %v46
  %v159 = vunpack.c.l.b16 %v47
  %v160 = vunpack.c.l.b16 %v48
  %v161 = vunpack.c.l.b16 %v49
  %v162 = vunpack.c.l.b16 %v50
  %v163 = vunpack.c.l.b16 %v51
  %v164 = vunpack.c.l.b16 %v52
  %v165 = vunpack.c.l.b16 %v53
  %v166 = vunpack.c.l.b16 %v54
  %v167 = vunpack.c.l.b16 %v55
  %v168 = vunpack.c.l.b16 %v56
  %v169 = vunpack.c.l.b16 %v57
  %v170 = vunpack.c.l.b16 %v58
  %v171 = vunpack.c.l.b16 %v59
  %v172 = vunpack.c.l.b16 %v60
  %v173 = vunpack.c.l.b16 %v61
  %v174 = vunpack.c.l.b16 %v62
  %v175 = vunpack.c.l.b16 %v63
  %v176 = vunpack.c.l.b16 %v64
  %v177 = vunpack.c.l.b16 %v65
  %v178 = vunpack.c.l.b16 %v66
  %v179 = vunpack.c.l.b16 %v67
  %v180 = vunpack.c.l.b16 %v68
  %v181 = vunpack.c.l.b16 %v69
  %v182 = vunpack.c.l.b16 %v70
  %v183 = vunpack.c.l.b16 %v71
  %v184 = vunpack.c.l.b16 %v72
  %v185 = vunpack.c.l.b16 %v73
  %v186 = vunpack.c.l.b16 %v74
  %v187 = vunpack.c.l.b16 %v75
  %v188 = vunpack.c.l.b16 %v76
  %v189 = vpack.c.b16 %v142, %v141
  %v190 = vpack.c.b16 %v144, %v143
  %v191 = vpack.c.b16 %v146, %v145
  %v192 = vpack.c.b16 %v148, %v147
  %v193 = vpack.c.b16 %v150, %v149
  %v194 = vpack.c.b16 %v152, %v151
  %v195 = vpack.c.b16 %v154, %v153
  %v196 = vpack.c.b16 %v156, %v155
  %v197 = vpack.c.b16 %v158, %v157
  %v198 = vpack.c.b16 %v160, %v159
  %v199 = vpack.c.b16 %v162, %v161
  %v200 = vpack.c.b16 %v164, %v163
  %v201 = vpack.c.b16 %v166, %v165
  %v202 = vpack.c.b16 %v168, %v167
  %v203 = vpack.c.b16 %v170, %v169
  %v204 = vpack.c.b16 %v172, %v171
  %v205 = vpack.c.b16 %v174, %v173
  %v206 = vpack.c.b16 %v176, %v175
  %v207 = vpack.c.b16 %v178, %v177
  %v208 = vpack.c.b16 %v180, %v179
  %v209 = vpack.c.b16 %v182, %v181
  %v210 = vpack.c.b16 %v184, %v183
  %v211 = vpack.c.b16 %v186, %v185
  %v212 = vpack.c.b16 %v188, %v187
  %237 = vmatpush.bf16.msra.mxu0 %v196
  %238 = vmatpush.bf16.msra.mxu0 %v195
  %239 = vmatpush.bf16.msra.mxu0 %v194
  %240 = vmatpush.bf16.msra.mxu0 %v193
  %241 = vmatpush.bf16.msra.mxu0 %v192
  %242 = vmatpush.bf16.msra.mxu0 %v191
  %243 = vmatpush.bf16.msra.mxu0 %v190
  %244 = vmatpush.bf16.msra.mxu0 %v189
  %245 = vmatmul.bf16.gmra.mxu0 %v87
  %v246 = vpop.f32.mrf.mxu0
  %v247 = vadd.f32 0.0, %v246
  %v248 = vpop.f32.mrf.mxu0
  %v249 = vadd.f32 0.0, %v248
  %250 = vdwg.mxu0
  %251 = vmatpush.bf16.msra.mxu0 %v204
  %252 = vmatpush.bf16.msra.mxu0 %v203
  %253 = vmatpush.bf16.msra.mxu0 %v202
  %254 = vmatpush.bf16.msra.mxu0 %v201
  %255 = vmatpush.bf16.msra.mxu0 %v200
  %256 = vmatpush.bf16.msra.mxu0 %v199
  %257 = vmatpush.bf16.msra.mxu0 %v198
  %258 = vmatpush.bf16.msra.mxu0 %v197
  %259 = vmatmul.bf16.gmra.mxu0 %v88
  %v260 = vpop.f32.mrf.mxu0
  %v261 = vadd.f32 %v247, %v260
  %v262 = vpop.f32.mrf.mxu0
  %v263 = vadd.f32 %v249, %v262
  %264 = vdwg.mxu0
  %265 = vmatpush.bf16.msra.mxu0 %v212
  %266 = vmatpush.bf16.msra.mxu0 %v211
  %267 = vmatpush.bf16.msra.mxu0 %v210
  %268 = vmatpush.bf16.msra.mxu0 %v209
  %269 = vmatpush.bf16.msra.mxu0 %v208
  %270 = vmatpush.bf16.msra.mxu0 %v207
  %271 = vmatpush.bf16.msra.mxu0 %v206
  %272 = vmatpush.bf16.msra.mxu0 %v205
  %273 = vmatmul.bf16.gmra.mxu0 %v89
  %v274 = vpop.f32.mrf.mxu0
  %v275 = vadd.f32 %v261, %v274
  %v276 = vpop.f32.mrf.mxu0
  %v277 = vadd.f32 %v263, %v276
  %278 = vdwg.mxu0
  %v279 = vadd.f32 %v23, %v275
  %v280 = vadd.f32 %v24, %v277
  %281 = vst [vmem:[#allocation2] sm:$0xff] %v279
  %282 = vst [vmem:[#allocation2 + $0x8] sm:$0xff] %v280
  // Predicated region
  $region22: #{_resnet_forward_impl.32} parent=0 // pred_check
    %p283 = pneg %p17
  $region23: #{_resnet_forward_impl.32} parent=0 // pred_check_branch
    %285 = sbr.rel (%p283) target = $region25
  $region24: #{_resnet_forward_impl.32} parent=0 // pred_region
    %v286 = vld [vmem:[#allocation2] sm:$0xff]
    %v287 = vld [vmem:[#allocation2 + $0x8] sm:$0xff]
    %v288 = vld [vmem:[%s2] sm:$0x1]
    %v290 = vperm.slane %v288, 0
    %v292 = vadd.f32 %v286, %v290
    %v293 = vadd.f32 %v287, %v290
    %v294 = vld [vmem:[%s3] sm:$0xf]
    %v295 = vld [vmem:[%s3 + $0x4] sm:$0xf]
    %v296 = vunpack.c.l.bf16 %v294
    %v297 = vunpack.c.l.bf16 %v295
    %v298 = vadd.f32 %v292, %v296
    %v299 = vadd.f32 %v293, %v297
    %v300 = vmax.f32 %v298, 0.0
    %v301 = vmax.f32 %v299, 0.0
    %v302 = vpack.c.bf16 %v300, %v300
    %v303 = vpack.c.bf16 %v301, %v301
    %304 = vst [vmem:[%s4] sm:$0xf] %v302
    %305 = vst [vmem:[%s4 + $0x4] sm:$0xf] %v303
  $region25: #{_resnet_forward_impl.32} parent=0 // pred_fallthru
    _
  // Predicated region
  $region26: #{_resnet_forward_impl.32} parent=0 // pred_check
    _
  $region27: #{_resnet_forward_impl.32} parent=0 // pred_check_branch
    %307 = sbr.rel (0) target = $region29
  $region28: #{_resnet_forward_impl.32} parent=0 // pred_region
    _
  $region29: #{_resnet_forward_impl.32} parent=0 // pred_fallthru
    _
  // Predicated region
  $region30: #{_resnet_forward_impl.32} parent=0 // pred_check
    _
  $region31: #{_resnet_forward_impl.32} parent=0 // pred_check_branch
    %309 = sbr.rel (0) target = $region33
  $region32: #{_resnet_forward_impl.32} parent=0 // pred_region
    _
  $region33: #{_resnet_forward_impl.32} parent=0 // pred_fallthru
    _

// kernel: _resnet_forward_impl.33
$region0: #{_resnet_forward_impl.33}
  #allocation0 [shape = 'u32[]', space=smem, size = 0x4, offset = 0x4, fixed_abs, tag = 'smem constant byte address 0x4 - core index']
  #allocation1 [shape = 'u32[72,128]{1,0:T(1,128)}', space=vmem, size = 0x9000, scoped, tag = 'internal scratch']
  #allocation2 [shape = 'f32[16,128]{1,0:T(8,128)}', space=vmem, size = 0x2000, scoped, tag = 'scratch operand']
  %s0 = inlined_call_operand.vmem [shape: bf16[16,384], index: 0, kind: input, shape index: {}]
  %s1 = inlined_call_operand.vmem [shape: bf16[384,128], index: 1, kind: input, shape index: {}]
  %s2 = inlined_call_operand.vmem [shape: f32[1,128], index: 2, kind: input, shape index: {}]
  %s3 = inlined_call_operand.vmem [shape: bf16[16,128], index: 3, kind: output, shape index: {}]
  %s4 = sld [smem:[#allocation0]]
  $region30: #{_resnet_forward_impl.33} parent=0
    _
  %s6 = ssub.s32 1, %s4
  %s7 = scalar_select 0, %s6, %s4
  // Predicated region
  $region2: #{_resnet_forward_impl.33} parent=0 // pred_check
    _
  $region3: #{_resnet_forward_impl.33} parent=0 // pred_check_branch
    %9 = sbr.rel (0) target = $region5
  $region4: #{_resnet_forward_impl.33} parent=0 // pred_region
    _
  $region5: #{_resnet_forward_impl.33} parent=0 // pred_fallthru
    _
  // Predicated region
  $region6: #{_resnet_forward_impl.33} parent=0 // pred_check
    _
  $region7: #{_resnet_forward_impl.33} parent=0 // pred_check_branch
    %11 = sbr.rel (0) target = $region9
  $region8: #{_resnet_forward_impl.33} parent=0 // pred_region
    _
  $region9: #{_resnet_forward_impl.33} parent=0 // pred_fallthru
    _
  // Predicated region
  $region10: #{_resnet_forward_impl.33} parent=0 // pred_check
    _
  $region11: #{_resnet_forward_impl.33} parent=0 // pred_check_branch
    %13 = sbr.rel (0) target = $region13
  $region12: #{_resnet_forward_impl.33} parent=0 // pred_region
    _
  $region13: #{_resnet_forward_impl.33} parent=0 // pred_fallthru
    _
  %p14 = scmp.eq.s32.totalorder 0, 0
  // Predicated region
  $region14: #{_resnet_forward_impl.33} parent=0 // pred_check
    %p15 = pneg %p14
  $region15: #{_resnet_forward_impl.33} parent=0 // pred_check_branch
    %17 = sbr.rel (%p15) target = $region17
  $region16: #{_resnet_forward_impl.33} parent=0 // pred_region
    %18 = vst [vmem:[#allocation2] sm:$0xff] 0.0
    %19 = vst [vmem:[#allocation2 + $0x8] sm:$0xff] 0.0
  $region17: #{_resnet_forward_impl.33} parent=0 // pred_fallthru
    _
  %v20 = vld [vmem:[#allocation2] sm:$0xff]
  %v21 = vld [vmem:[#allocation2 + $0x8] sm:$0xff]
  %v22 = vld [vmem:[%s0] sm:$0xff]
  %v23 = vld [vmem:[%s0 + $0x8] sm:$0xf]
  %v24 = vld [vmem:[%s0 + $0xc] sm:$0xff]
  %v25 = vld [vmem:[%s0 + $0x14] sm:$0xf]
  %v26 = vld [vmem:[%s1] sm:$0xf]
  %v27 = vld [vmem:[%s1 + $0x4] sm:$0xf]
  %v28 = vld [vmem:[%s1 + $0x8] sm:$0xf]
  %v29 = vld [vmem:[%s1 + $0xc] sm:$0xf]
  %v30 = vld [vmem:[%s1 + $0x10] sm:$0xf]
  %v31 = vld [vmem:[%s1 + $0x14] sm:$0xf]
  %v32 = vld [vmem:[%s1 + $0x18] sm:$0xf]
  %v33 = vld [vmem:[%s1 + $0x1c] sm:$0xf]
  %v34 = vld [vmem:[%s1 + $0x20] sm:$0xf]
  %v35 = vld [vmem:[%s1 + $0x24] sm:$0xf]
  %v36 = vld [vmem:[%s1 + $0x28] sm:$0xf]
  %v37 = vld [vmem:[%s1 + $0x2c] sm:$0xf]
  %v38 = vld [vmem:[%s1 + $0x30] sm:$0xf]
  %v39 = vld [vmem:[%s1 + $0x34] sm:$0xf]
  %v40 = vld [vmem:[%s1 + $0x38] sm:$0xf]
  %v41 = vld [vmem:[%s1 + $0x3c] sm:$0xf]
  %v42 = vld [vmem:[%s1 + $0x40] sm:$0xf]
  %v43 = vld [vmem:[%s1 + $0x44] sm:$0xf]
  %v44 = vld [vmem:[%s1 + $0x48] sm:$0xf]
  %v45 = vld [vmem:[%s1 + $0x4c] sm:$0xf]
  %v46 = vld [vmem:[%s1 + $0x50] sm:$0xf]
  %v47 = vld [vmem:[%s1 + $0x54] sm:$0xf]
  %v48 = vld [vmem:[%s1 + $0x58] sm:$0xf]
  %v49 = vld [vmem:[%s1 + $0x5c] sm:$0xf]
  %v50 = vld [vmem:[%s1 + $0x60] sm:$0xf]
  %v51 = vld [vmem:[%s1 + $0x64] sm:$0xf]
  %v52 = vld [vmem:[%s1 + $0x68] sm:$0xf]
  %v53 = vld [vmem:[%s1 + $0x6c] sm:$0xf]
  %v54 = vld [vmem:[%s1 + $0x70] sm:$0xf]
  %v55 = vld [vmem:[%s1 + $0x74] sm:$0xf]
  %v56 = vld [vmem:[%s1 + $0x78] sm:$0xf]
  %v57 = vld [vmem:[%s1 + $0x7c] sm:$0xf]
  %v58 = vld [vmem:[%s1 + $0x80] sm:$0xf]
  %v59 = vld [vmem:[%s1 + $0x84] sm:$0xf]
  %v60 = vld [vmem:[%s1 + $0x88] sm:$0xf]
  %v61 = vld [vmem:[%s1 + $0x8c] sm:$0xf]
  %v62 = vld [vmem:[%s1 + $0x90] sm:$0xf]
  %v63 = vld [vmem:[%s1 + $0x94] sm:$0xf]
  %v64 = vld [vmem:[%s1 + $0x98] sm:$0xf]
  %v65 = vld [vmem:[%s1 + $0x9c] sm:$0xf]
  %v66 = vld [vmem:[%s1 + $0xa0] sm:$0xf]
  %v67 = vld [vmem:[%s1 + $0xa4] sm:$0xf]
  %v68 = vld [vmem:[%s1 + $0xa8] sm:$0xf]
  %v69 = vld [vmem:[%s1 + $0xac] sm:$0xf]
  %v70 = vld [vmem:[%s1 + $0xb0] sm:$0xf]
  %v71 = vld [vmem:[%s1 + $0xb4] sm:$0xf]
  %v72 = vld [vmem:[%s1 + $0xb8] sm:$0xf]
  %v73 = vld [vmem:[%s1 + $0xbc] sm:$0xf]
  %v78 = vunpack.c.l.b16 %v22
  %v79 = vunpack.c.h.b16 %v22
  %v80 = vunpack.c.l.b16 %v23
  %v81 = vunpack.c.l.b16 %v24
  %v82 = vunpack.c.h.b16 %v24
  %v83 = vunpack.c.l.b16 %v25
  %v84 = vpack.c.b16 %v81, %v78
  %v85 = vpack.c.b16 %v82, %v79
  %v86 = vpack.c.b16 %v83, %v80
  %v138 = vunpack.c.l.b16 %v26
  %v139 = vunpack.c.l.b16 %v27
  %v140 = vunpack.c.l.b16 %v28
  %v141 = vunpack.c.l.b16 %v29
  %v142 = vunpack.c.l.b16 %v30
  %v143 = vunpack.c.l.b16 %v31
  %v144 = vunpack.c.l.b16 %v32
  %v145 = vunpack.c.l.b16 %v33
  %v146 = vunpack.c.l.b16 %v34
  %v147 = vunpack.c.l.b16 %v35
  %v148 = vunpack.c.l.b16 %v36
  %v149 = vunpack.c.l.b16 %v37
  %v150 = vunpack.c.l.b16 %v38
  %v151 = vunpack.c.l.b16 %v39
  %v152 = vunpack.c.l.b16 %v40
  %v153 = vunpack.c.l.b16 %v41
  %v154 = vunpack.c.l.b16 %v42
  %v155 = vunpack.c.l.b16 %v43
  %v156 = vunpack.c.l.b16 %v44
  %v157 = vunpack.c.l.b16 %v45
  %v158 = vunpack.c.l.b16 %v46
  %v159 = vunpack.c.l.b16 %v47
  %v160 = vunpack.c.l.b16 %v48
  %v161 = vunpack.c.l.b16 %v49
  %v162 = vunpack.c.l.b16 %v50
  %v163 = vunpack.c.l.b16 %v51
  %v164 = vunpack.c.l.b16 %v52
  %v165 = vunpack.c.l.b16 %v53
  %v166 = vunpack.c.l.b16 %v54
  %v167 = vunpack.c.l.b16 %v55
  %v168 = vunpack.c.l.b16 %v56
  %v169 = vunpack.c.l.b16 %v57
  %v170 = vunpack.c.l.b16 %v58
  %v171 = vunpack.c.l.b16 %v59
  %v172 = vunpack.c.l.b16 %v60
  %v173 = vunpack.c.l.b16 %v61
  %v174 = vunpack.c.l.b16 %v62
  %v175 = vunpack.c.l.b16 %v63
  %v176 = vunpack.c.l.b16 %v64
  %v177 = vunpack.c.l.b16 %v65
  %v178 = vunpack.c.l.b16 %v66
  %v179 = vunpack.c.l.b16 %v67
  %v180 = vunpack.c.l.b16 %v68
  %v181 = vunpack.c.l.b16 %v69
  %v182 = vunpack.c.l.b16 %v70
  %v183 = vunpack.c.l.b16 %v71
  %v184 = vunpack.c.l.b16 %v72
  %v185 = vunpack.c.l.b16 %v73
  %v186 = vpack.c.b16 %v139, %v138
  %v187 = vpack.c.b16 %v141, %v140
  %v188 = vpack.c.b16 %v143, %v142
  %v189 = vpack.c.b16 %v145, %v144
  %v190 = vpack.c.b16 %v147, %v146
  %v191 = vpack.c.b16 %v149, %v148
  %v192 = vpack.c.b16 %v151, %v150
  %v193 = vpack.c.b16 %v153, %v152
  %v194 = vpack.c.b16 %v155, %v154
  %v195 = vpack.c.b16 %v157, %v156
  %v196 = vpack.c.b16 %v159, %v158
  %v197 = vpack.c.b16 %v161, %v160
  %v198 = vpack.c.b16 %v163, %v162
  %v199 = vpack.c.b16 %v165, %v164
  %v200 = vpack.c.b16 %v167, %v166
  %v201 = vpack.c.b16 %v169, %v168
  %v202 = vpack.c.b16 %v171, %v170
  %v203 = vpack.c.b16 %v173, %v172
  %v204 = vpack.c.b16 %v175, %v174
  %v205 = vpack.c.b16 %v177, %v176
  %v206 = vpack.c.b16 %v179, %v178
  %v207 = vpack.c.b16 %v181, %v180
  %v208 = vpack.c.b16 %v183, %v182
  %v209 = vpack.c.b16 %v185, %v184
  %234 = vmatpush.bf16.msra.mxu0 %v193
  %235 = vmatpush.bf16.msra.mxu0 %v192
  %236 = vmatpush.bf16.msra.mxu0 %v191
  %237 = vmatpush.bf16.msra.mxu0 %v190
  %238 = vmatpush.bf16.msra.mxu0 %v189
  %239 = vmatpush.bf16.msra.mxu0 %v188
  %240 = vmatpush.bf16.msra.mxu0 %v187
  %241 = vmatpush.bf16.msra.mxu0 %v186
  %242 = vmatmul.bf16.gmra.mxu0 %v84
  %v243 = vpop.f32.mrf.mxu0
  %v244 = vadd.f32 0.0, %v243
  %v245 = vpop.f32.mrf.mxu0
  %v246 = vadd.f32 0.0, %v245
  %247 = vdwg.mxu0
  %248 = vmatpush.bf16.msra.mxu0 %v201
  %249 = vmatpush.bf16.msra.mxu0 %v200
  %250 = vmatpush.bf16.msra.mxu0 %v199
  %251 = vmatpush.bf16.msra.mxu0 %v198
  %252 = vmatpush.bf16.msra.mxu0 %v197
  %253 = vmatpush.bf16.msra.mxu0 %v196
  %254 = vmatpush.bf16.msra.mxu0 %v195
  %255 = vmatpush.bf16.msra.mxu0 %v194
  %256 = vmatmul.bf16.gmra.mxu0 %v85
  %v257 = vpop.f32.mrf.mxu0
  %v258 = vadd.f32 %v244, %v257
  %v259 = vpop.f32.mrf.mxu0
  %v260 = vadd.f32 %v246, %v259
  %261 = vdwg.mxu0
  %262 = vmatpush.bf16.msra.mxu0 %v209
  %263 = vmatpush.bf16.msra.mxu0 %v208
  %264 = vmatpush.bf16.msra.mxu0 %v207
  %265 = vmatpush.bf16.msra.mxu0 %v206
  %266 = vmatpush.bf16.msra.mxu0 %v205
  %267 = vmatpush.bf16.msra.mxu0 %v204
  %268 = vmatpush.bf16.msra.mxu0 %v203
  %269 = vmatpush.bf16.msra.mxu0 %v202
  %270 = vmatmul.bf16.gmra.mxu0 %v86
  %v271 = vpop.f32.mrf.mxu0
  %v272 = vadd.f32 %v258, %v271
  %v273 = vpop.f32.mrf.mxu0
  %v274 = vadd.f32 %v260, %v273
  %275 = vdwg.mxu0
  %v276 = vadd.f32 %v20, %v272
  %v277 = vadd.f32 %v21, %v274
  %278 = vst [vmem:[#allocation2] sm:$0xff] %v276
  %279 = vst [vmem:[#allocation2 + $0x8] sm:$0xff] %v277
  // Predicated region
  $region18: #{_resnet_forward_impl.33} parent=0 // pred_check
    %p280 = pneg %p14
  $region19: #{_resnet_forward_impl.33} parent=0 // pred_check_branch
    %282 = sbr.rel (%p280) target = $region21
  $region20: #{_resnet_forward_impl.33} parent=0 // pred_region
    %v283 = vld [vmem:[#allocation2] sm:$0xff]
    %v284 = vld [vmem:[#allocation2 + $0x8] sm:$0xff]
    %v285 = vld [vmem:[%s2] sm:$0x1]
    %v287 = vperm.slane %v285, 0
    %v289 = vadd.f32 %v283, %v287
    %v290 = vadd.f32 %v284, %v287
    %v291 = vmax.f32 %v289, 0.0
    %v292 = vmax.f32 %v290, 0.0
    %v293 = vpack.c.bf16 %v291, %v291
    %v294 = vpack.c.bf16 %v292, %v292
    %295 = vst [vmem:[%s3] sm:$0xf] %v293
    %296 = vst [vmem:[%s3 + $0x4] sm:$0xf] %v294
  $region21: #{_resnet_forward_impl.33} parent=0 // pred_fallthru
    _
  // Predicated region
  $region22: #{_resnet_forward_impl.33} parent=0 // pred_check
    _
  $region23: #{_resnet_forward_impl.33} parent=0 // pred_check_branch
    %298 = sbr.rel (0) target = $region25
  $region24: #{_resnet_forward_impl.33} parent=0 // pred_region
    _
  $region25: #{_resnet_forward_impl.33} parent=0 // pred_fallthru
    _
  // Predicated region
  $region26: #{_resnet_forward_impl.33} parent=0 // pred_check
    _
  $region27: #{_resnet_forward_impl.33} parent=0 // pred_check_branch
    %300 = sbr.rel (0) target = $region29
  $region28: #{_resnet_forward_impl.33} parent=0 // pred_region
    _
  $region29: #{_resnet_forward_impl.33} parent=0 // pred_fallthru
    _

// kernel: _resnet_forward_impl.38
$region0: #{_resnet_forward_impl.38}
  #allocation0 [shape = 'u32[]', space=smem, size = 0x4, offset = 0x4, fixed_abs, tag = 'smem constant byte address 0x4 - core index']
  #allocation1 [shape = 'u32[72,128]{1,0:T(1,128)}', space=vmem, size = 0x9000, scoped, tag = 'internal scratch']
  #allocation2 [shape = 'f32[16,128]{1,0:T(8,128)}', space=vmem, size = 0x2000, scoped, tag = 'scratch operand']
  %s0 = inlined_call_operand.vmem [shape: bf16[16,768], index: 0, kind: input, shape index: {}]
  %s1 = inlined_call_operand.vmem [shape: bf16[768,128], index: 1, kind: input, shape index: {}]
  %s2 = inlined_call_operand.vmem [shape: f32[1,128], index: 2, kind: input, shape index: {}]
  %s3 = inlined_call_operand.vmem [shape: bf16[16,128], index: 3, kind: output, shape index: {}]
  %s4 = sld [smem:[#allocation0]]
  $region91: #{_resnet_forward_impl.38} parent=0
    _
  %s6 = ssub.s32 1, %s4
  %s7 = scalar_select 0, %s6, %s4
  $region1: #{_resnet_forward_impl.38} parent=0
    #allocation3 [shape = 'u8[16384]{0}', space=vmem, size = 0x4000, scoped, tag = 'input window, operand 0']
    loop: start=0, step=1, limit=5
    $region2: #{_resnet_forward_impl.38} parent=1 // loop_pre_header
      _
    $region3: #{_resnet_forward_impl.38} parent=1 // loop_header
      %s9 = sphi 0, %s13
      %p10 = scmp.ge.s32.totalorder %s9, 5
      %s16 = sphi 0, %s35
      %s17 = sphi 0, %s31
      %s18 = sphi 0, %s27
      %s19 = sphi 0, %s16
      %s20 = sphi 0, %s17
      %s21 = sphi 0, %s18
      %s22 = sphi 0, %s19
      %s23 = sphi 0, %s20
      %s24 = sphi 0, %s21
      %s40 = sphi 0, %s42
      %s43 = sphi 0, %s40
      %s44 = sphi 0, %s43
      %s60 = sphi 0, %s44
      %s68 = sphi 0, %s70
      %s71 = sphi 0, %s68
      %s72 = sphi 0, %s71
      %s88 = sphi 0, %s72
      %s94 = sphi 0, %s96
      %s97 = sphi 0, %s94
      %s98 = sphi 0, %s97
      %s114 = sphi 0, %s98
      %s122 = sphi 0, %s124
      %s125 = sphi 0, %s122
      %s126 = sphi 0, %s125
      %s142 = sphi 0, %s126
    $region4: #{_resnet_forward_impl.38} parent=1 // loop_header_branch
      %12 = sbr.rel (%p10) target = $region8
    $region5: #{_resnet_forward_impl.38} parent=1 // loop_body
      %s14 = ssub.s32 %s9, 1
      %s15 = ssub.s32 %s9, 2
      %s25 = sadd.s32 1, %s18
      %p26 = scmp.ge.s32.totalorder %s25, 3
      %s27 = scalar_select %p26, 0, %s25
      %s28 = sadd.s32 1, %s17
      %s29 = scalar_select %p26, %s28, %s17
      %p30 = scmp.ge.s32.totalorder %s29, 1
      %s31 = scalar_select %p30, 0, %s29
      %s32 = sadd.s32 1, %s16
      %s33 = scalar_select %p30, %s32, %s16
      %p34 = scmp.ge.s32.totalorder %s33, 1
      %s35 = scalar_select %p34, 0, %s33
      %s36 = ssub.s32 %s16, %s35
      %s37 = ssub.s32 %s18, %s27
      %s38 = sor.u32 %s36, %s37
      %p39 = scmp.eq.s32.totalorder %s38, 0
      %s41 = sadd.s32 %s40, 1
      %s42 = scalar_select %p39, %s40, %s41
      %p45 = pneg %p39
      %p46 = scmp.eq.s32.totalorder %s9, 2
      %p47 = por %p45, %p46
      %p48 = scmp.ne.s32.totalorder %s40, %s43
      %p49 = scmp.eq.s32.totalorder %s9, 0
      %p50 = por %p48, %p49
      %p51 = scmp.ne.s32.totalorder %s40, %s43
      %p52 = scmp.eq.s32.totalorder %s14, 2
      %p53 = por %p51, %p52
      %p54 = scmp.ne.s32.totalorder %s43, %s44
      %p55 = scmp.eq.s32.totalorder %s14, 0
      %p56 = por %p54, %p55
      %p57 = scmp.ne.s32.totalorder %s43, %s44
      %p58 = scmp.eq.s32.totalorder %s15, 2
      %p59 = por %p57, %p58
      %p61 = scmp.ne.s32.totalorder %s44, %s60
      %p62 = scmp.eq.s32.totalorder %s15, 0
      %p63 = por %p61, %p62
      %s64 = ssub.s32 %s18, %s27
      %s65 = ssub.s32 %s17, %s31
      %s66 = sor.u32 %s64, %s65
      %p67 = scmp.eq.s32.totalorder %s66, 0
      %s69 = sadd.s32 %s68, 1
      %s70 = scalar_select %p67, %s68, %s69
      %p73 = pneg %p67
      %p74 = scmp.eq.s32.totalorder %s9, 2
      %p75 = por %p73, %p74
      %p76 = scmp.ne.s32.totalorder %s68, %s71
      %p77 = scmp.eq.s32.totalorder %s9, 0
      %p78 = por %p76, %p77
      %p79 = scmp.ne.s32.totalorder %s68, %s71
      %p80 = scmp.eq.s32.totalorder %s14, 2
      %p81 = por %p79, %p80
      %p82 = scmp.ne.s32.totalorder %s71, %s72
      %p83 = scmp.eq.s32.totalorder %s14, 0
      %p84 = por %p82, %p83
      %p85 = scmp.ne.s32.totalorder %s71, %s72
      %p86 = scmp.eq.s32.totalorder %s15, 2
      %p87 = por %p85, %p86
      %p89 = scmp.ne.s32.totalorder %s72, %s88
      %p90 = scmp.eq.s32.totalorder %s15, 0
      %p91 = por %p89, %p90
      %s92 = ssub.s32 %s17, %s31
      %p93 = scmp.eq.s32.totalorder %s92, 0
      %s95 = sadd.s32 %s94, 1
      %s96 = scalar_select %p93, %s94, %s95
      %p99 = pneg %p93
      %p100 = scmp.eq.s32.totalorder %s9, 2
      %p101 = por %p99, %p100
      %p102 = scmp.ne.s32.totalorder %s94, %s97
      %p103 = scmp.eq.s32.totalorder %s9, 0
      %p104 = por %p102, %p103
      %p105 = scmp.ne.s32.totalorder %s94, %s97
      %p106 = scmp.eq.s32.totalorder %s14, 2
      %p107 = por %p105, %p106
      %p108 = scmp.ne.s32.totalorder %s97, %s98
      %p109 = scmp.eq.s32.totalorder %s14, 0
      %p110 = por %p108, %p109
      %p111 = scmp.ne.s32.totalorder %s97, %s98
      %p112 = scmp.eq.s32.totalorder %s15, 2
      %p113 = por %p111, %p112
      %p115 = scmp.ne.s32.totalorder %s98, %s114
      %p116 = scmp.eq.s32.totalorder %s15, 0
      %p117 = por %p115, %p116
      %s118 = ssub.s32 %s16, %s35
      %s119 = ssub.s32 %s17, %s31
      %s120 = sor.u32 %s118, %s119
      %p121 = scmp.eq.s32.totalorder %s120, 0
      %s123 = sadd.s32 %s122, 1
      %s124 = scalar_select %p121, %s122, %s123
      %p127 = pneg %p121
      %p128 = scmp.eq.s32.totalorder %s9, 2
      %p129 = por %p127, %p128
      %p130 = scmp.ne.s32.totalorder %s122, %s125
      %p131 = scmp.eq.s32.totalorder %s9, 0
      %p132 = por %p130, %p131
      %p133 = scmp.ne.s32.totalorder %s122, %s125
      %p134 = scmp.eq.s32.totalorder %s14, 2
      %p135 = por %p133, %p134
      %p136 = scmp.ne.s32.totalorder %s125, %s126
      %p137 = scmp.eq.s32.totalorder %s14, 0
      %p138 = por %p136, %p137
      %p139 = scmp.ne.s32.totalorder %s125, %s126
      %p140 = scmp.eq.s32.totalorder %s15, 2
      %p141 = por %p139, %p140
      %p143 = scmp.ne.s32.totalorder %s126, %s142
      %p144 = scmp.eq.s32.totalorder %s15, 0
      %p145 = por %p143, %p144
      %p146 = scmp.le.s32.totalorder 1, %s9
      %p147 = scmp.lt.s32.totalorder %s9, 4
      %p148 = pnand %p146, %p147
      %p149 = pneg %p148
      // Predicated region
      $region9: #{_resnet_forward_impl.38} parent=5 // pred_check
        _
      $region10: #{_resnet_forward_impl.38} parent=5 // pred_check_branch
        %151 = sbr.rel (%p148) target = $region12
      $region11: #{_resnet_forward_impl.38} parent=5 // pred_region
        %s152 = ssub.s32 %s9, 1
        // Predicated region
        $region13: #{_resnet_forward_impl.38} parent=11 // pred_check
          %p153 = pneg %p110
        $region14: #{_resnet_forward_impl.38} parent=11 // pred_check_branch
          %155 = sbr.rel (%p153) target = $region16
        $region15: #{_resnet_forward_impl.38} parent=11 // pred_region
          %p156 = scmp.lt.s32.totalorder %s20, 0
          %s157 = scalar_select %p156, %s20, 0
          %s158 = scalar_lea.vmem %s2, %s157
        $region16: #{_resnet_forward_impl.38} parent=11 // pred_fallthru
          _
      $region12: #{_resnet_forward_impl.38} parent=5 // pred_fallthru
        _
      %p159 = scmp.lt.s32.totalorder %s9, 3
      // Predicated region
      $region17: #{_resnet_forward_impl.38} parent=5 // pred_check
        %p160 = pneg %p159
      $region18: #{_resnet_forward_impl.38} parent=5 // pred_check_branch
        %162 = sbr.rel (%p160) target = $region20
      $region19: #{_resnet_forward_impl.38} parent=5 // pred_region
        // Predicated region
        $region21: #{_resnet_forward_impl.38} parent=19 // pred_check
          %p163 = pneg %p50
        $region22: #{_resnet_forward_impl.38} parent=19 // pred_check_branch
          %165 = sbr.rel (%p163) target = $region24
        $region23: #{_resnet_forward_impl.38} parent=19 // pred_region
          %s166 = sand.u32 %s40, 1
          %s167 = sand.u32 %s40, 1
          %s168 = smul.addr %s167, 16
          %s169 = scalar_lea.vmem [#allocation3], %s168
          %s170 = smul.u32 2, %s16
          %s171 = smul.u32 2, %s18
          %s172 = smul.addr %s170, 6
          %s173 = sadd.s32 %s171, %s172
          %s174 = smul.addr %s173, 4
          %s175 = scalar_lea.vmem %s0, %s174
          // Predicated region
          $region25: #{_resnet_forward_impl.38} parent=23 // pred_check
            _
          $region26: #{_resnet_forward_impl.38} parent=23 // pred_check_branch
            %177 = sbr.rel (0) target = $region28
          $region27: #{_resnet_forward_impl.38} parent=23 // pred_region
            // Predicated region
            $region29: #{_resnet_forward_impl.38} parent=27 // pred_check
              _
            $region30: #{_resnet_forward_impl.38} parent=27 // pred_check_branch
              %179 = sbr.rel (0) target = $region32
            $region31: #{_resnet_forward_impl.38} parent=27 // pred_region
              // Predicated region
              $region44: #{_resnet_forward_impl.38} parent=31 // pred_check
                _
              $region45: #{_resnet_forward_impl.38} parent=31 // pred_check_branch
                %197 = sbr.rel (0) target = $region47
              $region46: #{_resnet_forward_impl.38} parent=31 // pred_region
                loop: start=0, step=1, limit=1
                $region48: #{_resnet_forward_impl.38} parent=46 // loop_pre_header
                  _
                $region49: #{_resnet_forward_impl.38} parent=46 // loop_header
                  %s199 = sphi 0, %s203
                  %p200 = scmp.ge.s32.totalorder %s199, 1
                  %s204 = sphi %s175, %s175
                  %s205 = sphi %s169, %s169
                $region50: #{_resnet_forward_impl.38} parent=46 // loop_header_branch
                  %202 = sbr.rel (%p200) target = $region54
                $region51: #{_resnet_forward_impl.38} parent=46 // loop_body
                  %v206 = vld [vmem:[%s204] sm:$0xff]
                  %207 = vst [vmem:[%s205] sm:$0xff] %v206
                  %v208 = vld [vmem:[%s204 + $0x18] sm:$0xff]
                  %209 = vst [vmem:[%s205 + $0x8] sm:$0xff] %v208
                $region52: #{_resnet_forward_impl.38} parent=46 // loop_footer
                  %s203 = sadd.s32 1, %s199
                $region53: #{_resnet_forward_impl.38} parent=46 // loop_footer_branch
                  %198 = sbr.rel target = $region49
                $region54: #{_resnet_forward_impl.38} parent=46 // loop_exit
                  _
              $region47: #{_resnet_forward_impl.38} parent=31 // pred_fallthru
                _
              // Predicated region
              $region55: #{_resnet_forward_impl.38} parent=31 // pred_check
                _
              $region56: #{_resnet_forward_impl.38} parent=31 // pred_check_branch
                %211 = sbr.rel target = $region58
              $region57: #{_resnet_forward_impl.38} parent=31 // pred_region
                _
              $region58: #{_resnet_forward_impl.38} parent=31 // pred_fallthru
                _
            $region32: #{_resnet_forward_impl.38} parent=27 // pred_fallthru
              _
            // Predicated region
            $region33: #{_resnet_forward_impl.38} parent=27 // pred_check
              _
            $region34: #{_resnet_forward_impl.38} parent=27 // pred_check_branch
              %181 = sbr.rel target = $region36
            $region35: #{_resnet_forward_impl.38} parent=27 // pred_region
              %s183 = ssub.s32 256, 1
              loop: start=0, step=1, limit=1
              $region37: #{_resnet_forward_impl.38} parent=35 // loop_pre_header
                _
              $region38: #{_resnet_forward_impl.38} parent=35 // loop_header
                %s185 = sphi 0, %s189
                %p186 = scmp.ge.s32.totalorder %s185, 1
                %s190 = sphi %s175, %s175
                %s191 = sphi %s169, %s169
              $region39: #{_resnet_forward_impl.38} parent=35 // loop_header_branch
                %188 = sbr.rel (%p186) target = $region43
              $region40: #{_resnet_forward_impl.38} parent=35 // loop_body
                %v192 = vld [vmem:[%s190] sm:%s183]
                %193 = vst [vmem:[%s191] sm:%s183] %v192
                %v194 = vld [vmem:[%s190 + $0x18] sm:%s183]
                %195 = vst [vmem:[%s191 + $0x8] sm:%s183] %v194
              $region41: #{_resnet_forward_impl.38} parent=35 // loop_footer
                %s189 = sadd.s32 1, %s185
              $region42: #{_resnet_forward_impl.38} parent=35 // loop_footer_branch
                %184 = sbr.rel target = $region38
              $region43: #{_resnet_forward_impl.38} parent=35 // loop_exit
                _
            $region36: #{_resnet_forward_impl.38} parent=27 // pred_fallthru
              _
          $region28: #{_resnet_forward_impl.38} parent=23 // pred_fallthru
            _
          %212 = vnop
        $region24: #{_resnet_forward_impl.38} parent=19 // pred_fallthru
          _
        // Predicated region
        $region59: #{_resnet_forward_impl.38} parent=19 // pred_check
          %p213 = pneg %p78
        $region60: #{_resnet_forward_impl.38} parent=19 // pred_check_branch
          %215 = sbr.rel (%p213) target = $region62
        $region61: #{_resnet_forward_impl.38} parent=19 // pred_region
          %s216 = smul.u32 32, %s18
          %p217 = scmp.lt.s32.totalorder %s216, 95
          %s218 = scalar_select %p217, %s216, 95
          %p219 = scmp.lt.s32.totalorder %s17, 0
          %s220 = scalar_select %p219, %s17, 0
          %s221 = sadd.s32 %s220, %s218
          %s222 = smul.addr %s221, 4
          %s223 = scalar_lea.vmem %s1, %s222
          %s224 = smul.u32 32, %s18
        $region62: #{_resnet_forward_impl.38} parent=19 // pred_fallthru
          _
      $region20: #{_resnet_forward_impl.38} parent=5 // pred_fallthru
        _
      %p225 = scmp.le.s32.totalorder 1, %s9
      %p226 = scmp.lt.s32.totalorder %s9, 4
      %p227 = pnand %p225, %p226
      %p228 = pneg %p227
      // Predicated region
      $region63: #{_resnet_forward_impl.38} parent=5 // pred_check
        _
      $region64: #{_resnet_forward_impl.38} parent=5 // pred_check_branch
        %230 = sbr.rel (%p227) target = $region66
      $region65: #{_resnet_forward_impl.38} parent=5 // pred_region
        %s231 = ssub.s32 %s9, 1
        %s232 = sand.u32 %s43, 1
        %s233 = sand.u32 %s43, 1
        %s234 = smul.addr %s233, 16
        %s235 = scalar_lea.vmem [#allocation3], %s234
        // Predicated region
        $region67: #{_resnet_forward_impl.38} parent=65 // pred_check
          %p236 = pneg %p56
        $region68: #{_resnet_forward_impl.38} parent=65 // pred_check_branch
          %238 = sbr.rel (%p236) target = $region70
        $region69: #{_resnet_forward_impl.38} parent=65 // pred_region
          _
        $region70: #{_resnet_forward_impl.38} parent=65 // pred_fallthru
          _
        %s239 = sand.u32 %s43, 1
        %s240 = sand.u32 %s43, 1
        %s241 = smul.addr %s240, 16
        %s242 = scalar_lea.vmem [#allocation3], %s241
        %p243 = pneg %p56
        %p244 = pneg %p53
        %s245 = smul.u32 32, %s21
        %p246 = scmp.lt.s32.totalorder %s245, 95
        %s247 = scalar_select %p246, %s245, 95
        %p248 = scmp.lt.s32.totalorder %s20, 0
        %s249 = scalar_select %p248, %s20, 0
        %s250 = sadd.s32 %s249, %s247
        %s251 = smul.addr %s250, 4
        %s252 = scalar_lea.vmem %s1, %s251
        %p253 = pneg %p84
        %p254 = pneg %p81
        %p255 = scmp.lt.s32.totalorder %s20, 0
        %s256 = scalar_select %p255, %s20, 0
        %s257 = scalar_lea.vmem %s2, %s256
        %p258 = pneg %p110
        %p259 = pneg %p107
        %p260 = pneg %p138
        %p261 = pneg %p135
        %s262 = smul.u32 2, %s19
        %p263 = scmp.lt.s32.totalorder %s262, 1
        %s264 = scalar_select %p263, %s262, 1
        %p265 = scmp.lt.s32.totalorder %s20, 0
        %s266 = scalar_select %p265, %s20, 0
        %s267 = sadd.s32 %s266, %s264
        %s268 = smul.addr %s267, 4
        %s269 = scalar_lea.vmem %s3, %s268
        %s270 = smul.u32 2, %s19
        %s271 = smul.u32 2, %s21
        %s272 = smul.u32 32, %s21
        %p273 = scmp.lt.s32.totalorder %s272, 95
        %s274 = scalar_select %p273, %s272, 95
        %p275 = scmp.lt.s32.totalorder %s20, 0
        %s276 = scalar_select %p275, %s20, 0
        %s277 = sadd.s32 %s276, %s274
        %s278 = smul.addr %s277, 4
        %s279 = scalar_lea.vmem %s1, %s278
        %s280 = smul.u32 32, %s21
        %p281 = scmp.lt.s32.totalorder %s20, 0
        %s282 = scalar_select %p281, %s20, 0
        %s283 = scalar_lea.vmem %s2, %s282
        %s284 = smul.u32 2, %s19
        %p285 = scmp.lt.s32.totalorder %s284, 1
        %s286 = scalar_select %p285, %s284, 1
        %p287 = scmp.lt.s32.totalorder %s20, 0
        %s288 = scalar_select %p287, %s20, 0
        %s289 = sadd.s32 %s288, %s286
        %s290 = smul.addr %s289, 4
        %s291 = scalar_lea.vmem %s3, %s290
        %s292 = smul.u32 2, %s19
        %p293 = scmp.eq.s32.totalorder %s21, 0
        // Predicated region
        $region71: #{_resnet_forward_impl.38} parent=65 // pred_check
          %p294 = pneg %p293
        $region72: #{_resnet_forward_impl.38} parent=65 // pred_check_branch
          %296 = sbr.rel (%p294) target = $region74
        $region73: #{_resnet_forward_impl.38} parent=65 // pred_region
          %297 = vst [vmem:[#allocation2] sm:$0xff] 0.0
          %298 = vst [vmem:[#allocation2 + $0x8] sm:$0xff] 0.0
        $region74: #{_resnet_forward_impl.38} parent=65 // pred_fallthru
          _
        %v299 = vld [vmem:[#allocation2] sm:$0xff]
        %v300 = vld [vmem:[#allocation2 + $0x8] sm:$0xff]
        %v301 = vld [vmem:[%s235] sm:$0xff]
        %v302 = vld [vmem:[%s235 + $0x8] sm:$0xff]
        %v303 = vld [vmem:[%s279] sm:$0xf]
        %v304 = vld [vmem:[%s279 + $0x4] sm:$0xf]
        %v305 = vld [vmem:[%s279 + $0x8] sm:$0xf]
        %v306 = vld [vmem:[%s279 + $0xc] sm:$0xf]
        %v307 = vld [vmem:[%s279 + $0x10] sm:$0xf]
        %v308 = vld [vmem:[%s279 + $0x14] sm:$0xf]
        %v309 = vld [vmem:[%s279 + $0x18] sm:$0xf]
        %v310 = vld [vmem:[%s279 + $0x1c] sm:$0xf]
        %v311 = vld [vmem:[%s279 + $0x20] sm:$0xf]
        %v312 = vld [vmem:[%s279 + $0x24] sm:$0xf]
        %v313 = vld [vmem:[%s279 + $0x28] sm:$0xf]
        %v314 = vld [vmem:[%s279 + $0x2c] sm:$0xf]
        %v315 = vld [vmem:[%s279 + $0x30] sm:$0xf]
        %v316 = vld [vmem:[%s279 + $0x34] sm:$0xf]
        %v317 = vld [vmem:[%s279 + $0x38] sm:$0xf]
        %v318 = vld [vmem:[%s279 + $0x3c] sm:$0xf]
        %v319 = vld [vmem:[%s279 + $0x40] sm:$0xf]
        %v320 = vld [vmem:[%s279 + $0x44] sm:$0xf]
        %v321 = vld [vmem:[%s279 + $0x48] sm:$0xf]
        %v322 = vld [vmem:[%s279 + $0x4c] sm:$0xf]
        %v323 = vld [vmem:[%s279 + $0x50] sm:$0xf]
        %v324 = vld [vmem:[%s279 + $0x54] sm:$0xf]
        %v325 = vld [vmem:[%s279 + $0x58] sm:$0xf]
        %v326 = vld [vmem:[%s279 + $0x5c] sm:$0xf]
        %v327 = vld [vmem:[%s279 + $0x60] sm:$0xf]
        %v328 = vld [vmem:[%s279 + $0x64] sm:$0xf]
        %v329 = vld [vmem:[%s279 + $0x68] sm:$0xf]
        %v330 = vld [vmem:[%s279 + $0x6c] sm:$0xf]
        %v331 = vld [vmem:[%s279 + $0x70] sm:$0xf]
        %v332 = vld [vmem:[%s279 + $0x74] sm:$0xf]
        %v333 = vld [vmem:[%s279 + $0x78] sm:$0xf]
        %v334 = vld [vmem:[%s279 + $0x7c] sm:$0xf]
        %v337 = vunpack.c.l.b16 %v301
        %v338 = vunpack.c.h.b16 %v301
        %v339 = vunpack.c.l.b16 %v302
        %v340 = vunpack.c.h.b16 %v302
        %v341 = vpack.c.b16 %v339, %v337
        %v342 = vpack.c.b16 %v340, %v338
        %v377 = vunpack.c.l.b16 %v303
        %v378 = vunpack.c.l.b16 %v304
        %v379 = vunpack.c.l.b16 %v305
        %v380 = vunpack.c.l.b16 %v306
        %v381 = vunpack.c.l.b16 %v307
        %v382 = vunpack.c.l.b16 %v308
        %v383 = vunpack.c.l.b16 %v309
        %v384 = vunpack.c.l.b16 %v310
        %v385 = vunpack.c.l.b16 %v311
        %v386 = vunpack.c.l.b16 %v312
        %v387 = vunpack.c.l.b16 %v313
        %v388 = vunpack.c.l.b16 %v314
        %v389 = vunpack.c.l.b16 %v315
        %v390 = vunpack.c.l.b16 %v316
        %v391 = vunpack.c.l.b16 %v317
        %v392 = vunpack.c.l.b16 %v318
        %v393 = vunpack.c.l.b16 %v319
        %v394 = vunpack.c.l.b16 %v320
        %v395 = vunpack.c.l.b16 %v321
        %v396 = vunpack.c.l.b16 %v322
        %v397 = vunpack.c.l.b16 %v323
        %v398 = vunpack.c.l.b16 %v324
        %v399 = vunpack.c.l.b16 %v325
        %v400 = vunpack.c.l.b16 %v326
        %v401 = vunpack.c.l.b16 %v327
        %v402 = vunpack.c.l.b16 %v328
        %v403 = vunpack.c.l.b16 %v329
        %v404 = vunpack.c.l.b16 %v330
        %v405 = vunpack.c.l.b16 %v331
        %v406 = vunpack.c.l.b16 %v332
        %v407 = vunpack.c.l.b16 %v333
        %v408 = vunpack.c.l.b16 %v334
        %v409 = vpack.c.b16 %v378, %v377
        %v410 = vpack.c.b16 %v380, %v379
        %v411 = vpack.c.b16 %v382, %v381
        %v412 = vpack.c.b16 %v384, %v383
        %v413 = vpack.c.b16 %v386, %v385
        %v414 = vpack.c.b16 %v388, %v387
        %v415 = vpack.c.b16 %v390, %v389
        %v416 = vpack.c.b16 %v392, %v391
        %v417 = vpack.c.b16 %v394, %v393
        %v418 = vpack.c.b16 %v396, %v395
        %v419 = vpack.c.b16 %v398, %v397
        %v420 = vpack.c.b16 %v400, %v399
        %v421 = vpack.c.b16 %v402, %v401
        %v422 = vpack.c.b16 %v404, %v403
        %v423 = vpack.c.b16 %v406, %v405
        %v424 = vpack.c.b16 %v408, %v407
        %441 = vmatpush.bf16.msra.mxu0 %v416
        %442 = vmatpush.bf16.msra.mxu0 %v415
        %443 = vmatpush.bf16.msra.mxu0 %v414
        %444 = vmatpush.bf16.msra.mxu0 %v413
        %445 = vmatpush.bf16.msra.mxu0 %v412
        %446 = vmatpush.bf16.msra.mxu0 %v411
        %447 = vmatpush.bf16.msra.mxu0 %v410
        %448 = vmatpush.bf16.msra.mxu0 %v409
        %449 = vmatmul.bf16.gmra.mxu0 %v341
        %v450 = vpop.f32.mrf.mxu0
        %v451 = vadd.f32 0.0, %v450
        %v452 = vpop.f32.mrf.mxu0
        %v453 = vadd.f32 0.0, %v452
        %454 = vdwg.mxu0
        %455 = vmatpush.bf16.msra.mxu0 %v424
        %456 = vmatpush.bf16.msra.mxu0 %v423
        %457 = vmatpush.bf16.msra.mxu0 %v422
        %458 = vmatpush.bf16.msra.mxu0 %v421
        %459 = vmatpush.bf16.msra.mxu0 %v420
        %460 = vmatpush.bf16.msra.mxu0 %v419
        %461 = vmatpush.bf16.msra.mxu0 %v418
        %462 = vmatpush.bf16.msra.mxu0 %v417
        %463 = vmatmul.bf16.gmra.mxu0 %v342
        %v464 = vpop.f32.mrf.mxu0
        %v465 = vadd.f32 %v451, %v464
        %v466 = vpop.f32.mrf.mxu0
        %v467 = vadd.f32 %v453, %v466
        %468 = vdwg.mxu0
        %v469 = vadd.f32 %v299, %v465
        %v470 = vadd.f32 %v300, %v467
        %471 = vst [vmem:[#allocation2] sm:$0xff] %v469
        %472 = vst [vmem:[#allocation2 + $0x8] sm:$0xff] %v470
        %p473 = scmp.eq.s32.totalorder %s21, 2
        // Predicated region
        $region75: #{_resnet_forward_impl.38} parent=65 // pred_check
          %p474 = pneg %p473
        $region76: #{_resnet_forward_impl.38} parent=65 // pred_check_branch
          %476 = sbr.rel (%p474) target = $region78
        $region77: #{_resnet_forward_impl.38} parent=65 // pred_region
          %v477 = vld [vmem:[#allocation2] sm:$0xff]
          %v478 = vld [vmem:[#allocation2 + $0x8] sm:$0xff]
          %v479 = vld [vmem:[%s283] sm:$0x1]
          %v481 = vperm.slane %v479, 0
          %v483 = vadd.f32 %v477, %v481
          %v484 = vadd.f32 %v478, %v481
          %v485 = vmax.f32 %v483, 0.0
          %v486 = vmax.f32 %v484, 0.0
          %v487 = vpack.c.bf16 %v485, %v485
          %v488 = vpack.c.bf16 %v486, %v486
          %489 = vst [vmem:[%s291] sm:$0xf] %v487
          %490 = vst [vmem:[%s291 + $0x4] sm:$0xf] %v488
        $region78: #{_resnet_forward_impl.38} parent=65 // pred_fallthru
          _
        %s491 = smul.u32 2, %s19
        %p492 = scmp.lt.s32.totalorder %s491, 1
        %s493 = scalar_select %p492, %s491, 1
        %p494 = scmp.lt.s32.totalorder %s20, 0
        %s495 = scalar_select %p494, %s20, 0
        %s496 = sadd.s32 %s495, %s493
        %s497 = smul.addr %s496, 4
        %s498 = scalar_lea.vmem %s3, %s497
        // Predicated region
        $region79: #{_resnet_forward_impl.38} parent=65 // pred_check
          %p499 = pneg %p135
        $region80: #{_resnet_forward_impl.38} parent=65 // pred_check_branch
          %501 = sbr.rel (%p499) target = $region82
        $region81: #{_resnet_forward_impl.38} parent=65 // pred_region
          %s502 = smul.u32 2, %s19
        $region82: #{_resnet_forward_impl.38} parent=65 // pred_fallthru
          _
        // Predicated region
        $region83: #{_resnet_forward_impl.38} parent=65 // pred_check
          %p503 = pneg %p135
        $region84: #{_resnet_forward_impl.38} parent=65 // pred_check_branch
          %505 = sbr.rel (%p503) target = $region86
        $region85: #{_resnet_forward_impl.38} parent=65 // pred_region
          %s506 = smul.u32 2, %s19
          %p507 = scmp.lt.s32.totalorder %s506, 1
          %s508 = scalar_select %p507, %s506, 1
          %p509 = scmp.lt.s32.totalorder %s20, 0
          %s510 = scalar_select %p509, %s20, 0
          %s511 = sadd.s32 %s510, %s508
          %s512 = smul.addr %s511, 4
          %s513 = scalar_lea.vmem %s3, %s512
        $region86: #{_resnet_forward_impl.38} parent=65 // pred_fallthru
          _
      $region66: #{_resnet_forward_impl.38} parent=5 // pred_fallthru
        _
      %p514 = scmp.le.s32.totalorder 2, %s9
      // Predicated region
      $region87: #{_resnet_forward_impl.38} parent=5 // pred_check
        %p515 = pneg %p514
      $region88: #{_resnet_forward_impl.38} parent=5 // pred_check_branch
        %517 = sbr.rel (%p515) target = $region90
      $region89: #{_resnet_forward_impl.38} parent=5 // pred_region
        %s518 = ssub.s32 %s9, 2
      $region90: #{_resnet_forward_impl.38} parent=5 // pred_fallthru
        _
    $region6: #{_resnet_forward_impl.38} parent=1 // loop_footer
      %s13 = sadd.s32 1, %s9
    $region7: #{_resnet_forward_impl.38} parent=1 // loop_footer_branch
      %8 = sbr.rel target = $region3
    $region8: #{_resnet_forward_impl.38} parent=1 // loop_exit
      _

// kernel: _resnet_forward_impl.37
$region0: #{_resnet_forward_impl.37}
  #allocation0 [shape = 'u32[]', space=smem, size = 0x4, offset = 0x4, fixed_abs, tag = 'smem constant byte address 0x4 - core index']
  #allocation1 [shape = 'u32[72,128]{1,0:T(1,128)}', space=vmem, size = 0x9000, scoped, tag = 'internal scratch']
  #allocation2 [shape = 'f32[16,128]{1,0:T(8,128)}', space=vmem, size = 0x2000, scoped, tag = 'scratch operand']
  %s0 = inlined_call_operand.vmem [shape: bf16[16,768], index: 0, kind: input, shape index: {}]
  %s1 = inlined_call_operand.vmem [shape: bf16[768,128], index: 1, kind: input, shape index: {}]
  %s2 = inlined_call_operand.vmem [shape: f32[1,128], index: 2, kind: input, shape index: {}]
  %s3 = inlined_call_operand.vmem [shape: bf16[16,128], index: 3, kind: input, shape index: {}]
  %s4 = inlined_call_operand.vmem [shape: bf16[16,128], index: 4, kind: output, shape index: {}]
  %s5 = sld [smem:[#allocation0]]
  $region95: #{_resnet_forward_impl.37} parent=0
    _
  %s7 = ssub.s32 1, %s5
  %s8 = scalar_select 0, %s7, %s5
  $region1: #{_resnet_forward_impl.37} parent=0
    #allocation3 [shape = 'u8[16384]{0}', space=vmem, size = 0x4000, scoped, tag = 'input window, operand 0']
    loop: start=0, step=1, limit=5
    $region2: #{_resnet_forward_impl.37} parent=1 // loop_pre_header
      _
    $region3: #{_resnet_forward_impl.37} parent=1 // loop_header
      %s10 = sphi 0, %s14
      %p11 = scmp.ge.s32.totalorder %s10, 5
      %s17 = sphi 0, %s36
      %s18 = sphi 0, %s32
      %s19 = sphi 0, %s28
      %s20 = sphi 0, %s17
      %s21 = sphi 0, %s18
      %s22 = sphi 0, %s19
      %s23 = sphi 0, %s20
      %s24 = sphi 0, %s21
      %s25 = sphi 0, %s22
      %s41 = sphi 0, %s43
      %s44 = sphi 0, %s41
      %s45 = sphi 0, %s44
      %s61 = sphi 0, %s45
      %s69 = sphi 0, %s71
      %s72 = sphi 0, %s69
      %s73 = sphi 0, %s72
      %s89 = sphi 0, %s73
      %s95 = sphi 0, %s97
      %s98 = sphi 0, %s95
      %s99 = sphi 0, %s98
      %s115 = sphi 0, %s99
      %s123 = sphi 0, %s125
      %s126 = sphi 0, %s123
      %s127 = sphi 0, %s126
      %s143 = sphi 0, %s127
      %s151 = sphi 0, %s153
      %s154 = sphi 0, %s151
      %s155 = sphi 0, %s154
      %s171 = sphi 0, %s155
    $region4: #{_resnet_forward_impl.37} parent=1 // loop_header_branch
      %13 = sbr.rel (%p11) target = $region8
    $region5: #{_resnet_forward_impl.37} parent=1 // loop_body
      %s15 = ssub.s32 %s10, 1
      %s16 = ssub.s32 %s10, 2
      %s26 = sadd.s32 1, %s19
      %p27 = scmp.ge.s32.totalorder %s26, 3
      %s28 = scalar_select %p27, 0, %s26
      %s29 = sadd.s32 1, %s18
      %s30 = scalar_select %p27, %s29, %s18
      %p31 = scmp.ge.s32.totalorder %s30, 1
      %s32 = scalar_select %p31, 0, %s30
      %s33 = sadd.s32 1, %s17
      %s34 = scalar_select %p31, %s33, %s17
      %p35 = scmp.ge.s32.totalorder %s34, 1
      %s36 = scalar_select %p35, 0, %s34
      %s37 = ssub.s32 %s17, %s36
      %s38 = ssub.s32 %s19, %s28
      %s39 = sor.u32 %s37, %s38
      %p40 = scmp.eq.s32.totalorder %s39, 0
      %s42 = sadd.s32 %s41, 1
      %s43 = scalar_select %p40, %s41, %s42
      %p46 = pneg %p40
      %p47 = scmp.eq.s32.totalorder %s10, 2
      %p48 = por %p46, %p47
      %p49 = scmp.ne.s32.totalorder %s41, %s44
      %p50 = scmp.eq.s32.totalorder %s10, 0
      %p51 = por %p49, %p50
      %p52 = scmp.ne.s32.totalorder %s41, %s44
      %p53 = scmp.eq.s32.totalorder %s15, 2
      %p54 = por %p52, %p53
      %p55 = scmp.ne.s32.totalorder %s44, %s45
      %p56 = scmp.eq.s32.totalorder %s15, 0
      %p57 = por %p55, %p56
      %p58 = scmp.ne.s32.totalorder %s44, %s45
      %p59 = scmp.eq.s32.totalorder %s16, 2
      %p60 = por %p58, %p59
      %p62 = scmp.ne.s32.totalorder %s45, %s61
      %p63 = scmp.eq.s32.totalorder %s16, 0
      %p64 = por %p62, %p63
      %s65 = ssub.s32 %s19, %s28
      %s66 = ssub.s32 %s18, %s32
      %s67 = sor.u32 %s65, %s66
      %p68 = scmp.eq.s32.totalorder %s67, 0
      %s70 = sadd.s32 %s69, 1
      %s71 = scalar_select %p68, %s69, %s70
      %p74 = pneg %p68
      %p75 = scmp.eq.s32.totalorder %s10, 2
      %p76 = por %p74, %p75
      %p77 = scmp.ne.s32.totalorder %s69, %s72
      %p78 = scmp.eq.s32.totalorder %s10, 0
      %p79 = por %p77, %p78
      %p80 = scmp.ne.s32.totalorder %s69, %s72
      %p81 = scmp.eq.s32.totalorder %s15, 2
      %p82 = por %p80, %p81
      %p83 = scmp.ne.s32.totalorder %s72, %s73
      %p84 = scmp.eq.s32.totalorder %s15, 0
      %p85 = por %p83, %p84
      %p86 = scmp.ne.s32.totalorder %s72, %s73
      %p87 = scmp.eq.s32.totalorder %s16, 2
      %p88 = por %p86, %p87
      %p90 = scmp.ne.s32.totalorder %s73, %s89
      %p91 = scmp.eq.s32.totalorder %s16, 0
      %p92 = por %p90, %p91
      %s93 = ssub.s32 %s18, %s32
      %p94 = scmp.eq.s32.totalorder %s93, 0
      %s96 = sadd.s32 %s95, 1
      %s97 = scalar_select %p94, %s95, %s96
      %p100 = pneg %p94
      %p101 = scmp.eq.s32.totalorder %s10, 2
      %p102 = por %p100, %p101
      %p103 = scmp.ne.s32.totalorder %s95, %s98
      %p104 = scmp.eq.s32.totalorder %s10, 0
      %p105 = por %p103, %p104
      %p106 = scmp.ne.s32.totalorder %s95, %s98
      %p107 = scmp.eq.s32.totalorder %s15, 2
      %p108 = por %p106, %p107
      %p109 = scmp.ne.s32.totalorder %s98, %s99
      %p110 = scmp.eq.s32.totalorder %s15, 0
      %p111 = por %p109, %p110
      %p112 = scmp.ne.s32.totalorder %s98, %s99
      %p113 = scmp.eq.s32.totalorder %s16, 2
      %p114 = por %p112, %p113
      %p116 = scmp.ne.s32.totalorder %s99, %s115
      %p117 = scmp.eq.s32.totalorder %s16, 0
      %p118 = por %p116, %p117
      %s119 = ssub.s32 %s17, %s36
      %s120 = ssub.s32 %s18, %s32
      %s121 = sor.u32 %s119, %s120
      %p122 = scmp.eq.s32.totalorder %s121, 0
      %s124 = sadd.s32 %s123, 1
      %s125 = scalar_select %p122, %s123, %s124
      %p128 = pneg %p122
      %p129 = scmp.eq.s32.totalorder %s10, 2
      %p130 = por %p128, %p129
      %p131 = scmp.ne.s32.totalorder %s123, %s126
      %p132 = scmp.eq.s32.totalorder %s10, 0
      %p133 = por %p131, %p132
      %p134 = scmp.ne.s32.totalorder %s123, %s126
      %p135 = scmp.eq.s32.totalorder %s15, 2
      %p136 = por %p134, %p135
      %p137 = scmp.ne.s32.totalorder %s126, %s127
      %p138 = scmp.eq.s32.totalorder %s15, 0
      %p139 = por %p137, %p138
      %p140 = scmp.ne.s32.totalorder %s126, %s127
      %p141 = scmp.eq.s32.totalorder %s16, 2
      %p142 = por %p140, %p141
      %p144 = scmp.ne.s32.totalorder %s127, %s143
      %p145 = scmp.eq.s32.totalorder %s16, 0
      %p146 = por %p144, %p145
      %s147 = ssub.s32 %s17, %s36
      %s148 = ssub.s32 %s18, %s32
      %s149 = sor.u32 %s147, %s148
      %p150 = scmp.eq.s32.totalorder %s149, 0
      %s152 = sadd.s32 %s151, 1
      %s153 = scalar_select %p150, %s151, %s152
      %p156 = pneg %p150
      %p157 = scmp.eq.s32.totalorder %s10, 2
      %p158 = por %p156, %p157
      %p159 = scmp.ne.s32.totalorder %s151, %s154
      %p160 = scmp.eq.s32.totalorder %s10, 0
      %p161 = por %p159, %p160
      %p162 = scmp.ne.s32.totalorder %s151, %s154
      %p163 = scmp.eq.s32.totalorder %s15, 2
      %p164 = por %p162, %p163
      %p165 = scmp.ne.s32.totalorder %s154, %s155
      %p166 = scmp.eq.s32.totalorder %s15, 0
      %p167 = por %p165, %p166
      %p168 = scmp.ne.s32.totalorder %s154, %s155
      %p169 = scmp.eq.s32.totalorder %s16, 2
      %p170 = por %p168, %p169
      %p172 = scmp.ne.s32.totalorder %s155, %s171
      %p173 = scmp.eq.s32.totalorder %s16, 0
      %p174 = por %p172, %p173
      %p175 = scmp.le.s32.totalorder 1, %s10
      %p176 = scmp.lt.s32.totalorder %s10, 4
      %p177 = pnand %p175, %p176
      %p178 = pneg %p177
      // Predicated region
      $region9: #{_resnet_forward_impl.37} parent=5 // pred_check
        _
      $region10: #{_resnet_forward_impl.37} parent=5 // pred_check_branch
        %180 = sbr.rel (%p177) target = $region12
      $region11: #{_resnet_forward_impl.37} parent=5 // pred_region
        %s181 = ssub.s32 %s10, 1
        // Predicated region
        $region13: #{_resnet_forward_impl.37} parent=11 // pred_check
          %p182 = pneg %p111
        $region14: #{_resnet_forward_impl.37} parent=11 // pred_check_branch
          %184 = sbr.rel (%p182) target = $region16
        $region15: #{_resnet_forward_impl.37} parent=11 // pred_region
          %p185 = scmp.lt.s32.totalorder %s21, 0
          %s186 = scalar_select %p185, %s21, 0
          %s187 = scalar_lea.vmem %s2, %s186
        $region16: #{_resnet_forward_impl.37} parent=11 // pred_fallthru
          _
        // Predicated region
        $region17: #{_resnet_forward_impl.37} parent=11 // pred_check
          %p188 = pneg %p139
        $region18: #{_resnet_forward_impl.37} parent=11 // pred_check_branch
          %190 = sbr.rel (%p188) target = $region20
        $region19: #{_resnet_forward_impl.37} parent=11 // pred_region
          %s191 = smul.u32 2, %s20
          %p192 = scmp.lt.s32.totalorder %s191, 1
          %s193 = scalar_select %p192, %s191, 1
          %p194 = scmp.lt.s32.totalorder %s21, 0
          %s195 = scalar_select %p194, %s21, 0
          %s196 = sadd.s32 %s195, %s193
          %s197 = smul.addr %s196, 4
          %s198 = scalar_lea.vmem %s3, %s197
          %s199 = smul.u32 2, %s20
        $region20: #{_resnet_forward_impl.37} parent=11 // pred_fallthru
          _
      $region12: #{_resnet_forward_impl.37} parent=5 // pred_fallthru
        _
      %p200 = scmp.lt.s32.totalorder %s10, 3
      // Predicated region
      $region21: #{_resnet_forward_impl.37} parent=5 // pred_check
        %p201 = pneg %p200
      $region22: #{_resnet_forward_impl.37} parent=5 // pred_check_branch
        %203 = sbr.rel (%p201) target = $region24
      $region23: #{_resnet_forward_impl.37} parent=5 // pred_region
        // Predicated region
        $region25: #{_resnet_forward_impl.37} parent=23 // pred_check
          %p204 = pneg %p51
        $region26: #{_resnet_forward_impl.37} parent=23 // pred_check_branch
          %206 = sbr.rel (%p204) target = $region28
        $region27: #{_resnet_forward_impl.37} parent=23 // pred_region
          %s207 = sand.u32 %s41, 1
          %s208 = sand.u32 %s41, 1
          %s209 = smul.addr %s208, 16
          %s210 = scalar_lea.vmem [#allocation3], %s209
          %s211 = smul.u32 2, %s17
          %s212 = smul.u32 2, %s19
          %s213 = smul.addr %s211, 6
          %s214 = sadd.s32 %s212, %s213
          %s215 = smul.addr %s214, 4
          %s216 = scalar_lea.vmem %s0, %s215
          // Predicated region
          $region29: #{_resnet_forward_impl.37} parent=27 // pred_check
            _
          $region30: #{_resnet_forward_impl.37} parent=27 // pred_check_branch
            %218 = sbr.rel (0) target = $region32
          $region31: #{_resnet_forward_impl.37} parent=27 // pred_region
            // Predicated region
            $region33: #{_resnet_forward_impl.37} parent=31 // pred_check
              _
            $region34: #{_resnet_forward_impl.37} parent=31 // pred_check_branch
              %220 = sbr.rel (0) target = $region36
            $region35: #{_resnet_forward_impl.37} parent=31 // pred_region
              // Predicated region
              $region48: #{_resnet_forward_impl.37} parent=35 // pred_check
                _
              $region49: #{_resnet_forward_impl.37} parent=35 // pred_check_branch
                %238 = sbr.rel (0) target = $region51
              $region50: #{_resnet_forward_impl.37} parent=35 // pred_region
                loop: start=0, step=1, limit=1
                $region52: #{_resnet_forward_impl.37} parent=50 // loop_pre_header
                  _
                $region53: #{_resnet_forward_impl.37} parent=50 // loop_header
                  %s240 = sphi 0, %s244
                  %p241 = scmp.ge.s32.totalorder %s240, 1
                  %s245 = sphi %s216, %s216
                  %s246 = sphi %s210, %s210
                $region54: #{_resnet_forward_impl.37} parent=50 // loop_header_branch
                  %243 = sbr.rel (%p241) target = $region58
                $region55: #{_resnet_forward_impl.37} parent=50 // loop_body
                  %v247 = vld [vmem:[%s245] sm:$0xff]
                  %248 = vst [vmem:[%s246] sm:$0xff] %v247
                  %v249 = vld [vmem:[%s245 + $0x18] sm:$0xff]
                  %250 = vst [vmem:[%s246 + $0x8] sm:$0xff] %v249
                $region56: #{_resnet_forward_impl.37} parent=50 // loop_footer
                  %s244 = sadd.s32 1, %s240
                $region57: #{_resnet_forward_impl.37} parent=50 // loop_footer_branch
                  %239 = sbr.rel target = $region53
                $region58: #{_resnet_forward_impl.37} parent=50 // loop_exit
                  _
              $region51: #{_resnet_forward_impl.37} parent=35 // pred_fallthru
                _
              // Predicated region
              $region59: #{_resnet_forward_impl.37} parent=35 // pred_check
                _
              $region60: #{_resnet_forward_impl.37} parent=35 // pred_check_branch
                %252 = sbr.rel target = $region62
              $region61: #{_resnet_forward_impl.37} parent=35 // pred_region
                _
              $region62: #{_resnet_forward_impl.37} parent=35 // pred_fallthru
                _
            $region36: #{_resnet_forward_impl.37} parent=31 // pred_fallthru
              _
            // Predicated region
            $region37: #{_resnet_forward_impl.37} parent=31 // pred_check
              _
            $region38: #{_resnet_forward_impl.37} parent=31 // pred_check_branch
              %222 = sbr.rel target = $region40
            $region39: #{_resnet_forward_impl.37} parent=31 // pred_region
              %s224 = ssub.s32 256, 1
              loop: start=0, step=1, limit=1
              $region41: #{_resnet_forward_impl.37} parent=39 // loop_pre_header
                _
              $region42: #{_resnet_forward_impl.37} parent=39 // loop_header
                %s226 = sphi 0, %s230
                %p227 = scmp.ge.s32.totalorder %s226, 1
                %s231 = sphi %s216, %s216
                %s232 = sphi %s210, %s210
              $region43: #{_resnet_forward_impl.37} parent=39 // loop_header_branch
                %229 = sbr.rel (%p227) target = $region47
              $region44: #{_resnet_forward_impl.37} parent=39 // loop_body
                %v233 = vld [vmem:[%s231] sm:%s224]
                %234 = vst [vmem:[%s232] sm:%s224] %v233
                %v235 = vld [vmem:[%s231 + $0x18] sm:%s224]
                %236 = vst [vmem:[%s232 + $0x8] sm:%s224] %v235
              $region45: #{_resnet_forward_impl.37} parent=39 // loop_footer
                %s230 = sadd.s32 1, %s226
              $region46: #{_resnet_forward_impl.37} parent=39 // loop_footer_branch
                %225 = sbr.rel target = $region42
              $region47: #{_resnet_forward_impl.37} parent=39 // loop_exit
                _
            $region40: #{_resnet_forward_impl.37} parent=31 // pred_fallthru
              _
          $region32: #{_resnet_forward_impl.37} parent=27 // pred_fallthru
            _
          %253 = vnop
        $region28: #{_resnet_forward_impl.37} parent=23 // pred_fallthru
          _
        // Predicated region
        $region63: #{_resnet_forward_impl.37} parent=23 // pred_check
          %p254 = pneg %p79
        $region64: #{_resnet_forward_impl.37} parent=23 // pred_check_branch
          %256 = sbr.rel (%p254) target = $region66
        $region65: #{_resnet_forward_impl.37} parent=23 // pred_region
          %s257 = smul.u32 32, %s19
          %p258 = scmp.lt.s32.totalorder %s257, 95
          %s259 = scalar_select %p258, %s257, 95
          %p260 = scmp.lt.s32.totalorder %s18, 0
          %s261 = scalar_select %p260, %s18, 0
          %s262 = sadd.s32 %s261, %s259
          %s263 = smul.addr %s262, 4
          %s264 = scalar_lea.vmem %s1, %s263
          %s265 = smul.u32 32, %s19
        $region66: #{_resnet_forward_impl.37} parent=23 // pred_fallthru
          _
      $region24: #{_resnet_forward_impl.37} parent=5 // pred_fallthru
        _
      %p266 = scmp.le.s32.totalorder 1, %s10
      %p267 = scmp.lt.s32.totalorder %s10, 4
      %p268 = pnand %p266, %p267
      %p269 = pneg %p268
      // Predicated region
      $region67: #{_resnet_forward_impl.37} parent=5 // pred_check
        _
      $region68: #{_resnet_forward_impl.37} parent=5 // pred_check_branch
        %271 = sbr.rel (%p268) target = $region70
      $region69: #{_resnet_forward_impl.37} parent=5 // pred_region
        %s272 = ssub.s32 %s10, 1
        %s273 = sand.u32 %s44, 1
        %s274 = sand.u32 %s44, 1
        %s275 = smul.addr %s274, 16
        %s276 = scalar_lea.vmem [#allocation3], %s275
        // Predicated region
        $region71: #{_resnet_forward_impl.37} parent=69 // pred_check
          %p277 = pneg %p57
        $region72: #{_resnet_forward_impl.37} parent=69 // pred_check_branch
          %279 = sbr.rel (%p277) target = $region74
        $region73: #{_resnet_forward_impl.37} parent=69 // pred_region
          _
        $region74: #{_resnet_forward_impl.37} parent=69 // pred_fallthru
          _
        %s280 = sand.u32 %s44, 1
        %s281 = sand.u32 %s44, 1
        %s282 = smul.addr %s281, 16
        %s283 = scalar_lea.vmem [#allocation3], %s282
        %p284 = pneg %p57
        %p285 = pneg %p54
        %s286 = smul.u32 32, %s22
        %p287 = scmp.lt.s32.totalorder %s286, 95
        %s288 = scalar_select %p287, %s286, 95
        %p289 = scmp.lt.s32.totalorder %s21, 0
        %s290 = scalar_select %p289, %s21, 0
        %s291 = sadd.s32 %s290, %s288
        %s292 = smul.addr %s291, 4
        %s293 = scalar_lea.vmem %s1, %s292
        %p294 = pneg %p85
        %p295 = pneg %p82
        %p296 = scmp.lt.s32.totalorder %s21, 0
        %s297 = scalar_select %p296, %s21, 0
        %s298 = scalar_lea.vmem %s2, %s297
        %p299 = pneg %p111
        %p300 = pneg %p108
        %s301 = smul.u32 2, %s20
        %p302 = scmp.lt.s32.totalorder %s301, 1
        %s303 = scalar_select %p302, %s301, 1
        %p304 = scmp.lt.s32.totalorder %s21, 0
        %s305 = scalar_select %p304, %s21, 0
        %s306 = sadd.s32 %s305, %s303
        %s307 = smul.addr %s306, 4
        %s308 = scalar_lea.vmem %s3, %s307
        %p309 = pneg %p139
        %p310 = pneg %p136
        %p311 = pneg %p167
        %p312 = pneg %p164
        %s313 = smul.u32 2, %s20
        %p314 = scmp.lt.s32.totalorder %s313, 1
        %s315 = scalar_select %p314, %s313, 1
        %p316 = scmp.lt.s32.totalorder %s21, 0
        %s317 = scalar_select %p316, %s21, 0
        %s318 = sadd.s32 %s317, %s315
        %s319 = smul.addr %s318, 4
        %s320 = scalar_lea.vmem %s4, %s319
        %s321 = smul.u32 2, %s20
        %s322 = smul.u32 2, %s22
        %s323 = smul.u32 32, %s22
        %p324 = scmp.lt.s32.totalorder %s323, 95
        %s325 = scalar_select %p324, %s323, 95
        %p326 = scmp.lt.s32.totalorder %s21, 0
        %s327 = scalar_select %p326, %s21, 0
        %s328 = sadd.s32 %s327, %s325
        %s329 = smul.addr %s328, 4
        %s330 = scalar_lea.vmem %s1, %s329
        %s331 = smul.u32 32, %s22
        %p332 = scmp.lt.s32.totalorder %s21, 0
        %s333 = scalar_select %p332, %s21, 0
        %s334 = scalar_lea.vmem %s2, %s333
        %s335 = smul.u32 2, %s20
        %p336 = scmp.lt.s32.totalorder %s335, 1
        %s337 = scalar_select %p336, %s335, 1
        %p338 = scmp.lt.s32.totalorder %s21, 0
        %s339 = scalar_select %p338, %s21, 0
        %s340 = sadd.s32 %s339, %s337
        %s341 = smul.addr %s340, 4
        %s342 = scalar_lea.vmem %s3, %s341
        %s343 = smul.u32 2, %s20
        %s344 = smul.u32 2, %s20
        %p345 = scmp.lt.s32.totalorder %s344, 1
        %s346 = scalar_select %p345, %s344, 1
        %p347 = scmp.lt.s32.totalorder %s21, 0
        %s348 = scalar_select %p347, %s21, 0
        %s349 = sadd.s32 %s348, %s346
        %s350 = smul.addr %s349, 4
        %s351 = scalar_lea.vmem %s4, %s350
        %s352 = smul.u32 2, %s20
        %p353 = scmp.eq.s32.totalorder %s22, 0
        // Predicated region
        $region75: #{_resnet_forward_impl.37} parent=69 // pred_check
          %p354 = pneg %p353
        $region76: #{_resnet_forward_impl.37} parent=69 // pred_check_branch
          %356 = sbr.rel (%p354) target = $region78
        $region77: #{_resnet_forward_impl.37} parent=69 // pred_region
          %357 = vst [vmem:[#allocation2] sm:$0xff] 0.0
          %358 = vst [vmem:[#allocation2 + $0x8] sm:$0xff] 0.0
        $region78: #{_resnet_forward_impl.37} parent=69 // pred_fallthru
          _
        %v359 = vld [vmem:[#allocation2] sm:$0xff]
        %v360 = vld [vmem:[#allocation2 + $0x8] sm:$0xff]
        %v361 = vld [vmem:[%s276] sm:$0xff]
        %v362 = vld [vmem:[%s276 + $0x8] sm:$0xff]
        %v363 = vld [vmem:[%s330] sm:$0xf]
        %v364 = vld [vmem:[%s330 + $0x4] sm:$0xf]
        %v365 = vld [vmem:[%s330 + $0x8] sm:$0xf]
        %v366 = vld [vmem:[%s330 + $0xc] sm:$0xf]
        %v367 = vld [vmem:[%s330 + $0x10] sm:$0xf]
        %v368 = vld [vmem:[%s330 + $0x14] sm:$0xf]
        %v369 = vld [vmem:[%s330 + $0x18] sm:$0xf]
        %v370 = vld [vmem:[%s330 + $0x1c] sm:$0xf]
        %v371 = vld [vmem:[%s330 + $0x20] sm:$0xf]
        %v372 = vld [vmem:[%s330 + $0x24] sm:$0xf]
        %v373 = vld [vmem:[%s330 + $0x28] sm:$0xf]
        %v374 = vld [vmem:[%s330 + $0x2c] sm:$0xf]
        %v375 = vld [vmem:[%s330 + $0x30] sm:$0xf]
        %v376 = vld [vmem:[%s330 + $0x34] sm:$0xf]
        %v377 = vld [vmem:[%s330 + $0x38] sm:$0xf]
        %v378 = vld [vmem:[%s330 + $0x3c] sm:$0xf]
        %v379 = vld [vmem:[%s330 + $0x40] sm:$0xf]
        %v380 = vld [vmem:[%s330 + $0x44] sm:$0xf]
        %v381 = vld [vmem:[%s330 + $0x48] sm:$0xf]
        %v382 = vld [vmem:[%s330 + $0x4c] sm:$0xf]
        %v383 = vld [vmem:[%s330 + $0x50] sm:$0xf]
        %v384 = vld [vmem:[%s330 + $0x54] sm:$0xf]
        %v385 = vld [vmem:[%s330 + $0x58] sm:$0xf]
        %v386 = vld [vmem:[%s330 + $0x5c] sm:$0xf]
        %v387 = vld [vmem:[%s330 + $0x60] sm:$0xf]
        %v388 = vld [vmem:[%s330 + $0x64] sm:$0xf]
        %v389 = vld [vmem:[%s330 + $0x68] sm:$0xf]
        %v390 = vld [vmem:[%s330 + $0x6c] sm:$0xf]
        %v391 = vld [vmem:[%s330 + $0x70] sm:$0xf]
        %v392 = vld [vmem:[%s330 + $0x74] sm:$0xf]
        %v393 = vld [vmem:[%s330 + $0x78] sm:$0xf]
        %v394 = vld [vmem:[%s330 + $0x7c] sm:$0xf]
        %v397 = vunpack.c.l.b16 %v361
        %v398 = vunpack.c.h.b16 %v361
        %v399 = vunpack.c.l.b16 %v362
        %v400 = vunpack.c.h.b16 %v362
        %v401 = vpack.c.b16 %v399, %v397
        %v402 = vpack.c.b16 %v400, %v398
        %v437 = vunpack.c.l.b16 %v363
        %v438 = vunpack.c.l.b16 %v364
        %v439 = vunpack.c.l.b16 %v365
        %v440 = vunpack.c.l.b16 %v366
        %v441 = vunpack.c.l.b16 %v367
        %v442 = vunpack.c.l.b16 %v368
        %v443 = vunpack.c.l.b16 %v369
        %v444 = vunpack.c.l.b16 %v370
        %v445 = vunpack.c.l.b16 %v371
        %v446 = vunpack.c.l.b16 %v372
        %v447 = vunpack.c.l.b16 %v373
        %v448 = vunpack.c.l.b16 %v374
        %v449 = vunpack.c.l.b16 %v375
        %v450 = vunpack.c.l.b16 %v376
        %v451 = vunpack.c.l.b16 %v377
        %v452 = vunpack.c.l.b16 %v378
        %v453 = vunpack.c.l.b16 %v379
        %v454 = vunpack.c.l.b16 %v380
        %v455 = vunpack.c.l.b16 %v381
        %v456 = vunpack.c.l.b16 %v382
        %v457 = vunpack.c.l.b16 %v383
        %v458 = vunpack.c.l.b16 %v384
        %v459 = vunpack.c.l.b16 %v385
        %v460 = vunpack.c.l.b16 %v386
        %v461 = vunpack.c.l.b16 %v387
        %v462 = vunpack.c.l.b16 %v388
        %v463 = vunpack.c.l.b16 %v389
        %v464 = vunpack.c.l.b16 %v390
        %v465 = vunpack.c.l.b16 %v391
        %v466 = vunpack.c.l.b16 %v392
        %v467 = vunpack.c.l.b16 %v393
        %v468 = vunpack.c.l.b16 %v394
        %v469 = vpack.c.b16 %v438, %v437
        %v470 = vpack.c.b16 %v440, %v439
        %v471 = vpack.c.b16 %v442, %v441
        %v472 = vpack.c.b16 %v444, %v443
        %v473 = vpack.c.b16 %v446, %v445
        %v474 = vpack.c.b16 %v448, %v447
        %v475 = vpack.c.b16 %v450, %v449
        %v476 = vpack.c.b16 %v452, %v451
        %v477 = vpack.c.b16 %v454, %v453
        %v478 = vpack.c.b16 %v456, %v455
        %v479 = vpack.c.b16 %v458, %v457
        %v480 = vpack.c.b16 %v460, %v459
        %v481 = vpack.c.b16 %v462, %v461
        %v482 = vpack.c.b16 %v464, %v463
        %v483 = vpack.c.b16 %v466, %v465
        %v484 = vpack.c.b16 %v468, %v467
        %501 = vmatpush.bf16.msra.mxu0 %v476
        %502 = vmatpush.bf16.msra.mxu0 %v475
        %503 = vmatpush.bf16.msra.mxu0 %v474
        %504 = vmatpush.bf16.msra.mxu0 %v473
        %505 = vmatpush.bf16.msra.mxu0 %v472
        %506 = vmatpush.bf16.msra.mxu0 %v471
        %507 = vmatpush.bf16.msra.mxu0 %v470
        %508 = vmatpush.bf16.msra.mxu0 %v469
        %509 = vmatmul.bf16.gmra.mxu0 %v401
        %v510 = vpop.f32.mrf.mxu0
        %v511 = vadd.f32 0.0, %v510
        %v512 = vpop.f32.mrf.mxu0
        %v513 = vadd.f32 0.0, %v512
        %514 = vdwg.mxu0
        %515 = vmatpush.bf16.msra.mxu0 %v484
        %516 = vmatpush.bf16.msra.mxu0 %v483
        %517 = vmatpush.bf16.msra.mxu0 %v482
        %518 = vmatpush.bf16.msra.mxu0 %v481
        %519 = vmatpush.bf16.msra.mxu0 %v480
        %520 = vmatpush.bf16.msra.mxu0 %v479
        %521 = vmatpush.bf16.msra.mxu0 %v478
        %522 = vmatpush.bf16.msra.mxu0 %v477
        %523 = vmatmul.bf16.gmra.mxu0 %v402
        %v524 = vpop.f32.mrf.mxu0
        %v525 = vadd.f32 %v511, %v524
        %v526 = vpop.f32.mrf.mxu0
        %v527 = vadd.f32 %v513, %v526
        %528 = vdwg.mxu0
        %v529 = vadd.f32 %v359, %v525
        %v530 = vadd.f32 %v360, %v527
        %531 = vst [vmem:[#allocation2] sm:$0xff] %v529
        %532 = vst [vmem:[#allocation2 + $0x8] sm:$0xff] %v530
        %p533 = scmp.eq.s32.totalorder %s22, 2
        // Predicated region
        $region79: #{_resnet_forward_impl.37} parent=69 // pred_check
          %p534 = pneg %p533
        $region80: #{_resnet_forward_impl.37} parent=69 // pred_check_branch
          %536 = sbr.rel (%p534) target = $region82
        $region81: #{_resnet_forward_impl.37} parent=69 // pred_region
          %v537 = vld [vmem:[#allocation2] sm:$0xff]
          %v538 = vld [vmem:[#allocation2 + $0x8] sm:$0xff]
          %v539 = vld [vmem:[%s334] sm:$0x1]
          %v541 = vperm.slane %v539, 0
          %v543 = vadd.f32 %v537, %v541
          %v544 = vadd.f32 %v538, %v541
          %v545 = vld [vmem:[%s342] sm:$0xf]
          %v546 = vld [vmem:[%s342 + $0x4] sm:$0xf]
          %v547 = vunpack.c.l.bf16 %v545
          %v548 = vunpack.c.l.bf16 %v546
          %v549 = vadd.f32 %v543, %v547
          %v550 = vadd.f32 %v544, %v548
          %v551 = vmax.f32 %v549, 0.0
          %v552 = vmax.f32 %v550, 0.0
          %v553 = vpack.c.bf16 %v551, %v551
          %v554 = vpack.c.bf16 %v552, %v552
          %555 = vst [vmem:[%s351] sm:$0xf] %v553
          %556 = vst [vmem:[%s351 + $0x4] sm:$0xf] %v554
        $region82: #{_resnet_forward_impl.37} parent=69 // pred_fallthru
          _
        %s557 = smul.u32 2, %s20
        %p558 = scmp.lt.s32.totalorder %s557, 1
        %s559 = scalar_select %p558, %s557, 1
        %p560 = scmp.lt.s32.totalorder %s21, 0
        %s561 = scalar_select %p560, %s21, 0
        %s562 = sadd.s32 %s561, %s559
        %s563 = smul.addr %s562, 4
        %s564 = scalar_lea.vmem %s4, %s563
        // Predicated region
        $region83: #{_resnet_forward_impl.37} parent=69 // pred_check
          %p565 = pneg %p164
        $region84: #{_resnet_forward_impl.37} parent=69 // pred_check_branch
          %567 = sbr.rel (%p565) target = $region86
        $region85: #{_resnet_forward_impl.37} parent=69 // pred_region
          %s568 = smul.u32 2, %s20
        $region86: #{_resnet_forward_impl.37} parent=69 // pred_fallthru
          _
        // Predicated region
        $region87: #{_resnet_forward_impl.37} parent=69 // pred_check
          %p569 = pneg %p164
        $region88: #{_resnet_forward_impl.37} parent=69 // pred_check_branch
          %571 = sbr.rel (%p569) target = $region90
        $region89: #{_resnet_forward_impl.37} parent=69 // pred_region
          %s572 = smul.u32 2, %s20
          %p573 = scmp.lt.s32.totalorder %s572, 1
          %s574 = scalar_select %p573, %s572, 1
          %p575 = scmp.lt.s32.totalorder %s21, 0
          %s576 = scalar_select %p575, %s21, 0
          %s577 = sadd.s32 %s576, %s574
          %s578 = smul.addr %s577, 4
          %s579 = scalar_lea.vmem %s4, %s578
        $region90: #{_resnet_forward_impl.37} parent=69 // pred_fallthru
          _
      $region70: #{_resnet_forward_impl.37} parent=5 // pred_fallthru
        _
      %p580 = scmp.le.s32.totalorder 2, %s10
      // Predicated region
      $region91: #{_resnet_forward_impl.37} parent=5 // pred_check
        %p581 = pneg %p580
      $region92: #{_resnet_forward_impl.37} parent=5 // pred_check_branch
        %583 = sbr.rel (%p581) target = $region94
      $region93: #{_resnet_forward_impl.37} parent=5 // pred_region
        %s584 = ssub.s32 %s10, 2
      $region94: #{_resnet_forward_impl.37} parent=5 // pred_fallthru
        _
    $region6: #{_resnet_forward_impl.37} parent=1 // loop_footer
      %s14 = sadd.s32 1, %s10
    $region7: #{_resnet_forward_impl.37} parent=1 // loop_footer_branch
      %9 = sbr.rel target = $region3
    $region8: #{_resnet_forward_impl.37} parent=1 // loop_exit
      _

</llo_original>
